<compile_context>
chip_gen: v7x
topology: tpu7x:2x2x1
jax: 0.10.0
libtpu: 0.0.40
codegen_flags: <defaults>
</compile_context>

<pallas_src>
import jax
import jax.numpy as jnp
from jax.experimental import pallas as pl
from jax.experimental.pallas import tpu as pltpu

EPS = 1e-5
_VMEM = pl.BlockSpec(memory_space=pltpu.MemorySpace.VMEM)


# ----------------------------------------------------------------------------
# The single fused kernel
# ----------------------------------------------------------------------------
def _mnist_fused_kernel(p1_ref, w1_ref, b1_ref, g1_ref, bb1_ref,
                        w2_ref, b2_ref, g2_ref, bb2_ref,
                        fc1w_ref, fc1b_ref, fc2w_ref, fc2b_ref,
                        out_ref, z1s, y2s):
    f32 = jnp.float32
    bf16 = jnp.bfloat16
    batch = out_ref.shape[0]
    n1 = batch * 144                       # rows of the pooled conv1 map (12*12/sample)

    # ---- conv1: one bf16 MXU matmul on host-prepped im2col patches + bias.
    #      Patch rows are (pool_di, pool_dj, b, i, j): the four 2x2-pool taps are
    #      contiguous row blocks of size n1, so pooling is a row-block max. ----
    y1 = (jnp.dot(p1_ref[...], w1_ref[...], preferred_element_type=f32)
          + b1_ref[...])                                          # (4*n1, 10) f32
    m1 = jnp.maximum(jnp.maximum(y1[0:n1], y1[n1:2 * n1]),
                     jnp.maximum(y1[2 * n1:3 * n1], y1[3 * n1:4 * n1]))
    r1 = jnp.maximum(m1, 0.0)
    mu1 = jnp.mean(r1, axis=0, keepdims=True)
    var1 = jnp.mean((r1 - mu1) ** 2, axis=0, keepdims=True)
    z1 = (r1 - mu1) * jax.lax.rsqrt(var1 + EPS) * g1_ref[...] + bb1_ref[...]
    # z1: (n1, 10) f32, row = b*144 + i*12 + j.

    # ---- stash z1 in a VMEM scratch so each conv2 tap is a plain row-offset load ----
    pad = z1s.shape[0] - n1
    z1s[pl.ds(0, n1), :] = z1
    z1s[pl.ds(n1, pad), :] = jnp.zeros((pad, 10), f32)            # keep shifted reads finite

    # ---- conv2: 25 shifted row slabs, lane-concatenated, ONE K=250 bf16 matmul.
    #      Output row r = b*144 + i*12 + j is a true conv2 value whenever i<8, j<8;
    #      other rows (and wrapped reads) are never consumed by the pooling below. ----
    slabs = [z1s[pl.ds(kh * 12 + kw, n1), :] for kh in range(5) for kw in range(5)]
    x2 = jnp.concatenate(slabs, axis=1).astype(bf16)              # (n1, 250)
    y2 = (jnp.dot(x2, w2_ref[...], preferred_element_type=f32)
          + b2_ref[...])                                          # (n1, 20) f32
    y2s[...] = y2

    # ---- maxpool(2) + relu + gather the 16 pooled positions as (B,20) lane blocks.
    #      For position p=(i2,j2) the 2x2 window rows are base+{0,1,12,13}; the batch
    #      entries sit 144 rows apart (strided ds).  BN2 sums accumulate on the fly. ----
    pieces = []
    s_acc = jnp.zeros((1, 20), f32)
    q_acc = jnp.zeros((1, 20), f32)
    for i2 in range(4):
        for j2 in range(4):
            base = 24 * i2 + 2 * j2
            m = jnp.maximum(
                jnp.maximum(y2s[pl.ds(base, batch, stride=144), :],
                            y2s[pl.ds(base + 1, batch, stride=144), :]),
                jnp.maximum(y2s[pl.ds(base + 12, batch, stride=144), :],
                            y2s[pl.ds(base + 13, batch, stride=144), :]))
            r = jnp.maximum(m, 0.0)                               # (B, 20)
            pieces.append(r)
            s_acc = s_acc + jnp.sum(r, axis=0, keepdims=True)
            q_acc = q_acc + jnp.sum(r * r, axis=0, keepdims=True)

    z2 = jnp.concatenate(pieces, axis=1)                          # (B, 320), col = p*20+c
    cnt = batch * 16
    mu2 = s_acc / cnt
    var2 = jnp.maximum(q_acc / cnt - mu2 * mu2, 0.0)              # biased variance
    inv2 = jax.lax.rsqrt(var2 + EPS)
    z2n = ((z2 - jnp.tile(mu2, (1, 16))) * jnp.tile(inv2, (1, 16))
           * g2_ref[...] + bb2_ref[...])                          # gamma/beta pre-tiled

    # ---- fc1 -> relu -> fc2 -> log_softmax (bf16 operands, f32 accumulate/softmax) ----
    h = (jnp.dot(z2n.astype(bf16), fc1w_ref[...], preferred_element_type=f32)
         + fc1b_ref[...])
    h = jnp.maximum(h, 0.0)
    logits = (jnp.dot(h.astype(bf16), fc2w_ref[...], preferred_element_type=f32)
              + fc2b_ref[...])
    zmax = jnp.max(logits, axis=-1, keepdims=True)
    zs = logits - zmax
    lse = jnp.log(jnp.sum(jnp.exp(zs), axis=-1, keepdims=True))
    out_ref[...] = zs - lse


# ----------------------------------------------------------------------------
# Host-side (trace-time) prep: conv1 im2col patches (tiny, input-side only)
# ----------------------------------------------------------------------------
def _conv1_patches(x_nchw):
    """(B,1,28,28) -> (4*B*144, 25) bf16 patches.

    Row order (pool_di, pool_dj, b, i, j), i,j in [0,12): each 2x2-pool tap is a
    contiguous block of B*144 rows.  Column order (kh, kw) matches packed w1."""
    batch = x_nchw.shape[0]
    xs = x_nchw[:, 0]                                             # (B, 28, 28)
    cols = [xs[:, kh:kh + 24, kw:kw + 24] for kh in range(5) for kw in range(5)]
    p = jnp.stack(cols, axis=-1)                                  # (B, 24, 24, 25)
    p = p.reshape(batch, 12, 2, 12, 2, 25)                        # h = 2*i + di
    p = p.transpose(2, 4, 0, 1, 3, 5)                             # (di, dj, b, i, j, 25)
    return p.reshape(4 * batch * 144, 25).astype(jnp.bfloat16)


def mnist_forward(x_nchw, params):
    batch = x_nchw.shape[0]
    patches = _conv1_patches(x_nchw)                              # (4*B*144, 25) bf16
    n1 = batch * 144
    return pl.pallas_call(
        _mnist_fused_kernel,
        out_shape=jax.ShapeDtypeStruct((batch, 10), jnp.float32),
        in_specs=[_VMEM] * 13,
        out_specs=_VMEM,
        scratch_shapes=[
            pltpu.VMEM((n1 + 56, 10), jnp.float32),   # z1 (+52-row shift margin, zeroed)
            pltpu.VMEM((n1, 20), jnp.float32),        # conv2 output for pooled reads
        ],
    )(patches,
      params["w1"], params["b1"], params["bn1_g"], params["bn1_b"],
      params["w2"], params["b2"], params["bn2_g320"], params["bn2_b320"],
      params["fc1_w"], params["fc1_b"], params["fc2_w"], params["fc2_b"])


# ----------------------------------------------------------------------------
# One-time weight packing (PyTorch layouts -> kernel layouts, bf16 matmul weights)
# ----------------------------------------------------------------------------
def pack_params(raw):
    bf16, f32 = jnp.bfloat16, jnp.float32
    # conv1 weight (10,1,5,5) -> (25,10), row = kh*5+kw (matches patch columns)
    w1 = raw["conv1_w"].reshape(10, 25).T.astype(bf16)
    # conv2 weight (20,10,5,5) -> (250,20), row = (kh*5+kw)*10 + c_in (matches x2 lanes)
    w2 = raw["conv2_w"].transpose(2, 3, 1, 0).reshape(250, 20).astype(bf16)
    # fc1 weight (50,320), PyTorch flatten index = c*16 + p  ->  (320,50), row = p*20 + c
    fc1 = (raw["fc1_w"].T.reshape(20, 16, 50).transpose(1, 0, 2)
           .reshape(320, 50).astype(bf16))
    return {
        "w1": w1, "b1": raw["conv1_b"].reshape(1, 10).astype(f32),
        "bn1_g": raw["bn1_g"].reshape(1, 10).astype(f32),
        "bn1_b": raw["bn1_b"].reshape(1, 10).astype(f32),
        "w2": w2, "b2": raw["conv2_b"].reshape(1, 20).astype(f32),
        "bn2_g320": jnp.tile(raw["bn2_g"].reshape(1, 20), (1, 16)).astype(f32),
        "bn2_b320": jnp.tile(raw["bn2_b"].reshape(1, 20), (1, 16)).astype(f32),
        "fc1_w": fc1, "fc1_b": raw["fc1_b"].reshape(1, 50).astype(f32),
        "fc2_w": raw["fc2_w"].T.astype(bf16),
        "fc2_b": raw["fc2_b"].reshape(1, 10).astype(f32),
    }


def init_raw_params(key):
    ks = jax.random.split(key, 12)
    f32 = jnp.float32
    return {
        "conv1_w": jax.random.normal(ks[0], (10, 1, 5, 5), f32) * 0.1,
        "conv1_b": jax.random.normal(ks[1], (10,), f32) * 0.1,
        "conv2_w": jax.random.normal(ks[2], (20, 10, 5, 5), f32) * 0.1,
        "conv2_b": jax.random.normal(ks[3], (20,), f32) * 0.1,
        "fc1_w": jax.random.normal(ks[4], (50, 320), f32) * 0.05,
        "fc1_b": jax.random.normal(ks[5], (50,), f32) * 0.05,
        "fc2_w": jax.random.normal(ks[6], (10, 50), f32) * 0.05,
        "fc2_b": jax.random.normal(ks[7], (10,), f32) * 0.05,
        "bn1_g": 1.0 + 0.1 * jax.random.normal(ks[8], (10,), f32),
        "bn1_b": 0.1 * jax.random.normal(ks[9], (10,), f32),
        "bn2_g": 1.0 + 0.1 * jax.random.normal(ks[10], (20,), f32),
        "bn2_b": 0.1 * jax.random.normal(ks[11], (20,), f32),
    }


# ----------------------------------------------------------------------------
# Pure-JAX reference (PyTorch train-mode semantics) for a correctness check
# ----------------------------------------------------------------------------
def reference_forward(x, raw):
    dn = ("NCHW", "OIHW", "NCHW")
    hp = jax.lax.Precision.HIGHEST

    def conv(x, w, b):
        y = jax.lax.conv_general_dilated(x, w, (1, 1), "VALID",
                                         dimension_numbers=dn, precision=hp)
        return y + b[None, :, None, None]

    def pool(x):
        return jax.lax.reduce_window(x, -jnp.inf, jax.lax.max,
                                     (1, 1, 2, 2), (1, 1, 2, 2), "VALID")

    def bn(x, g, b):
        m = jnp.mean(x, axis=(0, 2, 3), keepdims=True)
        v = jnp.mean((x - m) ** 2, axis=(0, 2, 3), keepdims=True)
        return ((x - m) * jax.lax.rsqrt(v + EPS) * g[None, :, None, None]
                + b[None, :, None, None])

    h = bn(jnp.maximum(pool(conv(x, raw["conv1_w"], raw["conv1_b"])), 0.0),
           raw["bn1_g"], raw["bn1_b"])
    h = bn(jnp.maximum(pool(conv(h, raw["conv2_w"], raw["conv2_b"])), 0.0),
           raw["bn2_g"], raw["bn2_b"])
    flat = h.reshape(h.shape[0], -1)
    h1 = jnp.maximum(jnp.dot(flat, raw["fc1_w"].T, precision=hp) + raw["fc1_b"], 0.0)
    z = jnp.dot(h1, raw["fc2_w"].T, precision=hp) + raw["fc2_b"]
    return jax.nn.log_softmax(z, axis=-1)


if __name__ == "__main__":
    key = jax.random.PRNGKey(0)
    kp, kx = jax.random.split(key)
    raw = init_raw_params(kp)
    params = pack_params(raw)
    # MNIST geometry is fixed by fc1 (320 = 20*4*4) => 28x28 single-channel input.
    x = jax.random.normal(kx, (2, 1, 28, 28), jnp.float32)

    out = jax.block_until_ready(jax.jit(mnist_forward)(x, params))
    assert out.shape == (2, 10)

    ref = jax.block_until_ready(jax.jit(reference_forward)(x, raw))
    max_diff = float(jnp.max(jnp.abs(out - ref)))
    # Tolerance accounts for bf16 MXU operands (f32 accumulation); layout/permutation
    # bugs would produce O(0.5+) differences, well above this bound.
    assert max_diff < 5e-2, f"kernel vs reference mismatch, max|diff|={max_diff}"
    # log_softmax rows must exponentiate-sum to ~1
    assert jnp.allclose(jnp.sum(jnp.exp(out), axis=1), 1.0, atol=1e-4)
    print("KERNEL_OK")
</pallas_src>

<mosaic_0001>
module attributes {stable_mosaic.version = 11 : i64} {
  func.func @_mnist_fused_kernel(%arg0: memref<1152x25xbf16, #tpu.memory_space<vmem>>, %arg1: memref<25x10xbf16, #tpu.memory_space<vmem>>, %arg2: memref<1x10xf32, #tpu.memory_space<vmem>>, %arg3: memref<1x10xf32, #tpu.memory_space<vmem>>, %arg4: memref<1x10xf32, #tpu.memory_space<vmem>>, %arg5: memref<250x20xbf16, #tpu.memory_space<vmem>>, %arg6: memref<1x20xf32, #tpu.memory_space<vmem>>, %arg7: memref<1x320xf32, #tpu.memory_space<vmem>>, %arg8: memref<1x320xf32, #tpu.memory_space<vmem>>, %arg9: memref<320x50xbf16, #tpu.memory_space<vmem>>, %arg10: memref<1x50xf32, #tpu.memory_space<vmem>>, %arg11: memref<50x10xbf16, #tpu.memory_space<vmem>>, %arg12: memref<1x10xf32, #tpu.memory_space<vmem>>, %arg13: memref<2x10xf32, #tpu.memory_space<vmem>>, %arg14: memref<344x10xf32, #tpu.memory_space<vmem>>, %arg15: memref<288x20xf32, #tpu.memory_space<vmem>>) attributes {dimension_semantics = [], scalar_prefetch = 0 : i64, scratch_operands = 2 : i64, tpu.core_type = #tpu.core_type<tc>} {
    %c0 = arith.constant 0 : index
    %c0_0 = arith.constant 0 : index
    %0 = vector.load %arg0[%c0, %c0_0] : memref<1152x25xbf16, #tpu.memory_space<vmem>>, vector<1152x25xbf16>
    %c0_1 = arith.constant 0 : index
    %c0_2 = arith.constant 0 : index
    %1 = vector.load %arg1[%c0_1, %c0_2] : memref<25x10xbf16, #tpu.memory_space<vmem>>, vector<25x10xbf16>
    %cst = arith.constant dense<0.000000e+00> : vector<1152x10xf32>
    %2 = tpu.matmul %0, %1, %cst {dimension_numbers = #tpu.dot_dimension_numbers<[1], [0], [0], [1], [0, 0, 1, 1], [], []>} : vector<1152x25xbf16>, vector<25x10xbf16>, vector<1152x10xf32> -> vector<1152x10xf32>
    %c0_3 = arith.constant 0 : index
    %c0_4 = arith.constant 0 : index
    %3 = vector.load %arg2[%c0_3, %c0_4] : memref<1x10xf32, #tpu.memory_space<vmem>>, vector<1x10xf32>
    %4 = vector.broadcast %3 : vector<1x10xf32> to vector<1152x10xf32>
    %5 = arith.addf %2, %4 : vector<1152x10xf32>
    %6 = vector.extract_strided_slice %5 {offsets = [0, 0], sizes = [288, 10], strides = [1, 1]} : vector<1152x10xf32> to vector<288x10xf32>
    %7 = vector.extract_strided_slice %5 {offsets = [288, 0], sizes = [288, 10], strides = [1, 1]} : vector<1152x10xf32> to vector<288x10xf32>
    %8 = arith.maximumf %6, %7 : vector<288x10xf32>
    %9 = vector.extract_strided_slice %5 {offsets = [576, 0], sizes = [288, 10], strides = [1, 1]} : vector<1152x10xf32> to vector<288x10xf32>
    %10 = vector.extract_strided_slice %5 {offsets = [864, 0], sizes = [288, 10], strides = [1, 1]} : vector<1152x10xf32> to vector<288x10xf32>
    %11 = arith.maximumf %9, %10 : vector<288x10xf32>
    %12 = arith.maximumf %8, %11 : vector<288x10xf32>
    %cst_5 = arith.constant 0.000000e+00 : f32
    %13 = vector.broadcast %cst_5 : f32 to vector<288x10xf32>
    %14 = arith.maximumf %12, %13 : vector<288x10xf32>
    %cst_6 = arith.constant dense<0.000000e+00> : vector<10xf32>
    %15 = vector.multi_reduction <add>, %14, %cst_6 [0] : vector<288x10xf32> to vector<10xf32>
    %16 = vector.shape_cast %15 : vector<10xf32> to vector<1x10xf32>
    %cst_7 = arith.constant 2.880000e+02 : f32
    %17 = vector.broadcast %cst_7 : f32 to vector<1x10xf32>
    %18 = arith.divf %16, %17 : vector<1x10xf32>
    %19 = vector.broadcast %18 : vector<1x10xf32> to vector<288x10xf32>
    %20 = arith.subf %14, %19 : vector<288x10xf32>
    %21 = arith.mulf %20, %20 : vector<288x10xf32>
    %cst_8 = arith.constant dense<0.000000e+00> : vector<10xf32>
    %22 = vector.multi_reduction <add>, %21, %cst_8 [0] : vector<288x10xf32> to vector<10xf32>
    %23 = vector.shape_cast %22 : vector<10xf32> to vector<1x10xf32>
    %cst_9 = arith.constant 2.880000e+02 : f32
    %24 = vector.broadcast %cst_9 : f32 to vector<1x10xf32>
    %25 = arith.divf %23, %24 : vector<1x10xf32>
    %26 = vector.broadcast %18 : vector<1x10xf32> to vector<288x10xf32>
    %27 = arith.subf %14, %26 : vector<288x10xf32>
    %cst_10 = arith.constant 9.99999974E-6 : f32
    %28 = vector.broadcast %cst_10 : f32 to vector<1x10xf32>
    %29 = arith.addf %25, %28 : vector<1x10xf32>
    %30 = math.rsqrt %29 : vector<1x10xf32>
    %31 = vector.broadcast %30 : vector<1x10xf32> to vector<288x10xf32>
    %32 = arith.mulf %27, %31 : vector<288x10xf32>
    %c0_11 = arith.constant 0 : index
    %c0_12 = arith.constant 0 : index
    %33 = vector.load %arg3[%c0_11, %c0_12] : memref<1x10xf32, #tpu.memory_space<vmem>>, vector<1x10xf32>
    %34 = vector.broadcast %33 : vector<1x10xf32> to vector<288x10xf32>
    %35 = arith.mulf %32, %34 : vector<288x10xf32>
    %c0_13 = arith.constant 0 : index
    %c0_14 = arith.constant 0 : index
    %36 = vector.load %arg4[%c0_13, %c0_14] : memref<1x10xf32, #tpu.memory_space<vmem>>, vector<1x10xf32>
    %37 = vector.broadcast %36 : vector<1x10xf32> to vector<288x10xf32>
    %38 = arith.addf %35, %37 : vector<288x10xf32>
    %c0_15 = arith.constant 0 : index
    %c0_16 = arith.constant 0 : index
    %39 = vector.load %arg14[%c0_15, %c0_16] : memref<344x10xf32, #tpu.memory_space<vmem>>, vector<288x10xf32>
    tpu.vector_store %arg14[%c0_15, %c0_16], %38 {strides = array<i32>} : memref<344x10xf32, #tpu.memory_space<vmem>>, vector<288x10xf32>,
    %cst_17 = arith.constant 0.000000e+00 : f32
    %40 = vector.broadcast %cst_17 : f32 to vector<56x10xf32>
    %c288 = arith.constant 288 : index
    %c0_18 = arith.constant 0 : index
    %41 = vector.load %arg14[%c288, %c0_18] : memref<344x10xf32, #tpu.memory_space<vmem>>, vector<56x10xf32>
    tpu.vector_store %arg14[%c288, %c0_18], %40 {strides = array<i32>} : memref<344x10xf32, #tpu.memory_space<vmem>>, vector<56x10xf32>,
    %c0_19 = arith.constant 0 : index
    %c0_20 = arith.constant 0 : index
    %42 = vector.load %arg14[%c0_19, %c0_20] : memref<344x10xf32, #tpu.memory_space<vmem>>, vector<288x10xf32>
    %c1 = arith.constant 1 : index
    %c0_21 = arith.constant 0 : index
    %43 = vector.load %arg14[%c1, %c0_21] : memref<344x10xf32, #tpu.memory_space<vmem>>, vector<288x10xf32>
    %c2 = arith.constant 2 : index
    %c0_22 = arith.constant 0 : index
    %44 = vector.load %arg14[%c2, %c0_22] : memref<344x10xf32, #tpu.memory_space<vmem>>, vector<288x10xf32>
    %c3 = arith.constant 3 : index
    %c0_23 = arith.constant 0 : index
    %45 = vector.load %arg14[%c3, %c0_23] : memref<344x10xf32, #tpu.memory_space<vmem>>, vector<288x10xf32>
    %c4 = arith.constant 4 : index
    %c0_24 = arith.constant 0 : index
    %46 = vector.load %arg14[%c4, %c0_24] : memref<344x10xf32, #tpu.memory_space<vmem>>, vector<288x10xf32>
    %c12 = arith.constant 12 : index
    %c0_25 = arith.constant 0 : index
    %47 = vector.load %arg14[%c12, %c0_25] : memref<344x10xf32, #tpu.memory_space<vmem>>, vector<288x10xf32>
    %c13 = arith.constant 13 : index
    %c0_26 = arith.constant 0 : index
    %48 = vector.load %arg14[%c13, %c0_26] : memref<344x10xf32, #tpu.memory_space<vmem>>, vector<288x10xf32>
    %c14 = arith.constant 14 : index
    %c0_27 = arith.constant 0 : index
    %49 = vector.load %arg14[%c14, %c0_27] : memref<344x10xf32, #tpu.memory_space<vmem>>, vector<288x10xf32>
    %c15 = arith.constant 15 : index
    %c0_28 = arith.constant 0 : index
    %50 = vector.load %arg14[%c15, %c0_28] : memref<344x10xf32, #tpu.memory_space<vmem>>, vector<288x10xf32>
    %c16 = arith.constant 16 : index
    %c0_29 = arith.constant 0 : index
    %51 = vector.load %arg14[%c16, %c0_29] : memref<344x10xf32, #tpu.memory_space<vmem>>, vector<288x10xf32>
    %c24 = arith.constant 24 : index
    %c0_30 = arith.constant 0 : index
    %52 = vector.load %arg14[%c24, %c0_30] : memref<344x10xf32, #tpu.memory_space<vmem>>, vector<288x10xf32>
    %c25 = arith.constant 25 : index
    %c0_31 = arith.constant 0 : index
    %53 = vector.load %arg14[%c25, %c0_31] : memref<344x10xf32, #tpu.memory_space<vmem>>, vector<288x10xf32>
    %c26 = arith.constant 26 : index
    %c0_32 = arith.constant 0 : index
    %54 = vector.load %arg14[%c26, %c0_32] : memref<344x10xf32, #tpu.memory_space<vmem>>, vector<288x10xf32>
    %c27 = arith.constant 27 : index
    %c0_33 = arith.constant 0 : index
    %55 = vector.load %arg14[%c27, %c0_33] : memref<344x10xf32, #tpu.memory_space<vmem>>, vector<288x10xf32>
    %c28 = arith.constant 28 : index
    %c0_34 = arith.constant 0 : index
    %56 = vector.load %arg14[%c28, %c0_34] : memref<344x10xf32, #tpu.memory_space<vmem>>, vector<288x10xf32>
    %c36 = arith.constant 36 : index
    %c0_35 = arith.constant 0 : index
    %57 = vector.load %arg14[%c36, %c0_35] : memref<344x10xf32, #tpu.memory_space<vmem>>, vector<288x10xf32>
    %c37 = arith.constant 37 : index
    %c0_36 = arith.constant 0 : index
    %58 = vector.load %arg14[%c37, %c0_36] : memref<344x10xf32, #tpu.memory_space<vmem>>, vector<288x10xf32>
    %c38 = arith.constant 38 : index
    %c0_37 = arith.constant 0 : index
    %59 = vector.load %arg14[%c38, %c0_37] : memref<344x10xf32, #tpu.memory_space<vmem>>, vector<288x10xf32>
    %c39 = arith.constant 39 : index
    %c0_38 = arith.constant 0 : index
    %60 = vector.load %arg14[%c39, %c0_38] : memref<344x10xf32, #tpu.memory_space<vmem>>, vector<288x10xf32>
    %c40 = arith.constant 40 : index
    %c0_39 = arith.constant 0 : index
    %61 = vector.load %arg14[%c40, %c0_39] : memref<344x10xf32, #tpu.memory_space<vmem>>, vector<288x10xf32>
    %c48 = arith.constant 48 : index
    %c0_40 = arith.constant 0 : index
    %62 = vector.load %arg14[%c48, %c0_40] : memref<344x10xf32, #tpu.memory_space<vmem>>, vector<288x10xf32>
    %c49 = arith.constant 49 : index
    %c0_41 = arith.constant 0 : index
    %63 = vector.load %arg14[%c49, %c0_41] : memref<344x10xf32, #tpu.memory_space<vmem>>, vector<288x10xf32>
    %c50 = arith.constant 50 : index
    %c0_42 = arith.constant 0 : index
    %64 = vector.load %arg14[%c50, %c0_42] : memref<344x10xf32, #tpu.memory_space<vmem>>, vector<288x10xf32>
    %c51 = arith.constant 51 : index
    %c0_43 = arith.constant 0 : index
    %65 = vector.load %arg14[%c51, %c0_43] : memref<344x10xf32, #tpu.memory_space<vmem>>, vector<288x10xf32>
    %c52 = arith.constant 52 : index
    %c0_44 = arith.constant 0 : index
    %66 = vector.load %arg14[%c52, %c0_44] : memref<344x10xf32, #tpu.memory_space<vmem>>, vector<288x10xf32>
    %67 = tpu.concatenate %42, %43, %44, %45, %46, %47, %48, %49, %50, %51, %52, %53, %54, %55, %56, %57 in 1 : vector<288x10xf32>, vector<288x10xf32>, vector<288x10xf32>, vector<288x10xf32>, vector<288x10xf32>, vector<288x10xf32>, vector<288x10xf32>, vector<288x10xf32>, vector<288x10xf32>, vector<288x10xf32>, vector<288x10xf32>, vector<288x10xf32>, vector<288x10xf32>, vector<288x10xf32>, vector<288x10xf32>, vector<288x10xf32> -> vector<288x160xf32>
    %68 = tpu.concatenate %58, %59, %60, %61, %62, %63, %64, %65, %66 in 1 : vector<288x10xf32>, vector<288x10xf32>, vector<288x10xf32>, vector<288x10xf32>, vector<288x10xf32>, vector<288x10xf32>, vector<288x10xf32>, vector<288x10xf32>, vector<288x10xf32> -> vector<288x90xf32>
    %69 = tpu.concatenate %67, %68 in 1 : vector<288x160xf32>, vector<288x90xf32> -> vector<288x250xf32>
    %70 = arith.truncf %69 : vector<288x250xf32> to vector<288x250xbf16>
    %c0_45 = arith.constant 0 : index
    %c0_46 = arith.constant 0 : index
    %71 = vector.load %arg5[%c0_45, %c0_46] : memref<250x20xbf16, #tpu.memory_space<vmem>>, vector<250x20xbf16>
    %cst_47 = arith.constant dense<0.000000e+00> : vector<288x20xf32>
    %72 = tpu.matmul %70, %71, %cst_47 {dimension_numbers = #tpu.dot_dimension_numbers<[1], [0], [0], [1], [0, 0, 1, 1], [], []>} : vector<288x250xbf16>, vector<250x20xbf16>, vector<288x20xf32> -> vector<288x20xf32>
    %c0_48 = arith.constant 0 : index
    %c0_49 = arith.constant 0 : index
    %73 = vector.load %arg6[%c0_48, %c0_49] : memref<1x20xf32, #tpu.memory_space<vmem>>, vector<1x20xf32>
    %74 = vector.broadcast %73 : vector<1x20xf32> to vector<288x20xf32>
    %75 = arith.addf %72, %74 : vector<288x20xf32>
    %c0_50 = arith.constant 0 : index
    %c0_51 = arith.constant 0 : index
    %76 = vector.load %arg15[%c0_50, %c0_51] : memref<288x20xf32, #tpu.memory_space<vmem>>, vector<288x20xf32>
    tpu.vector_store %arg15[%c0_50, %c0_51], %75 {strides = array<i32>} : memref<288x20xf32, #tpu.memory_space<vmem>>, vector<288x20xf32>,
    %cst_52 = arith.constant 0.000000e+00 : f32
    %77 = vector.broadcast %cst_52 : f32 to vector<1x20xf32>
    %cst_53 = arith.constant 0.000000e+00 : f32
    %78 = vector.broadcast %cst_53 : f32 to vector<1x20xf32>
    %c0_54 = arith.constant 0 : index
    %c0_55 = arith.constant 0 : index
    %79 = tpu.strided_load %arg15[%c0_54, %c0_55] {strides = array<i32: 144, 1>} : memref<288x20xf32, #tpu.memory_space<vmem>>, vector<2x20xf32>
    %c1_56 = arith.constant 1 : index
    %c0_57 = arith.constant 0 : index
    %80 = tpu.strided_load %arg15[%c1_56, %c0_57] {strides = array<i32: 144, 1>} : memref<288x20xf32, #tpu.memory_space<vmem>>, vector<2x20xf32>
    %81 = arith.maximumf %79, %80 : vector<2x20xf32>
    %c12_58 = arith.constant 12 : index
    %c0_59 = arith.constant 0 : index
    %82 = tpu.strided_load %arg15[%c12_58, %c0_59] {strides = array<i32: 144, 1>} : memref<288x20xf32, #tpu.memory_space<vmem>>, vector<2x20xf32>
    %c13_60 = arith.constant 13 : index
    %c0_61 = arith.constant 0 : index
    %83 = tpu.strided_load %arg15[%c13_60, %c0_61] {strides = array<i32: 144, 1>} : memref<288x20xf32, #tpu.memory_space<vmem>>, vector<2x20xf32>
    %84 = arith.maximumf %82, %83 : vector<2x20xf32>
    %85 = arith.maximumf %81, %84 : vector<2x20xf32>
    %cst_62 = arith.constant 0.000000e+00 : f32
    %86 = vector.broadcast %cst_62 : f32 to vector<2x20xf32>
    %87 = arith.maximumf %85, %86 : vector<2x20xf32>
    %cst_63 = arith.constant dense<0.000000e+00> : vector<20xf32>
    %88 = vector.multi_reduction <add>, %87, %cst_63 [0] : vector<2x20xf32> to vector<20xf32>
    %89 = vector.shape_cast %88 : vector<20xf32> to vector<1x20xf32>
    %90 = arith.addf %77, %89 : vector<1x20xf32>
    %91 = arith.mulf %87, %87 : vector<2x20xf32>
    %cst_64 = arith.constant dense<0.000000e+00> : vector<20xf32>
    %92 = vector.multi_reduction <add>, %91, %cst_64 [0] : vector<2x20xf32> to vector<20xf32>
    %93 = vector.shape_cast %92 : vector<20xf32> to vector<1x20xf32>
    %94 = arith.addf %78, %93 : vector<1x20xf32>
    %c2_65 = arith.constant 2 : index
    %c0_66 = arith.constant 0 : index
    %95 = tpu.strided_load %arg15[%c2_65, %c0_66] {strides = array<i32: 144, 1>} : memref<288x20xf32, #tpu.memory_space<vmem>>, vector<2x20xf32>
    %c3_67 = arith.constant 3 : index
    %c0_68 = arith.constant 0 : index
    %96 = tpu.strided_load %arg15[%c3_67, %c0_68] {strides = array<i32: 144, 1>} : memref<288x20xf32, #tpu.memory_space<vmem>>, vector<2x20xf32>
    %97 = arith.maximumf %95, %96 : vector<2x20xf32>
    %c14_69 = arith.constant 14 : index
    %c0_70 = arith.constant 0 : index
    %98 = tpu.strided_load %arg15[%c14_69, %c0_70] {strides = array<i32: 144, 1>} : memref<288x20xf32, #tpu.memory_space<vmem>>, vector<2x20xf32>
    %c15_71 = arith.constant 15 : index
    %c0_72 = arith.constant 0 : index
    %99 = tpu.strided_load %arg15[%c15_71, %c0_72] {strides = array<i32: 144, 1>} : memref<288x20xf32, #tpu.memory_space<vmem>>, vector<2x20xf32>
    %100 = arith.maximumf %98, %99 : vector<2x20xf32>
    %101 = arith.maximumf %97, %100 : vector<2x20xf32>
    %cst_73 = arith.constant 0.000000e+00 : f32
    %102 = vector.broadcast %cst_73 : f32 to vector<2x20xf32>
    %103 = arith.maximumf %101, %102 : vector<2x20xf32>
    %cst_74 = arith.constant dense<0.000000e+00> : vector<20xf32>
    %104 = vector.multi_reduction <add>, %103, %cst_74 [0] : vector<2x20xf32> to vector<20xf32>
    %105 = vector.shape_cast %104 : vector<20xf32> to vector<1x20xf32>
    %106 = arith.addf %90, %105 : vector<1x20xf32>
    %107 = arith.mulf %103, %103 : vector<2x20xf32>
    %cst_75 = arith.constant dense<0.000000e+00> : vector<20xf32>
    %108 = vector.multi_reduction <add>, %107, %cst_75 [0] : vector<2x20xf32> to vector<20xf32>
    %109 = vector.shape_cast %108 : vector<20xf32> to vector<1x20xf32>
    %110 = arith.addf %94, %109 : vector<1x20xf32>
    %c4_76 = arith.constant 4 : index
    %c0_77 = arith.constant 0 : index
    %111 = tpu.strided_load %arg15[%c4_76, %c0_77] {strides = array<i32: 144, 1>} : memref<288x20xf32, #tpu.memory_space<vmem>>, vector<2x20xf32>
    %c5 = arith.constant 5 : index
    %c0_78 = arith.constant 0 : index
    %112 = tpu.strided_load %arg15[%c5, %c0_78] {strides = array<i32: 144, 1>} : memref<288x20xf32, #tpu.memory_space<vmem>>, vector<2x20xf32>
    %113 = arith.maximumf %111, %112 : vector<2x20xf32>
    %c16_79 = arith.constant 16 : index
    %c0_80 = arith.constant 0 : index
    %114 = tpu.strided_load %arg15[%c16_79, %c0_80] {strides = array<i32: 144, 1>} : memref<288x20xf32, #tpu.memory_space<vmem>>, vector<2x20xf32>
    %c17 = arith.constant 17 : index
    %c0_81 = arith.constant 0 : index
    %115 = tpu.strided_load %arg15[%c17, %c0_81] {strides = array<i32: 144, 1>} : memref<288x20xf32, #tpu.memory_space<vmem>>, vector<2x20xf32>
    %116 = arith.maximumf %114, %115 : vector<2x20xf32>
    %117 = arith.maximumf %113, %116 : vector<2x20xf32>
    %cst_82 = arith.constant 0.000000e+00 : f32
    %118 = vector.broadcast %cst_82 : f32 to vector<2x20xf32>
    %119 = arith.maximumf %117, %118 : vector<2x20xf32>
    %cst_83 = arith.constant dense<0.000000e+00> : vector<20xf32>
    %120 = vector.multi_reduction <add>, %119, %cst_83 [0] : vector<2x20xf32> to vector<20xf32>
    %121 = vector.shape_cast %120 : vector<20xf32> to vector<1x20xf32>
    %122 = arith.addf %106, %121 : vector<1x20xf32>
    %123 = arith.mulf %119, %119 : vector<2x20xf32>
    %cst_84 = arith.constant dense<0.000000e+00> : vector<20xf32>
    %124 = vector.multi_reduction <add>, %123, %cst_84 [0] : vector<2x20xf32> to vector<20xf32>
    %125 = vector.shape_cast %124 : vector<20xf32> to vector<1x20xf32>
    %126 = arith.addf %110, %125 : vector<1x20xf32>
    %c6 = arith.constant 6 : index
    %c0_85 = arith.constant 0 : index
    %127 = tpu.strided_load %arg15[%c6, %c0_85] {strides = array<i32: 144, 1>} : memref<288x20xf32, #tpu.memory_space<vmem>>, vector<2x20xf32>
    %c7 = arith.constant 7 : index
    %c0_86 = arith.constant 0 : index
    %128 = tpu.strided_load %arg15[%c7, %c0_86] {strides = array<i32: 144, 1>} : memref<288x20xf32, #tpu.memory_space<vmem>>, vector<2x20xf32>
    %129 = arith.maximumf %127, %128 : vector<2x20xf32>
    %c18 = arith.constant 18 : index
    %c0_87 = arith.constant 0 : index
    %130 = tpu.strided_load %arg15[%c18, %c0_87] {strides = array<i32: 144, 1>} : memref<288x20xf32, #tpu.memory_space<vmem>>, vector<2x20xf32>
    %c19 = arith.constant 19 : index
    %c0_88 = arith.constant 0 : index
    %131 = tpu.strided_load %arg15[%c19, %c0_88] {strides = array<i32: 144, 1>} : memref<288x20xf32, #tpu.memory_space<vmem>>, vector<2x20xf32>
    %132 = arith.maximumf %130, %131 : vector<2x20xf32>
    %133 = arith.maximumf %129, %132 : vector<2x20xf32>
    %cst_89 = arith.constant 0.000000e+00 : f32
    %134 = vector.broadcast %cst_89 : f32 to vector<2x20xf32>
    %135 = arith.maximumf %133, %134 : vector<2x20xf32>
    %cst_90 = arith.constant dense<0.000000e+00> : vector<20xf32>
    %136 = vector.multi_reduction <add>, %135, %cst_90 [0] : vector<2x20xf32> to vector<20xf32>
    %137 = vector.shape_cast %136 : vector<20xf32> to vector<1x20xf32>
    %138 = arith.addf %122, %137 : vector<1x20xf32>
    %139 = arith.mulf %135, %135 : vector<2x20xf32>
    %cst_91 = arith.constant dense<0.000000e+00> : vector<20xf32>
    %140 = vector.multi_reduction <add>, %139, %cst_91 [0] : vector<2x20xf32> to vector<20xf32>
    %141 = vector.shape_cast %140 : vector<20xf32> to vector<1x20xf32>
    %142 = arith.addf %126, %141 : vector<1x20xf32>
    %c24_92 = arith.constant 24 : index
    %c0_93 = arith.constant 0 : index
    %143 = tpu.strided_load %arg15[%c24_92, %c0_93] {strides = array<i32: 144, 1>} : memref<288x20xf32, #tpu.memory_space<vmem>>, vector<2x20xf32>
    %c25_94 = arith.constant 25 : index
    %c0_95 = arith.constant 0 : index
    %144 = tpu.strided_load %arg15[%c25_94, %c0_95] {strides = array<i32: 144, 1>} : memref<288x20xf32, #tpu.memory_space<vmem>>, vector<2x20xf32>
    %145 = arith.maximumf %143, %144 : vector<2x20xf32>
    %c36_96 = arith.constant 36 : index
    %c0_97 = arith.constant 0 : index
    %146 = tpu.strided_load %arg15[%c36_96, %c0_97] {strides = array<i32: 144, 1>} : memref<288x20xf32, #tpu.memory_space<vmem>>, vector<2x20xf32>
    %c37_98 = arith.constant 37 : index
    %c0_99 = arith.constant 0 : index
    %147 = tpu.strided_load %arg15[%c37_98, %c0_99] {strides = array<i32: 144, 1>} : memref<288x20xf32, #tpu.memory_space<vmem>>, vector<2x20xf32>
    %148 = arith.maximumf %146, %147 : vector<2x20xf32>
    %149 = arith.maximumf %145, %148 : vector<2x20xf32>
    %cst_100 = arith.constant 0.000000e+00 : f32
    %150 = vector.broadcast %cst_100 : f32 to vector<2x20xf32>
    %151 = arith.maximumf %149, %150 : vector<2x20xf32>
    %cst_101 = arith.constant dense<0.000000e+00> : vector<20xf32>
    %152 = vector.multi_reduction <add>, %151, %cst_101 [0] : vector<2x20xf32> to vector<20xf32>
    %153 = vector.shape_cast %152 : vector<20xf32> to vector<1x20xf32>
    %154 = arith.addf %138, %153 : vector<1x20xf32>
    %155 = arith.mulf %151, %151 : vector<2x20xf32>
    %cst_102 = arith.constant dense<0.000000e+00> : vector<20xf32>
    %156 = vector.multi_reduction <add>, %155, %cst_102 [0] : vector<2x20xf32> to vector<20xf32>
    %157 = vector.shape_cast %156 : vector<20xf32> to vector<1x20xf32>
    %158 = arith.addf %142, %157 : vector<1x20xf32>
    %c26_103 = arith.constant 26 : index
    %c0_104 = arith.constant 0 : index
    %159 = tpu.strided_load %arg15[%c26_103, %c0_104] {strides = array<i32: 144, 1>} : memref<288x20xf32, #tpu.memory_space<vmem>>, vector<2x20xf32>
    %c27_105 = arith.constant 27 : index
    %c0_106 = arith.constant 0 : index
    %160 = tpu.strided_load %arg15[%c27_105, %c0_106] {strides = array<i32: 144, 1>} : memref<288x20xf32, #tpu.memory_space<vmem>>, vector<2x20xf32>
    %161 = arith.maximumf %159, %160 : vector<2x20xf32>
    %c38_107 = arith.constant 38 : index
    %c0_108 = arith.constant 0 : index
    %162 = tpu.strided_load %arg15[%c38_107, %c0_108] {strides = array<i32: 144, 1>} : memref<288x20xf32, #tpu.memory_space<vmem>>, vector<2x20xf32>
    %c39_109 = arith.constant 39 : index
    %c0_110 = arith.constant 0 : index
    %163 = tpu.strided_load %arg15[%c39_109, %c0_110] {strides = array<i32: 144, 1>} : memref<288x20xf32, #tpu.memory_space<vmem>>, vector<2x20xf32>
    %164 = arith.maximumf %162, %163 : vector<2x20xf32>
    %165 = arith.maximumf %161, %164 : vector<2x20xf32>
    %cst_111 = arith.constant 0.000000e+00 : f32
    %166 = vector.broadcast %cst_111 : f32 to vector<2x20xf32>
    %167 = arith.maximumf %165, %166 : vector<2x20xf32>
    %cst_112 = arith.constant dense<0.000000e+00> : vector<20xf32>
    %168 = vector.multi_reduction <add>, %167, %cst_112 [0] : vector<2x20xf32> to vector<20xf32>
    %169 = vector.shape_cast %168 : vector<20xf32> to vector<1x20xf32>
    %170 = arith.addf %154, %169 : vector<1x20xf32>
    %171 = arith.mulf %167, %167 : vector<2x20xf32>
    %cst_113 = arith.constant dense<0.000000e+00> : vector<20xf32>
    %172 = vector.multi_reduction <add>, %171, %cst_113 [0] : vector<2x20xf32> to vector<20xf32>
    %173 = vector.shape_cast %172 : vector<20xf32> to vector<1x20xf32>
    %174 = arith.addf %158, %173 : vector<1x20xf32>
    %c28_114 = arith.constant 28 : index
    %c0_115 = arith.constant 0 : index
    %175 = tpu.strided_load %arg15[%c28_114, %c0_115] {strides = array<i32: 144, 1>} : memref<288x20xf32, #tpu.memory_space<vmem>>, vector<2x20xf32>
    %c29 = arith.constant 29 : index
    %c0_116 = arith.constant 0 : index
    %176 = tpu.strided_load %arg15[%c29, %c0_116] {strides = array<i32: 144, 1>} : memref<288x20xf32, #tpu.memory_space<vmem>>, vector<2x20xf32>
    %177 = arith.maximumf %175, %176 : vector<2x20xf32>
    %c40_117 = arith.constant 40 : index
    %c0_118 = arith.constant 0 : index
    %178 = tpu.strided_load %arg15[%c40_117, %c0_118] {strides = array<i32: 144, 1>} : memref<288x20xf32, #tpu.memory_space<vmem>>, vector<2x20xf32>
    %c41 = arith.constant 41 : index
    %c0_119 = arith.constant 0 : index
    %179 = tpu.strided_load %arg15[%c41, %c0_119] {strides = array<i32: 144, 1>} : memref<288x20xf32, #tpu.memory_space<vmem>>, vector<2x20xf32>
    %180 = arith.maximumf %178, %179 : vector<2x20xf32>
    %181 = arith.maximumf %177, %180 : vector<2x20xf32>
    %cst_120 = arith.constant 0.000000e+00 : f32
    %182 = vector.broadcast %cst_120 : f32 to vector<2x20xf32>
    %183 = arith.maximumf %181, %182 : vector<2x20xf32>
    %cst_121 = arith.constant dense<0.000000e+00> : vector<20xf32>
    %184 = vector.multi_reduction <add>, %183, %cst_121 [0] : vector<2x20xf32> to vector<20xf32>
    %185 = vector.shape_cast %184 : vector<20xf32> to vector<1x20xf32>
    %186 = arith.addf %170, %185 : vector<1x20xf32>
    %187 = arith.mulf %183, %183 : vector<2x20xf32>
    %cst_122 = arith.constant dense<0.000000e+00> : vector<20xf32>
    %188 = vector.multi_reduction <add>, %187, %cst_122 [0] : vector<2x20xf32> to vector<20xf32>
    %189 = vector.shape_cast %188 : vector<20xf32> to vector<1x20xf32>
    %190 = arith.addf %174, %189 : vector<1x20xf32>
    %c30 = arith.constant 30 : index
    %c0_123 = arith.constant 0 : index
    %191 = tpu.strided_load %arg15[%c30, %c0_123] {strides = array<i32: 144, 1>} : memref<288x20xf32, #tpu.memory_space<vmem>>, vector<2x20xf32>
    %c31 = arith.constant 31 : index
    %c0_124 = arith.constant 0 : index
    %192 = tpu.strided_load %arg15[%c31, %c0_124] {strides = array<i32: 144, 1>} : memref<288x20xf32, #tpu.memory_space<vmem>>, vector<2x20xf32>
    %193 = arith.maximumf %191, %192 : vector<2x20xf32>
    %c42 = arith.constant 42 : index
    %c0_125 = arith.constant 0 : index
    %194 = tpu.strided_load %arg15[%c42, %c0_125] {strides = array<i32: 144, 1>} : memref<288x20xf32, #tpu.memory_space<vmem>>, vector<2x20xf32>
    %c43 = arith.constant 43 : index
    %c0_126 = arith.constant 0 : index
    %195 = tpu.strided_load %arg15[%c43, %c0_126] {strides = array<i32: 144, 1>} : memref<288x20xf32, #tpu.memory_space<vmem>>, vector<2x20xf32>
    %196 = arith.maximumf %194, %195 : vector<2x20xf32>
    %197 = arith.maximumf %193, %196 : vector<2x20xf32>
    %cst_127 = arith.constant 0.000000e+00 : f32
    %198 = vector.broadcast %cst_127 : f32 to vector<2x20xf32>
    %199 = arith.maximumf %197, %198 : vector<2x20xf32>
    %cst_128 = arith.constant dense<0.000000e+00> : vector<20xf32>
    %200 = vector.multi_reduction <add>, %199, %cst_128 [0] : vector<2x20xf32> to vector<20xf32>
    %201 = vector.shape_cast %200 : vector<20xf32> to vector<1x20xf32>
    %202 = arith.addf %186, %201 : vector<1x20xf32>
    %203 = arith.mulf %199, %199 : vector<2x20xf32>
    %cst_129 = arith.constant dense<0.000000e+00> : vector<20xf32>
    %204 = vector.multi_reduction <add>, %203, %cst_129 [0] : vector<2x20xf32> to vector<20xf32>
    %205 = vector.shape_cast %204 : vector<20xf32> to vector<1x20xf32>
    %206 = arith.addf %190, %205 : vector<1x20xf32>
    %c48_130 = arith.constant 48 : index
    %c0_131 = arith.constant 0 : index
    %207 = tpu.strided_load %arg15[%c48_130, %c0_131] {strides = array<i32: 144, 1>} : memref<288x20xf32, #tpu.memory_space<vmem>>, vector<2x20xf32>
    %c49_132 = arith.constant 49 : index
    %c0_133 = arith.constant 0 : index
    %208 = tpu.strided_load %arg15[%c49_132, %c0_133] {strides = array<i32: 144, 1>} : memref<288x20xf32, #tpu.memory_space<vmem>>, vector<2x20xf32>
    %209 = arith.maximumf %207, %208 : vector<2x20xf32>
    %c60 = arith.constant 60 : index
    %c0_134 = arith.constant 0 : index
    %210 = tpu.strided_load %arg15[%c60, %c0_134] {strides = array<i32: 144, 1>} : memref<288x20xf32, #tpu.memory_space<vmem>>, vector<2x20xf32>
    %c61 = arith.constant 61 : index
    %c0_135 = arith.constant 0 : index
    %211 = tpu.strided_load %arg15[%c61, %c0_135] {strides = array<i32: 144, 1>} : memref<288x20xf32, #tpu.memory_space<vmem>>, vector<2x20xf32>
    %212 = arith.maximumf %210, %211 : vector<2x20xf32>
    %213 = arith.maximumf %209, %212 : vector<2x20xf32>
    %cst_136 = arith.constant 0.000000e+00 : f32
    %214 = vector.broadcast %cst_136 : f32 to vector<2x20xf32>
    %215 = arith.maximumf %213, %214 : vector<2x20xf32>
    %cst_137 = arith.constant dense<0.000000e+00> : vector<20xf32>
    %216 = vector.multi_reduction <add>, %215, %cst_137 [0] : vector<2x20xf32> to vector<20xf32>
    %217 = vector.shape_cast %216 : vector<20xf32> to vector<1x20xf32>
    %218 = arith.addf %202, %217 : vector<1x20xf32>
    %219 = arith.mulf %215, %215 : vector<2x20xf32>
    %cst_138 = arith.constant dense<0.000000e+00> : vector<20xf32>
    %220 = vector.multi_reduction <add>, %219, %cst_138 [0] : vector<2x20xf32> to vector<20xf32>
    %221 = vector.shape_cast %220 : vector<20xf32> to vector<1x20xf32>
    %222 = arith.addf %206, %221 : vector<1x20xf32>
    %c50_139 = arith.constant 50 : index
    %c0_140 = arith.constant 0 : index
    %223 = tpu.strided_load %arg15[%c50_139, %c0_140] {strides = array<i32: 144, 1>} : memref<288x20xf32, #tpu.memory_space<vmem>>, vector<2x20xf32>
    %c51_141 = arith.constant 51 : index
    %c0_142 = arith.constant 0 : index
    %224 = tpu.strided_load %arg15[%c51_141, %c0_142] {strides = array<i32: 144, 1>} : memref<288x20xf32, #tpu.memory_space<vmem>>, vector<2x20xf32>
    %225 = arith.maximumf %223, %224 : vector<2x20xf32>
    %c62 = arith.constant 62 : index
    %c0_143 = arith.constant 0 : index
    %226 = tpu.strided_load %arg15[%c62, %c0_143] {strides = array<i32: 144, 1>} : memref<288x20xf32, #tpu.memory_space<vmem>>, vector<2x20xf32>
    %c63 = arith.constant 63 : index
    %c0_144 = arith.constant 0 : index
    %227 = tpu.strided_load %arg15[%c63, %c0_144] {strides = array<i32: 144, 1>} : memref<288x20xf32, #tpu.memory_space<vmem>>, vector<2x20xf32>
    %228 = arith.maximumf %226, %227 : vector<2x20xf32>
    %229 = arith.maximumf %225, %228 : vector<2x20xf32>
    %cst_145 = arith.constant 0.000000e+00 : f32
    %230 = vector.broadcast %cst_145 : f32 to vector<2x20xf32>
    %231 = arith.maximumf %229, %230 : vector<2x20xf32>
    %cst_146 = arith.constant dense<0.000000e+00> : vector<20xf32>
    %232 = vector.multi_reduction <add>, %231, %cst_146 [0] : vector<2x20xf32> to vector<20xf32>
    %233 = vector.shape_cast %232 : vector<20xf32> to vector<1x20xf32>
    %234 = arith.addf %218, %233 : vector<1x20xf32>
    %235 = arith.mulf %231, %231 : vector<2x20xf32>
    %cst_147 = arith.constant dense<0.000000e+00> : vector<20xf32>
    %236 = vector.multi_reduction <add>, %235, %cst_147 [0] : vector<2x20xf32> to vector<20xf32>
    %237 = vector.shape_cast %236 : vector<20xf32> to vector<1x20xf32>
    %238 = arith.addf %222, %237 : vector<1x20xf32>
    %c52_148 = arith.constant 52 : index
    %c0_149 = arith.constant 0 : index
    %239 = tpu.strided_load %arg15[%c52_148, %c0_149] {strides = array<i32: 144, 1>} : memref<288x20xf32, #tpu.memory_space<vmem>>, vector<2x20xf32>
    %c53 = arith.constant 53 : index
    %c0_150 = arith.constant 0 : index
    %240 = tpu.strided_load %arg15[%c53, %c0_150] {strides = array<i32: 144, 1>} : memref<288x20xf32, #tpu.memory_space<vmem>>, vector<2x20xf32>
    %241 = arith.maximumf %239, %240 : vector<2x20xf32>
    %c64 = arith.constant 64 : index
    %c0_151 = arith.constant 0 : index
    %242 = tpu.strided_load %arg15[%c64, %c0_151] {strides = array<i32: 144, 1>} : memref<288x20xf32, #tpu.memory_space<vmem>>, vector<2x20xf32>
    %c65 = arith.constant 65 : index
    %c0_152 = arith.constant 0 : index
    %243 = tpu.strided_load %arg15[%c65, %c0_152] {strides = array<i32: 144, 1>} : memref<288x20xf32, #tpu.memory_space<vmem>>, vector<2x20xf32>
    %244 = arith.maximumf %242, %243 : vector<2x20xf32>
    %245 = arith.maximumf %241, %244 : vector<2x20xf32>
    %cst_153 = arith.constant 0.000000e+00 : f32
    %246 = vector.broadcast %cst_153 : f32 to vector<2x20xf32>
    %247 = arith.maximumf %245, %246 : vector<2x20xf32>
    %cst_154 = arith.constant dense<0.000000e+00> : vector<20xf32>
    %248 = vector.multi_reduction <add>, %247, %cst_154 [0] : vector<2x20xf32> to vector<20xf32>
    %249 = vector.shape_cast %248 : vector<20xf32> to vector<1x20xf32>
    %250 = arith.addf %234, %249 : vector<1x20xf32>
    %251 = arith.mulf %247, %247 : vector<2x20xf32>
    %cst_155 = arith.constant dense<0.000000e+00> : vector<20xf32>
    %252 = vector.multi_reduction <add>, %251, %cst_155 [0] : vector<2x20xf32> to vector<20xf32>
    %253 = vector.shape_cast %252 : vector<20xf32> to vector<1x20xf32>
    %254 = arith.addf %238, %253 : vector<1x20xf32>
    %c54 = arith.constant 54 : index
    %c0_156 = arith.constant 0 : index
    %255 = tpu.strided_load %arg15[%c54, %c0_156] {strides = array<i32: 144, 1>} : memref<288x20xf32, #tpu.memory_space<vmem>>, vector<2x20xf32>
    %c55 = arith.constant 55 : index
    %c0_157 = arith.constant 0 : index
    %256 = tpu.strided_load %arg15[%c55, %c0_157] {strides = array<i32: 144, 1>} : memref<288x20xf32, #tpu.memory_space<vmem>>, vector<2x20xf32>
    %257 = arith.maximumf %255, %256 : vector<2x20xf32>
    %c66 = arith.constant 66 : index
    %c0_158 = arith.constant 0 : index
    %258 = tpu.strided_load %arg15[%c66, %c0_158] {strides = array<i32: 144, 1>} : memref<288x20xf32, #tpu.memory_space<vmem>>, vector<2x20xf32>
    %c67 = arith.constant 67 : index
    %c0_159 = arith.constant 0 : index
    %259 = tpu.strided_load %arg15[%c67, %c0_159] {strides = array<i32: 144, 1>} : memref<288x20xf32, #tpu.memory_space<vmem>>, vector<2x20xf32>
    %260 = arith.maximumf %258, %259 : vector<2x20xf32>
    %261 = arith.maximumf %257, %260 : vector<2x20xf32>
    %cst_160 = arith.constant 0.000000e+00 : f32
    %262 = vector.broadcast %cst_160 : f32 to vector<2x20xf32>
    %263 = arith.maximumf %261, %262 : vector<2x20xf32>
    %cst_161 = arith.constant dense<0.000000e+00> : vector<20xf32>
    %264 = vector.multi_reduction <add>, %263, %cst_161 [0] : vector<2x20xf32> to vector<20xf32>
    %265 = vector.shape_cast %264 : vector<20xf32> to vector<1x20xf32>
    %266 = arith.addf %250, %265 : vector<1x20xf32>
    %267 = arith.mulf %263, %263 : vector<2x20xf32>
    %cst_162 = arith.constant dense<0.000000e+00> : vector<20xf32>
    %268 = vector.multi_reduction <add>, %267, %cst_162 [0] : vector<2x20xf32> to vector<20xf32>
    %269 = vector.shape_cast %268 : vector<20xf32> to vector<1x20xf32>
    %270 = arith.addf %254, %269 : vector<1x20xf32>
    %c72 = arith.constant 72 : index
    %c0_163 = arith.constant 0 : index
    %271 = tpu.strided_load %arg15[%c72, %c0_163] {strides = array<i32: 144, 1>} : memref<288x20xf32, #tpu.memory_space<vmem>>, vector<2x20xf32>
    %c73 = arith.constant 73 : index
    %c0_164 = arith.constant 0 : index
    %272 = tpu.strided_load %arg15[%c73, %c0_164] {strides = array<i32: 144, 1>} : memref<288x20xf32, #tpu.memory_space<vmem>>, vector<2x20xf32>
    %273 = arith.maximumf %271, %272 : vector<2x20xf32>
    %c84 = arith.constant 84 : index
    %c0_165 = arith.constant 0 : index
    %274 = tpu.strided_load %arg15[%c84, %c0_165] {strides = array<i32: 144, 1>} : memref<288x20xf32, #tpu.memory_space<vmem>>, vector<2x20xf32>
    %c85 = arith.constant 85 : index
    %c0_166 = arith.constant 0 : index
    %275 = tpu.strided_load %arg15[%c85, %c0_166] {strides = array<i32: 144, 1>} : memref<288x20xf32, #tpu.memory_space<vmem>>, vector<2x20xf32>
    %276 = arith.maximumf %274, %275 : vector<2x20xf32>
    %277 = arith.maximumf %273, %276 : vector<2x20xf32>
    %cst_167 = arith.constant 0.000000e+00 : f32
    %278 = vector.broadcast %cst_167 : f32 to vector<2x20xf32>
    %279 = arith.maximumf %277, %278 : vector<2x20xf32>
    %cst_168 = arith.constant dense<0.000000e+00> : vector<20xf32>
    %280 = vector.multi_reduction <add>, %279, %cst_168 [0] : vector<2x20xf32> to vector<20xf32>
    %281 = vector.shape_cast %280 : vector<20xf32> to vector<1x20xf32>
    %282 = arith.addf %266, %281 : vector<1x20xf32>
    %283 = arith.mulf %279, %279 : vector<2x20xf32>
    %cst_169 = arith.constant dense<0.000000e+00> : vector<20xf32>
    %284 = vector.multi_reduction <add>, %283, %cst_169 [0] : vector<2x20xf32> to vector<20xf32>
    %285 = vector.shape_cast %284 : vector<20xf32> to vector<1x20xf32>
    %286 = arith.addf %270, %285 : vector<1x20xf32>
    %c74 = arith.constant 74 : index
    %c0_170 = arith.constant 0 : index
    %287 = tpu.strided_load %arg15[%c74, %c0_170] {strides = array<i32: 144, 1>} : memref<288x20xf32, #tpu.memory_space<vmem>>, vector<2x20xf32>
    %c75 = arith.constant 75 : index
    %c0_171 = arith.constant 0 : index
    %288 = tpu.strided_load %arg15[%c75, %c0_171] {strides = array<i32: 144, 1>} : memref<288x20xf32, #tpu.memory_space<vmem>>, vector<2x20xf32>
    %289 = arith.maximumf %287, %288 : vector<2x20xf32>
    %c86 = arith.constant 86 : index
    %c0_172 = arith.constant 0 : index
    %290 = tpu.strided_load %arg15[%c86, %c0_172] {strides = array<i32: 144, 1>} : memref<288x20xf32, #tpu.memory_space<vmem>>, vector<2x20xf32>
    %c87 = arith.constant 87 : index
    %c0_173 = arith.constant 0 : index
    %291 = tpu.strided_load %arg15[%c87, %c0_173] {strides = array<i32: 144, 1>} : memref<288x20xf32, #tpu.memory_space<vmem>>, vector<2x20xf32>
    %292 = arith.maximumf %290, %291 : vector<2x20xf32>
    %293 = arith.maximumf %289, %292 : vector<2x20xf32>
    %cst_174 = arith.constant 0.000000e+00 : f32
    %294 = vector.broadcast %cst_174 : f32 to vector<2x20xf32>
    %295 = arith.maximumf %293, %294 : vector<2x20xf32>
    %cst_175 = arith.constant dense<0.000000e+00> : vector<20xf32>
    %296 = vector.multi_reduction <add>, %295, %cst_175 [0] : vector<2x20xf32> to vector<20xf32>
    %297 = vector.shape_cast %296 : vector<20xf32> to vector<1x20xf32>
    %298 = arith.addf %282, %297 : vector<1x20xf32>
    %299 = arith.mulf %295, %295 : vector<2x20xf32>
    %cst_176 = arith.constant dense<0.000000e+00> : vector<20xf32>
    %300 = vector.multi_reduction <add>, %299, %cst_176 [0] : vector<2x20xf32> to vector<20xf32>
    %301 = vector.shape_cast %300 : vector<20xf32> to vector<1x20xf32>
    %302 = arith.addf %286, %301 : vector<1x20xf32>
    %c76 = arith.constant 76 : index
    %c0_177 = arith.constant 0 : index
    %303 = tpu.strided_load %arg15[%c76, %c0_177] {strides = array<i32: 144, 1>} : memref<288x20xf32, #tpu.memory_space<vmem>>, vector<2x20xf32>
    %c77 = arith.constant 77 : index
    %c0_178 = arith.constant 0 : index
    %304 = tpu.strided_load %arg15[%c77, %c0_178] {strides = array<i32: 144, 1>} : memref<288x20xf32, #tpu.memory_space<vmem>>, vector<2x20xf32>
    %305 = arith.maximumf %303, %304 : vector<2x20xf32>
    %c88 = arith.constant 88 : index
    %c0_179 = arith.constant 0 : index
    %306 = tpu.strided_load %arg15[%c88, %c0_179] {strides = array<i32: 144, 1>} : memref<288x20xf32, #tpu.memory_space<vmem>>, vector<2x20xf32>
    %c89 = arith.constant 89 : index
    %c0_180 = arith.constant 0 : index
    %307 = tpu.strided_load %arg15[%c89, %c0_180] {strides = array<i32: 144, 1>} : memref<288x20xf32, #tpu.memory_space<vmem>>, vector<2x20xf32>
    %308 = arith.maximumf %306, %307 : vector<2x20xf32>
    %309 = arith.maximumf %305, %308 : vector<2x20xf32>
    %cst_181 = arith.constant 0.000000e+00 : f32
    %310 = vector.broadcast %cst_181 : f32 to vector<2x20xf32>
    %311 = arith.maximumf %309, %310 : vector<2x20xf32>
    %cst_182 = arith.constant dense<0.000000e+00> : vector<20xf32>
    %312 = vector.multi_reduction <add>, %311, %cst_182 [0] : vector<2x20xf32> to vector<20xf32>
    %313 = vector.shape_cast %312 : vector<20xf32> to vector<1x20xf32>
    %314 = arith.addf %298, %313 : vector<1x20xf32>
    %315 = arith.mulf %311, %311 : vector<2x20xf32>
    %cst_183 = arith.constant dense<0.000000e+00> : vector<20xf32>
    %316 = vector.multi_reduction <add>, %315, %cst_183 [0] : vector<2x20xf32> to vector<20xf32>
    %317 = vector.shape_cast %316 : vector<20xf32> to vector<1x20xf32>
    %318 = arith.addf %302, %317 : vector<1x20xf32>
    %c78 = arith.constant 78 : index
    %c0_184 = arith.constant 0 : index
    %319 = tpu.strided_load %arg15[%c78, %c0_184] {strides = array<i32: 144, 1>} : memref<288x20xf32, #tpu.memory_space<vmem>>, vector<2x20xf32>
    %c79 = arith.constant 79 : index
    %c0_185 = arith.constant 0 : index
    %320 = tpu.strided_load %arg15[%c79, %c0_185] {strides = array<i32: 144, 1>} : memref<288x20xf32, #tpu.memory_space<vmem>>, vector<2x20xf32>
    %321 = arith.maximumf %319, %320 : vector<2x20xf32>
    %c90 = arith.constant 90 : index
    %c0_186 = arith.constant 0 : index
    %322 = tpu.strided_load %arg15[%c90, %c0_186] {strides = array<i32: 144, 1>} : memref<288x20xf32, #tpu.memory_space<vmem>>, vector<2x20xf32>
    %c91 = arith.constant 91 : index
    %c0_187 = arith.constant 0 : index
    %323 = tpu.strided_load %arg15[%c91, %c0_187] {strides = array<i32: 144, 1>} : memref<288x20xf32, #tpu.memory_space<vmem>>, vector<2x20xf32>
    %324 = arith.maximumf %322, %323 : vector<2x20xf32>
    %325 = arith.maximumf %321, %324 : vector<2x20xf32>
    %cst_188 = arith.constant 0.000000e+00 : f32
    %326 = vector.broadcast %cst_188 : f32 to vector<2x20xf32>
    %327 = arith.maximumf %325, %326 : vector<2x20xf32>
    %cst_189 = arith.constant dense<0.000000e+00> : vector<20xf32>
    %328 = vector.multi_reduction <add>, %327, %cst_189 [0] : vector<2x20xf32> to vector<20xf32>
    %329 = vector.shape_cast %328 : vector<20xf32> to vector<1x20xf32>
    %330 = arith.addf %314, %329 : vector<1x20xf32>
    %331 = arith.mulf %327, %327 : vector<2x20xf32>
    %cst_190 = arith.constant dense<0.000000e+00> : vector<20xf32>
    %332 = vector.multi_reduction <add>, %331, %cst_190 [0] : vector<2x20xf32> to vector<20xf32>
    %333 = vector.shape_cast %332 : vector<20xf32> to vector<1x20xf32>
    %334 = arith.addf %318, %333 : vector<1x20xf32>
    %335 = tpu.concatenate %87, %103, %119, %135, %151, %167, %183, %199, %215, %231, %247, %263, %279, %295, %311, %327 in 1 : vector<2x20xf32>, vector<2x20xf32>, vector<2x20xf32>, vector<2x20xf32>, vector<2x20xf32>, vector<2x20xf32>, vector<2x20xf32>, vector<2x20xf32>, vector<2x20xf32>, vector<2x20xf32>, vector<2x20xf32>, vector<2x20xf32>, vector<2x20xf32>, vector<2x20xf32>, vector<2x20xf32>, vector<2x20xf32> -> vector<2x320xf32>
    %cst_191 = arith.constant 3.200000e+01 : f32
    %336 = vector.broadcast %cst_191 : f32 to vector<1x20xf32>
    %337 = arith.divf %330, %336 : vector<1x20xf32>
    %cst_192 = arith.constant 3.200000e+01 : f32
    %338 = vector.broadcast %cst_192 : f32 to vector<1x20xf32>
    %339 = arith.divf %334, %338 : vector<1x20xf32>
    %340 = arith.mulf %337, %337 : vector<1x20xf32>
    %341 = arith.subf %339, %340 : vector<1x20xf32>
    %cst_193 = arith.constant 0.000000e+00 : f32
    %342 = vector.broadcast %cst_193 : f32 to vector<1x20xf32>
    %343 = arith.maximumf %341, %342 : vector<1x20xf32>
    %cst_194 = arith.constant 9.99999974E-6 : f32
    %344 = vector.broadcast %cst_194 : f32 to vector<1x20xf32>
    %345 = arith.addf %343, %344 : vector<1x20xf32>
    %346 = math.rsqrt %345 : vector<1x20xf32>
    %347 = tpu.concatenate %337, %337, %337, %337, %337, %337, %337, %337, %337, %337, %337, %337, %337, %337, %337, %337 in 1 : vector<1x20xf32>, vector<1x20xf32>, vector<1x20xf32>, vector<1x20xf32>, vector<1x20xf32>, vector<1x20xf32>, vector<1x20xf32>, vector<1x20xf32>, vector<1x20xf32>, vector<1x20xf32>, vector<1x20xf32>, vector<1x20xf32>, vector<1x20xf32>, vector<1x20xf32>, vector<1x20xf32>, vector<1x20xf32> -> vector<1x320xf32>
    %348 = vector.broadcast %347 : vector<1x320xf32> to vector<2x320xf32>
    %349 = arith.subf %335, %348 : vector<2x320xf32>
    %350 = tpu.concatenate %346, %346, %346, %346, %346, %346, %346, %346, %346, %346, %346, %346, %346, %346, %346, %346 in 1 : vector<1x20xf32>, vector<1x20xf32>, vector<1x20xf32>, vector<1x20xf32>, vector<1x20xf32>, vector<1x20xf32>, vector<1x20xf32>, vector<1x20xf32>, vector<1x20xf32>, vector<1x20xf32>, vector<1x20xf32>, vector<1x20xf32>, vector<1x20xf32>, vector<1x20xf32>, vector<1x20xf32>, vector<1x20xf32> -> vector<1x320xf32>
    %351 = vector.broadcast %350 : vector<1x320xf32> to vector<2x320xf32>
    %352 = arith.mulf %349, %351 : vector<2x320xf32>
    %c0_195 = arith.constant 0 : index
    %c0_196 = arith.constant 0 : index
    %353 = vector.load %arg7[%c0_195, %c0_196] : memref<1x320xf32, #tpu.memory_space<vmem>>, vector<1x320xf32>
    %354 = vector.broadcast %353 : vector<1x320xf32> to vector<2x320xf32>
    %355 = arith.mulf %352, %354 : vector<2x320xf32>
    %c0_197 = arith.constant 0 : index
    %c0_198 = arith.constant 0 : index
    %356 = vector.load %arg8[%c0_197, %c0_198] : memref<1x320xf32, #tpu.memory_space<vmem>>, vector<1x320xf32>
    %357 = vector.broadcast %356 : vector<1x320xf32> to vector<2x320xf32>
    %358 = arith.addf %355, %357 : vector<2x320xf32>
    %359 = arith.truncf %358 : vector<2x320xf32> to vector<2x320xbf16>
    %c0_199 = arith.constant 0 : index
    %c0_200 = arith.constant 0 : index
    %360 = vector.load %arg9[%c0_199, %c0_200] : memref<320x50xbf16, #tpu.memory_space<vmem>>, vector<320x50xbf16>
    %cst_201 = arith.constant dense<0.000000e+00> : vector<2x50xf32>
    %361 = tpu.matmul %359, %360, %cst_201 {dimension_numbers = #tpu.dot_dimension_numbers<[1], [0], [0], [1], [0, 0, 1, 1], [], []>} : vector<2x320xbf16>, vector<320x50xbf16>, vector<2x50xf32> -> vector<2x50xf32>
    %c0_202 = arith.constant 0 : index
    %c0_203 = arith.constant 0 : index
    %362 = vector.load %arg10[%c0_202, %c0_203] : memref<1x50xf32, #tpu.memory_space<vmem>>, vector<1x50xf32>
    %363 = vector.broadcast %362 : vector<1x50xf32> to vector<2x50xf32>
    %364 = arith.addf %361, %363 : vector<2x50xf32>
    %cst_204 = arith.constant 0.000000e+00 : f32
    %365 = vector.broadcast %cst_204 : f32 to vector<2x50xf32>
    %366 = arith.maximumf %364, %365 : vector<2x50xf32>
    %367 = arith.truncf %366 : vector<2x50xf32> to vector<2x50xbf16>
    %c0_205 = arith.constant 0 : index
    %c0_206 = arith.constant 0 : index
    %368 = vector.load %arg11[%c0_205, %c0_206] : memref<50x10xbf16, #tpu.memory_space<vmem>>, vector<50x10xbf16>
    %cst_207 = arith.constant dense<0.000000e+00> : vector<2x10xf32>
    %369 = tpu.matmul %367, %368, %cst_207 {dimension_numbers = #tpu.dot_dimension_numbers<[1], [0], [0], [1], [0, 0, 1, 1], [], []>} : vector<2x50xbf16>, vector<50x10xbf16>, vector<2x10xf32> -> vector<2x10xf32>
    %c0_208 = arith.constant 0 : index
    %c0_209 = arith.constant 0 : index
    %370 = vector.load %arg12[%c0_208, %c0_209] : memref<1x10xf32, #tpu.memory_space<vmem>>, vector<1x10xf32>
    %371 = vector.broadcast %370 : vector<1x10xf32> to vector<2x10xf32>
    %372 = arith.addf %369, %371 : vector<2x10xf32>
    %cst_210 = arith.constant dense<0xFF800000> : vector<2xf32>
    %373 = vector.multi_reduction <maximumf>, %372, %cst_210 [1] : vector<2x10xf32> to vector<2xf32>
    %374 = vector.shape_cast %373 : vector<2xf32> to vector<2x1xf32>
    %375 = vector.broadcast %374 : vector<2x1xf32> to vector<2x10xf32>
    %376 = arith.subf %372, %375 : vector<2x10xf32>
    %377 = math.exp %376 : vector<2x10xf32>
    %cst_211 = arith.constant dense<0.000000e+00> : vector<2xf32>
    %378 = vector.multi_reduction <add>, %377, %cst_211 [1] : vector<2x10xf32> to vector<2xf32>
    %379 = vector.shape_cast %378 : vector<2xf32> to vector<2x1xf32>
    %380 = math.log %379 : vector<2x1xf32>
    %381 = vector.broadcast %380 : vector<2x1xf32> to vector<2x10xf32>
    %382 = arith.subf %376, %381 : vector<2x10xf32>
    %c0_212 = arith.constant 0 : index
    %c0_213 = arith.constant 0 : index
    %383 = vector.load %arg13[%c0_212, %c0_213] : memref<2x10xf32, #tpu.memory_space<vmem>>, vector<2x10xf32>
    tpu.vector_store %arg13[%c0_212, %c0_213], %382 {strides = array<i32>} : memref<2x10xf32, #tpu.memory_space<vmem>>, vector<2x10xf32>,
    return
  }
}

</mosaic_0001>

<llo_original>
// kernel: mnist_forward.1
$region0: #{mnist_forward.1}
  #allocation0 [shape = 'u32[]', space=smem, size = 0x4, offset = 0x4, fixed_abs, tag = 'smem constant byte address 0x4 - core index']
  #allocation1 [shape = 'u32[144,128]{1,0:T(1,128)}', space=vmem, size = 0x12000, scoped, tag = 'internal scratch']
  #allocation2 [shape = 'f32[344,10]{1,0:T(8,128)}', space=vmem, size = 0x2b000, scoped, tag = 'scratch operand']
  #allocation3 [shape = 'f32[288,20]{1,0:T(8,128)}', space=vmem, size = 0x24000, scoped, tag = 'scratch operand']
  %s0 = inlined_call_operand.vmem [shape: bf16[1152,25], index: 0, kind: input, shape index: {}]
  %s1 = inlined_call_operand.vmem [shape: bf16[25,10], index: 1, kind: input, shape index: {}]
  %s2 = inlined_call_operand.vmem [shape: f32[1,10], index: 2, kind: input, shape index: {}]
  %s3 = inlined_call_operand.vmem [shape: f32[1,10], index: 3, kind: input, shape index: {}]
  %s4 = inlined_call_operand.vmem [shape: f32[1,10], index: 4, kind: input, shape index: {}]
  %s5 = inlined_call_operand.vmem [shape: bf16[250,20], index: 5, kind: input, shape index: {}]
  %s6 = inlined_call_operand.vmem [shape: f32[1,20], index: 6, kind: input, shape index: {}]
  %s7 = inlined_call_operand.vmem [shape: f32[1,320], index: 7, kind: input, shape index: {}]
  %s8 = inlined_call_operand.vmem [shape: f32[1,320], index: 8, kind: input, shape index: {}]
  %s9 = inlined_call_operand.vmem [shape: bf16[320,50], index: 9, kind: input, shape index: {}]
  %s10 = inlined_call_operand.vmem [shape: f32[1,50], index: 10, kind: input, shape index: {}]
  %s11 = inlined_call_operand.vmem [shape: bf16[50,10], index: 11, kind: input, shape index: {}]
  %s12 = inlined_call_operand.vmem [shape: f32[1,10], index: 12, kind: input, shape index: {}]
  %s13 = inlined_call_operand.hbm [shape: f32[2,10], index: 13, kind: output, shape index: {}]
  %s14 = sld [smem:[#allocation0]]
  $region62: #{mnist_forward.1} parent=0
    _
  %s16 = ssub.s32 1, %s14
  %s17 = scalar_select 0, %s16, %s14
  $region1: #{mnist_forward.1} parent=0
    #allocation4 [shape = 'u8[1024]{0}', space=vmem, size = 0x400, scoped, tag = 'output window, operand 0, single buffered']
    #allocation5 [shape = 's32[1]{0}', space=sflag, size = 0x4, scoped, tag = 'scoped memory for mnist_forward.1']
    %18 = vsyncpa [#allocation5], 0
    // Predicated region
    $region2: #{mnist_forward.1} parent=1 // pred_check
      _
    $region3: #{mnist_forward.1} parent=1 // pred_check_branch
      %20 = sbr.rel (0) target = $region5
    $region4: #{mnist_forward.1} parent=1 // pred_region
      _
    $region5: #{mnist_forward.1} parent=1 // pred_fallthru
      _
    // Predicated region
    $region6: #{mnist_forward.1} parent=1 // pred_check
      _
    $region7: #{mnist_forward.1} parent=1 // pred_check_branch
      %22 = sbr.rel (0) target = $region9
    $region8: #{mnist_forward.1} parent=1 // pred_region
      _
    $region9: #{mnist_forward.1} parent=1 // pred_fallthru
      _
    // Predicated region
    $region10: #{mnist_forward.1} parent=1 // pred_check
      _
    $region11: #{mnist_forward.1} parent=1 // pred_check_branch
      %24 = sbr.rel (0) target = $region13
    $region12: #{mnist_forward.1} parent=1 // pred_region
      _
    $region13: #{mnist_forward.1} parent=1 // pred_fallthru
      _
    // Predicated region
    $region14: #{mnist_forward.1} parent=1 // pred_check
      _
    $region15: #{mnist_forward.1} parent=1 // pred_check_branch
      %26 = sbr.rel (0) target = $region17
    $region16: #{mnist_forward.1} parent=1 // pred_region
      _
    $region17: #{mnist_forward.1} parent=1 // pred_fallthru
      _
    // Predicated region
    $region18: #{mnist_forward.1} parent=1 // pred_check
      _
    $region19: #{mnist_forward.1} parent=1 // pred_check_branch
      %28 = sbr.rel (0) target = $region21
    $region20: #{mnist_forward.1} parent=1 // pred_region
      _
    $region21: #{mnist_forward.1} parent=1 // pred_fallthru
      _
    // Predicated region
    $region22: #{mnist_forward.1} parent=1 // pred_check
      _
    $region23: #{mnist_forward.1} parent=1 // pred_check_branch
      %30 = sbr.rel (0) target = $region25
    $region24: #{mnist_forward.1} parent=1 // pred_region
      _
    $region25: #{mnist_forward.1} parent=1 // pred_fallthru
      _
    // Predicated region
    $region26: #{mnist_forward.1} parent=1 // pred_check
      _
    $region27: #{mnist_forward.1} parent=1 // pred_check_branch
      %32 = sbr.rel (0) target = $region29
    $region28: #{mnist_forward.1} parent=1 // pred_region
      _
    $region29: #{mnist_forward.1} parent=1 // pred_fallthru
      _
    // Predicated region
    $region30: #{mnist_forward.1} parent=1 // pred_check
      _
    $region31: #{mnist_forward.1} parent=1 // pred_check_branch
      %34 = sbr.rel (0) target = $region33
    $region32: #{mnist_forward.1} parent=1 // pred_region
      _
    $region33: #{mnist_forward.1} parent=1 // pred_fallthru
      _
    // Predicated region
    $region34: #{mnist_forward.1} parent=1 // pred_check
      _
    $region35: #{mnist_forward.1} parent=1 // pred_check_branch
      %36 = sbr.rel (0) target = $region37
    $region36: #{mnist_forward.1} parent=1 // pred_region
      _
    $region37: #{mnist_forward.1} parent=1 // pred_fallthru
      _
    // Predicated region
    $region38: #{mnist_forward.1} parent=1 // pred_check
      _
    $region39: #{mnist_forward.1} parent=1 // pred_check_branch
      %38 = sbr.rel (0) target = $region41
    $region40: #{mnist_forward.1} parent=1 // pred_region
      _
    $region41: #{mnist_forward.1} parent=1 // pred_fallthru
      _
    // Predicated region
    $region42: #{mnist_forward.1} parent=1 // pred_check
      _
    $region43: #{mnist_forward.1} parent=1 // pred_check_branch
      %40 = sbr.rel (0) target = $region45
    $region44: #{mnist_forward.1} parent=1 // pred_region
      _
    $region45: #{mnist_forward.1} parent=1 // pred_fallthru
      _
    // Predicated region
    $region46: #{mnist_forward.1} parent=1 // pred_check
      _
    $region47: #{mnist_forward.1} parent=1 // pred_check_branch
      %42 = sbr.rel (0) target = $region49
    $region48: #{mnist_forward.1} parent=1 // pred_region
      _
    $region49: #{mnist_forward.1} parent=1 // pred_fallthru
      _
    // Predicated region
    $region50: #{mnist_forward.1} parent=1 // pred_check
      _
    $region51: #{mnist_forward.1} parent=1 // pred_check_branch
      %44 = sbr.rel (0) target = $region53
    $region52: #{mnist_forward.1} parent=1 // pred_region
      _
    $region53: #{mnist_forward.1} parent=1 // pred_fallthru
      _
    %v46 = vld [vmem:[%s0] sm:$0xf]
    %v47 = vld [vmem:[%s0 + $0x4] sm:$0xf]
    %v48 = vld [vmem:[%s0 + $0x8] sm:$0xf]
    %v49 = vld [vmem:[%s0 + $0xc] sm:$0xf]
    %v50 = vld [vmem:[%s0 + $0x10] sm:$0xf]
    %v51 = vld [vmem:[%s0 + $0x14] sm:$0xf]
    %v52 = vld [vmem:[%s0 + $0x18] sm:$0xf]
    %v53 = vld [vmem:[%s0 + $0x1c] sm:$0xf]
    %v54 = vld [vmem:[%s0 + $0x20] sm:$0xf]
    %v55 = vld [vmem:[%s0 + $0x24] sm:$0xf]
    %v56 = vld [vmem:[%s0 + $0x28] sm:$0xf]
    %v57 = vld [vmem:[%s0 + $0x2c] sm:$0xf]
    %v58 = vld [vmem:[%s0 + $0x30] sm:$0xf]
    %v59 = vld [vmem:[%s0 + $0x34] sm:$0xf]
    %v60 = vld [vmem:[%s0 + $0x38] sm:$0xf]
    %v61 = vld [vmem:[%s0 + $0x3c] sm:$0xf]
    %v62 = vld [vmem:[%s0 + $0x40] sm:$0xf]
    %v63 = vld [vmem:[%s0 + $0x44] sm:$0xf]
    %v64 = vld [vmem:[%s0 + $0x48] sm:$0xf]
    %v65 = vld [vmem:[%s0 + $0x4c] sm:$0xf]
    %v66 = vld [vmem:[%s0 + $0x50] sm:$0xf]
    %v67 = vld [vmem:[%s0 + $0x54] sm:$0xf]
    %v68 = vld [vmem:[%s0 + $0x58] sm:$0xf]
    %v69 = vld [vmem:[%s0 + $0x5c] sm:$0xf]
    %v70 = vld [vmem:[%s0 + $0x60] sm:$0xf]
    %v71 = vld [vmem:[%s0 + $0x64] sm:$0xf]
    %v72 = vld [vmem:[%s0 + $0x68] sm:$0xf]
    %v73 = vld [vmem:[%s0 + $0x6c] sm:$0xf]
    %v74 = vld [vmem:[%s0 + $0x70] sm:$0xf]
    %v75 = vld [vmem:[%s0 + $0x74] sm:$0xf]
    %v76 = vld [vmem:[%s0 + $0x78] sm:$0xf]
    %v77 = vld [vmem:[%s0 + $0x7c] sm:$0xf]
    %v78 = vld [vmem:[%s0 + $0x80] sm:$0xf]
    %v79 = vld [vmem:[%s0 + $0x84] sm:$0xf]
    %v80 = vld [vmem:[%s0 + $0x88] sm:$0xf]
    %v81 = vld [vmem:[%s0 + $0x8c] sm:$0xf]
    %v82 = vld [vmem:[%s0 + $0x90] sm:$0xf]
    %v83 = vld [vmem:[%s0 + $0x94] sm:$0xf]
    %v84 = vld [vmem:[%s0 + $0x98] sm:$0xf]
    %v85 = vld [vmem:[%s0 + $0x9c] sm:$0xf]
    %v86 = vld [vmem:[%s0 + $0xa0] sm:$0xf]
    %v87 = vld [vmem:[%s0 + $0xa4] sm:$0xf]
    %v88 = vld [vmem:[%s0 + $0xa8] sm:$0xf]
    %v89 = vld [vmem:[%s0 + $0xac] sm:$0xf]
    %v90 = vld [vmem:[%s0 + $0xb0] sm:$0xf]
    %v91 = vld [vmem:[%s0 + $0xb4] sm:$0xf]
    %v92 = vld [vmem:[%s0 + $0xb8] sm:$0xf]
    %v93 = vld [vmem:[%s0 + $0xbc] sm:$0xf]
    %v94 = vld [vmem:[%s0 + $0xc0] sm:$0xf]
    %v95 = vld [vmem:[%s0 + $0xc4] sm:$0xf]
    %v96 = vld [vmem:[%s0 + $0xc8] sm:$0xf]
    %v97 = vld [vmem:[%s0 + $0xcc] sm:$0xf]
    %v98 = vld [vmem:[%s0 + $0xd0] sm:$0xf]
    %v99 = vld [vmem:[%s0 + $0xd4] sm:$0xf]
    %v100 = vld [vmem:[%s0 + $0xd8] sm:$0xf]
    %v101 = vld [vmem:[%s0 + $0xdc] sm:$0xf]
    %v102 = vld [vmem:[%s0 + $0xe0] sm:$0xf]
    %v103 = vld [vmem:[%s0 + $0xe4] sm:$0xf]
    %v104 = vld [vmem:[%s0 + $0xe8] sm:$0xf]
    %v105 = vld [vmem:[%s0 + $0xec] sm:$0xf]
    %v106 = vld [vmem:[%s0 + $0xf0] sm:$0xf]
    %v107 = vld [vmem:[%s0 + $0xf4] sm:$0xf]
    %v108 = vld [vmem:[%s0 + $0xf8] sm:$0xf]
    %v109 = vld [vmem:[%s0 + $0xfc] sm:$0xf]
    %v110 = vld [vmem:[%s0 + $0x100] sm:$0xf]
    %v111 = vld [vmem:[%s0 + $0x104] sm:$0xf]
    %v112 = vld [vmem:[%s0 + $0x108] sm:$0xf]
    %v113 = vld [vmem:[%s0 + $0x10c] sm:$0xf]
    %v114 = vld [vmem:[%s0 + $0x110] sm:$0xf]
    %v115 = vld [vmem:[%s0 + $0x114] sm:$0xf]
    %v116 = vld [vmem:[%s0 + $0x118] sm:$0xf]
    %v117 = vld [vmem:[%s0 + $0x11c] sm:$0xf]
    %v118 = vld [vmem:[%s0 + $0x120] sm:$0xf]
    %v119 = vld [vmem:[%s0 + $0x124] sm:$0xf]
    %v120 = vld [vmem:[%s0 + $0x128] sm:$0xf]
    %v121 = vld [vmem:[%s0 + $0x12c] sm:$0xf]
    %v122 = vld [vmem:[%s0 + $0x130] sm:$0xf]
    %v123 = vld [vmem:[%s0 + $0x134] sm:$0xf]
    %v124 = vld [vmem:[%s0 + $0x138] sm:$0xf]
    %v125 = vld [vmem:[%s0 + $0x13c] sm:$0xf]
    %v126 = vld [vmem:[%s0 + $0x140] sm:$0xf]
    %v127 = vld [vmem:[%s0 + $0x144] sm:$0xf]
    %v128 = vld [vmem:[%s0 + $0x148] sm:$0xf]
    %v129 = vld [vmem:[%s0 + $0x14c] sm:$0xf]
    %v130 = vld [vmem:[%s0 + $0x150] sm:$0xf]
    %v131 = vld [vmem:[%s0 + $0x154] sm:$0xf]
    %v132 = vld [vmem:[%s0 + $0x158] sm:$0xf]
    %v133 = vld [vmem:[%s0 + $0x15c] sm:$0xf]
    %v134 = vld [vmem:[%s0 + $0x160] sm:$0xf]
    %v135 = vld [vmem:[%s0 + $0x164] sm:$0xf]
    %v136 = vld [vmem:[%s0 + $0x168] sm:$0xf]
    %v137 = vld [vmem:[%s0 + $0x16c] sm:$0xf]
    %v138 = vld [vmem:[%s0 + $0x170] sm:$0xf]
    %v139 = vld [vmem:[%s0 + $0x174] sm:$0xf]
    %v140 = vld [vmem:[%s0 + $0x178] sm:$0xf]
    %v141 = vld [vmem:[%s0 + $0x17c] sm:$0xf]
    %v142 = vld [vmem:[%s0 + $0x180] sm:$0xf]
    %v143 = vld [vmem:[%s0 + $0x184] sm:$0xf]
    %v144 = vld [vmem:[%s0 + $0x188] sm:$0xf]
    %v145 = vld [vmem:[%s0 + $0x18c] sm:$0xf]
    %v146 = vld [vmem:[%s0 + $0x190] sm:$0xf]
    %v147 = vld [vmem:[%s0 + $0x194] sm:$0xf]
    %v148 = vld [vmem:[%s0 + $0x198] sm:$0xf]
    %v149 = vld [vmem:[%s0 + $0x19c] sm:$0xf]
    %v150 = vld [vmem:[%s0 + $0x1a0] sm:$0xf]
    %v151 = vld [vmem:[%s0 + $0x1a4] sm:$0xf]
    %v152 = vld [vmem:[%s0 + $0x1a8] sm:$0xf]
    %v153 = vld [vmem:[%s0 + $0x1ac] sm:$0xf]
    %v154 = vld [vmem:[%s0 + $0x1b0] sm:$0xf]
    %v155 = vld [vmem:[%s0 + $0x1b4] sm:$0xf]
    %v156 = vld [vmem:[%s0 + $0x1b8] sm:$0xf]
    %v157 = vld [vmem:[%s0 + $0x1bc] sm:$0xf]
    %v158 = vld [vmem:[%s0 + $0x1c0] sm:$0xf]
    %v159 = vld [vmem:[%s0 + $0x1c4] sm:$0xf]
    %v160 = vld [vmem:[%s0 + $0x1c8] sm:$0xf]
    %v161 = vld [vmem:[%s0 + $0x1cc] sm:$0xf]
    %v162 = vld [vmem:[%s0 + $0x1d0] sm:$0xf]
    %v163 = vld [vmem:[%s0 + $0x1d4] sm:$0xf]
    %v164 = vld [vmem:[%s0 + $0x1d8] sm:$0xf]
    %v165 = vld [vmem:[%s0 + $0x1dc] sm:$0xf]
    %v166 = vld [vmem:[%s0 + $0x1e0] sm:$0xf]
    %v167 = vld [vmem:[%s0 + $0x1e4] sm:$0xf]
    %v168 = vld [vmem:[%s0 + $0x1e8] sm:$0xf]
    %v169 = vld [vmem:[%s0 + $0x1ec] sm:$0xf]
    %v170 = vld [vmem:[%s0 + $0x1f0] sm:$0xf]
    %v171 = vld [vmem:[%s0 + $0x1f4] sm:$0xf]
    %v172 = vld [vmem:[%s0 + $0x1f8] sm:$0xf]
    %v173 = vld [vmem:[%s0 + $0x1fc] sm:$0xf]
    %v174 = vld [vmem:[%s0 + $0x200] sm:$0xf]
    %v175 = vld [vmem:[%s0 + $0x204] sm:$0xf]
    %v176 = vld [vmem:[%s0 + $0x208] sm:$0xf]
    %v177 = vld [vmem:[%s0 + $0x20c] sm:$0xf]
    %v178 = vld [vmem:[%s0 + $0x210] sm:$0xf]
    %v179 = vld [vmem:[%s0 + $0x214] sm:$0xf]
    %v180 = vld [vmem:[%s0 + $0x218] sm:$0xf]
    %v181 = vld [vmem:[%s0 + $0x21c] sm:$0xf]
    %v182 = vld [vmem:[%s0 + $0x220] sm:$0xf]
    %v183 = vld [vmem:[%s0 + $0x224] sm:$0xf]
    %v184 = vld [vmem:[%s0 + $0x228] sm:$0xf]
    %v185 = vld [vmem:[%s0 + $0x22c] sm:$0xf]
    %v186 = vld [vmem:[%s0 + $0x230] sm:$0xf]
    %v187 = vld [vmem:[%s0 + $0x234] sm:$0xf]
    %v188 = vld [vmem:[%s0 + $0x238] sm:$0xf]
    %v189 = vld [vmem:[%s0 + $0x23c] sm:$0xf]
    %v190 = vld [vmem:[%s1] sm:$0xf]
    %v191 = vld [vmem:[%s1 + $0x4] sm:$0xf]
    %v192 = vld [vmem:[%s1 + $0x8] sm:$0xf]
    %v193 = vld [vmem:[%s1 + $0xc] sm:$0x1]
    %v194 = vld [vmem:[%s2] sm:$0x1]
    %v196 = vlaneseq
    %v197 = vshrl.u32 %v196, 7
    %v198 = vsub.s32 0, %v197
    %v199 = vrot.slane %v194, %v198
    %v345 = vunpack.c.l.b16 %v46
    %v346 = vunpack.c.l.b16 %v47
    %v347 = vunpack.c.l.b16 %v48
    %v348 = vunpack.c.l.b16 %v49
    %v349 = vunpack.c.l.b16 %v50
    %v350 = vunpack.c.l.b16 %v51
    %v351 = vunpack.c.l.b16 %v52
    %v352 = vunpack.c.l.b16 %v53
    %v353 = vunpack.c.l.b16 %v54
    %v354 = vunpack.c.l.b16 %v55
    %v355 = vunpack.c.l.b16 %v56
    %v356 = vunpack.c.l.b16 %v57
    %v357 = vunpack.c.l.b16 %v58
    %v358 = vunpack.c.l.b16 %v59
    %v359 = vunpack.c.l.b16 %v60
    %v360 = vunpack.c.l.b16 %v61
    %v361 = vunpack.c.l.b16 %v62
    %v362 = vunpack.c.l.b16 %v63
    %v363 = vunpack.c.l.b16 %v64
    %v364 = vunpack.c.l.b16 %v65
    %v365 = vunpack.c.l.b16 %v66
    %v366 = vunpack.c.l.b16 %v67
    %v367 = vunpack.c.l.b16 %v68
    %v368 = vunpack.c.l.b16 %v69
    %v369 = vunpack.c.l.b16 %v70
    %v370 = vunpack.c.l.b16 %v71
    %v371 = vunpack.c.l.b16 %v72
    %v372 = vunpack.c.l.b16 %v73
    %v373 = vunpack.c.l.b16 %v74
    %v374 = vunpack.c.l.b16 %v75
    %v375 = vunpack.c.l.b16 %v76
    %v376 = vunpack.c.l.b16 %v77
    %v377 = vunpack.c.l.b16 %v78
    %v378 = vunpack.c.l.b16 %v79
    %v379 = vunpack.c.l.b16 %v80
    %v380 = vunpack.c.l.b16 %v81
    %v381 = vunpack.c.l.b16 %v82
    %v382 = vunpack.c.l.b16 %v83
    %v383 = vunpack.c.l.b16 %v84
    %v384 = vunpack.c.l.b16 %v85
    %v385 = vunpack.c.l.b16 %v86
    %v386 = vunpack.c.l.b16 %v87
    %v387 = vunpack.c.l.b16 %v88
    %v388 = vunpack.c.l.b16 %v89
    %v389 = vunpack.c.l.b16 %v90
    %v390 = vunpack.c.l.b16 %v91
    %v391 = vunpack.c.l.b16 %v92
    %v392 = vunpack.c.l.b16 %v93
    %v393 = vunpack.c.l.b16 %v94
    %v394 = vunpack.c.l.b16 %v95
    %v395 = vunpack.c.l.b16 %v96
    %v396 = vunpack.c.l.b16 %v97
    %v397 = vunpack.c.l.b16 %v98
    %v398 = vunpack.c.l.b16 %v99
    %v399 = vunpack.c.l.b16 %v100
    %v400 = vunpack.c.l.b16 %v101
    %v401 = vunpack.c.l.b16 %v102
    %v402 = vunpack.c.l.b16 %v103
    %v403 = vunpack.c.l.b16 %v104
    %v404 = vunpack.c.l.b16 %v105
    %v405 = vunpack.c.l.b16 %v106
    %v406 = vunpack.c.l.b16 %v107
    %v407 = vunpack.c.l.b16 %v108
    %v408 = vunpack.c.l.b16 %v109
    %v409 = vunpack.c.l.b16 %v110
    %v410 = vunpack.c.l.b16 %v111
    %v411 = vunpack.c.l.b16 %v112
    %v412 = vunpack.c.l.b16 %v113
    %v413 = vunpack.c.l.b16 %v114
    %v414 = vunpack.c.l.b16 %v115
    %v415 = vunpack.c.l.b16 %v116
    %v416 = vunpack.c.l.b16 %v117
    %v417 = vunpack.c.l.b16 %v118
    %v418 = vunpack.c.l.b16 %v119
    %v419 = vunpack.c.l.b16 %v120
    %v420 = vunpack.c.l.b16 %v121
    %v421 = vunpack.c.l.b16 %v122
    %v422 = vunpack.c.l.b16 %v123
    %v423 = vunpack.c.l.b16 %v124
    %v424 = vunpack.c.l.b16 %v125
    %v425 = vunpack.c.l.b16 %v126
    %v426 = vunpack.c.l.b16 %v127
    %v427 = vunpack.c.l.b16 %v128
    %v428 = vunpack.c.l.b16 %v129
    %v429 = vunpack.c.l.b16 %v130
    %v430 = vunpack.c.l.b16 %v131
    %v431 = vunpack.c.l.b16 %v132
    %v432 = vunpack.c.l.b16 %v133
    %v433 = vunpack.c.l.b16 %v134
    %v434 = vunpack.c.l.b16 %v135
    %v435 = vunpack.c.l.b16 %v136
    %v436 = vunpack.c.l.b16 %v137
    %v437 = vunpack.c.l.b16 %v138
    %v438 = vunpack.c.l.b16 %v139
    %v439 = vunpack.c.l.b16 %v140
    %v440 = vunpack.c.l.b16 %v141
    %v441 = vunpack.c.l.b16 %v142
    %v442 = vunpack.c.l.b16 %v143
    %v443 = vunpack.c.l.b16 %v144
    %v444 = vunpack.c.l.b16 %v145
    %v445 = vunpack.c.l.b16 %v146
    %v446 = vunpack.c.l.b16 %v147
    %v447 = vunpack.c.l.b16 %v148
    %v448 = vunpack.c.l.b16 %v149
    %v449 = vunpack.c.l.b16 %v150
    %v450 = vunpack.c.l.b16 %v151
    %v451 = vunpack.c.l.b16 %v152
    %v452 = vunpack.c.l.b16 %v153
    %v453 = vunpack.c.l.b16 %v154
    %v454 = vunpack.c.l.b16 %v155
    %v455 = vunpack.c.l.b16 %v156
    %v456 = vunpack.c.l.b16 %v157
    %v457 = vunpack.c.l.b16 %v158
    %v458 = vunpack.c.l.b16 %v159
    %v459 = vunpack.c.l.b16 %v160
    %v460 = vunpack.c.l.b16 %v161
    %v461 = vunpack.c.l.b16 %v162
    %v462 = vunpack.c.l.b16 %v163
    %v463 = vunpack.c.l.b16 %v164
    %v464 = vunpack.c.l.b16 %v165
    %v465 = vunpack.c.l.b16 %v166
    %v466 = vunpack.c.l.b16 %v167
    %v467 = vunpack.c.l.b16 %v168
    %v468 = vunpack.c.l.b16 %v169
    %v469 = vunpack.c.l.b16 %v170
    %v470 = vunpack.c.l.b16 %v171
    %v471 = vunpack.c.l.b16 %v172
    %v472 = vunpack.c.l.b16 %v173
    %v473 = vunpack.c.l.b16 %v174
    %v474 = vunpack.c.l.b16 %v175
    %v475 = vunpack.c.l.b16 %v176
    %v476 = vunpack.c.l.b16 %v177
    %v477 = vunpack.c.l.b16 %v178
    %v478 = vunpack.c.l.b16 %v179
    %v479 = vunpack.c.l.b16 %v180
    %v480 = vunpack.c.l.b16 %v181
    %v481 = vunpack.c.l.b16 %v182
    %v482 = vunpack.c.l.b16 %v183
    %v483 = vunpack.c.l.b16 %v184
    %v484 = vunpack.c.l.b16 %v185
    %v485 = vunpack.c.l.b16 %v186
    %v486 = vunpack.c.l.b16 %v187
    %v487 = vunpack.c.l.b16 %v188
    %v488 = vunpack.c.l.b16 %v189
    %v489 = vpack.c.b16 %v346, %v345
    %v490 = vpack.c.b16 %v348, %v347
    %v491 = vpack.c.b16 %v350, %v349
    %v492 = vpack.c.b16 %v352, %v351
    %v493 = vpack.c.b16 %v354, %v353
    %v494 = vpack.c.b16 %v356, %v355
    %v495 = vpack.c.b16 %v358, %v357
    %v496 = vpack.c.b16 %v360, %v359
    %v497 = vpack.c.b16 %v362, %v361
    %v498 = vpack.c.b16 %v364, %v363
    %v499 = vpack.c.b16 %v366, %v365
    %v500 = vpack.c.b16 %v368, %v367
    %v501 = vpack.c.b16 %v370, %v369
    %v502 = vpack.c.b16 %v372, %v371
    %v503 = vpack.c.b16 %v374, %v373
    %v504 = vpack.c.b16 %v376, %v375
    %v505 = vpack.c.b16 %v378, %v377
    %v506 = vpack.c.b16 %v380, %v379
    %v507 = vpack.c.b16 %v382, %v381
    %v508 = vpack.c.b16 %v384, %v383
    %v509 = vpack.c.b16 %v386, %v385
    %v510 = vpack.c.b16 %v388, %v387
    %v511 = vpack.c.b16 %v390, %v389
    %v512 = vpack.c.b16 %v392, %v391
    %v513 = vpack.c.b16 %v394, %v393
    %v514 = vpack.c.b16 %v396, %v395
    %v515 = vpack.c.b16 %v398, %v397
    %v516 = vpack.c.b16 %v400, %v399
    %v517 = vpack.c.b16 %v402, %v401
    %v518 = vpack.c.b16 %v404, %v403
    %v519 = vpack.c.b16 %v406, %v405
    %v520 = vpack.c.b16 %v408, %v407
    %v521 = vpack.c.b16 %v410, %v409
    %v522 = vpack.c.b16 %v412, %v411
    %v523 = vpack.c.b16 %v414, %v413
    %v524 = vpack.c.b16 %v416, %v415
    %v525 = vpack.c.b16 %v418, %v417
    %v526 = vpack.c.b16 %v420, %v419
    %v527 = vpack.c.b16 %v422, %v421
    %v528 = vpack.c.b16 %v424, %v423
    %v529 = vpack.c.b16 %v426, %v425
    %v530 = vpack.c.b16 %v428, %v427
    %v531 = vpack.c.b16 %v430, %v429
    %v532 = vpack.c.b16 %v432, %v431
    %v533 = vpack.c.b16 %v434, %v433
    %v534 = vpack.c.b16 %v436, %v435
    %v535 = vpack.c.b16 %v438, %v437
    %v536 = vpack.c.b16 %v440, %v439
    %v537 = vpack.c.b16 %v442, %v441
    %v538 = vpack.c.b16 %v444, %v443
    %v539 = vpack.c.b16 %v446, %v445
    %v540 = vpack.c.b16 %v448, %v447
    %v541 = vpack.c.b16 %v450, %v449
    %v542 = vpack.c.b16 %v452, %v451
    %v543 = vpack.c.b16 %v454, %v453
    %v544 = vpack.c.b16 %v456, %v455
    %v545 = vpack.c.b16 %v458, %v457
    %v546 = vpack.c.b16 %v460, %v459
    %v547 = vpack.c.b16 %v462, %v461
    %v548 = vpack.c.b16 %v464, %v463
    %v549 = vpack.c.b16 %v466, %v465
    %v550 = vpack.c.b16 %v468, %v467
    %v551 = vpack.c.b16 %v470, %v469
    %v552 = vpack.c.b16 %v472, %v471
    %v553 = vpack.c.b16 %v474, %v473
    %v554 = vpack.c.b16 %v476, %v475
    %v555 = vpack.c.b16 %v478, %v477
    %v556 = vpack.c.b16 %v480, %v479
    %v557 = vpack.c.b16 %v482, %v481
    %v558 = vpack.c.b16 %v484, %v483
    %v559 = vpack.c.b16 %v486, %v485
    %v560 = vpack.c.b16 %v488, %v487
    %v565 = vunpack.c.l.b16 %v190
    %v566 = vunpack.c.l.b16 %v191
    %v567 = vunpack.c.l.b16 %v192
    %v568 = vunpack.c.l.b16 %v193
    %v569 = vpack.c.b16 %v566, %v565
    %v570 = vpack.c.b16 %v568, %v567
    %vm572 = vcmask 203776
    %v574 = vsel %vm572, %v489, 0
    %v577 = vsel %vm572, %v490, 0
    %v580 = vsel %vm572, %v491, 0
    %v583 = vsel %vm572, %v492, 0
    %v586 = vsel %vm572, %v493, 0
    %v589 = vsel %vm572, %v494, 0
    %v592 = vsel %vm572, %v495, 0
    %v595 = vsel %vm572, %v496, 0
    %v598 = vsel %vm572, %v497, 0
    %v601 = vsel %vm572, %v498, 0
    %v604 = vsel %vm572, %v499, 0
    %v607 = vsel %vm572, %v500, 0
    %v610 = vsel %vm572, %v501, 0
    %v613 = vsel %vm572, %v502, 0
    %v616 = vsel %vm572, %v503, 0
    %v619 = vsel %vm572, %v504, 0
    %v622 = vsel %vm572, %v505, 0
    %v625 = vsel %vm572, %v506, 0
    %v628 = vsel %vm572, %v507, 0
    %v631 = vsel %vm572, %v508, 0
    %v634 = vsel %vm572, %v509, 0
    %v637 = vsel %vm572, %v510, 0
    %v640 = vsel %vm572, %v511, 0
    %v643 = vsel %vm572, %v512, 0
    %v646 = vsel %vm572, %v513, 0
    %v649 = vsel %vm572, %v514, 0
    %v652 = vsel %vm572, %v515, 0
    %v655 = vsel %vm572, %v516, 0
    %v658 = vsel %vm572, %v517, 0
    %v661 = vsel %vm572, %v518, 0
    %v664 = vsel %vm572, %v519, 0
    %v667 = vsel %vm572, %v520, 0
    %v670 = vsel %vm572, %v521, 0
    %v673 = vsel %vm572, %v522, 0
    %v676 = vsel %vm572, %v523, 0
    %v679 = vsel %vm572, %v524, 0
    %v682 = vsel %vm572, %v525, 0
    %v685 = vsel %vm572, %v526, 0
    %v688 = vsel %vm572, %v527, 0
    %v691 = vsel %vm572, %v528, 0
    %v694 = vsel %vm572, %v529, 0
    %v697 = vsel %vm572, %v530, 0
    %v700 = vsel %vm572, %v531, 0
    %v703 = vsel %vm572, %v532, 0
    %v706 = vsel %vm572, %v533, 0
    %v709 = vsel %vm572, %v534, 0
    %v712 = vsel %vm572, %v535, 0
    %v715 = vsel %vm572, %v536, 0
    %v718 = vsel %vm572, %v537, 0
    %v721 = vsel %vm572, %v538, 0
    %v724 = vsel %vm572, %v539, 0
    %v727 = vsel %vm572, %v540, 0
    %v730 = vsel %vm572, %v541, 0
    %v733 = vsel %vm572, %v542, 0
    %v736 = vsel %vm572, %v543, 0
    %v739 = vsel %vm572, %v544, 0
    %v742 = vsel %vm572, %v545, 0
    %v745 = vsel %vm572, %v546, 0
    %v748 = vsel %vm572, %v547, 0
    %v751 = vsel %vm572, %v548, 0
    %v754 = vsel %vm572, %v549, 0
    %v757 = vsel %vm572, %v550, 0
    %v760 = vsel %vm572, %v551, 0
    %v763 = vsel %vm572, %v552, 0
    %v766 = vsel %vm572, %v553, 0
    %v769 = vsel %vm572, %v554, 0
    %v772 = vsel %vm572, %v555, 0
    %v775 = vsel %vm572, %v556, 0
    %v778 = vsel %vm572, %v557, 0
    %v781 = vsel %vm572, %v558, 0
    %v784 = vsel %vm572, %v559, 0
    %v787 = vsel %vm572, %v560, 0
    %vm789 = vcmask 1043456
    %vm790 = vcmask 1044480
    %v791 = vsel %vm789, 4294967295, 65535
    %v792 = vsel %vm790, %v791, 0
    %v794 = vand.u32 %v570, %v792
    %796 = vmatprep.subr.bf16.mxu0 0
    %797 = vmatpush1.bf16.msra.mxu0 %v569
    %798 = vmatprep.subr.bf16.mxu0 0
    %799 = vmatpush1.bf16.msra.mxu0 %v794
    %800 = vmatprep.subr.bf16.mxu0 0
    %801 = vmatpush1.bf16.msra.mxu0 0
    %802 = vmatprep.subr.bf16.mxu0 0
    %803 = vmatpush1.bf16.msra.mxu0 0
    %804 = vmatprep.subr.bf16.mxu0 0
    %805 = vmatpush1.bf16.msra.mxu0 0
    %806 = vmatprep.subr.bf16.mxu0 0
    %807 = vmatpush1.bf16.msra.mxu0 0
    %808 = vmatprep.subr.bf16.mxu0 0
    %809 = vmatpush1.bf16.msra.mxu0 0
    %810 = vmatprep.subr.bf16.mxu0 0
    %811 = vmatpush1.bf16.msra.mxu0 0
    %812 = vmatprep.subr.bf16.mxu0 0
    %813 = vmatpush1.bf16.msra.mxu0 0
    %814 = vmatprep.subr.bf16.mxu0 0
    %815 = vmatpush1.bf16.msra.mxu0 0
    %816 = vmatprep.subr.bf16.mxu0 0
    %817 = vmatpush1.bf16.msra.mxu0 0
    %818 = vmatprep.subr.bf16.mxu0 0
    %819 = vmatpush1.bf16.msra.mxu0 0
    %820 = vmatprep.subr.bf16.mxu0 0
    %821 = vmatpush1.bf16.msra.mxu0 0
    %822 = vmatprep.subr.bf16.mxu0 0
    %823 = vmatpush1.bf16.msra.mxu0 0
    %824 = vmatprep.subr.bf16.mxu0 0
    %825 = vmatpush1.bf16.msra.mxu0 0
    %826 = vmatprep.subr.bf16.mxu0 0
    %827 = vmatpush1.bf16.msra.mxu0 0
    %828 = vmatprep.mubr.bf16.mxu0 0
    %829 = vmatmul.mubr.bf16.gmra.mrb[0].mxu0 %v574
    %v830 = vpop.f32.mrb[0].mxu0
    %v831 = vadd.f32 %v199, %v830
    %v832 = vpop.f32.mrb[0].mxu0
    %v833 = vpop.f32.mrb[0].mxu0
    %v834 = vadd.f32 %v199, %v833
    %v835 = vpop.f32.mrb[0].mxu0
    %836 = vmatprep.mubr.bf16.mxu0 0
    %837 = vmatmul.mubr.bf16.gmra.mrb[0].mxu0 %v577
    %v838 = vpop.f32.mrb[0].mxu0
    %v839 = vadd.f32 %v199, %v838
    %v840 = vpop.f32.mrb[0].mxu0
    %v841 = vpop.f32.mrb[0].mxu0
    %v842 = vadd.f32 %v199, %v841
    %v843 = vpop.f32.mrb[0].mxu0
    %844 = vmatprep.mubr.bf16.mxu0 0
    %845 = vmatmul.mubr.bf16.gmra.mrb[0].mxu0 %v580
    %v846 = vpop.f32.mrb[0].mxu0
    %v847 = vadd.f32 %v199, %v846
    %v848 = vpop.f32.mrb[0].mxu0
    %v849 = vpop.f32.mrb[0].mxu0
    %v850 = vadd.f32 %v199, %v849
    %v851 = vpop.f32.mrb[0].mxu0
    %852 = vmatprep.mubr.bf16.mxu0 0
    %853 = vmatmul.mubr.bf16.gmra.mrb[0].mxu0 %v583
    %v854 = vpop.f32.mrb[0].mxu0
    %v855 = vadd.f32 %v199, %v854
    %v856 = vpop.f32.mrb[0].mxu0
    %v857 = vpop.f32.mrb[0].mxu0
    %v858 = vadd.f32 %v199, %v857
    %v859 = vpop.f32.mrb[0].mxu0
    %860 = vmatprep.mubr.bf16.mxu0 0
    %861 = vmatmul.mubr.bf16.gmra.mrb[0].mxu0 %v586
    %v862 = vpop.f32.mrb[0].mxu0
    %v863 = vadd.f32 %v199, %v862
    %v864 = vpop.f32.mrb[0].mxu0
    %v865 = vpop.f32.mrb[0].mxu0
    %v866 = vadd.f32 %v199, %v865
    %v867 = vpop.f32.mrb[0].mxu0
    %868 = vmatprep.mubr.bf16.mxu0 0
    %869 = vmatmul.mubr.bf16.gmra.mrb[0].mxu0 %v589
    %v870 = vpop.f32.mrb[0].mxu0
    %v871 = vadd.f32 %v199, %v870
    %v872 = vpop.f32.mrb[0].mxu0
    %v873 = vpop.f32.mrb[0].mxu0
    %v874 = vadd.f32 %v199, %v873
    %v875 = vpop.f32.mrb[0].mxu0
    %876 = vmatprep.mubr.bf16.mxu0 0
    %877 = vmatmul.mubr.bf16.gmra.mrb[0].mxu0 %v592
    %v878 = vpop.f32.mrb[0].mxu0
    %v879 = vadd.f32 %v199, %v878
    %v880 = vpop.f32.mrb[0].mxu0
    %v881 = vpop.f32.mrb[0].mxu0
    %v882 = vadd.f32 %v199, %v881
    %v883 = vpop.f32.mrb[0].mxu0
    %884 = vmatprep.mubr.bf16.mxu0 0
    %885 = vmatmul.mubr.bf16.gmra.mrb[0].mxu0 %v595
    %v886 = vpop.f32.mrb[0].mxu0
    %v887 = vadd.f32 %v199, %v886
    %v888 = vpop.f32.mrb[0].mxu0
    %v889 = vpop.f32.mrb[0].mxu0
    %v890 = vadd.f32 %v199, %v889
    %v891 = vpop.f32.mrb[0].mxu0
    %892 = vmatprep.mubr.bf16.mxu0 0
    %893 = vmatmul.mubr.bf16.gmra.mrb[0].mxu0 %v598
    %v894 = vpop.f32.mrb[0].mxu0
    %v895 = vadd.f32 %v199, %v894
    %v896 = vpop.f32.mrb[0].mxu0
    %v897 = vpop.f32.mrb[0].mxu0
    %v898 = vadd.f32 %v199, %v897
    %v899 = vpop.f32.mrb[0].mxu0
    %900 = vmatprep.mubr.bf16.mxu0 0
    %901 = vmatmul.mubr.bf16.gmra.mrb[0].mxu0 %v601
    %v902 = vpop.f32.mrb[0].mxu0
    %v903 = vadd.f32 %v199, %v902
    %v904 = vpop.f32.mrb[0].mxu0
    %v905 = vpop.f32.mrb[0].mxu0
    %v906 = vadd.f32 %v199, %v905
    %v907 = vpop.f32.mrb[0].mxu0
    %908 = vmatprep.mubr.bf16.mxu0 0
    %909 = vmatmul.mubr.bf16.gmra.mrb[0].mxu0 %v604
    %v910 = vpop.f32.mrb[0].mxu0
    %v911 = vadd.f32 %v199, %v910
    %v912 = vpop.f32.mrb[0].mxu0
    %v913 = vpop.f32.mrb[0].mxu0
    %v914 = vadd.f32 %v199, %v913
    %v915 = vpop.f32.mrb[0].mxu0
    %916 = vmatprep.mubr.bf16.mxu0 0
    %917 = vmatmul.mubr.bf16.gmra.mrb[0].mxu0 %v607
    %v918 = vpop.f32.mrb[0].mxu0
    %v919 = vadd.f32 %v199, %v918
    %v920 = vpop.f32.mrb[0].mxu0
    %v921 = vpop.f32.mrb[0].mxu0
    %v922 = vadd.f32 %v199, %v921
    %v923 = vpop.f32.mrb[0].mxu0
    %924 = vmatprep.mubr.bf16.mxu0 0
    %925 = vmatmul.mubr.bf16.gmra.mrb[0].mxu0 %v610
    %v926 = vpop.f32.mrb[0].mxu0
    %v927 = vadd.f32 %v199, %v926
    %v928 = vpop.f32.mrb[0].mxu0
    %v929 = vpop.f32.mrb[0].mxu0
    %v930 = vadd.f32 %v199, %v929
    %v931 = vpop.f32.mrb[0].mxu0
    %932 = vmatprep.mubr.bf16.mxu0 0
    %933 = vmatmul.mubr.bf16.gmra.mrb[0].mxu0 %v613
    %v934 = vpop.f32.mrb[0].mxu0
    %v935 = vadd.f32 %v199, %v934
    %v936 = vpop.f32.mrb[0].mxu0
    %v937 = vpop.f32.mrb[0].mxu0
    %v938 = vadd.f32 %v199, %v937
    %v939 = vpop.f32.mrb[0].mxu0
    %940 = vmatprep.mubr.bf16.mxu0 0
    %941 = vmatmul.mubr.bf16.gmra.mrb[0].mxu0 %v616
    %v942 = vpop.f32.mrb[0].mxu0
    %v943 = vadd.f32 %v199, %v942
    %v944 = vpop.f32.mrb[0].mxu0
    %v945 = vpop.f32.mrb[0].mxu0
    %v946 = vadd.f32 %v199, %v945
    %v947 = vpop.f32.mrb[0].mxu0
    %948 = vmatprep.mubr.bf16.mxu0 0
    %949 = vmatmul.mubr.bf16.gmra.mrb[0].mxu0 %v619
    %v950 = vpop.f32.mrb[0].mxu0
    %v951 = vadd.f32 %v199, %v950
    %v952 = vpop.f32.mrb[0].mxu0
    %v953 = vpop.f32.mrb[0].mxu0
    %v954 = vadd.f32 %v199, %v953
    %v955 = vpop.f32.mrb[0].mxu0
    %956 = vmatprep.mubr.bf16.mxu0 0
    %957 = vmatmul.mubr.bf16.gmra.mrb[0].mxu0 %v622
    %v958 = vpop.f32.mrb[0].mxu0
    %v959 = vadd.f32 %v199, %v958
    %v960 = vpop.f32.mrb[0].mxu0
    %v961 = vpop.f32.mrb[0].mxu0
    %v962 = vadd.f32 %v199, %v961
    %v963 = vpop.f32.mrb[0].mxu0
    %964 = vmatprep.mubr.bf16.mxu0 0
    %965 = vmatmul.mubr.bf16.gmra.mrb[0].mxu0 %v625
    %v966 = vpop.f32.mrb[0].mxu0
    %v967 = vadd.f32 %v199, %v966
    %v968 = vpop.f32.mrb[0].mxu0
    %v969 = vpop.f32.mrb[0].mxu0
    %v970 = vadd.f32 %v199, %v969
    %v971 = vpop.f32.mrb[0].mxu0
    %972 = vmatprep.mubr.bf16.mxu0 0
    %973 = vmatmul.mubr.bf16.gmra.mrb[0].mxu0 %v628
    %v974 = vpop.f32.mrb[0].mxu0
    %v975 = vadd.f32 %v199, %v974
    %v976 = vpop.f32.mrb[0].mxu0
    %v977 = vpop.f32.mrb[0].mxu0
    %v978 = vadd.f32 %v199, %v977
    %v979 = vpop.f32.mrb[0].mxu0
    %980 = vmatprep.mubr.bf16.mxu0 0
    %981 = vmatmul.mubr.bf16.gmra.mrb[0].mxu0 %v631
    %v982 = vpop.f32.mrb[0].mxu0
    %v983 = vadd.f32 %v199, %v982
    %v984 = vpop.f32.mrb[0].mxu0
    %v985 = vpop.f32.mrb[0].mxu0
    %v986 = vadd.f32 %v199, %v985
    %v987 = vpop.f32.mrb[0].mxu0
    %988 = vmatprep.mubr.bf16.mxu0 0
    %989 = vmatmul.mubr.bf16.gmra.mrb[0].mxu0 %v634
    %v990 = vpop.f32.mrb[0].mxu0
    %v991 = vadd.f32 %v199, %v990
    %v992 = vpop.f32.mrb[0].mxu0
    %v993 = vpop.f32.mrb[0].mxu0
    %v994 = vadd.f32 %v199, %v993
    %v995 = vpop.f32.mrb[0].mxu0
    %996 = vmatprep.mubr.bf16.mxu0 0
    %997 = vmatmul.mubr.bf16.gmra.mrb[0].mxu0 %v637
    %v998 = vpop.f32.mrb[0].mxu0
    %v999 = vadd.f32 %v199, %v998
    %v1000 = vpop.f32.mrb[0].mxu0
    %v1001 = vpop.f32.mrb[0].mxu0
    %v1002 = vadd.f32 %v199, %v1001
    %v1003 = vpop.f32.mrb[0].mxu0
    %1004 = vmatprep.mubr.bf16.mxu0 0
    %1005 = vmatmul.mubr.bf16.gmra.mrb[0].mxu0 %v640
    %v1006 = vpop.f32.mrb[0].mxu0
    %v1007 = vadd.f32 %v199, %v1006
    %v1008 = vpop.f32.mrb[0].mxu0
    %v1009 = vpop.f32.mrb[0].mxu0
    %v1010 = vadd.f32 %v199, %v1009
    %v1011 = vpop.f32.mrb[0].mxu0
    %1012 = vmatprep.mubr.bf16.mxu0 0
    %1013 = vmatmul.mubr.bf16.gmra.mrb[0].mxu0 %v643
    %v1014 = vpop.f32.mrb[0].mxu0
    %v1015 = vadd.f32 %v199, %v1014
    %v1016 = vpop.f32.mrb[0].mxu0
    %v1017 = vpop.f32.mrb[0].mxu0
    %v1018 = vadd.f32 %v199, %v1017
    %v1019 = vpop.f32.mrb[0].mxu0
    %1020 = vmatprep.mubr.bf16.mxu0 0
    %1021 = vmatmul.mubr.bf16.gmra.mrb[0].mxu0 %v646
    %v1022 = vpop.f32.mrb[0].mxu0
    %v1023 = vadd.f32 %v199, %v1022
    %v1024 = vpop.f32.mrb[0].mxu0
    %v1025 = vpop.f32.mrb[0].mxu0
    %v1026 = vadd.f32 %v199, %v1025
    %v1027 = vpop.f32.mrb[0].mxu0
    %1028 = vmatprep.mubr.bf16.mxu0 0
    %1029 = vmatmul.mubr.bf16.gmra.mrb[0].mxu0 %v649
    %v1030 = vpop.f32.mrb[0].mxu0
    %v1031 = vadd.f32 %v199, %v1030
    %v1032 = vpop.f32.mrb[0].mxu0
    %v1033 = vpop.f32.mrb[0].mxu0
    %v1034 = vadd.f32 %v199, %v1033
    %v1035 = vpop.f32.mrb[0].mxu0
    %1036 = vmatprep.mubr.bf16.mxu0 0
    %1037 = vmatmul.mubr.bf16.gmra.mrb[0].mxu0 %v652
    %v1038 = vpop.f32.mrb[0].mxu0
    %v1039 = vadd.f32 %v199, %v1038
    %v1040 = vpop.f32.mrb[0].mxu0
    %v1041 = vpop.f32.mrb[0].mxu0
    %v1042 = vadd.f32 %v199, %v1041
    %v1043 = vpop.f32.mrb[0].mxu0
    %1044 = vmatprep.mubr.bf16.mxu0 0
    %1045 = vmatmul.mubr.bf16.gmra.mrb[0].mxu0 %v655
    %v1046 = vpop.f32.mrb[0].mxu0
    %v1047 = vadd.f32 %v199, %v1046
    %v1048 = vpop.f32.mrb[0].mxu0
    %v1049 = vpop.f32.mrb[0].mxu0
    %v1050 = vadd.f32 %v199, %v1049
    %v1051 = vpop.f32.mrb[0].mxu0
    %1052 = vmatprep.mubr.bf16.mxu0 0
    %1053 = vmatmul.mubr.bf16.gmra.mrb[0].mxu0 %v658
    %v1054 = vpop.f32.mrb[0].mxu0
    %v1055 = vadd.f32 %v199, %v1054
    %v1056 = vpop.f32.mrb[0].mxu0
    %v1057 = vpop.f32.mrb[0].mxu0
    %v1058 = vadd.f32 %v199, %v1057
    %v1059 = vpop.f32.mrb[0].mxu0
    %1060 = vmatprep.mubr.bf16.mxu0 0
    %1061 = vmatmul.mubr.bf16.gmra.mrb[0].mxu0 %v661
    %v1062 = vpop.f32.mrb[0].mxu0
    %v1063 = vadd.f32 %v199, %v1062
    %v1064 = vpop.f32.mrb[0].mxu0
    %v1065 = vpop.f32.mrb[0].mxu0
    %v1066 = vadd.f32 %v199, %v1065
    %v1067 = vpop.f32.mrb[0].mxu0
    %1068 = vmatprep.mubr.bf16.mxu0 0
    %1069 = vmatmul.mubr.bf16.gmra.mrb[0].mxu0 %v664
    %v1070 = vpop.f32.mrb[0].mxu0
    %v1071 = vadd.f32 %v199, %v1070
    %v1072 = vpop.f32.mrb[0].mxu0
    %v1073 = vpop.f32.mrb[0].mxu0
    %v1074 = vadd.f32 %v199, %v1073
    %v1075 = vpop.f32.mrb[0].mxu0
    %1076 = vmatprep.mubr.bf16.mxu0 0
    %1077 = vmatmul.mubr.bf16.gmra.mrb[0].mxu0 %v667
    %v1078 = vpop.f32.mrb[0].mxu0
    %v1079 = vadd.f32 %v199, %v1078
    %v1080 = vpop.f32.mrb[0].mxu0
    %v1081 = vpop.f32.mrb[0].mxu0
    %v1082 = vadd.f32 %v199, %v1081
    %v1083 = vpop.f32.mrb[0].mxu0
    %1084 = vmatprep.mubr.bf16.mxu0 0
    %1085 = vmatmul.mubr.bf16.gmra.mrb[0].mxu0 %v670
    %v1086 = vpop.f32.mrb[0].mxu0
    %v1087 = vadd.f32 %v199, %v1086
    %v1088 = vpop.f32.mrb[0].mxu0
    %v1089 = vpop.f32.mrb[0].mxu0
    %v1090 = vadd.f32 %v199, %v1089
    %v1091 = vpop.f32.mrb[0].mxu0
    %1092 = vmatprep.mubr.bf16.mxu0 0
    %1093 = vmatmul.mubr.bf16.gmra.mrb[0].mxu0 %v673
    %v1094 = vpop.f32.mrb[0].mxu0
    %v1095 = vadd.f32 %v199, %v1094
    %v1096 = vpop.f32.mrb[0].mxu0
    %v1097 = vpop.f32.mrb[0].mxu0
    %v1098 = vadd.f32 %v199, %v1097
    %v1099 = vpop.f32.mrb[0].mxu0
    %1100 = vmatprep.mubr.bf16.mxu0 0
    %1101 = vmatmul.mubr.bf16.gmra.mrb[0].mxu0 %v676
    %v1102 = vpop.f32.mrb[0].mxu0
    %v1103 = vadd.f32 %v199, %v1102
    %v1104 = vpop.f32.mrb[0].mxu0
    %v1105 = vpop.f32.mrb[0].mxu0
    %v1106 = vadd.f32 %v199, %v1105
    %v1107 = vpop.f32.mrb[0].mxu0
    %1108 = vmatprep.mubr.bf16.mxu0 0
    %1109 = vmatmul.mubr.bf16.gmra.mrb[0].mxu0 %v679
    %v1110 = vpop.f32.mrb[0].mxu0
    %v1111 = vadd.f32 %v199, %v1110
    %v1112 = vpop.f32.mrb[0].mxu0
    %v1113 = vpop.f32.mrb[0].mxu0
    %v1114 = vadd.f32 %v199, %v1113
    %v1115 = vpop.f32.mrb[0].mxu0
    %1116 = vmatprep.mubr.bf16.mxu0 0
    %1117 = vmatmul.mubr.bf16.gmra.mrb[0].mxu0 %v682
    %v1118 = vpop.f32.mrb[0].mxu0
    %v1119 = vadd.f32 %v199, %v1118
    %v1120 = vpop.f32.mrb[0].mxu0
    %v1121 = vpop.f32.mrb[0].mxu0
    %v1122 = vadd.f32 %v199, %v1121
    %v1123 = vpop.f32.mrb[0].mxu0
    %1124 = vmatprep.mubr.bf16.mxu0 0
    %1125 = vmatmul.mubr.bf16.gmra.mrb[0].mxu0 %v685
    %v1126 = vpop.f32.mrb[0].mxu0
    %v1127 = vadd.f32 %v199, %v1126
    %v1128 = vpop.f32.mrb[0].mxu0
    %v1129 = vpop.f32.mrb[0].mxu0
    %v1130 = vadd.f32 %v199, %v1129
    %v1131 = vpop.f32.mrb[0].mxu0
    %1132 = vmatprep.mubr.bf16.mxu0 0
    %1133 = vmatmul.mubr.bf16.gmra.mrb[0].mxu0 %v688
    %v1134 = vpop.f32.mrb[0].mxu0
    %v1135 = vadd.f32 %v199, %v1134
    %v1136 = vpop.f32.mrb[0].mxu0
    %v1137 = vpop.f32.mrb[0].mxu0
    %v1138 = vadd.f32 %v199, %v1137
    %v1139 = vpop.f32.mrb[0].mxu0
    %1140 = vmatprep.mubr.bf16.mxu0 0
    %1141 = vmatmul.mubr.bf16.gmra.mrb[0].mxu0 %v691
    %v1142 = vpop.f32.mrb[0].mxu0
    %v1143 = vadd.f32 %v199, %v1142
    %v1144 = vpop.f32.mrb[0].mxu0
    %v1145 = vpop.f32.mrb[0].mxu0
    %v1146 = vadd.f32 %v199, %v1145
    %v1147 = vpop.f32.mrb[0].mxu0
    %1148 = vmatprep.mubr.bf16.mxu0 0
    %1149 = vmatmul.mubr.bf16.gmra.mrb[0].mxu0 %v694
    %v1150 = vpop.f32.mrb[0].mxu0
    %v1151 = vadd.f32 %v199, %v1150
    %v1152 = vpop.f32.mrb[0].mxu0
    %v1153 = vpop.f32.mrb[0].mxu0
    %v1154 = vadd.f32 %v199, %v1153
    %v1155 = vpop.f32.mrb[0].mxu0
    %1156 = vmatprep.mubr.bf16.mxu0 0
    %1157 = vmatmul.mubr.bf16.gmra.mrb[0].mxu0 %v697
    %v1158 = vpop.f32.mrb[0].mxu0
    %v1159 = vadd.f32 %v199, %v1158
    %v1160 = vpop.f32.mrb[0].mxu0
    %v1161 = vpop.f32.mrb[0].mxu0
    %v1162 = vadd.f32 %v199, %v1161
    %v1163 = vpop.f32.mrb[0].mxu0
    %1164 = vmatprep.mubr.bf16.mxu0 0
    %1165 = vmatmul.mubr.bf16.gmra.mrb[0].mxu0 %v700
    %v1166 = vpop.f32.mrb[0].mxu0
    %v1167 = vadd.f32 %v199, %v1166
    %v1168 = vpop.f32.mrb[0].mxu0
    %v1169 = vpop.f32.mrb[0].mxu0
    %v1170 = vadd.f32 %v199, %v1169
    %v1171 = vpop.f32.mrb[0].mxu0
    %1172 = vmatprep.mubr.bf16.mxu0 0
    %1173 = vmatmul.mubr.bf16.gmra.mrb[0].mxu0 %v703
    %v1174 = vpop.f32.mrb[0].mxu0
    %v1175 = vadd.f32 %v199, %v1174
    %v1176 = vpop.f32.mrb[0].mxu0
    %v1177 = vpop.f32.mrb[0].mxu0
    %v1178 = vadd.f32 %v199, %v1177
    %v1179 = vpop.f32.mrb[0].mxu0
    %1180 = vmatprep.mubr.bf16.mxu0 0
    %1181 = vmatmul.mubr.bf16.gmra.mrb[0].mxu0 %v706
    %v1182 = vpop.f32.mrb[0].mxu0
    %v1183 = vadd.f32 %v199, %v1182
    %v1184 = vpop.f32.mrb[0].mxu0
    %v1185 = vpop.f32.mrb[0].mxu0
    %v1186 = vadd.f32 %v199, %v1185
    %v1187 = vpop.f32.mrb[0].mxu0
    %1188 = vmatprep.mubr.bf16.mxu0 0
    %1189 = vmatmul.mubr.bf16.gmra.mrb[0].mxu0 %v709
    %v1190 = vpop.f32.mrb[0].mxu0
    %v1191 = vadd.f32 %v199, %v1190
    %v1192 = vpop.f32.mrb[0].mxu0
    %v1193 = vpop.f32.mrb[0].mxu0
    %v1194 = vadd.f32 %v199, %v1193
    %v1195 = vpop.f32.mrb[0].mxu0
    %1196 = vmatprep.mubr.bf16.mxu0 0
    %1197 = vmatmul.mubr.bf16.gmra.mrb[0].mxu0 %v712
    %v1198 = vpop.f32.mrb[0].mxu0
    %v1199 = vadd.f32 %v199, %v1198
    %v1200 = vpop.f32.mrb[0].mxu0
    %v1201 = vpop.f32.mrb[0].mxu0
    %v1202 = vadd.f32 %v199, %v1201
    %v1203 = vpop.f32.mrb[0].mxu0
    %1204 = vmatprep.mubr.bf16.mxu0 0
    %1205 = vmatmul.mubr.bf16.gmra.mrb[0].mxu0 %v715
    %v1206 = vpop.f32.mrb[0].mxu0
    %v1207 = vadd.f32 %v199, %v1206
    %v1208 = vpop.f32.mrb[0].mxu0
    %v1209 = vpop.f32.mrb[0].mxu0
    %v1210 = vadd.f32 %v199, %v1209
    %v1211 = vpop.f32.mrb[0].mxu0
    %1212 = vmatprep.mubr.bf16.mxu0 0
    %1213 = vmatmul.mubr.bf16.gmra.mrb[0].mxu0 %v718
    %v1214 = vpop.f32.mrb[0].mxu0
    %v1215 = vadd.f32 %v199, %v1214
    %v1216 = vpop.f32.mrb[0].mxu0
    %v1217 = vpop.f32.mrb[0].mxu0
    %v1218 = vadd.f32 %v199, %v1217
    %v1219 = vpop.f32.mrb[0].mxu0
    %1220 = vmatprep.mubr.bf16.mxu0 0
    %1221 = vmatmul.mubr.bf16.gmra.mrb[0].mxu0 %v721
    %v1222 = vpop.f32.mrb[0].mxu0
    %v1223 = vadd.f32 %v199, %v1222
    %v1224 = vpop.f32.mrb[0].mxu0
    %v1225 = vpop.f32.mrb[0].mxu0
    %v1226 = vadd.f32 %v199, %v1225
    %v1227 = vpop.f32.mrb[0].mxu0
    %1228 = vmatprep.mubr.bf16.mxu0 0
    %1229 = vmatmul.mubr.bf16.gmra.mrb[0].mxu0 %v724
    %v1230 = vpop.f32.mrb[0].mxu0
    %v1231 = vadd.f32 %v199, %v1230
    %v1232 = vpop.f32.mrb[0].mxu0
    %v1233 = vpop.f32.mrb[0].mxu0
    %v1234 = vadd.f32 %v199, %v1233
    %v1235 = vpop.f32.mrb[0].mxu0
    %1236 = vmatprep.mubr.bf16.mxu0 0
    %1237 = vmatmul.mubr.bf16.gmra.mrb[0].mxu0 %v727
    %v1238 = vpop.f32.mrb[0].mxu0
    %v1239 = vadd.f32 %v199, %v1238
    %v1240 = vpop.f32.mrb[0].mxu0
    %v1241 = vpop.f32.mrb[0].mxu0
    %v1242 = vadd.f32 %v199, %v1241
    %v1243 = vpop.f32.mrb[0].mxu0
    %1244 = vmatprep.mubr.bf16.mxu0 0
    %1245 = vmatmul.mubr.bf16.gmra.mrb[0].mxu0 %v730
    %v1246 = vpop.f32.mrb[0].mxu0
    %v1247 = vadd.f32 %v199, %v1246
    %v1248 = vpop.f32.mrb[0].mxu0
    %v1249 = vpop.f32.mrb[0].mxu0
    %v1250 = vadd.f32 %v199, %v1249
    %v1251 = vpop.f32.mrb[0].mxu0
    %1252 = vmatprep.mubr.bf16.mxu0 0
    %1253 = vmatmul.mubr.bf16.gmra.mrb[0].mxu0 %v733
    %v1254 = vpop.f32.mrb[0].mxu0
    %v1255 = vadd.f32 %v199, %v1254
    %v1256 = vpop.f32.mrb[0].mxu0
    %v1257 = vpop.f32.mrb[0].mxu0
    %v1258 = vadd.f32 %v199, %v1257
    %v1259 = vpop.f32.mrb[0].mxu0
    %1260 = vmatprep.mubr.bf16.mxu0 0
    %1261 = vmatmul.mubr.bf16.gmra.mrb[0].mxu0 %v736
    %v1262 = vpop.f32.mrb[0].mxu0
    %v1263 = vadd.f32 %v199, %v1262
    %v1264 = vpop.f32.mrb[0].mxu0
    %v1265 = vpop.f32.mrb[0].mxu0
    %v1266 = vadd.f32 %v199, %v1265
    %v1267 = vpop.f32.mrb[0].mxu0
    %1268 = vmatprep.mubr.bf16.mxu0 0
    %1269 = vmatmul.mubr.bf16.gmra.mrb[0].mxu0 %v739
    %v1270 = vpop.f32.mrb[0].mxu0
    %v1271 = vadd.f32 %v199, %v1270
    %v1272 = vpop.f32.mrb[0].mxu0
    %v1273 = vpop.f32.mrb[0].mxu0
    %v1274 = vadd.f32 %v199, %v1273
    %v1275 = vpop.f32.mrb[0].mxu0
    %1276 = vmatprep.mubr.bf16.mxu0 0
    %1277 = vmatmul.mubr.bf16.gmra.mrb[0].mxu0 %v742
    %v1278 = vpop.f32.mrb[0].mxu0
    %v1279 = vadd.f32 %v199, %v1278
    %v1280 = vpop.f32.mrb[0].mxu0
    %v1281 = vpop.f32.mrb[0].mxu0
    %v1282 = vadd.f32 %v199, %v1281
    %v1283 = vpop.f32.mrb[0].mxu0
    %1284 = vmatprep.mubr.bf16.mxu0 0
    %1285 = vmatmul.mubr.bf16.gmra.mrb[0].mxu0 %v745
    %v1286 = vpop.f32.mrb[0].mxu0
    %v1287 = vadd.f32 %v199, %v1286
    %v1288 = vpop.f32.mrb[0].mxu0
    %v1289 = vpop.f32.mrb[0].mxu0
    %v1290 = vadd.f32 %v199, %v1289
    %v1291 = vpop.f32.mrb[0].mxu0
    %1292 = vmatprep.mubr.bf16.mxu0 0
    %1293 = vmatmul.mubr.bf16.gmra.mrb[0].mxu0 %v748
    %v1294 = vpop.f32.mrb[0].mxu0
    %v1295 = vadd.f32 %v199, %v1294
    %v1296 = vpop.f32.mrb[0].mxu0
    %v1297 = vpop.f32.mrb[0].mxu0
    %v1298 = vadd.f32 %v199, %v1297
    %v1299 = vpop.f32.mrb[0].mxu0
    %1300 = vmatprep.mubr.bf16.mxu0 0
    %1301 = vmatmul.mubr.bf16.gmra.mrb[0].mxu0 %v751
    %v1302 = vpop.f32.mrb[0].mxu0
    %v1303 = vadd.f32 %v199, %v1302
    %v1304 = vpop.f32.mrb[0].mxu0
    %v1305 = vpop.f32.mrb[0].mxu0
    %v1306 = vadd.f32 %v199, %v1305
    %v1307 = vpop.f32.mrb[0].mxu0
    %1308 = vmatprep.mubr.bf16.mxu0 0
    %1309 = vmatmul.mubr.bf16.gmra.mrb[0].mxu0 %v754
    %v1310 = vpop.f32.mrb[0].mxu0
    %v1311 = vadd.f32 %v199, %v1310
    %v1312 = vpop.f32.mrb[0].mxu0
    %v1313 = vpop.f32.mrb[0].mxu0
    %v1314 = vadd.f32 %v199, %v1313
    %v1315 = vpop.f32.mrb[0].mxu0
    %1316 = vmatprep.mubr.bf16.mxu0 0
    %1317 = vmatmul.mubr.bf16.gmra.mrb[0].mxu0 %v757
    %v1318 = vpop.f32.mrb[0].mxu0
    %v1319 = vadd.f32 %v199, %v1318
    %v1320 = vpop.f32.mrb[0].mxu0
    %v1321 = vpop.f32.mrb[0].mxu0
    %v1322 = vadd.f32 %v199, %v1321
    %v1323 = vpop.f32.mrb[0].mxu0
    %1324 = vmatprep.mubr.bf16.mxu0 0
    %1325 = vmatmul.mubr.bf16.gmra.mrb[0].mxu0 %v760
    %v1326 = vpop.f32.mrb[0].mxu0
    %v1327 = vadd.f32 %v199, %v1326
    %v1328 = vpop.f32.mrb[0].mxu0
    %v1329 = vpop.f32.mrb[0].mxu0
    %v1330 = vadd.f32 %v199, %v1329
    %v1331 = vpop.f32.mrb[0].mxu0
    %1332 = vmatprep.mubr.bf16.mxu0 0
    %1333 = vmatmul.mubr.bf16.gmra.mrb[0].mxu0 %v763
    %v1334 = vpop.f32.mrb[0].mxu0
    %v1335 = vadd.f32 %v199, %v1334
    %v1336 = vpop.f32.mrb[0].mxu0
    %v1337 = vpop.f32.mrb[0].mxu0
    %v1338 = vadd.f32 %v199, %v1337
    %v1339 = vpop.f32.mrb[0].mxu0
    %1340 = vmatprep.mubr.bf16.mxu0 0
    %1341 = vmatmul.mubr.bf16.gmra.mrb[0].mxu0 %v766
    %v1342 = vpop.f32.mrb[0].mxu0
    %v1343 = vadd.f32 %v199, %v1342
    %v1344 = vpop.f32.mrb[0].mxu0
    %v1345 = vpop.f32.mrb[0].mxu0
    %v1346 = vadd.f32 %v199, %v1345
    %v1347 = vpop.f32.mrb[0].mxu0
    %1348 = vmatprep.mubr.bf16.mxu0 0
    %1349 = vmatmul.mubr.bf16.gmra.mrb[0].mxu0 %v769
    %v1350 = vpop.f32.mrb[0].mxu0
    %v1351 = vadd.f32 %v199, %v1350
    %v1352 = vpop.f32.mrb[0].mxu0
    %v1353 = vpop.f32.mrb[0].mxu0
    %v1354 = vadd.f32 %v199, %v1353
    %v1355 = vpop.f32.mrb[0].mxu0
    %1356 = vmatprep.mubr.bf16.mxu0 0
    %1357 = vmatmul.mubr.bf16.gmra.mrb[0].mxu0 %v772
    %v1358 = vpop.f32.mrb[0].mxu0
    %v1359 = vadd.f32 %v199, %v1358
    %v1360 = vpop.f32.mrb[0].mxu0
    %v1361 = vpop.f32.mrb[0].mxu0
    %v1362 = vadd.f32 %v199, %v1361
    %v1363 = vpop.f32.mrb[0].mxu0
    %1364 = vmatprep.mubr.bf16.mxu0 0
    %1365 = vmatmul.mubr.bf16.gmra.mrb[0].mxu0 %v775
    %v1366 = vpop.f32.mrb[0].mxu0
    %v1367 = vadd.f32 %v199, %v1366
    %v1368 = vpop.f32.mrb[0].mxu0
    %v1369 = vpop.f32.mrb[0].mxu0
    %v1370 = vadd.f32 %v199, %v1369
    %v1371 = vpop.f32.mrb[0].mxu0
    %1372 = vmatprep.mubr.bf16.mxu0 0
    %1373 = vmatmul.mubr.bf16.gmra.mrb[0].mxu0 %v778
    %v1374 = vpop.f32.mrb[0].mxu0
    %v1375 = vadd.f32 %v199, %v1374
    %v1376 = vpop.f32.mrb[0].mxu0
    %v1377 = vpop.f32.mrb[0].mxu0
    %v1378 = vadd.f32 %v199, %v1377
    %v1379 = vpop.f32.mrb[0].mxu0
    %1380 = vmatprep.mubr.bf16.mxu0 0
    %1381 = vmatmul.mubr.bf16.gmra.mrb[0].mxu0 %v781
    %v1382 = vpop.f32.mrb[0].mxu0
    %v1383 = vadd.f32 %v199, %v1382
    %v1384 = vpop.f32.mrb[0].mxu0
    %v1385 = vpop.f32.mrb[0].mxu0
    %v1386 = vadd.f32 %v199, %v1385
    %v1387 = vpop.f32.mrb[0].mxu0
    %1388 = vmatprep.mubr.bf16.mxu0 0
    %1389 = vmatmul.mubr.bf16.gmra.mrb[0].mxu0 %v784
    %v1390 = vpop.f32.mrb[0].mxu0
    %v1391 = vadd.f32 %v199, %v1390
    %v1392 = vpop.f32.mrb[0].mxu0
    %v1393 = vpop.f32.mrb[0].mxu0
    %v1394 = vadd.f32 %v199, %v1393
    %v1395 = vpop.f32.mrb[0].mxu0
    %1396 = vmatprep.mubr.bf16.mxu0 0
    %1397 = vmatmul.mubr.bf16.gmra.mrb[0].mxu0 %v787
    %v1398 = vpop.f32.mrb[0].mxu0
    %v1399 = vadd.f32 %v199, %v1398
    %v1400 = vpop.f32.mrb[0].mxu0
    %v1401 = vpop.f32.mrb[0].mxu0
    %v1402 = vadd.f32 %v199, %v1401
    %v1403 = vpop.f32.mrb[0].mxu0
    %1404 = vdwg.mxu0
    %v1405 = vmax.f32 %v831, %v975
    %v1406 = vmax.f32 %v834, %v978
    %v1407 = vmax.f32 %v839, %v983
    %v1408 = vmax.f32 %v842, %v986
    %v1409 = vmax.f32 %v847, %v991
    %v1410 = vmax.f32 %v850, %v994
    %v1411 = vmax.f32 %v855, %v999
    %v1412 = vmax.f32 %v858, %v1002
    %v1413 = vmax.f32 %v863, %v1007
    %v1414 = vmax.f32 %v866, %v1010
    %v1415 = vmax.f32 %v871, %v1015
    %v1416 = vmax.f32 %v874, %v1018
    %v1417 = vmax.f32 %v879, %v1023
    %v1418 = vmax.f32 %v882, %v1026
    %v1419 = vmax.f32 %v887, %v1031
    %v1420 = vmax.f32 %v890, %v1034
    %v1421 = vmax.f32 %v895, %v1039
    %v1422 = vmax.f32 %v898, %v1042
    %v1423 = vmax.f32 %v903, %v1047
    %v1424 = vmax.f32 %v906, %v1050
    %v1425 = vmax.f32 %v911, %v1055
    %v1426 = vmax.f32 %v914, %v1058
    %v1427 = vmax.f32 %v919, %v1063
    %v1428 = vmax.f32 %v922, %v1066
    %v1429 = vmax.f32 %v927, %v1071
    %v1430 = vmax.f32 %v930, %v1074
    %v1431 = vmax.f32 %v935, %v1079
    %v1432 = vmax.f32 %v938, %v1082
    %v1433 = vmax.f32 %v943, %v1087
    %v1434 = vmax.f32 %v946, %v1090
    %v1435 = vmax.f32 %v951, %v1095
    %v1436 = vmax.f32 %v954, %v1098
    %v1437 = vmax.f32 %v959, %v1103
    %v1438 = vmax.f32 %v962, %v1106
    %v1439 = vmax.f32 %v967, %v1111
    %v1440 = vmax.f32 %v970, %v1114
    %v1441 = vmax.f32 %v1119, %v1263
    %v1442 = vmax.f32 %v1122, %v1266
    %v1443 = vmax.f32 %v1127, %v1271
    %v1444 = vmax.f32 %v1130, %v1274
    %v1445 = vmax.f32 %v1135, %v1279
    %v1446 = vmax.f32 %v1138, %v1282
    %v1447 = vmax.f32 %v1143, %v1287
    %v1448 = vmax.f32 %v1146, %v1290
    %v1449 = vmax.f32 %v1151, %v1295
    %v1450 = vmax.f32 %v1154, %v1298
    %v1451 = vmax.f32 %v1159, %v1303
    %v1452 = vmax.f32 %v1162, %v1306
    %v1453 = vmax.f32 %v1167, %v1311
    %v1454 = vmax.f32 %v1170, %v1314
    %v1455 = vmax.f32 %v1175, %v1319
    %v1456 = vmax.f32 %v1178, %v1322
    %v1457 = vmax.f32 %v1183, %v1327
    %v1458 = vmax.f32 %v1186, %v1330
    %v1459 = vmax.f32 %v1191, %v1335
    %v1460 = vmax.f32 %v1194, %v1338
    %v1461 = vmax.f32 %v1199, %v1343
    %v1462 = vmax.f32 %v1202, %v1346
    %v1463 = vmax.f32 %v1207, %v1351
    %v1464 = vmax.f32 %v1210, %v1354
    %v1465 = vmax.f32 %v1215, %v1359
    %v1466 = vmax.f32 %v1218, %v1362
    %v1467 = vmax.f32 %v1223, %v1367
    %v1468 = vmax.f32 %v1226, %v1370
    %v1469 = vmax.f32 %v1231, %v1375
    %v1470 = vmax.f32 %v1234, %v1378
    %v1471 = vmax.f32 %v1239, %v1383
    %v1472 = vmax.f32 %v1242, %v1386
    %v1473 = vmax.f32 %v1247, %v1391
    %v1474 = vmax.f32 %v1250, %v1394
    %v1475 = vmax.f32 %v1255, %v1399
    %v1476 = vmax.f32 %v1258, %v1402
    %v1477 = vmax.f32 %v1405, %v1441
    %v1478 = vmax.f32 %v1406, %v1442
    %v1479 = vmax.f32 %v1407, %v1443
    %v1480 = vmax.f32 %v1408, %v1444
    %v1481 = vmax.f32 %v1409, %v1445
    %v1482 = vmax.f32 %v1410, %v1446
    %v1483 = vmax.f32 %v1411, %v1447
    %v1484 = vmax.f32 %v1412, %v1448
    %v1485 = vmax.f32 %v1413, %v1449
    %v1486 = vmax.f32 %v1414, %v1450
    %v1487 = vmax.f32 %v1415, %v1451
    %v1488 = vmax.f32 %v1416, %v1452
    %v1489 = vmax.f32 %v1417, %v1453
    %v1490 = vmax.f32 %v1418, %v1454
    %v1491 = vmax.f32 %v1419, %v1455
    %v1492 = vmax.f32 %v1420, %v1456
    %v1493 = vmax.f32 %v1421, %v1457
    %v1494 = vmax.f32 %v1422, %v1458
    %v1495 = vmax.f32 %v1423, %v1459
    %v1496 = vmax.f32 %v1424, %v1460
    %v1497 = vmax.f32 %v1425, %v1461
    %v1498 = vmax.f32 %v1426, %v1462
    %v1499 = vmax.f32 %v1427, %v1463
    %v1500 = vmax.f32 %v1428, %v1464
    %v1501 = vmax.f32 %v1429, %v1465
    %v1502 = vmax.f32 %v1430, %v1466
    %v1503 = vmax.f32 %v1431, %v1467
    %v1504 = vmax.f32 %v1432, %v1468
    %v1505 = vmax.f32 %v1433, %v1469
    %v1506 = vmax.f32 %v1434, %v1470
    %v1507 = vmax.f32 %v1435, %v1471
    %v1508 = vmax.f32 %v1436, %v1472
    %v1509 = vmax.f32 %v1437, %v1473
    %v1510 = vmax.f32 %v1438, %v1474
    %v1511 = vmax.f32 %v1439, %v1475
    %v1512 = vmax.f32 %v1440, %v1476
    %v1513 = vmax.f32 %v1477, 0.0
    %v1514 = vmax.f32 %v1478, 0.0
    %v1515 = vmax.f32 %v1479, 0.0
    %v1516 = vmax.f32 %v1480, 0.0
    %v1517 = vmax.f32 %v1481, 0.0
    %v1518 = vmax.f32 %v1482, 0.0
    %v1519 = vmax.f32 %v1483, 0.0
    %v1520 = vmax.f32 %v1484, 0.0
    %v1521 = vmax.f32 %v1485, 0.0
    %v1522 = vmax.f32 %v1486, 0.0
    %v1523 = vmax.f32 %v1487, 0.0
    %v1524 = vmax.f32 %v1488, 0.0
    %v1525 = vmax.f32 %v1489, 0.0
    %v1526 = vmax.f32 %v1490, 0.0
    %v1527 = vmax.f32 %v1491, 0.0
    %v1528 = vmax.f32 %v1492, 0.0
    %v1529 = vmax.f32 %v1493, 0.0
    %v1530 = vmax.f32 %v1494, 0.0
    %v1531 = vmax.f32 %v1495, 0.0
    %v1532 = vmax.f32 %v1496, 0.0
    %v1533 = vmax.f32 %v1497, 0.0
    %v1534 = vmax.f32 %v1498, 0.0
    %v1535 = vmax.f32 %v1499, 0.0
    %v1536 = vmax.f32 %v1500, 0.0
    %v1537 = vmax.f32 %v1501, 0.0
    %v1538 = vmax.f32 %v1502, 0.0
    %v1539 = vmax.f32 %v1503, 0.0
    %v1540 = vmax.f32 %v1504, 0.0
    %v1541 = vmax.f32 %v1505, 0.0
    %v1542 = vmax.f32 %v1506, 0.0
    %v1543 = vmax.f32 %v1507, 0.0
    %v1544 = vmax.f32 %v1508, 0.0
    %v1545 = vmax.f32 %v1509, 0.0
    %v1546 = vmax.f32 %v1510, 0.0
    %v1547 = vmax.f32 %v1511, 0.0
    %v1548 = vmax.f32 %v1512, 0.0
    %vm1549 = vcmask 80896
    %v1550 = vsel %vm1549, %v1513, 0.0
    %v1551 = vsel %vm1549, %v1514, 0.0
    %v1552 = vadd.f32 %v1550, %v1551
    %v1553 = vsel %vm1549, %v1515, 0.0
    %v1554 = vadd.f32 %v1552, %v1553
    %v1555 = vsel %vm1549, %v1516, 0.0
    %v1556 = vadd.f32 %v1554, %v1555
    %v1557 = vsel %vm1549, %v1517, 0.0
    %v1558 = vadd.f32 %v1556, %v1557
    %v1559 = vsel %vm1549, %v1518, 0.0
    %v1560 = vadd.f32 %v1558, %v1559
    %v1561 = vsel %vm1549, %v1519, 0.0
    %v1562 = vadd.f32 %v1560, %v1561
    %v1563 = vsel %vm1549, %v1520, 0.0
    %v1564 = vadd.f32 %v1562, %v1563
    %v1565 = vsel %vm1549, %v1521, 0.0
    %v1566 = vadd.f32 %v1564, %v1565
    %v1567 = vsel %vm1549, %v1522, 0.0
    %v1568 = vadd.f32 %v1566, %v1567
    %v1569 = vsel %vm1549, %v1523, 0.0
    %v1570 = vadd.f32 %v1568, %v1569
    %v1571 = vsel %vm1549, %v1524, 0.0
    %v1572 = vadd.f32 %v1570, %v1571
    %v1573 = vsel %vm1549, %v1525, 0.0
    %v1574 = vadd.f32 %v1572, %v1573
    %v1575 = vsel %vm1549, %v1526, 0.0
    %v1576 = vadd.f32 %v1574, %v1575
    %v1577 = vsel %vm1549, %v1527, 0.0
    %v1578 = vadd.f32 %v1576, %v1577
    %v1579 = vsel %vm1549, %v1528, 0.0
    %v1580 = vadd.f32 %v1578, %v1579
    %v1581 = vsel %vm1549, %v1529, 0.0
    %v1582 = vadd.f32 %v1580, %v1581
    %v1583 = vsel %vm1549, %v1530, 0.0
    %v1584 = vadd.f32 %v1582, %v1583
    %v1585 = vsel %vm1549, %v1531, 0.0
    %v1586 = vadd.f32 %v1584, %v1585
    %v1587 = vsel %vm1549, %v1532, 0.0
    %v1588 = vadd.f32 %v1586, %v1587
    %v1589 = vsel %vm1549, %v1533, 0.0
    %v1590 = vadd.f32 %v1588, %v1589
    %v1591 = vsel %vm1549, %v1534, 0.0
    %v1592 = vadd.f32 %v1590, %v1591
    %v1593 = vsel %vm1549, %v1535, 0.0
    %v1594 = vadd.f32 %v1592, %v1593
    %v1595 = vsel %vm1549, %v1536, 0.0
    %v1596 = vadd.f32 %v1594, %v1595
    %v1597 = vsel %vm1549, %v1537, 0.0
    %v1598 = vadd.f32 %v1596, %v1597
    %v1599 = vsel %vm1549, %v1538, 0.0
    %v1600 = vadd.f32 %v1598, %v1599
    %v1601 = vsel %vm1549, %v1539, 0.0
    %v1602 = vadd.f32 %v1600, %v1601
    %v1603 = vsel %vm1549, %v1540, 0.0
    %v1604 = vadd.f32 %v1602, %v1603
    %v1605 = vsel %vm1549, %v1541, 0.0
    %v1606 = vadd.f32 %v1604, %v1605
    %v1607 = vsel %vm1549, %v1542, 0.0
    %v1608 = vadd.f32 %v1606, %v1607
    %v1609 = vsel %vm1549, %v1543, 0.0
    %v1610 = vadd.f32 %v1608, %v1609
    %v1611 = vsel %vm1549, %v1544, 0.0
    %v1612 = vadd.f32 %v1610, %v1611
    %v1613 = vsel %vm1549, %v1545, 0.0
    %v1614 = vadd.f32 %v1612, %v1613
    %v1615 = vsel %vm1549, %v1546, 0.0
    %v1616 = vadd.f32 %v1614, %v1615
    %v1617 = vsel %vm1549, %v1547, 0.0
    %v1618 = vadd.f32 %v1616, %v1617
    %v1619 = vsel %vm1549, %v1548, 0.0
    %v1620 = vadd.f32 %v1618, %v1619
    %v1621 = vrot.slane %v1620, 4
    %v1622 = vadd.f32 %v1620, %v1621
    %v1623 = vrot.slane %v1622, 2
    %v1624 = vadd.f32 %v1622, %v1623
    %v1625 = vrot.slane %v1624, 1
    %v1626 = vadd.f32 %v1624, %v1625
    %v1627 = vrcp.pop 288.0
    %v1628 = vmul.f32 %v1626, %v1627
    %v1629 = vsub.f32 %v1513, %v1628
    %v1630 = vsub.f32 %v1514, %v1628
    %v1631 = vsub.f32 %v1515, %v1628
    %v1632 = vsub.f32 %v1516, %v1628
    %v1633 = vsub.f32 %v1517, %v1628
    %v1634 = vsub.f32 %v1518, %v1628
    %v1635 = vsub.f32 %v1519, %v1628
    %v1636 = vsub.f32 %v1520, %v1628
    %v1637 = vsub.f32 %v1521, %v1628
    %v1638 = vsub.f32 %v1522, %v1628
    %v1639 = vsub.f32 %v1523, %v1628
    %v1640 = vsub.f32 %v1524, %v1628
    %v1641 = vsub.f32 %v1525, %v1628
    %v1642 = vsub.f32 %v1526, %v1628
    %v1643 = vsub.f32 %v1527, %v1628
    %v1644 = vsub.f32 %v1528, %v1628
    %v1645 = vsub.f32 %v1529, %v1628
    %v1646 = vsub.f32 %v1530, %v1628
    %v1647 = vsub.f32 %v1531, %v1628
    %v1648 = vsub.f32 %v1532, %v1628
    %v1649 = vsub.f32 %v1533, %v1628
    %v1650 = vsub.f32 %v1534, %v1628
    %v1651 = vsub.f32 %v1535, %v1628
    %v1652 = vsub.f32 %v1536, %v1628
    %v1653 = vsub.f32 %v1537, %v1628
    %v1654 = vsub.f32 %v1538, %v1628
    %v1655 = vsub.f32 %v1539, %v1628
    %v1656 = vsub.f32 %v1540, %v1628
    %v1657 = vsub.f32 %v1541, %v1628
    %v1658 = vsub.f32 %v1542, %v1628
    %v1659 = vsub.f32 %v1543, %v1628
    %v1660 = vsub.f32 %v1544, %v1628
    %v1661 = vsub.f32 %v1545, %v1628
    %v1662 = vsub.f32 %v1546, %v1628
    %v1663 = vsub.f32 %v1547, %v1628
    %v1664 = vsub.f32 %v1548, %v1628
    %v1665 = vmul.f32 %v1629, %v1629
    %v1666 = vmul.f32 %v1630, %v1630
    %v1667 = vmul.f32 %v1631, %v1631
    %v1668 = vmul.f32 %v1632, %v1632
    %v1669 = vmul.f32 %v1633, %v1633
    %v1670 = vmul.f32 %v1634, %v1634
    %v1671 = vmul.f32 %v1635, %v1635
    %v1672 = vmul.f32 %v1636, %v1636
    %v1673 = vmul.f32 %v1637, %v1637
    %v1674 = vmul.f32 %v1638, %v1638
    %v1675 = vmul.f32 %v1639, %v1639
    %v1676 = vmul.f32 %v1640, %v1640
    %v1677 = vmul.f32 %v1641, %v1641
    %v1678 = vmul.f32 %v1642, %v1642
    %v1679 = vmul.f32 %v1643, %v1643
    %v1680 = vmul.f32 %v1644, %v1644
    %v1681 = vmul.f32 %v1645, %v1645
    %v1682 = vmul.f32 %v1646, %v1646
    %v1683 = vmul.f32 %v1647, %v1647
    %v1684 = vmul.f32 %v1648, %v1648
    %v1685 = vmul.f32 %v1649, %v1649
    %v1686 = vmul.f32 %v1650, %v1650
    %v1687 = vmul.f32 %v1651, %v1651
    %v1688 = vmul.f32 %v1652, %v1652
    %v1689 = vmul.f32 %v1653, %v1653
    %v1690 = vmul.f32 %v1654, %v1654
    %v1691 = vmul.f32 %v1655, %v1655
    %v1692 = vmul.f32 %v1656, %v1656
    %v1693 = vmul.f32 %v1657, %v1657
    %v1694 = vmul.f32 %v1658, %v1658
    %v1695 = vmul.f32 %v1659, %v1659
    %v1696 = vmul.f32 %v1660, %v1660
    %v1697 = vmul.f32 %v1661, %v1661
    %v1698 = vmul.f32 %v1662, %v1662
    %v1699 = vmul.f32 %v1663, %v1663
    %v1700 = vmul.f32 %v1664, %v1664
    %v1701 = vsel %vm1549, %v1665, 0.0
    %v1702 = vsel %vm1549, %v1666, 0.0
    %v1703 = vadd.f32 %v1701, %v1702
    %v1704 = vsel %vm1549, %v1667, 0.0
    %v1705 = vadd.f32 %v1703, %v1704
    %v1706 = vsel %vm1549, %v1668, 0.0
    %v1707 = vadd.f32 %v1705, %v1706
    %v1708 = vsel %vm1549, %v1669, 0.0
    %v1709 = vadd.f32 %v1707, %v1708
    %v1710 = vsel %vm1549, %v1670, 0.0
    %v1711 = vadd.f32 %v1709, %v1710
    %v1712 = vsel %vm1549, %v1671, 0.0
    %v1713 = vadd.f32 %v1711, %v1712
    %v1714 = vsel %vm1549, %v1672, 0.0
    %v1715 = vadd.f32 %v1713, %v1714
    %v1716 = vsel %vm1549, %v1673, 0.0
    %v1717 = vadd.f32 %v1715, %v1716
    %v1718 = vsel %vm1549, %v1674, 0.0
    %v1719 = vadd.f32 %v1717, %v1718
    %v1720 = vsel %vm1549, %v1675, 0.0
    %v1721 = vadd.f32 %v1719, %v1720
    %v1722 = vsel %vm1549, %v1676, 0.0
    %v1723 = vadd.f32 %v1721, %v1722
    %v1724 = vsel %vm1549, %v1677, 0.0
    %v1725 = vadd.f32 %v1723, %v1724
    %v1726 = vsel %vm1549, %v1678, 0.0
    %v1727 = vadd.f32 %v1725, %v1726
    %v1728 = vsel %vm1549, %v1679, 0.0
    %v1729 = vadd.f32 %v1727, %v1728
    %v1730 = vsel %vm1549, %v1680, 0.0
    %v1731 = vadd.f32 %v1729, %v1730
    %v1732 = vsel %vm1549, %v1681, 0.0
    %v1733 = vadd.f32 %v1731, %v1732
    %v1734 = vsel %vm1549, %v1682, 0.0
    %v1735 = vadd.f32 %v1733, %v1734
    %v1736 = vsel %vm1549, %v1683, 0.0
    %v1737 = vadd.f32 %v1735, %v1736
    %v1738 = vsel %vm1549, %v1684, 0.0
    %v1739 = vadd.f32 %v1737, %v1738
    %v1740 = vsel %vm1549, %v1685, 0.0
    %v1741 = vadd.f32 %v1739, %v1740
    %v1742 = vsel %vm1549, %v1686, 0.0
    %v1743 = vadd.f32 %v1741, %v1742
    %v1744 = vsel %vm1549, %v1687, 0.0
    %v1745 = vadd.f32 %v1743, %v1744
    %v1746 = vsel %vm1549, %v1688, 0.0
    %v1747 = vadd.f32 %v1745, %v1746
    %v1748 = vsel %vm1549, %v1689, 0.0
    %v1749 = vadd.f32 %v1747, %v1748
    %v1750 = vsel %vm1549, %v1690, 0.0
    %v1751 = vadd.f32 %v1749, %v1750
    %v1752 = vsel %vm1549, %v1691, 0.0
    %v1753 = vadd.f32 %v1751, %v1752
    %v1754 = vsel %vm1549, %v1692, 0.0
    %v1755 = vadd.f32 %v1753, %v1754
    %v1756 = vsel %vm1549, %v1693, 0.0
    %v1757 = vadd.f32 %v1755, %v1756
    %v1758 = vsel %vm1549, %v1694, 0.0
    %v1759 = vadd.f32 %v1757, %v1758
    %v1760 = vsel %vm1549, %v1695, 0.0
    %v1761 = vadd.f32 %v1759, %v1760
    %v1762 = vsel %vm1549, %v1696, 0.0
    %v1763 = vadd.f32 %v1761, %v1762
    %v1764 = vsel %vm1549, %v1697, 0.0
    %v1765 = vadd.f32 %v1763, %v1764
    %v1766 = vsel %vm1549, %v1698, 0.0
    %v1767 = vadd.f32 %v1765, %v1766
    %v1768 = vsel %vm1549, %v1699, 0.0
    %v1769 = vadd.f32 %v1767, %v1768
    %v1770 = vsel %vm1549, %v1700, 0.0
    %v1771 = vadd.f32 %v1769, %v1770
    %v1772 = vrot.slane %v1771, 4
    %v1773 = vadd.f32 %v1771, %v1772
    %v1774 = vrot.slane %v1773, 2
    %v1775 = vadd.f32 %v1773, %v1774
    %v1776 = vrot.slane %v1775, 1
    %v1777 = vadd.f32 %v1775, %v1776
    %v1778 = vmul.f32 %v1777, %v1627
    %v1779 = vadd.f32 %v1778, 1e-05
    %v1780 = vrsqrt.pop %v1779
    %v1781 = vmul.f32 %v1629, %v1780
    %v1782 = vmul.f32 %v1630, %v1780
    %v1783 = vmul.f32 %v1631, %v1780
    %v1784 = vmul.f32 %v1632, %v1780
    %v1785 = vmul.f32 %v1633, %v1780
    %v1786 = vmul.f32 %v1634, %v1780
    %v1787 = vmul.f32 %v1635, %v1780
    %v1788 = vmul.f32 %v1636, %v1780
    %v1789 = vmul.f32 %v1637, %v1780
    %v1790 = vmul.f32 %v1638, %v1780
    %v1791 = vmul.f32 %v1639, %v1780
    %v1792 = vmul.f32 %v1640, %v1780
    %v1793 = vmul.f32 %v1641, %v1780
    %v1794 = vmul.f32 %v1642, %v1780
    %v1795 = vmul.f32 %v1643, %v1780
    %v1796 = vmul.f32 %v1644, %v1780
    %v1797 = vmul.f32 %v1645, %v1780
    %v1798 = vmul.f32 %v1646, %v1780
    %v1799 = vmul.f32 %v1647, %v1780
    %v1800 = vmul.f32 %v1648, %v1780
    %v1801 = vmul.f32 %v1649, %v1780
    %v1802 = vmul.f32 %v1650, %v1780
    %v1803 = vmul.f32 %v1651, %v1780
    %v1804 = vmul.f32 %v1652, %v1780
    %v1805 = vmul.f32 %v1653, %v1780
    %v1806 = vmul.f32 %v1654, %v1780
    %v1807 = vmul.f32 %v1655, %v1780
    %v1808 = vmul.f32 %v1656, %v1780
    %v1809 = vmul.f32 %v1657, %v1780
    %v1810 = vmul.f32 %v1658, %v1780
    %v1811 = vmul.f32 %v1659, %v1780
    %v1812 = vmul.f32 %v1660, %v1780
    %v1813 = vmul.f32 %v1661, %v1780
    %v1814 = vmul.f32 %v1662, %v1780
    %v1815 = vmul.f32 %v1663, %v1780
    %v1816 = vmul.f32 %v1664, %v1780
    %v1817 = vld [vmem:[%s3] sm:$0x1]
    %v1819 = vlaneseq
    %v1820 = vshrl.u32 %v1819, 7
    %v1821 = vsub.s32 0, %v1820
    %v1822 = vrot.slane %v1817, %v1821
    %v1824 = vmul.f32 %v1781, %v1822
    %v1825 = vmul.f32 %v1782, %v1822
    %v1826 = vmul.f32 %v1783, %v1822
    %v1827 = vmul.f32 %v1784, %v1822
    %v1828 = vmul.f32 %v1785, %v1822
    %v1829 = vmul.f32 %v1786, %v1822
    %v1830 = vmul.f32 %v1787, %v1822
    %v1831 = vmul.f32 %v1788, %v1822
    %v1832 = vmul.f32 %v1789, %v1822
    %v1833 = vmul.f32 %v1790, %v1822
    %v1834 = vmul.f32 %v1791, %v1822
    %v1835 = vmul.f32 %v1792, %v1822
    %v1836 = vmul.f32 %v1793, %v1822
    %v1837 = vmul.f32 %v1794, %v1822
    %v1838 = vmul.f32 %v1795, %v1822
    %v1839 = vmul.f32 %v1796, %v1822
    %v1840 = vmul.f32 %v1797, %v1822
    %v1841 = vmul.f32 %v1798, %v1822
    %v1842 = vmul.f32 %v1799, %v1822
    %v1843 = vmul.f32 %v1800, %v1822
    %v1844 = vmul.f32 %v1801, %v1822
    %v1845 = vmul.f32 %v1802, %v1822
    %v1846 = vmul.f32 %v1803, %v1822
    %v1847 = vmul.f32 %v1804, %v1822
    %v1848 = vmul.f32 %v1805, %v1822
    %v1849 = vmul.f32 %v1806, %v1822
    %v1850 = vmul.f32 %v1807, %v1822
    %v1851 = vmul.f32 %v1808, %v1822
    %v1852 = vmul.f32 %v1809, %v1822
    %v1853 = vmul.f32 %v1810, %v1822
    %v1854 = vmul.f32 %v1811, %v1822
    %v1855 = vmul.f32 %v1812, %v1822
    %v1856 = vmul.f32 %v1813, %v1822
    %v1857 = vmul.f32 %v1814, %v1822
    %v1858 = vmul.f32 %v1815, %v1822
    %v1859 = vmul.f32 %v1816, %v1822
    %v1860 = vld [vmem:[%s4] sm:$0x1]
    %v1862 = vlaneseq
    %v1863 = vshrl.u32 %v1862, 7
    %v1864 = vsub.s32 0, %v1863
    %v1865 = vrot.slane %v1860, %v1864
    %v1867 = vadd.f32 %v1824, %v1865
    %v1868 = vadd.f32 %v1825, %v1865
    %v1869 = vadd.f32 %v1826, %v1865
    %v1870 = vadd.f32 %v1827, %v1865
    %v1871 = vadd.f32 %v1828, %v1865
    %v1872 = vadd.f32 %v1829, %v1865
    %v1873 = vadd.f32 %v1830, %v1865
    %v1874 = vadd.f32 %v1831, %v1865
    %v1875 = vadd.f32 %v1832, %v1865
    %v1876 = vadd.f32 %v1833, %v1865
    %v1877 = vadd.f32 %v1834, %v1865
    %v1878 = vadd.f32 %v1835, %v1865
    %v1879 = vadd.f32 %v1836, %v1865
    %v1880 = vadd.f32 %v1837, %v1865
    %v1881 = vadd.f32 %v1838, %v1865
    %v1882 = vadd.f32 %v1839, %v1865
    %v1883 = vadd.f32 %v1840, %v1865
    %v1884 = vadd.f32 %v1841, %v1865
    %v1885 = vadd.f32 %v1842, %v1865
    %v1886 = vadd.f32 %v1843, %v1865
    %v1887 = vadd.f32 %v1844, %v1865
    %v1888 = vadd.f32 %v1845, %v1865
    %v1889 = vadd.f32 %v1846, %v1865
    %v1890 = vadd.f32 %v1847, %v1865
    %v1891 = vadd.f32 %v1848, %v1865
    %v1892 = vadd.f32 %v1849, %v1865
    %v1893 = vadd.f32 %v1850, %v1865
    %v1894 = vadd.f32 %v1851, %v1865
    %v1895 = vadd.f32 %v1852, %v1865
    %v1896 = vadd.f32 %v1853, %v1865
    %v1897 = vadd.f32 %v1854, %v1865
    %v1898 = vadd.f32 %v1855, %v1865
    %v1899 = vadd.f32 %v1856, %v1865
    %v1900 = vadd.f32 %v1857, %v1865
    %v1901 = vadd.f32 %v1858, %v1865
    %v1902 = vadd.f32 %v1859, %v1865
    %1903 = vst.msk [vmem:[#allocation2] sm:$0xff] %vm1549, %v1867
    %1904 = vst.msk [vmem:[#allocation2 + $0x8] sm:$0xff] %vm1549, %v1868
    %1905 = vst.msk [vmem:[#allocation2 + $0x10] sm:$0xff] %vm1549, %v1869
    %1906 = vst.msk [vmem:[#allocation2 + $0x18] sm:$0xff] %vm1549, %v1870
    %1907 = vst.msk [vmem:[#allocation2 + $0x20] sm:$0xff] %vm1549, %v1871
    %1908 = vst.msk [vmem:[#allocation2 + $0x28] sm:$0xff] %vm1549, %v1872
    %1909 = vst.msk [vmem:[#allocation2 + $0x30] sm:$0xff] %vm1549, %v1873
    %1910 = vst.msk [vmem:[#allocation2 + $0x38] sm:$0xff] %vm1549, %v1874
    %1911 = vst.msk [vmem:[#allocation2 + $0x40] sm:$0xff] %vm1549, %v1875
    %1912 = vst.msk [vmem:[#allocation2 + $0x48] sm:$0xff] %vm1549, %v1876
    %1913 = vst.msk [vmem:[#allocation2 + $0x50] sm:$0xff] %vm1549, %v1877
    %1914 = vst.msk [vmem:[#allocation2 + $0x58] sm:$0xff] %vm1549, %v1878
    %1915 = vst.msk [vmem:[#allocation2 + $0x60] sm:$0xff] %vm1549, %v1879
    %1916 = vst.msk [vmem:[#allocation2 + $0x68] sm:$0xff] %vm1549, %v1880
    %1917 = vst.msk [vmem:[#allocation2 + $0x70] sm:$0xff] %vm1549, %v1881
    %1918 = vst.msk [vmem:[#allocation2 + $0x78] sm:$0xff] %vm1549, %v1882
    %1919 = vst.msk [vmem:[#allocation2 + $0x80] sm:$0xff] %vm1549, %v1883
    %1920 = vst.msk [vmem:[#allocation2 + $0x88] sm:$0xff] %vm1549, %v1884
    %1921 = vst.msk [vmem:[#allocation2 + $0x90] sm:$0xff] %vm1549, %v1885
    %1922 = vst.msk [vmem:[#allocation2 + $0x98] sm:$0xff] %vm1549, %v1886
    %1923 = vst.msk [vmem:[#allocation2 + $0xa0] sm:$0xff] %vm1549, %v1887
    %1924 = vst.msk [vmem:[#allocation2 + $0xa8] sm:$0xff] %vm1549, %v1888
    %1925 = vst.msk [vmem:[#allocation2 + $0xb0] sm:$0xff] %vm1549, %v1889
    %1926 = vst.msk [vmem:[#allocation2 + $0xb8] sm:$0xff] %vm1549, %v1890
    %1927 = vst.msk [vmem:[#allocation2 + $0xc0] sm:$0xff] %vm1549, %v1891
    %1928 = vst.msk [vmem:[#allocation2 + $0xc8] sm:$0xff] %vm1549, %v1892
    %1929 = vst.msk [vmem:[#allocation2 + $0xd0] sm:$0xff] %vm1549, %v1893
    %1930 = vst.msk [vmem:[#allocation2 + $0xd8] sm:$0xff] %vm1549, %v1894
    %1931 = vst.msk [vmem:[#allocation2 + $0xe0] sm:$0xff] %vm1549, %v1895
    %1932 = vst.msk [vmem:[#allocation2 + $0xe8] sm:$0xff] %vm1549, %v1896
    %1933 = vst.msk [vmem:[#allocation2 + $0xf0] sm:$0xff] %vm1549, %v1897
    %1934 = vst.msk [vmem:[#allocation2 + $0xf8] sm:$0xff] %vm1549, %v1898
    %1935 = vst.msk [vmem:[#allocation2 + $0x100] sm:$0xff] %vm1549, %v1899
    %1936 = vst.msk [vmem:[#allocation2 + $0x108] sm:$0xff] %vm1549, %v1900
    %1937 = vst.msk [vmem:[#allocation2 + $0x110] sm:$0xff] %vm1549, %v1901
    %1938 = vst.msk [vmem:[#allocation2 + $0x118] sm:$0xff] %vm1549, %v1902
    %1939 = vst.msk [vmem:[#allocation2 + $0x120] sm:$0xff] %vm1549, 0.0
    %1940 = vst.msk [vmem:[#allocation2 + $0x128] sm:$0xff] %vm1549, 0.0
    %1941 = vst.msk [vmem:[#allocation2 + $0x130] sm:$0xff] %vm1549, 0.0
    %1942 = vst.msk [vmem:[#allocation2 + $0x138] sm:$0xff] %vm1549, 0.0
    %1943 = vst.msk [vmem:[#allocation2 + $0x140] sm:$0xff] %vm1549, 0.0
    %1944 = vst.msk [vmem:[#allocation2 + $0x148] sm:$0xff] %vm1549, 0.0
    %1945 = vst.msk [vmem:[#allocation2 + $0x150] sm:$0xff] %vm1549, 0.0
    %v1946 = vld [vmem:[#allocation2] sm:$0xff]
    %v1947 = vld [vmem:[#allocation2 + $0x8] sm:$0xff]
    %v1948 = vld [vmem:[#allocation2 + $0x10] sm:$0xff]
    %v1949 = vld [vmem:[#allocation2 + $0x18] sm:$0xff]
    %v1950 = vld [vmem:[#allocation2 + $0x20] sm:$0xff]
    %v1951 = vld [vmem:[#allocation2 + $0x28] sm:$0xff]
    %v1952 = vld [vmem:[#allocation2 + $0x30] sm:$0xff]
    %v1953 = vld [vmem:[#allocation2 + $0x38] sm:$0xff]
    %v1954 = vld [vmem:[#allocation2 + $0x40] sm:$0xff]
    %v1955 = vld [vmem:[#allocation2 + $0x48] sm:$0xff]
    %v1956 = vld [vmem:[#allocation2 + $0x50] sm:$0xff]
    %v1957 = vld [vmem:[#allocation2 + $0x58] sm:$0xff]
    %v1958 = vld [vmem:[#allocation2 + $0x60] sm:$0xff]
    %v1959 = vld [vmem:[#allocation2 + $0x68] sm:$0xff]
    %v1960 = vld [vmem:[#allocation2 + $0x70] sm:$0xff]
    %v1961 = vld [vmem:[#allocation2 + $0x78] sm:$0xff]
    %v1962 = vld [vmem:[#allocation2 + $0x80] sm:$0xff]
    %v1963 = vld [vmem:[#allocation2 + $0x88] sm:$0xff]
    %v1964 = vld [vmem:[#allocation2 + $0x90] sm:$0xff]
    %v1965 = vld [vmem:[#allocation2 + $0x98] sm:$0xff]
    %v1966 = vld [vmem:[#allocation2 + $0xa0] sm:$0xff]
    %v1967 = vld [vmem:[#allocation2 + $0xa8] sm:$0xff]
    %v1968 = vld [vmem:[#allocation2 + $0xb0] sm:$0xff]
    %v1969 = vld [vmem:[#allocation2 + $0xb8] sm:$0xff]
    %v1970 = vld [vmem:[#allocation2 + $0xc0] sm:$0xff]
    %v1971 = vld [vmem:[#allocation2 + $0xc8] sm:$0xff]
    %v1972 = vld [vmem:[#allocation2 + $0xd0] sm:$0xff]
    %v1973 = vld [vmem:[#allocation2 + $0xd8] sm:$0xff]
    %v1974 = vld [vmem:[#allocation2 + $0xe0] sm:$0xff]
    %v1975 = vld [vmem:[#allocation2 + $0xe8] sm:$0xff]
    %v1976 = vld [vmem:[#allocation2 + $0xf0] sm:$0xff]
    %v1977 = vld [vmem:[#allocation2 + $0xf8] sm:$0xff]
    %v1978 = vld [vmem:[#allocation2 + $0x100] sm:$0xff]
    %v1979 = vld [vmem:[#allocation2 + $0x108] sm:$0xff]
    %v1980 = vld [vmem:[#allocation2 + $0x110] sm:$0xff]
    %v1981 = vld [vmem:[#allocation2 + $0x118] sm:$0xff]
    %v1982 = vld [vmem:[#allocation2 + $0x1] sm:$0xff]
    %v1983 = vld [vmem:[#allocation2 + $0x9] sm:$0xff]
    %v1984 = vld [vmem:[#allocation2 + $0x11] sm:$0xff]
    %v1985 = vld [vmem:[#allocation2 + $0x19] sm:$0xff]
    %v1986 = vld [vmem:[#allocation2 + $0x21] sm:$0xff]
    %v1987 = vld [vmem:[#allocation2 + $0x29] sm:$0xff]
    %v1988 = vld [vmem:[#allocation2 + $0x31] sm:$0xff]
    %v1989 = vld [vmem:[#allocation2 + $0x39] sm:$0xff]
    %v1990 = vld [vmem:[#allocation2 + $0x41] sm:$0xff]
    %v1991 = vld [vmem:[#allocation2 + $0x49] sm:$0xff]
    %v1992 = vld [vmem:[#allocation2 + $0x51] sm:$0xff]
    %v1993 = vld [vmem:[#allocation2 + $0x59] sm:$0xff]
    %v1994 = vld [vmem:[#allocation2 + $0x61] sm:$0xff]
    %v1995 = vld [vmem:[#allocation2 + $0x69] sm:$0xff]
    %v1996 = vld [vmem:[#allocation2 + $0x71] sm:$0xff]
    %v1997 = vld [vmem:[#allocation2 + $0x79] sm:$0xff]
    %v1998 = vld [vmem:[#allocation2 + $0x81] sm:$0xff]
    %v1999 = vld [vmem:[#allocation2 + $0x89] sm:$0xff]
    %v2000 = vld [vmem:[#allocation2 + $0x91] sm:$0xff]
    %v2001 = vld [vmem:[#allocation2 + $0x99] sm:$0xff]
    %v2002 = vld [vmem:[#allocation2 + $0xa1] sm:$0xff]
    %v2003 = vld [vmem:[#allocation2 + $0xa9] sm:$0xff]
    %v2004 = vld [vmem:[#allocation2 + $0xb1] sm:$0xff]
    %v2005 = vld [vmem:[#allocation2 + $0xb9] sm:$0xff]
    %v2006 = vld [vmem:[#allocation2 + $0xc1] sm:$0xff]
    %v2007 = vld [vmem:[#allocation2 + $0xc9] sm:$0xff]
    %v2008 = vld [vmem:[#allocation2 + $0xd1] sm:$0xff]
    %v2009 = vld [vmem:[#allocation2 + $0xd9] sm:$0xff]
    %v2010 = vld [vmem:[#allocation2 + $0xe1] sm:$0xff]
    %v2011 = vld [vmem:[#allocation2 + $0xe9] sm:$0xff]
    %v2012 = vld [vmem:[#allocation2 + $0xf1] sm:$0xff]
    %v2013 = vld [vmem:[#allocation2 + $0xf9] sm:$0xff]
    %v2014 = vld [vmem:[#allocation2 + $0x101] sm:$0xff]
    %v2015 = vld [vmem:[#allocation2 + $0x109] sm:$0xff]
    %v2016 = vld [vmem:[#allocation2 + $0x111] sm:$0xff]
    %v2017 = vld [vmem:[#allocation2 + $0x119] sm:$0xff]
    %v2018 = vld [vmem:[#allocation2 + $0x2] sm:$0xff]
    %v2019 = vld [vmem:[#allocation2 + $0xa] sm:$0xff]
    %v2020 = vld [vmem:[#allocation2 + $0x12] sm:$0xff]
    %v2021 = vld [vmem:[#allocation2 + $0x1a] sm:$0xff]
    %v2022 = vld [vmem:[#allocation2 + $0x22] sm:$0xff]
    %v2023 = vld [vmem:[#allocation2 + $0x2a] sm:$0xff]
    %v2024 = vld [vmem:[#allocation2 + $0x32] sm:$0xff]
    %v2025 = vld [vmem:[#allocation2 + $0x3a] sm:$0xff]
    %v2026 = vld [vmem:[#allocation2 + $0x42] sm:$0xff]
    %v2027 = vld [vmem:[#allocation2 + $0x4a] sm:$0xff]
    %v2028 = vld [vmem:[#allocation2 + $0x52] sm:$0xff]
    %v2029 = vld [vmem:[#allocation2 + $0x5a] sm:$0xff]
    %v2030 = vld [vmem:[#allocation2 + $0x62] sm:$0xff]
    %v2031 = vld [vmem:[#allocation2 + $0x6a] sm:$0xff]
    %v2032 = vld [vmem:[#allocation2 + $0x72] sm:$0xff]
    %v2033 = vld [vmem:[#allocation2 + $0x7a] sm:$0xff]
    %v2034 = vld [vmem:[#allocation2 + $0x82] sm:$0xff]
    %v2035 = vld [vmem:[#allocation2 + $0x8a] sm:$0xff]
    %v2036 = vld [vmem:[#allocation2 + $0x92] sm:$0xff]
    %v2037 = vld [vmem:[#allocation2 + $0x9a] sm:$0xff]
    %v2038 = vld [vmem:[#allocation2 + $0xa2] sm:$0xff]
    %v2039 = vld [vmem:[#allocation2 + $0xaa] sm:$0xff]
    %v2040 = vld [vmem:[#allocation2 + $0xb2] sm:$0xff]
    %v2041 = vld [vmem:[#allocation2 + $0xba] sm:$0xff]
    %v2042 = vld [vmem:[#allocation2 + $0xc2] sm:$0xff]
    %v2043 = vld [vmem:[#allocation2 + $0xca] sm:$0xff]
    %v2044 = vld [vmem:[#allocation2 + $0xd2] sm:$0xff]
    %v2045 = vld [vmem:[#allocation2 + $0xda] sm:$0xff]
    %v2046 = vld [vmem:[#allocation2 + $0xe2] sm:$0xff]
    %v2047 = vld [vmem:[#allocation2 + $0xea] sm:$0xff]
    %v2048 = vld [vmem:[#allocation2 + $0xf2] sm:$0xff]
    %v2049 = vld [vmem:[#allocation2 + $0xfa] sm:$0xff]
    %v2050 = vld [vmem:[#allocation2 + $0x102] sm:$0xff]
    %v2051 = vld [vmem:[#allocation2 + $0x10a] sm:$0xff]
    %v2052 = vld [vmem:[#allocation2 + $0x112] sm:$0xff]
    %v2053 = vld [vmem:[#allocation2 + $0x11a] sm:$0xff]
    %v2054 = vld [vmem:[#allocation2 + $0x3] sm:$0xff]
    %v2055 = vld [vmem:[#allocation2 + $0xb] sm:$0xff]
    %v2056 = vld [vmem:[#allocation2 + $0x13] sm:$0xff]
    %v2057 = vld [vmem:[#allocation2 + $0x1b] sm:$0xff]
    %v2058 = vld [vmem:[#allocation2 + $0x23] sm:$0xff]
    %v2059 = vld [vmem:[#allocation2 + $0x2b] sm:$0xff]
    %v2060 = vld [vmem:[#allocation2 + $0x33] sm:$0xff]
    %v2061 = vld [vmem:[#allocation2 + $0x3b] sm:$0xff]
    %v2062 = vld [vmem:[#allocation2 + $0x43] sm:$0xff]
    %v2063 = vld [vmem:[#allocation2 + $0x4b] sm:$0xff]
    %v2064 = vld [vmem:[#allocation2 + $0x53] sm:$0xff]
    %v2065 = vld [vmem:[#allocation2 + $0x5b] sm:$0xff]
    %v2066 = vld [vmem:[#allocation2 + $0x63] sm:$0xff]
    %v2067 = vld [vmem:[#allocation2 + $0x6b] sm:$0xff]
    %v2068 = vld [vmem:[#allocation2 + $0x73] sm:$0xff]
    %v2069 = vld [vmem:[#allocation2 + $0x7b] sm:$0xff]
    %v2070 = vld [vmem:[#allocation2 + $0x83] sm:$0xff]
    %v2071 = vld [vmem:[#allocation2 + $0x8b] sm:$0xff]
    %v2072 = vld [vmem:[#allocation2 + $0x93] sm:$0xff]
    %v2073 = vld [vmem:[#allocation2 + $0x9b] sm:$0xff]
    %v2074 = vld [vmem:[#allocation2 + $0xa3] sm:$0xff]
    %v2075 = vld [vmem:[#allocation2 + $0xab] sm:$0xff]
    %v2076 = vld [vmem:[#allocation2 + $0xb3] sm:$0xff]
    %v2077 = vld [vmem:[#allocation2 + $0xbb] sm:$0xff]
    %v2078 = vld [vmem:[#allocation2 + $0xc3] sm:$0xff]
    %v2079 = vld [vmem:[#allocation2 + $0xcb] sm:$0xff]
    %v2080 = vld [vmem:[#allocation2 + $0xd3] sm:$0xff]
    %v2081 = vld [vmem:[#allocation2 + $0xdb] sm:$0xff]
    %v2082 = vld [vmem:[#allocation2 + $0xe3] sm:$0xff]
    %v2083 = vld [vmem:[#allocation2 + $0xeb] sm:$0xff]
    %v2084 = vld [vmem:[#allocation2 + $0xf3] sm:$0xff]
    %v2085 = vld [vmem:[#allocation2 + $0xfb] sm:$0xff]
    %v2086 = vld [vmem:[#allocation2 + $0x103] sm:$0xff]
    %v2087 = vld [vmem:[#allocation2 + $0x10b] sm:$0xff]
    %v2088 = vld [vmem:[#allocation2 + $0x113] sm:$0xff]
    %v2089 = vld [vmem:[#allocation2 + $0x11b] sm:$0xff]
    %v2090 = vld [vmem:[#allocation2 + $0x4] sm:$0xff]
    %v2091 = vld [vmem:[#allocation2 + $0xc] sm:$0xff]
    %v2092 = vld [vmem:[#allocation2 + $0x14] sm:$0xff]
    %v2093 = vld [vmem:[#allocation2 + $0x1c] sm:$0xff]
    %v2094 = vld [vmem:[#allocation2 + $0x24] sm:$0xff]
    %v2095 = vld [vmem:[#allocation2 + $0x2c] sm:$0xff]
    %v2096 = vld [vmem:[#allocation2 + $0x34] sm:$0xff]
    %v2097 = vld [vmem:[#allocation2 + $0x3c] sm:$0xff]
    %v2098 = vld [vmem:[#allocation2 + $0x44] sm:$0xff]
    %v2099 = vld [vmem:[#allocation2 + $0x4c] sm:$0xff]
    %v2100 = vld [vmem:[#allocation2 + $0x54] sm:$0xff]
    %v2101 = vld [vmem:[#allocation2 + $0x5c] sm:$0xff]
    %v2102 = vld [vmem:[#allocation2 + $0x64] sm:$0xff]
    %v2103 = vld [vmem:[#allocation2 + $0x6c] sm:$0xff]
    %v2104 = vld [vmem:[#allocation2 + $0x74] sm:$0xff]
    %v2105 = vld [vmem:[#allocation2 + $0x7c] sm:$0xff]
    %v2106 = vld [vmem:[#allocation2 + $0x84] sm:$0xff]
    %v2107 = vld [vmem:[#allocation2 + $0x8c] sm:$0xff]
    %v2108 = vld [vmem:[#allocation2 + $0x94] sm:$0xff]
    %v2109 = vld [vmem:[#allocation2 + $0x9c] sm:$0xff]
    %v2110 = vld [vmem:[#allocation2 + $0xa4] sm:$0xff]
    %v2111 = vld [vmem:[#allocation2 + $0xac] sm:$0xff]
    %v2112 = vld [vmem:[#allocation2 + $0xb4] sm:$0xff]
    %v2113 = vld [vmem:[#allocation2 + $0xbc] sm:$0xff]
    %v2114 = vld [vmem:[#allocation2 + $0xc4] sm:$0xff]
    %v2115 = vld [vmem:[#allocation2 + $0xcc] sm:$0xff]
    %v2116 = vld [vmem:[#allocation2 + $0xd4] sm:$0xff]
    %v2117 = vld [vmem:[#allocation2 + $0xdc] sm:$0xff]
    %v2118 = vld [vmem:[#allocation2 + $0xe4] sm:$0xff]
    %v2119 = vld [vmem:[#allocation2 + $0xec] sm:$0xff]
    %v2120 = vld [vmem:[#allocation2 + $0xf4] sm:$0xff]
    %v2121 = vld [vmem:[#allocation2 + $0xfc] sm:$0xff]
    %v2122 = vld [vmem:[#allocation2 + $0x104] sm:$0xff]
    %v2123 = vld [vmem:[#allocation2 + $0x10c] sm:$0xff]
    %v2124 = vld [vmem:[#allocation2 + $0x114] sm:$0xff]
    %v2125 = vld [vmem:[#allocation2 + $0x11c] sm:$0xff]
    %v2126 = vld [vmem:[#allocation2 + $0x124] sm:$0xff]
    %v2127 = vld [vmem:[#allocation2 + $0xd] sm:$0xff]
    %v2128 = vld [vmem:[#allocation2 + $0x15] sm:$0xff]
    %v2129 = vld [vmem:[#allocation2 + $0x1d] sm:$0xff]
    %v2130 = vld [vmem:[#allocation2 + $0x25] sm:$0xff]
    %v2131 = vld [vmem:[#allocation2 + $0x2d] sm:$0xff]
    %v2132 = vld [vmem:[#allocation2 + $0x35] sm:$0xff]
    %v2133 = vld [vmem:[#allocation2 + $0x3d] sm:$0xff]
    %v2134 = vld [vmem:[#allocation2 + $0x45] sm:$0xff]
    %v2135 = vld [vmem:[#allocation2 + $0x4d] sm:$0xff]
    %v2136 = vld [vmem:[#allocation2 + $0x55] sm:$0xff]
    %v2137 = vld [vmem:[#allocation2 + $0x5d] sm:$0xff]
    %v2138 = vld [vmem:[#allocation2 + $0x65] sm:$0xff]
    %v2139 = vld [vmem:[#allocation2 + $0x6d] sm:$0xff]
    %v2140 = vld [vmem:[#allocation2 + $0x75] sm:$0xff]
    %v2141 = vld [vmem:[#allocation2 + $0x7d] sm:$0xff]
    %v2142 = vld [vmem:[#allocation2 + $0x85] sm:$0xff]
    %v2143 = vld [vmem:[#allocation2 + $0x8d] sm:$0xff]
    %v2144 = vld [vmem:[#allocation2 + $0x95] sm:$0xff]
    %v2145 = vld [vmem:[#allocation2 + $0x9d] sm:$0xff]
    %v2146 = vld [vmem:[#allocation2 + $0xa5] sm:$0xff]
    %v2147 = vld [vmem:[#allocation2 + $0xad] sm:$0xff]
    %v2148 = vld [vmem:[#allocation2 + $0xb5] sm:$0xff]
    %v2149 = vld [vmem:[#allocation2 + $0xbd] sm:$0xff]
    %v2150 = vld [vmem:[#allocation2 + $0xc5] sm:$0xff]
    %v2151 = vld [vmem:[#allocation2 + $0xcd] sm:$0xff]
    %v2152 = vld [vmem:[#allocation2 + $0xd5] sm:$0xff]
    %v2153 = vld [vmem:[#allocation2 + $0xdd] sm:$0xff]
    %v2154 = vld [vmem:[#allocation2 + $0xe5] sm:$0xff]
    %v2155 = vld [vmem:[#allocation2 + $0xed] sm:$0xff]
    %v2156 = vld [vmem:[#allocation2 + $0xf5] sm:$0xff]
    %v2157 = vld [vmem:[#allocation2 + $0xfd] sm:$0xff]
    %v2158 = vld [vmem:[#allocation2 + $0x105] sm:$0xff]
    %v2159 = vld [vmem:[#allocation2 + $0x10d] sm:$0xff]
    %v2160 = vld [vmem:[#allocation2 + $0x115] sm:$0xff]
    %v2161 = vld [vmem:[#allocation2 + $0x11d] sm:$0xff]
    %v2162 = vld [vmem:[#allocation2 + $0x125] sm:$0xff]
    %v2163 = vld [vmem:[#allocation2 + $0xe] sm:$0xff]
    %v2164 = vld [vmem:[#allocation2 + $0x16] sm:$0xff]
    %v2165 = vld [vmem:[#allocation2 + $0x1e] sm:$0xff]
    %v2166 = vld [vmem:[#allocation2 + $0x26] sm:$0xff]
    %v2167 = vld [vmem:[#allocation2 + $0x2e] sm:$0xff]
    %v2168 = vld [vmem:[#allocation2 + $0x36] sm:$0xff]
    %v2169 = vld [vmem:[#allocation2 + $0x3e] sm:$0xff]
    %v2170 = vld [vmem:[#allocation2 + $0x46] sm:$0xff]
    %v2171 = vld [vmem:[#allocation2 + $0x4e] sm:$0xff]
    %v2172 = vld [vmem:[#allocation2 + $0x56] sm:$0xff]
    %v2173 = vld [vmem:[#allocation2 + $0x5e] sm:$0xff]
    %v2174 = vld [vmem:[#allocation2 + $0x66] sm:$0xff]
    %v2175 = vld [vmem:[#allocation2 + $0x6e] sm:$0xff]
    %v2176 = vld [vmem:[#allocation2 + $0x76] sm:$0xff]
    %v2177 = vld [vmem:[#allocation2 + $0x7e] sm:$0xff]
    %v2178 = vld [vmem:[#allocation2 + $0x86] sm:$0xff]
    %v2179 = vld [vmem:[#allocation2 + $0x8e] sm:$0xff]
    %v2180 = vld [vmem:[#allocation2 + $0x96] sm:$0xff]
    %v2181 = vld [vmem:[#allocation2 + $0x9e] sm:$0xff]
    %v2182 = vld [vmem:[#allocation2 + $0xa6] sm:$0xff]
    %v2183 = vld [vmem:[#allocation2 + $0xae] sm:$0xff]
    %v2184 = vld [vmem:[#allocation2 + $0xb6] sm:$0xff]
    %v2185 = vld [vmem:[#allocation2 + $0xbe] sm:$0xff]
    %v2186 = vld [vmem:[#allocation2 + $0xc6] sm:$0xff]
    %v2187 = vld [vmem:[#allocation2 + $0xce] sm:$0xff]
    %v2188 = vld [vmem:[#allocation2 + $0xd6] sm:$0xff]
    %v2189 = vld [vmem:[#allocation2 + $0xde] sm:$0xff]
    %v2190 = vld [vmem:[#allocation2 + $0xe6] sm:$0xff]
    %v2191 = vld [vmem:[#allocation2 + $0xee] sm:$0xff]
    %v2192 = vld [vmem:[#allocation2 + $0xf6] sm:$0xff]
    %v2193 = vld [vmem:[#allocation2 + $0xfe] sm:$0xff]
    %v2194 = vld [vmem:[#allocation2 + $0x106] sm:$0xff]
    %v2195 = vld [vmem:[#allocation2 + $0x10e] sm:$0xff]
    %v2196 = vld [vmem:[#allocation2 + $0x116] sm:$0xff]
    %v2197 = vld [vmem:[#allocation2 + $0x11e] sm:$0xff]
    %v2198 = vld [vmem:[#allocation2 + $0x126] sm:$0xff]
    %v2199 = vld [vmem:[#allocation2 + $0xf] sm:$0xff]
    %v2200 = vld [vmem:[#allocation2 + $0x17] sm:$0xff]
    %v2201 = vld [vmem:[#allocation2 + $0x1f] sm:$0xff]
    %v2202 = vld [vmem:[#allocation2 + $0x27] sm:$0xff]
    %v2203 = vld [vmem:[#allocation2 + $0x2f] sm:$0xff]
    %v2204 = vld [vmem:[#allocation2 + $0x37] sm:$0xff]
    %v2205 = vld [vmem:[#allocation2 + $0x3f] sm:$0xff]
    %v2206 = vld [vmem:[#allocation2 + $0x47] sm:$0xff]
    %v2207 = vld [vmem:[#allocation2 + $0x4f] sm:$0xff]
    %v2208 = vld [vmem:[#allocation2 + $0x57] sm:$0xff]
    %v2209 = vld [vmem:[#allocation2 + $0x5f] sm:$0xff]
    %v2210 = vld [vmem:[#allocation2 + $0x67] sm:$0xff]
    %v2211 = vld [vmem:[#allocation2 + $0x6f] sm:$0xff]
    %v2212 = vld [vmem:[#allocation2 + $0x77] sm:$0xff]
    %v2213 = vld [vmem:[#allocation2 + $0x7f] sm:$0xff]
    %v2214 = vld [vmem:[#allocation2 + $0x87] sm:$0xff]
    %v2215 = vld [vmem:[#allocation2 + $0x8f] sm:$0xff]
    %v2216 = vld [vmem:[#allocation2 + $0x97] sm:$0xff]
    %v2217 = vld [vmem:[#allocation2 + $0x9f] sm:$0xff]
    %v2218 = vld [vmem:[#allocation2 + $0xa7] sm:$0xff]
    %v2219 = vld [vmem:[#allocation2 + $0xaf] sm:$0xff]
    %v2220 = vld [vmem:[#allocation2 + $0xb7] sm:$0xff]
    %v2221 = vld [vmem:[#allocation2 + $0xbf] sm:$0xff]
    %v2222 = vld [vmem:[#allocation2 + $0xc7] sm:$0xff]
    %v2223 = vld [vmem:[#allocation2 + $0xcf] sm:$0xff]
    %v2224 = vld [vmem:[#allocation2 + $0xd7] sm:$0xff]
    %v2225 = vld [vmem:[#allocation2 + $0xdf] sm:$0xff]
    %v2226 = vld [vmem:[#allocation2 + $0xe7] sm:$0xff]
    %v2227 = vld [vmem:[#allocation2 + $0xef] sm:$0xff]
    %v2228 = vld [vmem:[#allocation2 + $0xf7] sm:$0xff]
    %v2229 = vld [vmem:[#allocation2 + $0xff] sm:$0xff]
    %v2230 = vld [vmem:[#allocation2 + $0x107] sm:$0xff]
    %v2231 = vld [vmem:[#allocation2 + $0x10f] sm:$0xff]
    %v2232 = vld [vmem:[#allocation2 + $0x117] sm:$0xff]
    %v2233 = vld [vmem:[#allocation2 + $0x11f] sm:$0xff]
    %v2234 = vld [vmem:[#allocation2 + $0x127] sm:$0xff]
    %v2235 = vld [vmem:[#allocation2 + $0x120] sm:$0xff]
    %v2236 = vld [vmem:[#allocation2 + $0x128] sm:$0xff]
    %v2237 = vld [vmem:[#allocation2 + $0x130] sm:$0xff]
    %v2238 = vld [vmem:[#allocation2 + $0x121] sm:$0xff]
    %v2239 = vld [vmem:[#allocation2 + $0x129] sm:$0xff]
    %v2240 = vld [vmem:[#allocation2 + $0x131] sm:$0xff]
    %v2241 = vld [vmem:[#allocation2 + $0x122] sm:$0xff]
    %v2242 = vld [vmem:[#allocation2 + $0x12a] sm:$0xff]
    %v2243 = vld [vmem:[#allocation2 + $0x132] sm:$0xff]
    %v2244 = vld [vmem:[#allocation2 + $0x123] sm:$0xff]
    %v2245 = vld [vmem:[#allocation2 + $0x12b] sm:$0xff]
    %v2246 = vld [vmem:[#allocation2 + $0x133] sm:$0xff]
    %v2247 = vld [vmem:[#allocation2 + $0x12c] sm:$0xff]
    %v2248 = vld [vmem:[#allocation2 + $0x134] sm:$0xff]
    %v2249 = vld [vmem:[#allocation2 + $0x13c] sm:$0xff]
    %v2250 = vld [vmem:[#allocation2 + $0x12d] sm:$0xff]
    %v2251 = vld [vmem:[#allocation2 + $0x135] sm:$0xff]
    %v2252 = vld [vmem:[#allocation2 + $0x13d] sm:$0xff]
    %v2253 = vld [vmem:[#allocation2 + $0x12e] sm:$0xff]
    %v2254 = vld [vmem:[#allocation2 + $0x136] sm:$0xff]
    %v2255 = vld [vmem:[#allocation2 + $0x13e] sm:$0xff]
    %v2256 = vld [vmem:[#allocation2 + $0x12f] sm:$0xff]
    %v2257 = vld [vmem:[#allocation2 + $0x137] sm:$0xff]
    %v2258 = vld [vmem:[#allocation2 + $0x13f] sm:$0xff]
    %v2259 = vld [vmem:[#allocation2 + $0x138] sm:$0xff]
    %v2260 = vld [vmem:[#allocation2 + $0x140] sm:$0xff]
    %v2261 = vld [vmem:[#allocation2 + $0x148] sm:$0xff]
    %v2262 = vld [vmem:[#allocation2 + $0x139] sm:$0xff]
    %v2263 = vld [vmem:[#allocation2 + $0x141] sm:$0xff]
    %v2264 = vld [vmem:[#allocation2 + $0x149] sm:$0xff]
    %v2265 = vld [vmem:[#allocation2 + $0x13a] sm:$0xff]
    %v2266 = vld [vmem:[#allocation2 + $0x142] sm:$0xff]
    %v2267 = vld [vmem:[#allocation2 + $0x14a] sm:$0xff]
    %v2268 = vld [vmem:[#allocation2 + $0x13b] sm:$0xff]
    %v2269 = vld [vmem:[#allocation2 + $0x143] sm:$0xff]
    %v2270 = vld [vmem:[#allocation2 + $0x14b] sm:$0xff]
    %v2271 = vld [vmem:[#allocation2 + $0x144] sm:$0xff]
    %v2272 = vld [vmem:[#allocation2 + $0x14c] sm:$0xff]
    %2309 = vrot.lane.b32.xlu0 %v1982, 10
    %v2310 = vpop.permute.xlu0 %2309
    %2311 = vrot.lane.b32.xlu0 %v1983, 10
    %v2312 = vpop.permute.xlu0 %2311
    %2313 = vrot.lane.b32.xlu0 %v1984, 10
    %v2314 = vpop.permute.xlu0 %2313
    %2315 = vrot.lane.b32.xlu0 %v1985, 10
    %v2316 = vpop.permute.xlu0 %2315
    %2317 = vrot.lane.b32.xlu0 %v1986, 10
    %v2318 = vpop.permute.xlu0 %2317
    %2319 = vrot.lane.b32.xlu0 %v1987, 10
    %v2320 = vpop.permute.xlu0 %2319
    %2321 = vrot.lane.b32.xlu0 %v1988, 10
    %v2322 = vpop.permute.xlu0 %2321
    %2323 = vrot.lane.b32.xlu0 %v1989, 10
    %v2324 = vpop.permute.xlu0 %2323
    %2325 = vrot.lane.b32.xlu0 %v1990, 10
    %v2326 = vpop.permute.xlu0 %2325
    %2327 = vrot.lane.b32.xlu0 %v1991, 10
    %v2328 = vpop.permute.xlu0 %2327
    %2329 = vrot.lane.b32.xlu0 %v1992, 10
    %v2330 = vpop.permute.xlu0 %2329
    %2331 = vrot.lane.b32.xlu0 %v1993, 10
    %v2332 = vpop.permute.xlu0 %2331
    %2333 = vrot.lane.b32.xlu0 %v1994, 10
    %v2334 = vpop.permute.xlu0 %2333
    %2335 = vrot.lane.b32.xlu0 %v1995, 10
    %v2336 = vpop.permute.xlu0 %2335
    %2337 = vrot.lane.b32.xlu0 %v1996, 10
    %v2338 = vpop.permute.xlu0 %2337
    %2339 = vrot.lane.b32.xlu0 %v1997, 10
    %v2340 = vpop.permute.xlu0 %2339
    %2341 = vrot.lane.b32.xlu0 %v1998, 10
    %v2342 = vpop.permute.xlu0 %2341
    %2343 = vrot.lane.b32.xlu0 %v1999, 10
    %v2344 = vpop.permute.xlu0 %2343
    %2345 = vrot.lane.b32.xlu0 %v2000, 10
    %v2346 = vpop.permute.xlu0 %2345
    %2347 = vrot.lane.b32.xlu0 %v2001, 10
    %v2348 = vpop.permute.xlu0 %2347
    %2349 = vrot.lane.b32.xlu0 %v2002, 10
    %v2350 = vpop.permute.xlu0 %2349
    %2351 = vrot.lane.b32.xlu0 %v2003, 10
    %v2352 = vpop.permute.xlu0 %2351
    %2353 = vrot.lane.b32.xlu0 %v2004, 10
    %v2354 = vpop.permute.xlu0 %2353
    %2355 = vrot.lane.b32.xlu0 %v2005, 10
    %v2356 = vpop.permute.xlu0 %2355
    %2357 = vrot.lane.b32.xlu0 %v2006, 10
    %v2358 = vpop.permute.xlu0 %2357
    %2359 = vrot.lane.b32.xlu0 %v2007, 10
    %v2360 = vpop.permute.xlu0 %2359
    %2361 = vrot.lane.b32.xlu0 %v2008, 10
    %v2362 = vpop.permute.xlu0 %2361
    %2363 = vrot.lane.b32.xlu0 %v2009, 10
    %v2364 = vpop.permute.xlu0 %2363
    %2365 = vrot.lane.b32.xlu0 %v2010, 10
    %v2366 = vpop.permute.xlu0 %2365
    %2367 = vrot.lane.b32.xlu0 %v2011, 10
    %v2368 = vpop.permute.xlu0 %2367
    %2369 = vrot.lane.b32.xlu0 %v2012, 10
    %v2370 = vpop.permute.xlu0 %2369
    %2371 = vrot.lane.b32.xlu0 %v2013, 10
    %v2372 = vpop.permute.xlu0 %2371
    %2373 = vrot.lane.b32.xlu0 %v2014, 10
    %v2374 = vpop.permute.xlu0 %2373
    %2375 = vrot.lane.b32.xlu0 %v2015, 10
    %v2376 = vpop.permute.xlu0 %2375
    %2377 = vrot.lane.b32.xlu0 %v2016, 10
    %v2378 = vpop.permute.xlu0 %2377
    %2379 = vrot.lane.b32.xlu0 %v2017, 10
    %v2380 = vpop.permute.xlu0 %2379
    %2453 = vrot.lane.b32.xlu0 %v2018, 20
    %v2454 = vpop.permute.xlu0 %2453
    %2455 = vrot.lane.b32.xlu0 %v2019, 20
    %v2456 = vpop.permute.xlu0 %2455
    %2457 = vrot.lane.b32.xlu0 %v2020, 20
    %v2458 = vpop.permute.xlu0 %2457
    %2459 = vrot.lane.b32.xlu0 %v2021, 20
    %v2460 = vpop.permute.xlu0 %2459
    %2461 = vrot.lane.b32.xlu0 %v2022, 20
    %v2462 = vpop.permute.xlu0 %2461
    %2463 = vrot.lane.b32.xlu0 %v2023, 20
    %v2464 = vpop.permute.xlu0 %2463
    %2465 = vrot.lane.b32.xlu0 %v2024, 20
    %v2466 = vpop.permute.xlu0 %2465
    %2467 = vrot.lane.b32.xlu0 %v2025, 20
    %v2468 = vpop.permute.xlu0 %2467
    %2469 = vrot.lane.b32.xlu0 %v2026, 20
    %v2470 = vpop.permute.xlu0 %2469
    %2471 = vrot.lane.b32.xlu0 %v2027, 20
    %v2472 = vpop.permute.xlu0 %2471
    %2473 = vrot.lane.b32.xlu0 %v2028, 20
    %v2474 = vpop.permute.xlu0 %2473
    %2475 = vrot.lane.b32.xlu0 %v2029, 20
    %v2476 = vpop.permute.xlu0 %2475
    %2477 = vrot.lane.b32.xlu0 %v2030, 20
    %v2478 = vpop.permute.xlu0 %2477
    %2479 = vrot.lane.b32.xlu0 %v2031, 20
    %v2480 = vpop.permute.xlu0 %2479
    %2481 = vrot.lane.b32.xlu0 %v2032, 20
    %v2482 = vpop.permute.xlu0 %2481
    %2483 = vrot.lane.b32.xlu0 %v2033, 20
    %v2484 = vpop.permute.xlu0 %2483
    %2485 = vrot.lane.b32.xlu0 %v2034, 20
    %v2486 = vpop.permute.xlu0 %2485
    %2487 = vrot.lane.b32.xlu0 %v2035, 20
    %v2488 = vpop.permute.xlu0 %2487
    %2489 = vrot.lane.b32.xlu0 %v2036, 20
    %v2490 = vpop.permute.xlu0 %2489
    %2491 = vrot.lane.b32.xlu0 %v2037, 20
    %v2492 = vpop.permute.xlu0 %2491
    %2493 = vrot.lane.b32.xlu0 %v2038, 20
    %v2494 = vpop.permute.xlu0 %2493
    %2495 = vrot.lane.b32.xlu0 %v2039, 20
    %v2496 = vpop.permute.xlu0 %2495
    %2497 = vrot.lane.b32.xlu0 %v2040, 20
    %v2498 = vpop.permute.xlu0 %2497
    %2499 = vrot.lane.b32.xlu0 %v2041, 20
    %v2500 = vpop.permute.xlu0 %2499
    %2501 = vrot.lane.b32.xlu0 %v2042, 20
    %v2502 = vpop.permute.xlu0 %2501
    %2503 = vrot.lane.b32.xlu0 %v2043, 20
    %v2504 = vpop.permute.xlu0 %2503
    %2505 = vrot.lane.b32.xlu0 %v2044, 20
    %v2506 = vpop.permute.xlu0 %2505
    %2507 = vrot.lane.b32.xlu0 %v2045, 20
    %v2508 = vpop.permute.xlu0 %2507
    %2509 = vrot.lane.b32.xlu0 %v2046, 20
    %v2510 = vpop.permute.xlu0 %2509
    %2511 = vrot.lane.b32.xlu0 %v2047, 20
    %v2512 = vpop.permute.xlu0 %2511
    %2513 = vrot.lane.b32.xlu0 %v2048, 20
    %v2514 = vpop.permute.xlu0 %2513
    %2515 = vrot.lane.b32.xlu0 %v2049, 20
    %v2516 = vpop.permute.xlu0 %2515
    %2517 = vrot.lane.b32.xlu0 %v2050, 20
    %v2518 = vpop.permute.xlu0 %2517
    %2519 = vrot.lane.b32.xlu0 %v2051, 20
    %v2520 = vpop.permute.xlu0 %2519
    %2521 = vrot.lane.b32.xlu0 %v2052, 20
    %v2522 = vpop.permute.xlu0 %2521
    %2523 = vrot.lane.b32.xlu0 %v2053, 20
    %v2524 = vpop.permute.xlu0 %2523
    %2597 = vrot.lane.b32.xlu0 %v2054, 30
    %v2598 = vpop.permute.xlu0 %2597
    %2599 = vrot.lane.b32.xlu0 %v2055, 30
    %v2600 = vpop.permute.xlu0 %2599
    %2601 = vrot.lane.b32.xlu0 %v2056, 30
    %v2602 = vpop.permute.xlu0 %2601
    %2603 = vrot.lane.b32.xlu0 %v2057, 30
    %v2604 = vpop.permute.xlu0 %2603
    %2605 = vrot.lane.b32.xlu0 %v2058, 30
    %v2606 = vpop.permute.xlu0 %2605
    %2607 = vrot.lane.b32.xlu0 %v2059, 30
    %v2608 = vpop.permute.xlu0 %2607
    %2609 = vrot.lane.b32.xlu0 %v2060, 30
    %v2610 = vpop.permute.xlu0 %2609
    %2611 = vrot.lane.b32.xlu0 %v2061, 30
    %v2612 = vpop.permute.xlu0 %2611
    %2613 = vrot.lane.b32.xlu0 %v2062, 30
    %v2614 = vpop.permute.xlu0 %2613
    %2615 = vrot.lane.b32.xlu0 %v2063, 30
    %v2616 = vpop.permute.xlu0 %2615
    %2617 = vrot.lane.b32.xlu0 %v2064, 30
    %v2618 = vpop.permute.xlu0 %2617
    %2619 = vrot.lane.b32.xlu0 %v2065, 30
    %v2620 = vpop.permute.xlu0 %2619
    %2621 = vrot.lane.b32.xlu0 %v2066, 30
    %v2622 = vpop.permute.xlu0 %2621
    %2623 = vrot.lane.b32.xlu0 %v2067, 30
    %v2624 = vpop.permute.xlu0 %2623
    %2625 = vrot.lane.b32.xlu0 %v2068, 30
    %v2626 = vpop.permute.xlu0 %2625
    %2627 = vrot.lane.b32.xlu0 %v2069, 30
    %v2628 = vpop.permute.xlu0 %2627
    %2629 = vrot.lane.b32.xlu0 %v2070, 30
    %v2630 = vpop.permute.xlu0 %2629
    %2631 = vrot.lane.b32.xlu0 %v2071, 30
    %v2632 = vpop.permute.xlu0 %2631
    %2633 = vrot.lane.b32.xlu0 %v2072, 30
    %v2634 = vpop.permute.xlu0 %2633
    %2635 = vrot.lane.b32.xlu0 %v2073, 30
    %v2636 = vpop.permute.xlu0 %2635
    %2637 = vrot.lane.b32.xlu0 %v2074, 30
    %v2638 = vpop.permute.xlu0 %2637
    %2639 = vrot.lane.b32.xlu0 %v2075, 30
    %v2640 = vpop.permute.xlu0 %2639
    %2641 = vrot.lane.b32.xlu0 %v2076, 30
    %v2642 = vpop.permute.xlu0 %2641
    %2643 = vrot.lane.b32.xlu0 %v2077, 30
    %v2644 = vpop.permute.xlu0 %2643
    %2645 = vrot.lane.b32.xlu0 %v2078, 30
    %v2646 = vpop.permute.xlu0 %2645
    %2647 = vrot.lane.b32.xlu0 %v2079, 30
    %v2648 = vpop.permute.xlu0 %2647
    %2649 = vrot.lane.b32.xlu0 %v2080, 30
    %v2650 = vpop.permute.xlu0 %2649
    %2651 = vrot.lane.b32.xlu0 %v2081, 30
    %v2652 = vpop.permute.xlu0 %2651
    %2653 = vrot.lane.b32.xlu0 %v2082, 30
    %v2654 = vpop.permute.xlu0 %2653
    %2655 = vrot.lane.b32.xlu0 %v2083, 30
    %v2656 = vpop.permute.xlu0 %2655
    %2657 = vrot.lane.b32.xlu0 %v2084, 30
    %v2658 = vpop.permute.xlu0 %2657
    %2659 = vrot.lane.b32.xlu0 %v2085, 30
    %v2660 = vpop.permute.xlu0 %2659
    %2661 = vrot.lane.b32.xlu0 %v2086, 30
    %v2662 = vpop.permute.xlu0 %2661
    %2663 = vrot.lane.b32.xlu0 %v2087, 30
    %v2664 = vpop.permute.xlu0 %2663
    %2665 = vrot.lane.b32.xlu0 %v2088, 30
    %v2666 = vpop.permute.xlu0 %2665
    %2667 = vrot.lane.b32.xlu0 %v2089, 30
    %v2668 = vpop.permute.xlu0 %2667
    %2741 = vrot.lane.b32.xlu0 %v2090, 40
    %v2742 = vpop.permute.xlu0 %2741
    %2743 = vrot.lane.b32.xlu0 %v2091, 40
    %v2744 = vpop.permute.xlu0 %2743
    %2745 = vrot.lane.b32.xlu0 %v2092, 40
    %v2746 = vpop.permute.xlu0 %2745
    %2747 = vrot.lane.b32.xlu0 %v2093, 40
    %v2748 = vpop.permute.xlu0 %2747
    %2749 = vrot.lane.b32.xlu0 %v2094, 40
    %v2750 = vpop.permute.xlu0 %2749
    %2751 = vrot.lane.b32.xlu0 %v2095, 40
    %v2752 = vpop.permute.xlu0 %2751
    %2753 = vrot.lane.b32.xlu0 %v2096, 40
    %v2754 = vpop.permute.xlu0 %2753
    %2755 = vrot.lane.b32.xlu0 %v2097, 40
    %v2756 = vpop.permute.xlu0 %2755
    %2757 = vrot.lane.b32.xlu0 %v2098, 40
    %v2758 = vpop.permute.xlu0 %2757
    %2759 = vrot.lane.b32.xlu0 %v2099, 40
    %v2760 = vpop.permute.xlu0 %2759
    %2761 = vrot.lane.b32.xlu0 %v2100, 40
    %v2762 = vpop.permute.xlu0 %2761
    %2763 = vrot.lane.b32.xlu0 %v2101, 40
    %v2764 = vpop.permute.xlu0 %2763
    %2765 = vrot.lane.b32.xlu0 %v2102, 40
    %v2766 = vpop.permute.xlu0 %2765
    %2767 = vrot.lane.b32.xlu0 %v2103, 40
    %v2768 = vpop.permute.xlu0 %2767
    %2769 = vrot.lane.b32.xlu0 %v2104, 40
    %v2770 = vpop.permute.xlu0 %2769
    %2771 = vrot.lane.b32.xlu0 %v2105, 40
    %v2772 = vpop.permute.xlu0 %2771
    %2773 = vrot.lane.b32.xlu0 %v2106, 40
    %v2774 = vpop.permute.xlu0 %2773
    %2775 = vrot.lane.b32.xlu0 %v2107, 40
    %v2776 = vpop.permute.xlu0 %2775
    %2777 = vrot.lane.b32.xlu0 %v2108, 40
    %v2778 = vpop.permute.xlu0 %2777
    %2779 = vrot.lane.b32.xlu0 %v2109, 40
    %v2780 = vpop.permute.xlu0 %2779
    %2781 = vrot.lane.b32.xlu0 %v2110, 40
    %v2782 = vpop.permute.xlu0 %2781
    %2783 = vrot.lane.b32.xlu0 %v2111, 40
    %v2784 = vpop.permute.xlu0 %2783
    %2785 = vrot.lane.b32.xlu0 %v2112, 40
    %v2786 = vpop.permute.xlu0 %2785
    %2787 = vrot.lane.b32.xlu0 %v2113, 40
    %v2788 = vpop.permute.xlu0 %2787
    %2789 = vrot.lane.b32.xlu0 %v2114, 40
    %v2790 = vpop.permute.xlu0 %2789
    %2791 = vrot.lane.b32.xlu0 %v2115, 40
    %v2792 = vpop.permute.xlu0 %2791
    %2793 = vrot.lane.b32.xlu0 %v2116, 40
    %v2794 = vpop.permute.xlu0 %2793
    %2795 = vrot.lane.b32.xlu0 %v2117, 40
    %v2796 = vpop.permute.xlu0 %2795
    %2797 = vrot.lane.b32.xlu0 %v2118, 40
    %v2798 = vpop.permute.xlu0 %2797
    %2799 = vrot.lane.b32.xlu0 %v2119, 40
    %v2800 = vpop.permute.xlu0 %2799
    %2801 = vrot.lane.b32.xlu0 %v2120, 40
    %v2802 = vpop.permute.xlu0 %2801
    %2803 = vrot.lane.b32.xlu0 %v2121, 40
    %v2804 = vpop.permute.xlu0 %2803
    %2805 = vrot.lane.b32.xlu0 %v2122, 40
    %v2806 = vpop.permute.xlu0 %2805
    %2807 = vrot.lane.b32.xlu0 %v2123, 40
    %v2808 = vpop.permute.xlu0 %2807
    %2809 = vrot.lane.b32.xlu0 %v2124, 40
    %v2810 = vpop.permute.xlu0 %2809
    %2811 = vrot.lane.b32.xlu0 %v2125, 40
    %v2812 = vpop.permute.xlu0 %2811
    %2850 = vrot.lane.b32.xlu0 %v2091, 50
    %v2851 = vpop.permute.xlu0 %2850
    %2852 = vrot.lane.b32.xlu0 %v2092, 50
    %v2853 = vpop.permute.xlu0 %2852
    %2854 = vrot.lane.b32.xlu0 %v2093, 50
    %v2855 = vpop.permute.xlu0 %2854
    %2856 = vrot.lane.b32.xlu0 %v2094, 50
    %v2857 = vpop.permute.xlu0 %2856
    %2858 = vrot.lane.b32.xlu0 %v2095, 50
    %v2859 = vpop.permute.xlu0 %2858
    %2860 = vrot.lane.b32.xlu0 %v2096, 50
    %v2861 = vpop.permute.xlu0 %2860
    %2862 = vrot.lane.b32.xlu0 %v2097, 50
    %v2863 = vpop.permute.xlu0 %2862
    %2864 = vrot.lane.b32.xlu0 %v2098, 50
    %v2865 = vpop.permute.xlu0 %2864
    %2866 = vrot.lane.b32.xlu0 %v2099, 50
    %v2867 = vpop.permute.xlu0 %2866
    %2868 = vrot.lane.b32.xlu0 %v2100, 50
    %v2869 = vpop.permute.xlu0 %2868
    %2870 = vrot.lane.b32.xlu0 %v2101, 50
    %v2871 = vpop.permute.xlu0 %2870
    %2872 = vrot.lane.b32.xlu0 %v2102, 50
    %v2873 = vpop.permute.xlu0 %2872
    %2874 = vrot.lane.b32.xlu0 %v2103, 50
    %v2875 = vpop.permute.xlu0 %2874
    %2876 = vrot.lane.b32.xlu0 %v2104, 50
    %v2877 = vpop.permute.xlu0 %2876
    %2878 = vrot.lane.b32.xlu0 %v2105, 50
    %v2879 = vpop.permute.xlu0 %2878
    %2880 = vrot.lane.b32.xlu0 %v2106, 50
    %v2881 = vpop.permute.xlu0 %2880
    %2882 = vrot.lane.b32.xlu0 %v2107, 50
    %v2883 = vpop.permute.xlu0 %2882
    %2884 = vrot.lane.b32.xlu0 %v2108, 50
    %v2885 = vpop.permute.xlu0 %2884
    %2886 = vrot.lane.b32.xlu0 %v2109, 50
    %v2887 = vpop.permute.xlu0 %2886
    %2888 = vrot.lane.b32.xlu0 %v2110, 50
    %v2889 = vpop.permute.xlu0 %2888
    %2890 = vrot.lane.b32.xlu0 %v2111, 50
    %v2891 = vpop.permute.xlu0 %2890
    %2892 = vrot.lane.b32.xlu0 %v2112, 50
    %v2893 = vpop.permute.xlu0 %2892
    %2894 = vrot.lane.b32.xlu0 %v2113, 50
    %v2895 = vpop.permute.xlu0 %2894
    %2896 = vrot.lane.b32.xlu0 %v2114, 50
    %v2897 = vpop.permute.xlu0 %2896
    %2898 = vrot.lane.b32.xlu0 %v2115, 50
    %v2899 = vpop.permute.xlu0 %2898
    %2900 = vrot.lane.b32.xlu0 %v2116, 50
    %v2901 = vpop.permute.xlu0 %2900
    %2902 = vrot.lane.b32.xlu0 %v2117, 50
    %v2903 = vpop.permute.xlu0 %2902
    %2904 = vrot.lane.b32.xlu0 %v2118, 50
    %v2905 = vpop.permute.xlu0 %2904
    %2906 = vrot.lane.b32.xlu0 %v2119, 50
    %v2907 = vpop.permute.xlu0 %2906
    %2908 = vrot.lane.b32.xlu0 %v2120, 50
    %v2909 = vpop.permute.xlu0 %2908
    %2910 = vrot.lane.b32.xlu0 %v2121, 50
    %v2911 = vpop.permute.xlu0 %2910
    %2912 = vrot.lane.b32.xlu0 %v2122, 50
    %v2913 = vpop.permute.xlu0 %2912
    %2914 = vrot.lane.b32.xlu0 %v2123, 50
    %v2915 = vpop.permute.xlu0 %2914
    %2916 = vrot.lane.b32.xlu0 %v2124, 50
    %v2917 = vpop.permute.xlu0 %2916
    %2918 = vrot.lane.b32.xlu0 %v2125, 50
    %v2919 = vpop.permute.xlu0 %2918
    %2920 = vrot.lane.b32.xlu0 %v2126, 50
    %v2921 = vpop.permute.xlu0 %2920
    %2994 = vrot.lane.b32.xlu0 %v2127, 60
    %v2995 = vpop.permute.xlu0 %2994
    %2996 = vrot.lane.b32.xlu0 %v2128, 60
    %v2997 = vpop.permute.xlu0 %2996
    %2998 = vrot.lane.b32.xlu0 %v2129, 60
    %v2999 = vpop.permute.xlu0 %2998
    %3000 = vrot.lane.b32.xlu0 %v2130, 60
    %v3001 = vpop.permute.xlu0 %3000
    %3002 = vrot.lane.b32.xlu0 %v2131, 60
    %v3003 = vpop.permute.xlu0 %3002
    %3004 = vrot.lane.b32.xlu0 %v2132, 60
    %v3005 = vpop.permute.xlu0 %3004
    %3006 = vrot.lane.b32.xlu0 %v2133, 60
    %v3007 = vpop.permute.xlu0 %3006
    %3008 = vrot.lane.b32.xlu0 %v2134, 60
    %v3009 = vpop.permute.xlu0 %3008
    %3010 = vrot.lane.b32.xlu0 %v2135, 60
    %v3011 = vpop.permute.xlu0 %3010
    %3012 = vrot.lane.b32.xlu0 %v2136, 60
    %v3013 = vpop.permute.xlu0 %3012
    %3014 = vrot.lane.b32.xlu0 %v2137, 60
    %v3015 = vpop.permute.xlu0 %3014
    %3016 = vrot.lane.b32.xlu0 %v2138, 60
    %v3017 = vpop.permute.xlu0 %3016
    %3018 = vrot.lane.b32.xlu0 %v2139, 60
    %v3019 = vpop.permute.xlu0 %3018
    %3020 = vrot.lane.b32.xlu0 %v2140, 60
    %v3021 = vpop.permute.xlu0 %3020
    %3022 = vrot.lane.b32.xlu0 %v2141, 60
    %v3023 = vpop.permute.xlu0 %3022
    %3024 = vrot.lane.b32.xlu0 %v2142, 60
    %v3025 = vpop.permute.xlu0 %3024
    %3026 = vrot.lane.b32.xlu0 %v2143, 60
    %v3027 = vpop.permute.xlu0 %3026
    %3028 = vrot.lane.b32.xlu0 %v2144, 60
    %v3029 = vpop.permute.xlu0 %3028
    %3030 = vrot.lane.b32.xlu0 %v2145, 60
    %v3031 = vpop.permute.xlu0 %3030
    %3032 = vrot.lane.b32.xlu0 %v2146, 60
    %v3033 = vpop.permute.xlu0 %3032
    %3034 = vrot.lane.b32.xlu0 %v2147, 60
    %v3035 = vpop.permute.xlu0 %3034
    %3036 = vrot.lane.b32.xlu0 %v2148, 60
    %v3037 = vpop.permute.xlu0 %3036
    %3038 = vrot.lane.b32.xlu0 %v2149, 60
    %v3039 = vpop.permute.xlu0 %3038
    %3040 = vrot.lane.b32.xlu0 %v2150, 60
    %v3041 = vpop.permute.xlu0 %3040
    %3042 = vrot.lane.b32.xlu0 %v2151, 60
    %v3043 = vpop.permute.xlu0 %3042
    %3044 = vrot.lane.b32.xlu0 %v2152, 60
    %v3045 = vpop.permute.xlu0 %3044
    %3046 = vrot.lane.b32.xlu0 %v2153, 60
    %v3047 = vpop.permute.xlu0 %3046
    %3048 = vrot.lane.b32.xlu0 %v2154, 60
    %v3049 = vpop.permute.xlu0 %3048
    %3050 = vrot.lane.b32.xlu0 %v2155, 60
    %v3051 = vpop.permute.xlu0 %3050
    %3052 = vrot.lane.b32.xlu0 %v2156, 60
    %v3053 = vpop.permute.xlu0 %3052
    %3054 = vrot.lane.b32.xlu0 %v2157, 60
    %v3055 = vpop.permute.xlu0 %3054
    %3056 = vrot.lane.b32.xlu0 %v2158, 60
    %v3057 = vpop.permute.xlu0 %3056
    %3058 = vrot.lane.b32.xlu0 %v2159, 60
    %v3059 = vpop.permute.xlu0 %3058
    %3060 = vrot.lane.b32.xlu0 %v2160, 60
    %v3061 = vpop.permute.xlu0 %3060
    %3062 = vrot.lane.b32.xlu0 %v2161, 60
    %v3063 = vpop.permute.xlu0 %3062
    %3064 = vrot.lane.b32.xlu0 %v2162, 60
    %v3065 = vpop.permute.xlu0 %3064
    %3138 = vrot.lane.b32.xlu0 %v2163, 70
    %v3139 = vpop.permute.xlu0 %3138
    %3140 = vrot.lane.b32.xlu0 %v2164, 70
    %v3141 = vpop.permute.xlu0 %3140
    %3142 = vrot.lane.b32.xlu0 %v2165, 70
    %v3143 = vpop.permute.xlu0 %3142
    %3144 = vrot.lane.b32.xlu0 %v2166, 70
    %v3145 = vpop.permute.xlu0 %3144
    %3146 = vrot.lane.b32.xlu0 %v2167, 70
    %v3147 = vpop.permute.xlu0 %3146
    %3148 = vrot.lane.b32.xlu0 %v2168, 70
    %v3149 = vpop.permute.xlu0 %3148
    %3150 = vrot.lane.b32.xlu0 %v2169, 70
    %v3151 = vpop.permute.xlu0 %3150
    %3152 = vrot.lane.b32.xlu0 %v2170, 70
    %v3153 = vpop.permute.xlu0 %3152
    %3154 = vrot.lane.b32.xlu0 %v2171, 70
    %v3155 = vpop.permute.xlu0 %3154
    %3156 = vrot.lane.b32.xlu0 %v2172, 70
    %v3157 = vpop.permute.xlu0 %3156
    %3158 = vrot.lane.b32.xlu0 %v2173, 70
    %v3159 = vpop.permute.xlu0 %3158
    %3160 = vrot.lane.b32.xlu0 %v2174, 70
    %v3161 = vpop.permute.xlu0 %3160
    %3162 = vrot.lane.b32.xlu0 %v2175, 70
    %v3163 = vpop.permute.xlu0 %3162
    %3164 = vrot.lane.b32.xlu0 %v2176, 70
    %v3165 = vpop.permute.xlu0 %3164
    %3166 = vrot.lane.b32.xlu0 %v2177, 70
    %v3167 = vpop.permute.xlu0 %3166
    %3168 = vrot.lane.b32.xlu0 %v2178, 70
    %v3169 = vpop.permute.xlu0 %3168
    %3170 = vrot.lane.b32.xlu0 %v2179, 70
    %v3171 = vpop.permute.xlu0 %3170
    %3172 = vrot.lane.b32.xlu0 %v2180, 70
    %v3173 = vpop.permute.xlu0 %3172
    %3174 = vrot.lane.b32.xlu0 %v2181, 70
    %v3175 = vpop.permute.xlu0 %3174
    %3176 = vrot.lane.b32.xlu0 %v2182, 70
    %v3177 = vpop.permute.xlu0 %3176
    %3178 = vrot.lane.b32.xlu0 %v2183, 70
    %v3179 = vpop.permute.xlu0 %3178
    %3180 = vrot.lane.b32.xlu0 %v2184, 70
    %v3181 = vpop.permute.xlu0 %3180
    %3182 = vrot.lane.b32.xlu0 %v2185, 70
    %v3183 = vpop.permute.xlu0 %3182
    %3184 = vrot.lane.b32.xlu0 %v2186, 70
    %v3185 = vpop.permute.xlu0 %3184
    %3186 = vrot.lane.b32.xlu0 %v2187, 70
    %v3187 = vpop.permute.xlu0 %3186
    %3188 = vrot.lane.b32.xlu0 %v2188, 70
    %v3189 = vpop.permute.xlu0 %3188
    %3190 = vrot.lane.b32.xlu0 %v2189, 70
    %v3191 = vpop.permute.xlu0 %3190
    %3192 = vrot.lane.b32.xlu0 %v2190, 70
    %v3193 = vpop.permute.xlu0 %3192
    %3194 = vrot.lane.b32.xlu0 %v2191, 70
    %v3195 = vpop.permute.xlu0 %3194
    %3196 = vrot.lane.b32.xlu0 %v2192, 70
    %v3197 = vpop.permute.xlu0 %3196
    %3198 = vrot.lane.b32.xlu0 %v2193, 70
    %v3199 = vpop.permute.xlu0 %3198
    %3200 = vrot.lane.b32.xlu0 %v2194, 70
    %v3201 = vpop.permute.xlu0 %3200
    %3202 = vrot.lane.b32.xlu0 %v2195, 70
    %v3203 = vpop.permute.xlu0 %3202
    %3204 = vrot.lane.b32.xlu0 %v2196, 70
    %v3205 = vpop.permute.xlu0 %3204
    %3206 = vrot.lane.b32.xlu0 %v2197, 70
    %v3207 = vpop.permute.xlu0 %3206
    %3208 = vrot.lane.b32.xlu0 %v2198, 70
    %v3209 = vpop.permute.xlu0 %3208
    %3282 = vrot.lane.b32.xlu0 %v2199, 80
    %v3283 = vpop.permute.xlu0 %3282
    %3284 = vrot.lane.b32.xlu0 %v2200, 80
    %v3285 = vpop.permute.xlu0 %3284
    %3286 = vrot.lane.b32.xlu0 %v2201, 80
    %v3287 = vpop.permute.xlu0 %3286
    %3288 = vrot.lane.b32.xlu0 %v2202, 80
    %v3289 = vpop.permute.xlu0 %3288
    %3290 = vrot.lane.b32.xlu0 %v2203, 80
    %v3291 = vpop.permute.xlu0 %3290
    %3292 = vrot.lane.b32.xlu0 %v2204, 80
    %v3293 = vpop.permute.xlu0 %3292
    %3294 = vrot.lane.b32.xlu0 %v2205, 80
    %v3295 = vpop.permute.xlu0 %3294
    %3296 = vrot.lane.b32.xlu0 %v2206, 80
    %v3297 = vpop.permute.xlu0 %3296
    %3298 = vrot.lane.b32.xlu0 %v2207, 80
    %v3299 = vpop.permute.xlu0 %3298
    %3300 = vrot.lane.b32.xlu0 %v2208, 80
    %v3301 = vpop.permute.xlu0 %3300
    %3302 = vrot.lane.b32.xlu0 %v2209, 80
    %v3303 = vpop.permute.xlu0 %3302
    %3304 = vrot.lane.b32.xlu0 %v2210, 80
    %v3305 = vpop.permute.xlu0 %3304
    %3306 = vrot.lane.b32.xlu0 %v2211, 80
    %v3307 = vpop.permute.xlu0 %3306
    %3308 = vrot.lane.b32.xlu0 %v2212, 80
    %v3309 = vpop.permute.xlu0 %3308
    %3310 = vrot.lane.b32.xlu0 %v2213, 80
    %v3311 = vpop.permute.xlu0 %3310
    %3312 = vrot.lane.b32.xlu0 %v2214, 80
    %v3313 = vpop.permute.xlu0 %3312
    %3314 = vrot.lane.b32.xlu0 %v2215, 80
    %v3315 = vpop.permute.xlu0 %3314
    %3316 = vrot.lane.b32.xlu0 %v2216, 80
    %v3317 = vpop.permute.xlu0 %3316
    %3318 = vrot.lane.b32.xlu0 %v2217, 80
    %v3319 = vpop.permute.xlu0 %3318
    %3320 = vrot.lane.b32.xlu0 %v2218, 80
    %v3321 = vpop.permute.xlu0 %3320
    %3322 = vrot.lane.b32.xlu0 %v2219, 80
    %v3323 = vpop.permute.xlu0 %3322
    %3324 = vrot.lane.b32.xlu0 %v2220, 80
    %v3325 = vpop.permute.xlu0 %3324
    %3326 = vrot.lane.b32.xlu0 %v2221, 80
    %v3327 = vpop.permute.xlu0 %3326
    %3328 = vrot.lane.b32.xlu0 %v2222, 80
    %v3329 = vpop.permute.xlu0 %3328
    %3330 = vrot.lane.b32.xlu0 %v2223, 80
    %v3331 = vpop.permute.xlu0 %3330
    %3332 = vrot.lane.b32.xlu0 %v2224, 80
    %v3333 = vpop.permute.xlu0 %3332
    %3334 = vrot.lane.b32.xlu0 %v2225, 80
    %v3335 = vpop.permute.xlu0 %3334
    %3336 = vrot.lane.b32.xlu0 %v2226, 80
    %v3337 = vpop.permute.xlu0 %3336
    %3338 = vrot.lane.b32.xlu0 %v2227, 80
    %v3339 = vpop.permute.xlu0 %3338
    %3340 = vrot.lane.b32.xlu0 %v2228, 80
    %v3341 = vpop.permute.xlu0 %3340
    %3342 = vrot.lane.b32.xlu0 %v2229, 80
    %v3343 = vpop.permute.xlu0 %3342
    %3344 = vrot.lane.b32.xlu0 %v2230, 80
    %v3345 = vpop.permute.xlu0 %3344
    %3346 = vrot.lane.b32.xlu0 %v2231, 80
    %v3347 = vpop.permute.xlu0 %3346
    %3348 = vrot.lane.b32.xlu0 %v2232, 80
    %v3349 = vpop.permute.xlu0 %3348
    %3350 = vrot.lane.b32.xlu0 %v2233, 80
    %v3351 = vpop.permute.xlu0 %3350
    %3352 = vrot.lane.b32.xlu0 %v2234, 80
    %v3353 = vpop.permute.xlu0 %3352
    %3426 = vrot.lane.b32.xlu0 %v1948, 90
    %v3427 = vpop.permute.xlu0 %3426
    %3428 = vrot.lane.b32.xlu0 %v1949, 90
    %v3429 = vpop.permute.xlu0 %3428
    %3430 = vrot.lane.b32.xlu0 %v1950, 90
    %v3431 = vpop.permute.xlu0 %3430
    %3432 = vrot.lane.b32.xlu0 %v1951, 90
    %v3433 = vpop.permute.xlu0 %3432
    %3434 = vrot.lane.b32.xlu0 %v1952, 90
    %v3435 = vpop.permute.xlu0 %3434
    %3436 = vrot.lane.b32.xlu0 %v1953, 90
    %v3437 = vpop.permute.xlu0 %3436
    %3438 = vrot.lane.b32.xlu0 %v1954, 90
    %v3439 = vpop.permute.xlu0 %3438
    %3440 = vrot.lane.b32.xlu0 %v1955, 90
    %v3441 = vpop.permute.xlu0 %3440
    %3442 = vrot.lane.b32.xlu0 %v1956, 90
    %v3443 = vpop.permute.xlu0 %3442
    %3444 = vrot.lane.b32.xlu0 %v1957, 90
    %v3445 = vpop.permute.xlu0 %3444
    %3446 = vrot.lane.b32.xlu0 %v1958, 90
    %v3447 = vpop.permute.xlu0 %3446
    %3448 = vrot.lane.b32.xlu0 %v1959, 90
    %v3449 = vpop.permute.xlu0 %3448
    %3450 = vrot.lane.b32.xlu0 %v1960, 90
    %v3451 = vpop.permute.xlu0 %3450
    %3452 = vrot.lane.b32.xlu0 %v1961, 90
    %v3453 = vpop.permute.xlu0 %3452
    %3454 = vrot.lane.b32.xlu0 %v1962, 90
    %v3455 = vpop.permute.xlu0 %3454
    %3456 = vrot.lane.b32.xlu0 %v1963, 90
    %v3457 = vpop.permute.xlu0 %3456
    %3458 = vrot.lane.b32.xlu0 %v1964, 90
    %v3459 = vpop.permute.xlu0 %3458
    %3460 = vrot.lane.b32.xlu0 %v1965, 90
    %v3461 = vpop.permute.xlu0 %3460
    %3462 = vrot.lane.b32.xlu0 %v1966, 90
    %v3463 = vpop.permute.xlu0 %3462
    %3464 = vrot.lane.b32.xlu0 %v1967, 90
    %v3465 = vpop.permute.xlu0 %3464
    %3466 = vrot.lane.b32.xlu0 %v1968, 90
    %v3467 = vpop.permute.xlu0 %3466
    %3468 = vrot.lane.b32.xlu0 %v1969, 90
    %v3469 = vpop.permute.xlu0 %3468
    %3470 = vrot.lane.b32.xlu0 %v1970, 90
    %v3471 = vpop.permute.xlu0 %3470
    %3472 = vrot.lane.b32.xlu0 %v1971, 90
    %v3473 = vpop.permute.xlu0 %3472
    %3474 = vrot.lane.b32.xlu0 %v1972, 90
    %v3475 = vpop.permute.xlu0 %3474
    %3476 = vrot.lane.b32.xlu0 %v1973, 90
    %v3477 = vpop.permute.xlu0 %3476
    %3478 = vrot.lane.b32.xlu0 %v1974, 90
    %v3479 = vpop.permute.xlu0 %3478
    %3480 = vrot.lane.b32.xlu0 %v1975, 90
    %v3481 = vpop.permute.xlu0 %3480
    %3482 = vrot.lane.b32.xlu0 %v1976, 90
    %v3483 = vpop.permute.xlu0 %3482
    %3484 = vrot.lane.b32.xlu0 %v1977, 90
    %v3485 = vpop.permute.xlu0 %3484
    %3486 = vrot.lane.b32.xlu0 %v1978, 90
    %v3487 = vpop.permute.xlu0 %3486
    %3488 = vrot.lane.b32.xlu0 %v1979, 90
    %v3489 = vpop.permute.xlu0 %3488
    %3490 = vrot.lane.b32.xlu0 %v1980, 90
    %v3491 = vpop.permute.xlu0 %3490
    %3492 = vrot.lane.b32.xlu0 %v1981, 90
    %v3493 = vpop.permute.xlu0 %3492
    %3494 = vrot.lane.b32.xlu0 %v2235, 90
    %v3495 = vpop.permute.xlu0 %3494
    %3496 = vrot.lane.b32.xlu0 %v2236, 90
    %v3497 = vpop.permute.xlu0 %3496
    %3535 = vrot.lane.b32.xlu0 %v1949, 100
    %v3536 = vpop.permute.xlu0 %3535
    %3537 = vrot.lane.b32.xlu0 %v1950, 100
    %v3538 = vpop.permute.xlu0 %3537
    %3539 = vrot.lane.b32.xlu0 %v1951, 100
    %v3540 = vpop.permute.xlu0 %3539
    %3541 = vrot.lane.b32.xlu0 %v1952, 100
    %v3542 = vpop.permute.xlu0 %3541
    %3543 = vrot.lane.b32.xlu0 %v1953, 100
    %v3544 = vpop.permute.xlu0 %3543
    %3545 = vrot.lane.b32.xlu0 %v1954, 100
    %v3546 = vpop.permute.xlu0 %3545
    %3547 = vrot.lane.b32.xlu0 %v1955, 100
    %v3548 = vpop.permute.xlu0 %3547
    %3549 = vrot.lane.b32.xlu0 %v1956, 100
    %v3550 = vpop.permute.xlu0 %3549
    %3551 = vrot.lane.b32.xlu0 %v1957, 100
    %v3552 = vpop.permute.xlu0 %3551
    %3553 = vrot.lane.b32.xlu0 %v1958, 100
    %v3554 = vpop.permute.xlu0 %3553
    %3555 = vrot.lane.b32.xlu0 %v1959, 100
    %v3556 = vpop.permute.xlu0 %3555
    %3557 = vrot.lane.b32.xlu0 %v1960, 100
    %v3558 = vpop.permute.xlu0 %3557
    %3559 = vrot.lane.b32.xlu0 %v1961, 100
    %v3560 = vpop.permute.xlu0 %3559
    %3561 = vrot.lane.b32.xlu0 %v1962, 100
    %v3562 = vpop.permute.xlu0 %3561
    %3563 = vrot.lane.b32.xlu0 %v1963, 100
    %v3564 = vpop.permute.xlu0 %3563
    %3565 = vrot.lane.b32.xlu0 %v1964, 100
    %v3566 = vpop.permute.xlu0 %3565
    %3567 = vrot.lane.b32.xlu0 %v1965, 100
    %v3568 = vpop.permute.xlu0 %3567
    %3569 = vrot.lane.b32.xlu0 %v1966, 100
    %v3570 = vpop.permute.xlu0 %3569
    %3571 = vrot.lane.b32.xlu0 %v1967, 100
    %v3572 = vpop.permute.xlu0 %3571
    %3573 = vrot.lane.b32.xlu0 %v1968, 100
    %v3574 = vpop.permute.xlu0 %3573
    %3575 = vrot.lane.b32.xlu0 %v1969, 100
    %v3576 = vpop.permute.xlu0 %3575
    %3577 = vrot.lane.b32.xlu0 %v1970, 100
    %v3578 = vpop.permute.xlu0 %3577
    %3579 = vrot.lane.b32.xlu0 %v1971, 100
    %v3580 = vpop.permute.xlu0 %3579
    %3581 = vrot.lane.b32.xlu0 %v1972, 100
    %v3582 = vpop.permute.xlu0 %3581
    %3583 = vrot.lane.b32.xlu0 %v1973, 100
    %v3584 = vpop.permute.xlu0 %3583
    %3585 = vrot.lane.b32.xlu0 %v1974, 100
    %v3586 = vpop.permute.xlu0 %3585
    %3587 = vrot.lane.b32.xlu0 %v1975, 100
    %v3588 = vpop.permute.xlu0 %3587
    %3589 = vrot.lane.b32.xlu0 %v1976, 100
    %v3590 = vpop.permute.xlu0 %3589
    %3591 = vrot.lane.b32.xlu0 %v1977, 100
    %v3592 = vpop.permute.xlu0 %3591
    %3593 = vrot.lane.b32.xlu0 %v1978, 100
    %v3594 = vpop.permute.xlu0 %3593
    %3595 = vrot.lane.b32.xlu0 %v1979, 100
    %v3596 = vpop.permute.xlu0 %3595
    %3597 = vrot.lane.b32.xlu0 %v1980, 100
    %v3598 = vpop.permute.xlu0 %3597
    %3599 = vrot.lane.b32.xlu0 %v1981, 100
    %v3600 = vpop.permute.xlu0 %3599
    %3601 = vrot.lane.b32.xlu0 %v2235, 100
    %v3602 = vpop.permute.xlu0 %3601
    %3603 = vrot.lane.b32.xlu0 %v2236, 100
    %v3604 = vpop.permute.xlu0 %3603
    %3605 = vrot.lane.b32.xlu0 %v2237, 100
    %v3606 = vpop.permute.xlu0 %3605
    %3646 = vrot.lane.b32.xlu0 %v1985, 110
    %v3647 = vpop.permute.xlu0 %3646
    %3648 = vrot.lane.b32.xlu0 %v1986, 110
    %v3649 = vpop.permute.xlu0 %3648
    %3650 = vrot.lane.b32.xlu0 %v1987, 110
    %v3651 = vpop.permute.xlu0 %3650
    %3652 = vrot.lane.b32.xlu0 %v1988, 110
    %v3653 = vpop.permute.xlu0 %3652
    %3654 = vrot.lane.b32.xlu0 %v1989, 110
    %v3655 = vpop.permute.xlu0 %3654
    %3656 = vrot.lane.b32.xlu0 %v1990, 110
    %v3657 = vpop.permute.xlu0 %3656
    %3658 = vrot.lane.b32.xlu0 %v1991, 110
    %v3659 = vpop.permute.xlu0 %3658
    %3660 = vrot.lane.b32.xlu0 %v1992, 110
    %v3661 = vpop.permute.xlu0 %3660
    %3662 = vrot.lane.b32.xlu0 %v1993, 110
    %v3663 = vpop.permute.xlu0 %3662
    %3664 = vrot.lane.b32.xlu0 %v1994, 110
    %v3665 = vpop.permute.xlu0 %3664
    %3666 = vrot.lane.b32.xlu0 %v1995, 110
    %v3667 = vpop.permute.xlu0 %3666
    %3668 = vrot.lane.b32.xlu0 %v1996, 110
    %v3669 = vpop.permute.xlu0 %3668
    %3670 = vrot.lane.b32.xlu0 %v1997, 110
    %v3671 = vpop.permute.xlu0 %3670
    %3672 = vrot.lane.b32.xlu0 %v1998, 110
    %v3673 = vpop.permute.xlu0 %3672
    %3674 = vrot.lane.b32.xlu0 %v1999, 110
    %v3675 = vpop.permute.xlu0 %3674
    %3676 = vrot.lane.b32.xlu0 %v2000, 110
    %v3677 = vpop.permute.xlu0 %3676
    %3678 = vrot.lane.b32.xlu0 %v2001, 110
    %v3679 = vpop.permute.xlu0 %3678
    %3680 = vrot.lane.b32.xlu0 %v2002, 110
    %v3681 = vpop.permute.xlu0 %3680
    %3682 = vrot.lane.b32.xlu0 %v2003, 110
    %v3683 = vpop.permute.xlu0 %3682
    %3684 = vrot.lane.b32.xlu0 %v2004, 110
    %v3685 = vpop.permute.xlu0 %3684
    %3686 = vrot.lane.b32.xlu0 %v2005, 110
    %v3687 = vpop.permute.xlu0 %3686
    %3688 = vrot.lane.b32.xlu0 %v2006, 110
    %v3689 = vpop.permute.xlu0 %3688
    %3690 = vrot.lane.b32.xlu0 %v2007, 110
    %v3691 = vpop.permute.xlu0 %3690
    %3692 = vrot.lane.b32.xlu0 %v2008, 110
    %v3693 = vpop.permute.xlu0 %3692
    %3694 = vrot.lane.b32.xlu0 %v2009, 110
    %v3695 = vpop.permute.xlu0 %3694
    %3696 = vrot.lane.b32.xlu0 %v2010, 110
    %v3697 = vpop.permute.xlu0 %3696
    %3698 = vrot.lane.b32.xlu0 %v2011, 110
    %v3699 = vpop.permute.xlu0 %3698
    %3700 = vrot.lane.b32.xlu0 %v2012, 110
    %v3701 = vpop.permute.xlu0 %3700
    %3702 = vrot.lane.b32.xlu0 %v2013, 110
    %v3703 = vpop.permute.xlu0 %3702
    %3704 = vrot.lane.b32.xlu0 %v2014, 110
    %v3705 = vpop.permute.xlu0 %3704
    %3706 = vrot.lane.b32.xlu0 %v2015, 110
    %v3707 = vpop.permute.xlu0 %3706
    %3708 = vrot.lane.b32.xlu0 %v2016, 110
    %v3709 = vpop.permute.xlu0 %3708
    %3710 = vrot.lane.b32.xlu0 %v2017, 110
    %v3711 = vpop.permute.xlu0 %3710
    %3712 = vrot.lane.b32.xlu0 %v2238, 110
    %v3713 = vpop.permute.xlu0 %3712
    %3714 = vrot.lane.b32.xlu0 %v2239, 110
    %v3715 = vpop.permute.xlu0 %3714
    %3716 = vrot.lane.b32.xlu0 %v2240, 110
    %v3717 = vpop.permute.xlu0 %3716
    %3757 = vrot.lane.b32.xlu0 %v2021, 120
    %v3758 = vpop.permute.xlu0 %3757
    %3759 = vrot.lane.b32.xlu0 %v2022, 120
    %v3760 = vpop.permute.xlu0 %3759
    %3761 = vrot.lane.b32.xlu0 %v2023, 120
    %v3762 = vpop.permute.xlu0 %3761
    %3763 = vrot.lane.b32.xlu0 %v2024, 120
    %v3764 = vpop.permute.xlu0 %3763
    %3765 = vrot.lane.b32.xlu0 %v2025, 120
    %v3766 = vpop.permute.xlu0 %3765
    %3767 = vrot.lane.b32.xlu0 %v2026, 120
    %v3768 = vpop.permute.xlu0 %3767
    %3769 = vrot.lane.b32.xlu0 %v2027, 120
    %v3770 = vpop.permute.xlu0 %3769
    %3771 = vrot.lane.b32.xlu0 %v2028, 120
    %v3772 = vpop.permute.xlu0 %3771
    %3773 = vrot.lane.b32.xlu0 %v2029, 120
    %v3774 = vpop.permute.xlu0 %3773
    %3775 = vrot.lane.b32.xlu0 %v2030, 120
    %v3776 = vpop.permute.xlu0 %3775
    %3777 = vrot.lane.b32.xlu0 %v2031, 120
    %v3778 = vpop.permute.xlu0 %3777
    %3779 = vrot.lane.b32.xlu0 %v2032, 120
    %v3780 = vpop.permute.xlu0 %3779
    %3781 = vrot.lane.b32.xlu0 %v2033, 120
    %v3782 = vpop.permute.xlu0 %3781
    %3783 = vrot.lane.b32.xlu0 %v2034, 120
    %v3784 = vpop.permute.xlu0 %3783
    %3785 = vrot.lane.b32.xlu0 %v2035, 120
    %v3786 = vpop.permute.xlu0 %3785
    %3787 = vrot.lane.b32.xlu0 %v2036, 120
    %v3788 = vpop.permute.xlu0 %3787
    %3789 = vrot.lane.b32.xlu0 %v2037, 120
    %v3790 = vpop.permute.xlu0 %3789
    %3791 = vrot.lane.b32.xlu0 %v2038, 120
    %v3792 = vpop.permute.xlu0 %3791
    %3793 = vrot.lane.b32.xlu0 %v2039, 120
    %v3794 = vpop.permute.xlu0 %3793
    %3795 = vrot.lane.b32.xlu0 %v2040, 120
    %v3796 = vpop.permute.xlu0 %3795
    %3797 = vrot.lane.b32.xlu0 %v2041, 120
    %v3798 = vpop.permute.xlu0 %3797
    %3799 = vrot.lane.b32.xlu0 %v2042, 120
    %v3800 = vpop.permute.xlu0 %3799
    %3801 = vrot.lane.b32.xlu0 %v2043, 120
    %v3802 = vpop.permute.xlu0 %3801
    %3803 = vrot.lane.b32.xlu0 %v2044, 120
    %v3804 = vpop.permute.xlu0 %3803
    %3805 = vrot.lane.b32.xlu0 %v2045, 120
    %v3806 = vpop.permute.xlu0 %3805
    %3807 = vrot.lane.b32.xlu0 %v2046, 120
    %v3808 = vpop.permute.xlu0 %3807
    %3809 = vrot.lane.b32.xlu0 %v2047, 120
    %v3810 = vpop.permute.xlu0 %3809
    %3811 = vrot.lane.b32.xlu0 %v2048, 120
    %v3812 = vpop.permute.xlu0 %3811
    %3813 = vrot.lane.b32.xlu0 %v2049, 120
    %v3814 = vpop.permute.xlu0 %3813
    %3815 = vrot.lane.b32.xlu0 %v2050, 120
    %v3816 = vpop.permute.xlu0 %3815
    %3817 = vrot.lane.b32.xlu0 %v2051, 120
    %v3818 = vpop.permute.xlu0 %3817
    %3819 = vrot.lane.b32.xlu0 %v2052, 120
    %v3820 = vpop.permute.xlu0 %3819
    %3821 = vrot.lane.b32.xlu0 %v2053, 120
    %v3822 = vpop.permute.xlu0 %3821
    %3823 = vrot.lane.b32.xlu0 %v2241, 120
    %v3824 = vpop.permute.xlu0 %3823
    %3825 = vrot.lane.b32.xlu0 %v2242, 120
    %v3826 = vpop.permute.xlu0 %3825
    %3827 = vrot.lane.b32.xlu0 %v2243, 120
    %v3828 = vpop.permute.xlu0 %3827
    %3868 = vrot.lane.b32.xlu0 %v2057, 2
    %v3869 = vpop.permute.xlu0 %3868
    %3870 = vrot.lane.b32.xlu0 %v2058, 2
    %v3871 = vpop.permute.xlu0 %3870
    %3872 = vrot.lane.b32.xlu0 %v2059, 2
    %v3873 = vpop.permute.xlu0 %3872
    %3874 = vrot.lane.b32.xlu0 %v2060, 2
    %v3875 = vpop.permute.xlu0 %3874
    %3876 = vrot.lane.b32.xlu0 %v2061, 2
    %v3877 = vpop.permute.xlu0 %3876
    %3878 = vrot.lane.b32.xlu0 %v2062, 2
    %v3879 = vpop.permute.xlu0 %3878
    %3880 = vrot.lane.b32.xlu0 %v2063, 2
    %v3881 = vpop.permute.xlu0 %3880
    %3882 = vrot.lane.b32.xlu0 %v2064, 2
    %v3883 = vpop.permute.xlu0 %3882
    %3884 = vrot.lane.b32.xlu0 %v2065, 2
    %v3885 = vpop.permute.xlu0 %3884
    %3886 = vrot.lane.b32.xlu0 %v2066, 2
    %v3887 = vpop.permute.xlu0 %3886
    %3888 = vrot.lane.b32.xlu0 %v2067, 2
    %v3889 = vpop.permute.xlu0 %3888
    %3890 = vrot.lane.b32.xlu0 %v2068, 2
    %v3891 = vpop.permute.xlu0 %3890
    %3892 = vrot.lane.b32.xlu0 %v2069, 2
    %v3893 = vpop.permute.xlu0 %3892
    %3894 = vrot.lane.b32.xlu0 %v2070, 2
    %v3895 = vpop.permute.xlu0 %3894
    %3896 = vrot.lane.b32.xlu0 %v2071, 2
    %v3897 = vpop.permute.xlu0 %3896
    %3898 = vrot.lane.b32.xlu0 %v2072, 2
    %v3899 = vpop.permute.xlu0 %3898
    %3900 = vrot.lane.b32.xlu0 %v2073, 2
    %v3901 = vpop.permute.xlu0 %3900
    %3902 = vrot.lane.b32.xlu0 %v2074, 2
    %v3903 = vpop.permute.xlu0 %3902
    %3904 = vrot.lane.b32.xlu0 %v2075, 2
    %v3905 = vpop.permute.xlu0 %3904
    %3906 = vrot.lane.b32.xlu0 %v2076, 2
    %v3907 = vpop.permute.xlu0 %3906
    %3908 = vrot.lane.b32.xlu0 %v2077, 2
    %v3909 = vpop.permute.xlu0 %3908
    %3910 = vrot.lane.b32.xlu0 %v2078, 2
    %v3911 = vpop.permute.xlu0 %3910
    %3912 = vrot.lane.b32.xlu0 %v2079, 2
    %v3913 = vpop.permute.xlu0 %3912
    %3914 = vrot.lane.b32.xlu0 %v2080, 2
    %v3915 = vpop.permute.xlu0 %3914
    %3916 = vrot.lane.b32.xlu0 %v2081, 2
    %v3917 = vpop.permute.xlu0 %3916
    %3918 = vrot.lane.b32.xlu0 %v2082, 2
    %v3919 = vpop.permute.xlu0 %3918
    %3920 = vrot.lane.b32.xlu0 %v2083, 2
    %v3921 = vpop.permute.xlu0 %3920
    %3922 = vrot.lane.b32.xlu0 %v2084, 2
    %v3923 = vpop.permute.xlu0 %3922
    %3924 = vrot.lane.b32.xlu0 %v2085, 2
    %v3925 = vpop.permute.xlu0 %3924
    %3926 = vrot.lane.b32.xlu0 %v2086, 2
    %v3927 = vpop.permute.xlu0 %3926
    %3928 = vrot.lane.b32.xlu0 %v2087, 2
    %v3929 = vpop.permute.xlu0 %3928
    %3930 = vrot.lane.b32.xlu0 %v2088, 2
    %v3931 = vpop.permute.xlu0 %3930
    %3932 = vrot.lane.b32.xlu0 %v2089, 2
    %v3933 = vpop.permute.xlu0 %3932
    %3934 = vrot.lane.b32.xlu0 %v2244, 2
    %v3935 = vpop.permute.xlu0 %3934
    %3936 = vrot.lane.b32.xlu0 %v2245, 2
    %v3937 = vpop.permute.xlu0 %3936
    %3938 = vrot.lane.b32.xlu0 %v2246, 2
    %v3939 = vpop.permute.xlu0 %3938
    %3978 = vrot.lane.b32.xlu0 %v2093, 12
    %v3979 = vpop.permute.xlu0 %3978
    %3980 = vrot.lane.b32.xlu0 %v2094, 12
    %v3981 = vpop.permute.xlu0 %3980
    %3982 = vrot.lane.b32.xlu0 %v2095, 12
    %v3983 = vpop.permute.xlu0 %3982
    %3984 = vrot.lane.b32.xlu0 %v2096, 12
    %v3985 = vpop.permute.xlu0 %3984
    %3986 = vrot.lane.b32.xlu0 %v2097, 12
    %v3987 = vpop.permute.xlu0 %3986
    %3988 = vrot.lane.b32.xlu0 %v2098, 12
    %v3989 = vpop.permute.xlu0 %3988
    %3990 = vrot.lane.b32.xlu0 %v2099, 12
    %v3991 = vpop.permute.xlu0 %3990
    %3992 = vrot.lane.b32.xlu0 %v2100, 12
    %v3993 = vpop.permute.xlu0 %3992
    %3994 = vrot.lane.b32.xlu0 %v2101, 12
    %v3995 = vpop.permute.xlu0 %3994
    %3996 = vrot.lane.b32.xlu0 %v2102, 12
    %v3997 = vpop.permute.xlu0 %3996
    %3998 = vrot.lane.b32.xlu0 %v2103, 12
    %v3999 = vpop.permute.xlu0 %3998
    %4000 = vrot.lane.b32.xlu0 %v2104, 12
    %v4001 = vpop.permute.xlu0 %4000
    %4002 = vrot.lane.b32.xlu0 %v2105, 12
    %v4003 = vpop.permute.xlu0 %4002
    %4004 = vrot.lane.b32.xlu0 %v2106, 12
    %v4005 = vpop.permute.xlu0 %4004
    %4006 = vrot.lane.b32.xlu0 %v2107, 12
    %v4007 = vpop.permute.xlu0 %4006
    %4008 = vrot.lane.b32.xlu0 %v2108, 12
    %v4009 = vpop.permute.xlu0 %4008
    %4010 = vrot.lane.b32.xlu0 %v2109, 12
    %v4011 = vpop.permute.xlu0 %4010
    %4012 = vrot.lane.b32.xlu0 %v2110, 12
    %v4013 = vpop.permute.xlu0 %4012
    %4014 = vrot.lane.b32.xlu0 %v2111, 12
    %v4015 = vpop.permute.xlu0 %4014
    %4016 = vrot.lane.b32.xlu0 %v2112, 12
    %v4017 = vpop.permute.xlu0 %4016
    %4018 = vrot.lane.b32.xlu0 %v2113, 12
    %v4019 = vpop.permute.xlu0 %4018
    %4020 = vrot.lane.b32.xlu0 %v2114, 12
    %v4021 = vpop.permute.xlu0 %4020
    %4022 = vrot.lane.b32.xlu0 %v2115, 12
    %v4023 = vpop.permute.xlu0 %4022
    %4024 = vrot.lane.b32.xlu0 %v2116, 12
    %v4025 = vpop.permute.xlu0 %4024
    %4026 = vrot.lane.b32.xlu0 %v2117, 12
    %v4027 = vpop.permute.xlu0 %4026
    %4028 = vrot.lane.b32.xlu0 %v2118, 12
    %v4029 = vpop.permute.xlu0 %4028
    %4030 = vrot.lane.b32.xlu0 %v2119, 12
    %v4031 = vpop.permute.xlu0 %4030
    %4032 = vrot.lane.b32.xlu0 %v2120, 12
    %v4033 = vpop.permute.xlu0 %4032
    %4034 = vrot.lane.b32.xlu0 %v2121, 12
    %v4035 = vpop.permute.xlu0 %4034
    %4036 = vrot.lane.b32.xlu0 %v2122, 12
    %v4037 = vpop.permute.xlu0 %4036
    %4038 = vrot.lane.b32.xlu0 %v2123, 12
    %v4039 = vpop.permute.xlu0 %4038
    %4040 = vrot.lane.b32.xlu0 %v2124, 12
    %v4041 = vpop.permute.xlu0 %4040
    %4042 = vrot.lane.b32.xlu0 %v2125, 12
    %v4043 = vpop.permute.xlu0 %4042
    %4044 = vrot.lane.b32.xlu0 %v2126, 12
    %v4045 = vpop.permute.xlu0 %4044
    %4046 = vrot.lane.b32.xlu0 %v2247, 12
    %v4047 = vpop.permute.xlu0 %4046
    %4048 = vrot.lane.b32.xlu0 %v2248, 12
    %v4049 = vpop.permute.xlu0 %4048
    %4087 = vrot.lane.b32.xlu0 %v2094, 22
    %v4088 = vpop.permute.xlu0 %4087
    %4089 = vrot.lane.b32.xlu0 %v2095, 22
    %v4090 = vpop.permute.xlu0 %4089
    %4091 = vrot.lane.b32.xlu0 %v2096, 22
    %v4092 = vpop.permute.xlu0 %4091
    %4093 = vrot.lane.b32.xlu0 %v2097, 22
    %v4094 = vpop.permute.xlu0 %4093
    %4095 = vrot.lane.b32.xlu0 %v2098, 22
    %v4096 = vpop.permute.xlu0 %4095
    %4097 = vrot.lane.b32.xlu0 %v2099, 22
    %v4098 = vpop.permute.xlu0 %4097
    %4099 = vrot.lane.b32.xlu0 %v2100, 22
    %v4100 = vpop.permute.xlu0 %4099
    %4101 = vrot.lane.b32.xlu0 %v2101, 22
    %v4102 = vpop.permute.xlu0 %4101
    %4103 = vrot.lane.b32.xlu0 %v2102, 22
    %v4104 = vpop.permute.xlu0 %4103
    %4105 = vrot.lane.b32.xlu0 %v2103, 22
    %v4106 = vpop.permute.xlu0 %4105
    %4107 = vrot.lane.b32.xlu0 %v2104, 22
    %v4108 = vpop.permute.xlu0 %4107
    %4109 = vrot.lane.b32.xlu0 %v2105, 22
    %v4110 = vpop.permute.xlu0 %4109
    %4111 = vrot.lane.b32.xlu0 %v2106, 22
    %v4112 = vpop.permute.xlu0 %4111
    %4113 = vrot.lane.b32.xlu0 %v2107, 22
    %v4114 = vpop.permute.xlu0 %4113
    %4115 = vrot.lane.b32.xlu0 %v2108, 22
    %v4116 = vpop.permute.xlu0 %4115
    %4117 = vrot.lane.b32.xlu0 %v2109, 22
    %v4118 = vpop.permute.xlu0 %4117
    %4119 = vrot.lane.b32.xlu0 %v2110, 22
    %v4120 = vpop.permute.xlu0 %4119
    %4121 = vrot.lane.b32.xlu0 %v2111, 22
    %v4122 = vpop.permute.xlu0 %4121
    %4123 = vrot.lane.b32.xlu0 %v2112, 22
    %v4124 = vpop.permute.xlu0 %4123
    %4125 = vrot.lane.b32.xlu0 %v2113, 22
    %v4126 = vpop.permute.xlu0 %4125
    %4127 = vrot.lane.b32.xlu0 %v2114, 22
    %v4128 = vpop.permute.xlu0 %4127
    %4129 = vrot.lane.b32.xlu0 %v2115, 22
    %v4130 = vpop.permute.xlu0 %4129
    %4131 = vrot.lane.b32.xlu0 %v2116, 22
    %v4132 = vpop.permute.xlu0 %4131
    %4133 = vrot.lane.b32.xlu0 %v2117, 22
    %v4134 = vpop.permute.xlu0 %4133
    %4135 = vrot.lane.b32.xlu0 %v2118, 22
    %v4136 = vpop.permute.xlu0 %4135
    %4137 = vrot.lane.b32.xlu0 %v2119, 22
    %v4138 = vpop.permute.xlu0 %4137
    %4139 = vrot.lane.b32.xlu0 %v2120, 22
    %v4140 = vpop.permute.xlu0 %4139
    %4141 = vrot.lane.b32.xlu0 %v2121, 22
    %v4142 = vpop.permute.xlu0 %4141
    %4143 = vrot.lane.b32.xlu0 %v2122, 22
    %v4144 = vpop.permute.xlu0 %4143
    %4145 = vrot.lane.b32.xlu0 %v2123, 22
    %v4146 = vpop.permute.xlu0 %4145
    %4147 = vrot.lane.b32.xlu0 %v2124, 22
    %v4148 = vpop.permute.xlu0 %4147
    %4149 = vrot.lane.b32.xlu0 %v2125, 22
    %v4150 = vpop.permute.xlu0 %4149
    %4151 = vrot.lane.b32.xlu0 %v2126, 22
    %v4152 = vpop.permute.xlu0 %4151
    %4153 = vrot.lane.b32.xlu0 %v2247, 22
    %v4154 = vpop.permute.xlu0 %4153
    %4155 = vrot.lane.b32.xlu0 %v2248, 22
    %v4156 = vpop.permute.xlu0 %4155
    %4157 = vrot.lane.b32.xlu0 %v2249, 22
    %v4158 = vpop.permute.xlu0 %4157
    %v4195 = vsel %vm1549, %v1946, %v2310
    %v4196 = vsel %vm1549, %v1947, %v2312
    %v4197 = vsel %vm1549, %v1948, %v2314
    %v4198 = vsel %vm1549, %v1949, %v2316
    %v4199 = vsel %vm1549, %v1950, %v2318
    %v4200 = vsel %vm1549, %v1951, %v2320
    %v4201 = vsel %vm1549, %v1952, %v2322
    %v4202 = vsel %vm1549, %v1953, %v2324
    %v4203 = vsel %vm1549, %v1954, %v2326
    %v4204 = vsel %vm1549, %v1955, %v2328
    %v4205 = vsel %vm1549, %v1956, %v2330
    %v4206 = vsel %vm1549, %v1957, %v2332
    %v4207 = vsel %vm1549, %v1958, %v2334
    %v4208 = vsel %vm1549, %v1959, %v2336
    %v4209 = vsel %vm1549, %v1960, %v2338
    %v4210 = vsel %vm1549, %v1961, %v2340
    %v4211 = vsel %vm1549, %v1962, %v2342
    %v4212 = vsel %vm1549, %v1963, %v2344
    %v4213 = vsel %vm1549, %v1964, %v2346
    %v4214 = vsel %vm1549, %v1965, %v2348
    %v4215 = vsel %vm1549, %v1966, %v2350
    %v4216 = vsel %vm1549, %v1967, %v2352
    %v4217 = vsel %vm1549, %v1968, %v2354
    %v4218 = vsel %vm1549, %v1969, %v2356
    %v4219 = vsel %vm1549, %v1970, %v2358
    %v4220 = vsel %vm1549, %v1971, %v2360
    %v4221 = vsel %vm1549, %v1972, %v2362
    %v4222 = vsel %vm1549, %v1973, %v2364
    %v4223 = vsel %vm1549, %v1974, %v2366
    %v4224 = vsel %vm1549, %v1975, %v2368
    %v4225 = vsel %vm1549, %v1976, %v2370
    %v4226 = vsel %vm1549, %v1977, %v2372
    %v4227 = vsel %vm1549, %v1978, %v2374
    %v4228 = vsel %vm1549, %v1979, %v2376
    %v4229 = vsel %vm1549, %v1980, %v2378
    %v4230 = vsel %vm1549, %v1981, %v2380
    %vm4231 = vcmask 162816
    %v4232 = vsel %vm4231, %v4195, %v2454
    %v4233 = vsel %vm4231, %v4196, %v2456
    %v4234 = vsel %vm4231, %v4197, %v2458
    %v4235 = vsel %vm4231, %v4198, %v2460
    %v4236 = vsel %vm4231, %v4199, %v2462
    %v4237 = vsel %vm4231, %v4200, %v2464
    %v4238 = vsel %vm4231, %v4201, %v2466
    %v4239 = vsel %vm4231, %v4202, %v2468
    %v4240 = vsel %vm4231, %v4203, %v2470
    %v4241 = vsel %vm4231, %v4204, %v2472
    %v4242 = vsel %vm4231, %v4205, %v2474
    %v4243 = vsel %vm4231, %v4206, %v2476
    %v4244 = vsel %vm4231, %v4207, %v2478
    %v4245 = vsel %vm4231, %v4208, %v2480
    %v4246 = vsel %vm4231, %v4209, %v2482
    %v4247 = vsel %vm4231, %v4210, %v2484
    %v4248 = vsel %vm4231, %v4211, %v2486
    %v4249 = vsel %vm4231, %v4212, %v2488
    %v4250 = vsel %vm4231, %v4213, %v2490
    %v4251 = vsel %vm4231, %v4214, %v2492
    %v4252 = vsel %vm4231, %v4215, %v2494
    %v4253 = vsel %vm4231, %v4216, %v2496
    %v4254 = vsel %vm4231, %v4217, %v2498
    %v4255 = vsel %vm4231, %v4218, %v2500
    %v4256 = vsel %vm4231, %v4219, %v2502
    %v4257 = vsel %vm4231, %v4220, %v2504
    %v4258 = vsel %vm4231, %v4221, %v2506
    %v4259 = vsel %vm4231, %v4222, %v2508
    %v4260 = vsel %vm4231, %v4223, %v2510
    %v4261 = vsel %vm4231, %v4224, %v2512
    %v4262 = vsel %vm4231, %v4225, %v2514
    %v4263 = vsel %vm4231, %v4226, %v2516
    %v4264 = vsel %vm4231, %v4227, %v2518
    %v4265 = vsel %vm4231, %v4228, %v2520
    %v4266 = vsel %vm4231, %v4229, %v2522
    %v4267 = vsel %vm4231, %v4230, %v2524
    %vm4268 = vcmask 244736
    %v4269 = vsel %vm4268, %v4232, %v2598
    %v4270 = vsel %vm4268, %v4233, %v2600
    %v4271 = vsel %vm4268, %v4234, %v2602
    %v4272 = vsel %vm4268, %v4235, %v2604
    %v4273 = vsel %vm4268, %v4236, %v2606
    %v4274 = vsel %vm4268, %v4237, %v2608
    %v4275 = vsel %vm4268, %v4238, %v2610
    %v4276 = vsel %vm4268, %v4239, %v2612
    %v4277 = vsel %vm4268, %v4240, %v2614
    %v4278 = vsel %vm4268, %v4241, %v2616
    %v4279 = vsel %vm4268, %v4242, %v2618
    %v4280 = vsel %vm4268, %v4243, %v2620
    %v4281 = vsel %vm4268, %v4244, %v2622
    %v4282 = vsel %vm4268, %v4245, %v2624
    %v4283 = vsel %vm4268, %v4246, %v2626
    %v4284 = vsel %vm4268, %v4247, %v2628
    %v4285 = vsel %vm4268, %v4248, %v2630
    %v4286 = vsel %vm4268, %v4249, %v2632
    %v4287 = vsel %vm4268, %v4250, %v2634
    %v4288 = vsel %vm4268, %v4251, %v2636
    %v4289 = vsel %vm4268, %v4252, %v2638
    %v4290 = vsel %vm4268, %v4253, %v2640
    %v4291 = vsel %vm4268, %v4254, %v2642
    %v4292 = vsel %vm4268, %v4255, %v2644
    %v4293 = vsel %vm4268, %v4256, %v2646
    %v4294 = vsel %vm4268, %v4257, %v2648
    %v4295 = vsel %vm4268, %v4258, %v2650
    %v4296 = vsel %vm4268, %v4259, %v2652
    %v4297 = vsel %vm4268, %v4260, %v2654
    %v4298 = vsel %vm4268, %v4261, %v2656
    %v4299 = vsel %vm4268, %v4262, %v2658
    %v4300 = vsel %vm4268, %v4263, %v2660
    %v4301 = vsel %vm4268, %v4264, %v2662
    %v4302 = vsel %vm4268, %v4265, %v2664
    %v4303 = vsel %vm4268, %v4266, %v2666
    %v4304 = vsel %vm4268, %v4267, %v2668
    %vm4305 = vcmask 326656
    %v4306 = vsel %vm4305, %v4269, %v2742
    %v4307 = vsel %vm4305, %v4270, %v2744
    %v4308 = vsel %vm4305, %v4271, %v2746
    %v4309 = vsel %vm4305, %v4272, %v2748
    %v4310 = vsel %vm4305, %v4273, %v2750
    %v4311 = vsel %vm4305, %v4274, %v2752
    %v4312 = vsel %vm4305, %v4275, %v2754
    %v4313 = vsel %vm4305, %v4276, %v2756
    %v4314 = vsel %vm4305, %v4277, %v2758
    %v4315 = vsel %vm4305, %v4278, %v2760
    %v4316 = vsel %vm4305, %v4279, %v2762
    %v4317 = vsel %vm4305, %v4280, %v2764
    %v4318 = vsel %vm4305, %v4281, %v2766
    %v4319 = vsel %vm4305, %v4282, %v2768
    %v4320 = vsel %vm4305, %v4283, %v2770
    %v4321 = vsel %vm4305, %v4284, %v2772
    %v4322 = vsel %vm4305, %v4285, %v2774
    %v4323 = vsel %vm4305, %v4286, %v2776
    %v4324 = vsel %vm4305, %v4287, %v2778
    %v4325 = vsel %vm4305, %v4288, %v2780
    %v4326 = vsel %vm4305, %v4289, %v2782
    %v4327 = vsel %vm4305, %v4290, %v2784
    %v4328 = vsel %vm4305, %v4291, %v2786
    %v4329 = vsel %vm4305, %v4292, %v2788
    %v4330 = vsel %vm4305, %v4293, %v2790
    %v4331 = vsel %vm4305, %v4294, %v2792
    %v4332 = vsel %vm4305, %v4295, %v2794
    %v4333 = vsel %vm4305, %v4296, %v2796
    %v4334 = vsel %vm4305, %v4297, %v2798
    %v4335 = vsel %vm4305, %v4298, %v2800
    %v4336 = vsel %vm4305, %v4299, %v2802
    %v4337 = vsel %vm4305, %v4300, %v2804
    %v4338 = vsel %vm4305, %v4301, %v2806
    %v4339 = vsel %vm4305, %v4302, %v2808
    %v4340 = vsel %vm4305, %v4303, %v2810
    %v4341 = vsel %vm4305, %v4304, %v2812
    %vm4342 = vcmask 408576
    %v4343 = vsel %vm4342, %v4306, %v2851
    %v4344 = vsel %vm4342, %v4307, %v2853
    %v4345 = vsel %vm4342, %v4308, %v2855
    %v4346 = vsel %vm4342, %v4309, %v2857
    %v4347 = vsel %vm4342, %v4310, %v2859
    %v4348 = vsel %vm4342, %v4311, %v2861
    %v4349 = vsel %vm4342, %v4312, %v2863
    %v4350 = vsel %vm4342, %v4313, %v2865
    %v4351 = vsel %vm4342, %v4314, %v2867
    %v4352 = vsel %vm4342, %v4315, %v2869
    %v4353 = vsel %vm4342, %v4316, %v2871
    %v4354 = vsel %vm4342, %v4317, %v2873
    %v4355 = vsel %vm4342, %v4318, %v2875
    %v4356 = vsel %vm4342, %v4319, %v2877
    %v4357 = vsel %vm4342, %v4320, %v2879
    %v4358 = vsel %vm4342, %v4321, %v2881
    %v4359 = vsel %vm4342, %v4322, %v2883
    %v4360 = vsel %vm4342, %v4323, %v2885
    %v4361 = vsel %vm4342, %v4324, %v2887
    %v4362 = vsel %vm4342, %v4325, %v2889
    %v4363 = vsel %vm4342, %v4326, %v2891
    %v4364 = vsel %vm4342, %v4327, %v2893
    %v4365 = vsel %vm4342, %v4328, %v2895
    %v4366 = vsel %vm4342, %v4329, %v2897
    %v4367 = vsel %vm4342, %v4330, %v2899
    %v4368 = vsel %vm4342, %v4331, %v2901
    %v4369 = vsel %vm4342, %v4332, %v2903
    %v4370 = vsel %vm4342, %v4333, %v2905
    %v4371 = vsel %vm4342, %v4334, %v2907
    %v4372 = vsel %vm4342, %v4335, %v2909
    %v4373 = vsel %vm4342, %v4336, %v2911
    %v4374 = vsel %vm4342, %v4337, %v2913
    %v4375 = vsel %vm4342, %v4338, %v2915
    %v4376 = vsel %vm4342, %v4339, %v2917
    %v4377 = vsel %vm4342, %v4340, %v2919
    %v4378 = vsel %vm4342, %v4341, %v2921
    %vm4379 = vcmask 490496
    %v4380 = vsel %vm4379, %v4343, %v2995
    %v4381 = vsel %vm4379, %v4344, %v2997
    %v4382 = vsel %vm4379, %v4345, %v2999
    %v4383 = vsel %vm4379, %v4346, %v3001
    %v4384 = vsel %vm4379, %v4347, %v3003
    %v4385 = vsel %vm4379, %v4348, %v3005
    %v4386 = vsel %vm4379, %v4349, %v3007
    %v4387 = vsel %vm4379, %v4350, %v3009
    %v4388 = vsel %vm4379, %v4351, %v3011
    %v4389 = vsel %vm4379, %v4352, %v3013
    %v4390 = vsel %vm4379, %v4353, %v3015
    %v4391 = vsel %vm4379, %v4354, %v3017
    %v4392 = vsel %vm4379, %v4355, %v3019
    %v4393 = vsel %vm4379, %v4356, %v3021
    %v4394 = vsel %vm4379, %v4357, %v3023
    %v4395 = vsel %vm4379, %v4358, %v3025
    %v4396 = vsel %vm4379, %v4359, %v3027
    %v4397 = vsel %vm4379, %v4360, %v3029
    %v4398 = vsel %vm4379, %v4361, %v3031
    %v4399 = vsel %vm4379, %v4362, %v3033
    %v4400 = vsel %vm4379, %v4363, %v3035
    %v4401 = vsel %vm4379, %v4364, %v3037
    %v4402 = vsel %vm4379, %v4365, %v3039
    %v4403 = vsel %vm4379, %v4366, %v3041
    %v4404 = vsel %vm4379, %v4367, %v3043
    %v4405 = vsel %vm4379, %v4368, %v3045
    %v4406 = vsel %vm4379, %v4369, %v3047
    %v4407 = vsel %vm4379, %v4370, %v3049
    %v4408 = vsel %vm4379, %v4371, %v3051
    %v4409 = vsel %vm4379, %v4372, %v3053
    %v4410 = vsel %vm4379, %v4373, %v3055
    %v4411 = vsel %vm4379, %v4374, %v3057
    %v4412 = vsel %vm4379, %v4375, %v3059
    %v4413 = vsel %vm4379, %v4376, %v3061
    %v4414 = vsel %vm4379, %v4377, %v3063
    %v4415 = vsel %vm4379, %v4378, %v3065
    %vm4416 = vcmask 572416
    %v4417 = vsel %vm4416, %v4380, %v3139
    %v4418 = vsel %vm4416, %v4381, %v3141
    %v4419 = vsel %vm4416, %v4382, %v3143
    %v4420 = vsel %vm4416, %v4383, %v3145
    %v4421 = vsel %vm4416, %v4384, %v3147
    %v4422 = vsel %vm4416, %v4385, %v3149
    %v4423 = vsel %vm4416, %v4386, %v3151
    %v4424 = vsel %vm4416, %v4387, %v3153
    %v4425 = vsel %vm4416, %v4388, %v3155
    %v4426 = vsel %vm4416, %v4389, %v3157
    %v4427 = vsel %vm4416, %v4390, %v3159
    %v4428 = vsel %vm4416, %v4391, %v3161
    %v4429 = vsel %vm4416, %v4392, %v3163
    %v4430 = vsel %vm4416, %v4393, %v3165
    %v4431 = vsel %vm4416, %v4394, %v3167
    %v4432 = vsel %vm4416, %v4395, %v3169
    %v4433 = vsel %vm4416, %v4396, %v3171
    %v4434 = vsel %vm4416, %v4397, %v3173
    %v4435 = vsel %vm4416, %v4398, %v3175
    %v4436 = vsel %vm4416, %v4399, %v3177
    %v4437 = vsel %vm4416, %v4400, %v3179
    %v4438 = vsel %vm4416, %v4401, %v3181
    %v4439 = vsel %vm4416, %v4402, %v3183
    %v4440 = vsel %vm4416, %v4403, %v3185
    %v4441 = vsel %vm4416, %v4404, %v3187
    %v4442 = vsel %vm4416, %v4405, %v3189
    %v4443 = vsel %vm4416, %v4406, %v3191
    %v4444 = vsel %vm4416, %v4407, %v3193
    %v4445 = vsel %vm4416, %v4408, %v3195
    %v4446 = vsel %vm4416, %v4409, %v3197
    %v4447 = vsel %vm4416, %v4410, %v3199
    %v4448 = vsel %vm4416, %v4411, %v3201
    %v4449 = vsel %vm4416, %v4412, %v3203
    %v4450 = vsel %vm4416, %v4413, %v3205
    %v4451 = vsel %vm4416, %v4414, %v3207
    %v4452 = vsel %vm4416, %v4415, %v3209
    %vm4453 = vcmask 654336
    %v4454 = vsel %vm4453, %v4417, %v3283
    %v4455 = vsel %vm4453, %v4418, %v3285
    %v4456 = vsel %vm4453, %v4419, %v3287
    %v4457 = vsel %vm4453, %v4420, %v3289
    %v4458 = vsel %vm4453, %v4421, %v3291
    %v4459 = vsel %vm4453, %v4422, %v3293
    %v4460 = vsel %vm4453, %v4423, %v3295
    %v4461 = vsel %vm4453, %v4424, %v3297
    %v4462 = vsel %vm4453, %v4425, %v3299
    %v4463 = vsel %vm4453, %v4426, %v3301
    %v4464 = vsel %vm4453, %v4427, %v3303
    %v4465 = vsel %vm4453, %v4428, %v3305
    %v4466 = vsel %vm4453, %v4429, %v3307
    %v4467 = vsel %vm4453, %v4430, %v3309
    %v4468 = vsel %vm4453, %v4431, %v3311
    %v4469 = vsel %vm4453, %v4432, %v3313
    %v4470 = vsel %vm4453, %v4433, %v3315
    %v4471 = vsel %vm4453, %v4434, %v3317
    %v4472 = vsel %vm4453, %v4435, %v3319
    %v4473 = vsel %vm4453, %v4436, %v3321
    %v4474 = vsel %vm4453, %v4437, %v3323
    %v4475 = vsel %vm4453, %v4438, %v3325
    %v4476 = vsel %vm4453, %v4439, %v3327
    %v4477 = vsel %vm4453, %v4440, %v3329
    %v4478 = vsel %vm4453, %v4441, %v3331
    %v4479 = vsel %vm4453, %v4442, %v3333
    %v4480 = vsel %vm4453, %v4443, %v3335
    %v4481 = vsel %vm4453, %v4444, %v3337
    %v4482 = vsel %vm4453, %v4445, %v3339
    %v4483 = vsel %vm4453, %v4446, %v3341
    %v4484 = vsel %vm4453, %v4447, %v3343
    %v4485 = vsel %vm4453, %v4448, %v3345
    %v4486 = vsel %vm4453, %v4449, %v3347
    %v4487 = vsel %vm4453, %v4450, %v3349
    %v4488 = vsel %vm4453, %v4451, %v3351
    %v4489 = vsel %vm4453, %v4452, %v3353
    %vm4490 = vcmask 736256
    %v4491 = vsel %vm4490, %v4454, %v3427
    %v4492 = vsel %vm4490, %v4455, %v3429
    %v4493 = vsel %vm4490, %v4456, %v3431
    %v4494 = vsel %vm4490, %v4457, %v3433
    %v4495 = vsel %vm4490, %v4458, %v3435
    %v4496 = vsel %vm4490, %v4459, %v3437
    %v4497 = vsel %vm4490, %v4460, %v3439
    %v4498 = vsel %vm4490, %v4461, %v3441
    %v4499 = vsel %vm4490, %v4462, %v3443
    %v4500 = vsel %vm4490, %v4463, %v3445
    %v4501 = vsel %vm4490, %v4464, %v3447
    %v4502 = vsel %vm4490, %v4465, %v3449
    %v4503 = vsel %vm4490, %v4466, %v3451
    %v4504 = vsel %vm4490, %v4467, %v3453
    %v4505 = vsel %vm4490, %v4468, %v3455
    %v4506 = vsel %vm4490, %v4469, %v3457
    %v4507 = vsel %vm4490, %v4470, %v3459
    %v4508 = vsel %vm4490, %v4471, %v3461
    %v4509 = vsel %vm4490, %v4472, %v3463
    %v4510 = vsel %vm4490, %v4473, %v3465
    %v4511 = vsel %vm4490, %v4474, %v3467
    %v4512 = vsel %vm4490, %v4475, %v3469
    %v4513 = vsel %vm4490, %v4476, %v3471
    %v4514 = vsel %vm4490, %v4477, %v3473
    %v4515 = vsel %vm4490, %v4478, %v3475
    %v4516 = vsel %vm4490, %v4479, %v3477
    %v4517 = vsel %vm4490, %v4480, %v3479
    %v4518 = vsel %vm4490, %v4481, %v3481
    %v4519 = vsel %vm4490, %v4482, %v3483
    %v4520 = vsel %vm4490, %v4483, %v3485
    %v4521 = vsel %vm4490, %v4484, %v3487
    %v4522 = vsel %vm4490, %v4485, %v3489
    %v4523 = vsel %vm4490, %v4486, %v3491
    %v4524 = vsel %vm4490, %v4487, %v3493
    %v4525 = vsel %vm4490, %v4488, %v3495
    %v4526 = vsel %vm4490, %v4489, %v3497
    %vm4527 = vcmask 818176
    %v4528 = vsel %vm4527, %v4491, %v3536
    %v4529 = vsel %vm4527, %v4492, %v3538
    %v4530 = vsel %vm4527, %v4493, %v3540
    %v4531 = vsel %vm4527, %v4494, %v3542
    %v4532 = vsel %vm4527, %v4495, %v3544
    %v4533 = vsel %vm4527, %v4496, %v3546
    %v4534 = vsel %vm4527, %v4497, %v3548
    %v4535 = vsel %vm4527, %v4498, %v3550
    %v4536 = vsel %vm4527, %v4499, %v3552
    %v4537 = vsel %vm4527, %v4500, %v3554
    %v4538 = vsel %vm4527, %v4501, %v3556
    %v4539 = vsel %vm4527, %v4502, %v3558
    %v4540 = vsel %vm4527, %v4503, %v3560
    %v4541 = vsel %vm4527, %v4504, %v3562
    %v4542 = vsel %vm4527, %v4505, %v3564
    %v4543 = vsel %vm4527, %v4506, %v3566
    %v4544 = vsel %vm4527, %v4507, %v3568
    %v4545 = vsel %vm4527, %v4508, %v3570
    %v4546 = vsel %vm4527, %v4509, %v3572
    %v4547 = vsel %vm4527, %v4510, %v3574
    %v4548 = vsel %vm4527, %v4511, %v3576
    %v4549 = vsel %vm4527, %v4512, %v3578
    %v4550 = vsel %vm4527, %v4513, %v3580
    %v4551 = vsel %vm4527, %v4514, %v3582
    %v4552 = vsel %vm4527, %v4515, %v3584
    %v4553 = vsel %vm4527, %v4516, %v3586
    %v4554 = vsel %vm4527, %v4517, %v3588
    %v4555 = vsel %vm4527, %v4518, %v3590
    %v4556 = vsel %vm4527, %v4519, %v3592
    %v4557 = vsel %vm4527, %v4520, %v3594
    %v4558 = vsel %vm4527, %v4521, %v3596
    %v4559 = vsel %vm4527, %v4522, %v3598
    %v4560 = vsel %vm4527, %v4523, %v3600
    %v4561 = vsel %vm4527, %v4524, %v3602
    %v4562 = vsel %vm4527, %v4525, %v3604
    %v4563 = vsel %vm4527, %v4526, %v3606
    %vm4564 = vcmask 900096
    %v4565 = vsel %vm4564, %v4528, %v3647
    %v4566 = vsel %vm4564, %v4529, %v3649
    %v4567 = vsel %vm4564, %v4530, %v3651
    %v4568 = vsel %vm4564, %v4531, %v3653
    %v4569 = vsel %vm4564, %v4532, %v3655
    %v4570 = vsel %vm4564, %v4533, %v3657
    %v4571 = vsel %vm4564, %v4534, %v3659
    %v4572 = vsel %vm4564, %v4535, %v3661
    %v4573 = vsel %vm4564, %v4536, %v3663
    %v4574 = vsel %vm4564, %v4537, %v3665
    %v4575 = vsel %vm4564, %v4538, %v3667
    %v4576 = vsel %vm4564, %v4539, %v3669
    %v4577 = vsel %vm4564, %v4540, %v3671
    %v4578 = vsel %vm4564, %v4541, %v3673
    %v4579 = vsel %vm4564, %v4542, %v3675
    %v4580 = vsel %vm4564, %v4543, %v3677
    %v4581 = vsel %vm4564, %v4544, %v3679
    %v4582 = vsel %vm4564, %v4545, %v3681
    %v4583 = vsel %vm4564, %v4546, %v3683
    %v4584 = vsel %vm4564, %v4547, %v3685
    %v4585 = vsel %vm4564, %v4548, %v3687
    %v4586 = vsel %vm4564, %v4549, %v3689
    %v4587 = vsel %vm4564, %v4550, %v3691
    %v4588 = vsel %vm4564, %v4551, %v3693
    %v4589 = vsel %vm4564, %v4552, %v3695
    %v4590 = vsel %vm4564, %v4553, %v3697
    %v4591 = vsel %vm4564, %v4554, %v3699
    %v4592 = vsel %vm4564, %v4555, %v3701
    %v4593 = vsel %vm4564, %v4556, %v3703
    %v4594 = vsel %vm4564, %v4557, %v3705
    %v4595 = vsel %vm4564, %v4558, %v3707
    %v4596 = vsel %vm4564, %v4559, %v3709
    %v4597 = vsel %vm4564, %v4560, %v3711
    %v4598 = vsel %vm4564, %v4561, %v3713
    %v4599 = vsel %vm4564, %v4562, %v3715
    %v4600 = vsel %vm4564, %v4563, %v3717
    %vm4601 = vcmask 982016
    %v4602 = vsel %vm4601, %v4565, %v3758
    %v4603 = vsel %vm4601, %v4566, %v3760
    %v4604 = vsel %vm4601, %v4567, %v3762
    %v4605 = vsel %vm4601, %v4568, %v3764
    %v4606 = vsel %vm4601, %v4569, %v3766
    %v4607 = vsel %vm4601, %v4570, %v3768
    %v4608 = vsel %vm4601, %v4571, %v3770
    %v4609 = vsel %vm4601, %v4572, %v3772
    %v4610 = vsel %vm4601, %v4573, %v3774
    %v4611 = vsel %vm4601, %v4574, %v3776
    %v4612 = vsel %vm4601, %v4575, %v3778
    %v4613 = vsel %vm4601, %v4576, %v3780
    %v4614 = vsel %vm4601, %v4577, %v3782
    %v4615 = vsel %vm4601, %v4578, %v3784
    %v4616 = vsel %vm4601, %v4579, %v3786
    %v4617 = vsel %vm4601, %v4580, %v3788
    %v4618 = vsel %vm4601, %v4581, %v3790
    %v4619 = vsel %vm4601, %v4582, %v3792
    %v4620 = vsel %vm4601, %v4583, %v3794
    %v4621 = vsel %vm4601, %v4584, %v3796
    %v4622 = vsel %vm4601, %v4585, %v3798
    %v4623 = vsel %vm4601, %v4586, %v3800
    %v4624 = vsel %vm4601, %v4587, %v3802
    %v4625 = vsel %vm4601, %v4588, %v3804
    %v4626 = vsel %vm4601, %v4589, %v3806
    %v4627 = vsel %vm4601, %v4590, %v3808
    %v4628 = vsel %vm4601, %v4591, %v3810
    %v4629 = vsel %vm4601, %v4592, %v3812
    %v4630 = vsel %vm4601, %v4593, %v3814
    %v4631 = vsel %vm4601, %v4594, %v3816
    %v4632 = vsel %vm4601, %v4595, %v3818
    %v4633 = vsel %vm4601, %v4596, %v3820
    %v4634 = vsel %vm4601, %v4597, %v3822
    %v4635 = vsel %vm4601, %v4598, %v3824
    %v4636 = vsel %vm4601, %v4599, %v3826
    %v4637 = vsel %vm4601, %v4600, %v3828
    %vm4638 = vcmask 15360
    %v4639 = vsel %vm4638, %v3758, %v3869
    %v4640 = vsel %vm4638, %v3760, %v3871
    %v4641 = vsel %vm4638, %v3762, %v3873
    %v4642 = vsel %vm4638, %v3764, %v3875
    %v4643 = vsel %vm4638, %v3766, %v3877
    %v4644 = vsel %vm4638, %v3768, %v3879
    %v4645 = vsel %vm4638, %v3770, %v3881
    %v4646 = vsel %vm4638, %v3772, %v3883
    %v4647 = vsel %vm4638, %v3774, %v3885
    %v4648 = vsel %vm4638, %v3776, %v3887
    %v4649 = vsel %vm4638, %v3778, %v3889
    %v4650 = vsel %vm4638, %v3780, %v3891
    %v4651 = vsel %vm4638, %v3782, %v3893
    %v4652 = vsel %vm4638, %v3784, %v3895
    %v4653 = vsel %vm4638, %v3786, %v3897
    %v4654 = vsel %vm4638, %v3788, %v3899
    %v4655 = vsel %vm4638, %v3790, %v3901
    %v4656 = vsel %vm4638, %v3792, %v3903
    %v4657 = vsel %vm4638, %v3794, %v3905
    %v4658 = vsel %vm4638, %v3796, %v3907
    %v4659 = vsel %vm4638, %v3798, %v3909
    %v4660 = vsel %vm4638, %v3800, %v3911
    %v4661 = vsel %vm4638, %v3802, %v3913
    %v4662 = vsel %vm4638, %v3804, %v3915
    %v4663 = vsel %vm4638, %v3806, %v3917
    %v4664 = vsel %vm4638, %v3808, %v3919
    %v4665 = vsel %vm4638, %v3810, %v3921
    %v4666 = vsel %vm4638, %v3812, %v3923
    %v4667 = vsel %vm4638, %v3814, %v3925
    %v4668 = vsel %vm4638, %v3816, %v3927
    %v4669 = vsel %vm4638, %v3818, %v3929
    %v4670 = vsel %vm4638, %v3820, %v3931
    %v4671 = vsel %vm4638, %v3822, %v3933
    %v4672 = vsel %vm4638, %v3824, %v3935
    %v4673 = vsel %vm4638, %v3826, %v3937
    %v4674 = vsel %vm4638, %v3828, %v3939
    %vm4675 = vcmask 97280
    %v4676 = vsel %vm4675, %v4639, %v3979
    %v4677 = vsel %vm4675, %v4640, %v3981
    %v4678 = vsel %vm4675, %v4641, %v3983
    %v4679 = vsel %vm4675, %v4642, %v3985
    %v4680 = vsel %vm4675, %v4643, %v3987
    %v4681 = vsel %vm4675, %v4644, %v3989
    %v4682 = vsel %vm4675, %v4645, %v3991
    %v4683 = vsel %vm4675, %v4646, %v3993
    %v4684 = vsel %vm4675, %v4647, %v3995
    %v4685 = vsel %vm4675, %v4648, %v3997
    %v4686 = vsel %vm4675, %v4649, %v3999
    %v4687 = vsel %vm4675, %v4650, %v4001
    %v4688 = vsel %vm4675, %v4651, %v4003
    %v4689 = vsel %vm4675, %v4652, %v4005
    %v4690 = vsel %vm4675, %v4653, %v4007
    %v4691 = vsel %vm4675, %v4654, %v4009
    %v4692 = vsel %vm4675, %v4655, %v4011
    %v4693 = vsel %vm4675, %v4656, %v4013
    %v4694 = vsel %vm4675, %v4657, %v4015
    %v4695 = vsel %vm4675, %v4658, %v4017
    %v4696 = vsel %vm4675, %v4659, %v4019
    %v4697 = vsel %vm4675, %v4660, %v4021
    %v4698 = vsel %vm4675, %v4661, %v4023
    %v4699 = vsel %vm4675, %v4662, %v4025
    %v4700 = vsel %vm4675, %v4663, %v4027
    %v4701 = vsel %vm4675, %v4664, %v4029
    %v4702 = vsel %vm4675, %v4665, %v4031
    %v4703 = vsel %vm4675, %v4666, %v4033
    %v4704 = vsel %vm4675, %v4667, %v4035
    %v4705 = vsel %vm4675, %v4668, %v4037
    %v4706 = vsel %vm4675, %v4669, %v4039
    %v4707 = vsel %vm4675, %v4670, %v4041
    %v4708 = vsel %vm4675, %v4671, %v4043
    %v4709 = vsel %vm4675, %v4672, %v4045
    %v4710 = vsel %vm4675, %v4673, %v4047
    %v4711 = vsel %vm4675, %v4674, %v4049
    %vm4712 = vcmask 179200
    %v4713 = vsel %vm4712, %v4676, %v4088
    %v4714 = vsel %vm4712, %v4677, %v4090
    %v4715 = vsel %vm4712, %v4678, %v4092
    %v4716 = vsel %vm4712, %v4679, %v4094
    %v4717 = vsel %vm4712, %v4680, %v4096
    %v4718 = vsel %vm4712, %v4681, %v4098
    %v4719 = vsel %vm4712, %v4682, %v4100
    %v4720 = vsel %vm4712, %v4683, %v4102
    %v4721 = vsel %vm4712, %v4684, %v4104
    %v4722 = vsel %vm4712, %v4685, %v4106
    %v4723 = vsel %vm4712, %v4686, %v4108
    %v4724 = vsel %vm4712, %v4687, %v4110
    %v4725 = vsel %vm4712, %v4688, %v4112
    %v4726 = vsel %vm4712, %v4689, %v4114
    %v4727 = vsel %vm4712, %v4690, %v4116
    %v4728 = vsel %vm4712, %v4691, %v4118
    %v4729 = vsel %vm4712, %v4692, %v4120
    %v4730 = vsel %vm4712, %v4693, %v4122
    %v4731 = vsel %vm4712, %v4694, %v4124
    %v4732 = vsel %vm4712, %v4695, %v4126
    %v4733 = vsel %vm4712, %v4696, %v4128
    %v4734 = vsel %vm4712, %v4697, %v4130
    %v4735 = vsel %vm4712, %v4698, %v4132
    %v4736 = vsel %vm4712, %v4699, %v4134
    %v4737 = vsel %vm4712, %v4700, %v4136
    %v4738 = vsel %vm4712, %v4701, %v4138
    %v4739 = vsel %vm4712, %v4702, %v4140
    %v4740 = vsel %vm4712, %v4703, %v4142
    %v4741 = vsel %vm4712, %v4704, %v4144
    %v4742 = vsel %vm4712, %v4705, %v4146
    %v4743 = vsel %vm4712, %v4706, %v4148
    %v4744 = vsel %vm4712, %v4707, %v4150
    %v4745 = vsel %vm4712, %v4708, %v4152
    %v4746 = vsel %vm4712, %v4709, %v4154
    %v4747 = vsel %vm4712, %v4710, %v4156
    %v4748 = vsel %vm4712, %v4711, %v4158
    %4752 = vrot.lane.b32.xlu0 %v2166, 10
    %v4753 = vpop.permute.xlu0 %4752
    %4754 = vrot.lane.b32.xlu0 %v2167, 10
    %v4755 = vpop.permute.xlu0 %4754
    %4756 = vrot.lane.b32.xlu0 %v2168, 10
    %v4757 = vpop.permute.xlu0 %4756
    %4758 = vrot.lane.b32.xlu0 %v2169, 10
    %v4759 = vpop.permute.xlu0 %4758
    %4760 = vrot.lane.b32.xlu0 %v2170, 10
    %v4761 = vpop.permute.xlu0 %4760
    %4762 = vrot.lane.b32.xlu0 %v2171, 10
    %v4763 = vpop.permute.xlu0 %4762
    %4764 = vrot.lane.b32.xlu0 %v2172, 10
    %v4765 = vpop.permute.xlu0 %4764
    %4766 = vrot.lane.b32.xlu0 %v2173, 10
    %v4767 = vpop.permute.xlu0 %4766
    %4768 = vrot.lane.b32.xlu0 %v2174, 10
    %v4769 = vpop.permute.xlu0 %4768
    %4770 = vrot.lane.b32.xlu0 %v2175, 10
    %v4771 = vpop.permute.xlu0 %4770
    %4772 = vrot.lane.b32.xlu0 %v2176, 10
    %v4773 = vpop.permute.xlu0 %4772
    %4774 = vrot.lane.b32.xlu0 %v2177, 10
    %v4775 = vpop.permute.xlu0 %4774
    %4776 = vrot.lane.b32.xlu0 %v2178, 10
    %v4777 = vpop.permute.xlu0 %4776
    %4778 = vrot.lane.b32.xlu0 %v2179, 10
    %v4779 = vpop.permute.xlu0 %4778
    %4780 = vrot.lane.b32.xlu0 %v2180, 10
    %v4781 = vpop.permute.xlu0 %4780
    %4782 = vrot.lane.b32.xlu0 %v2181, 10
    %v4783 = vpop.permute.xlu0 %4782
    %4784 = vrot.lane.b32.xlu0 %v2182, 10
    %v4785 = vpop.permute.xlu0 %4784
    %4786 = vrot.lane.b32.xlu0 %v2183, 10
    %v4787 = vpop.permute.xlu0 %4786
    %4788 = vrot.lane.b32.xlu0 %v2184, 10
    %v4789 = vpop.permute.xlu0 %4788
    %4790 = vrot.lane.b32.xlu0 %v2185, 10
    %v4791 = vpop.permute.xlu0 %4790
    %4792 = vrot.lane.b32.xlu0 %v2186, 10
    %v4793 = vpop.permute.xlu0 %4792
    %4794 = vrot.lane.b32.xlu0 %v2187, 10
    %v4795 = vpop.permute.xlu0 %4794
    %4796 = vrot.lane.b32.xlu0 %v2188, 10
    %v4797 = vpop.permute.xlu0 %4796
    %4798 = vrot.lane.b32.xlu0 %v2189, 10
    %v4799 = vpop.permute.xlu0 %4798
    %4800 = vrot.lane.b32.xlu0 %v2190, 10
    %v4801 = vpop.permute.xlu0 %4800
    %4802 = vrot.lane.b32.xlu0 %v2191, 10
    %v4803 = vpop.permute.xlu0 %4802
    %4804 = vrot.lane.b32.xlu0 %v2192, 10
    %v4805 = vpop.permute.xlu0 %4804
    %4806 = vrot.lane.b32.xlu0 %v2193, 10
    %v4807 = vpop.permute.xlu0 %4806
    %4808 = vrot.lane.b32.xlu0 %v2194, 10
    %v4809 = vpop.permute.xlu0 %4808
    %4810 = vrot.lane.b32.xlu0 %v2195, 10
    %v4811 = vpop.permute.xlu0 %4810
    %4812 = vrot.lane.b32.xlu0 %v2196, 10
    %v4813 = vpop.permute.xlu0 %4812
    %4814 = vrot.lane.b32.xlu0 %v2197, 10
    %v4815 = vpop.permute.xlu0 %4814
    %4816 = vrot.lane.b32.xlu0 %v2198, 10
    %v4817 = vpop.permute.xlu0 %4816
    %4818 = vrot.lane.b32.xlu0 %v2253, 10
    %v4819 = vpop.permute.xlu0 %4818
    %4820 = vrot.lane.b32.xlu0 %v2254, 10
    %v4821 = vpop.permute.xlu0 %4820
    %4822 = vrot.lane.b32.xlu0 %v2255, 10
    %v4823 = vpop.permute.xlu0 %4822
    %4863 = vrot.lane.b32.xlu0 %v2202, 20
    %v4864 = vpop.permute.xlu0 %4863
    %4865 = vrot.lane.b32.xlu0 %v2203, 20
    %v4866 = vpop.permute.xlu0 %4865
    %4867 = vrot.lane.b32.xlu0 %v2204, 20
    %v4868 = vpop.permute.xlu0 %4867
    %4869 = vrot.lane.b32.xlu0 %v2205, 20
    %v4870 = vpop.permute.xlu0 %4869
    %4871 = vrot.lane.b32.xlu0 %v2206, 20
    %v4872 = vpop.permute.xlu0 %4871
    %4873 = vrot.lane.b32.xlu0 %v2207, 20
    %v4874 = vpop.permute.xlu0 %4873
    %4875 = vrot.lane.b32.xlu0 %v2208, 20
    %v4876 = vpop.permute.xlu0 %4875
    %4877 = vrot.lane.b32.xlu0 %v2209, 20
    %v4878 = vpop.permute.xlu0 %4877
    %4879 = vrot.lane.b32.xlu0 %v2210, 20
    %v4880 = vpop.permute.xlu0 %4879
    %4881 = vrot.lane.b32.xlu0 %v2211, 20
    %v4882 = vpop.permute.xlu0 %4881
    %4883 = vrot.lane.b32.xlu0 %v2212, 20
    %v4884 = vpop.permute.xlu0 %4883
    %4885 = vrot.lane.b32.xlu0 %v2213, 20
    %v4886 = vpop.permute.xlu0 %4885
    %4887 = vrot.lane.b32.xlu0 %v2214, 20
    %v4888 = vpop.permute.xlu0 %4887
    %4889 = vrot.lane.b32.xlu0 %v2215, 20
    %v4890 = vpop.permute.xlu0 %4889
    %4891 = vrot.lane.b32.xlu0 %v2216, 20
    %v4892 = vpop.permute.xlu0 %4891
    %4893 = vrot.lane.b32.xlu0 %v2217, 20
    %v4894 = vpop.permute.xlu0 %4893
    %4895 = vrot.lane.b32.xlu0 %v2218, 20
    %v4896 = vpop.permute.xlu0 %4895
    %4897 = vrot.lane.b32.xlu0 %v2219, 20
    %v4898 = vpop.permute.xlu0 %4897
    %4899 = vrot.lane.b32.xlu0 %v2220, 20
    %v4900 = vpop.permute.xlu0 %4899
    %4901 = vrot.lane.b32.xlu0 %v2221, 20
    %v4902 = vpop.permute.xlu0 %4901
    %4903 = vrot.lane.b32.xlu0 %v2222, 20
    %v4904 = vpop.permute.xlu0 %4903
    %4905 = vrot.lane.b32.xlu0 %v2223, 20
    %v4906 = vpop.permute.xlu0 %4905
    %4907 = vrot.lane.b32.xlu0 %v2224, 20
    %v4908 = vpop.permute.xlu0 %4907
    %4909 = vrot.lane.b32.xlu0 %v2225, 20
    %v4910 = vpop.permute.xlu0 %4909
    %4911 = vrot.lane.b32.xlu0 %v2226, 20
    %v4912 = vpop.permute.xlu0 %4911
    %4913 = vrot.lane.b32.xlu0 %v2227, 20
    %v4914 = vpop.permute.xlu0 %4913
    %4915 = vrot.lane.b32.xlu0 %v2228, 20
    %v4916 = vpop.permute.xlu0 %4915
    %4917 = vrot.lane.b32.xlu0 %v2229, 20
    %v4918 = vpop.permute.xlu0 %4917
    %4919 = vrot.lane.b32.xlu0 %v2230, 20
    %v4920 = vpop.permute.xlu0 %4919
    %4921 = vrot.lane.b32.xlu0 %v2231, 20
    %v4922 = vpop.permute.xlu0 %4921
    %4923 = vrot.lane.b32.xlu0 %v2232, 20
    %v4924 = vpop.permute.xlu0 %4923
    %4925 = vrot.lane.b32.xlu0 %v2233, 20
    %v4926 = vpop.permute.xlu0 %4925
    %4927 = vrot.lane.b32.xlu0 %v2234, 20
    %v4928 = vpop.permute.xlu0 %4927
    %4929 = vrot.lane.b32.xlu0 %v2256, 20
    %v4930 = vpop.permute.xlu0 %4929
    %4931 = vrot.lane.b32.xlu0 %v2257, 20
    %v4932 = vpop.permute.xlu0 %4931
    %4933 = vrot.lane.b32.xlu0 %v2258, 20
    %v4934 = vpop.permute.xlu0 %4933
    %4973 = vrot.lane.b32.xlu0 %v1951, 30
    %v4974 = vpop.permute.xlu0 %4973
    %4975 = vrot.lane.b32.xlu0 %v1952, 30
    %v4976 = vpop.permute.xlu0 %4975
    %4977 = vrot.lane.b32.xlu0 %v1953, 30
    %v4978 = vpop.permute.xlu0 %4977
    %4979 = vrot.lane.b32.xlu0 %v1954, 30
    %v4980 = vpop.permute.xlu0 %4979
    %4981 = vrot.lane.b32.xlu0 %v1955, 30
    %v4982 = vpop.permute.xlu0 %4981
    %4983 = vrot.lane.b32.xlu0 %v1956, 30
    %v4984 = vpop.permute.xlu0 %4983
    %4985 = vrot.lane.b32.xlu0 %v1957, 30
    %v4986 = vpop.permute.xlu0 %4985
    %4987 = vrot.lane.b32.xlu0 %v1958, 30
    %v4988 = vpop.permute.xlu0 %4987
    %4989 = vrot.lane.b32.xlu0 %v1959, 30
    %v4990 = vpop.permute.xlu0 %4989
    %4991 = vrot.lane.b32.xlu0 %v1960, 30
    %v4992 = vpop.permute.xlu0 %4991
    %4993 = vrot.lane.b32.xlu0 %v1961, 30
    %v4994 = vpop.permute.xlu0 %4993
    %4995 = vrot.lane.b32.xlu0 %v1962, 30
    %v4996 = vpop.permute.xlu0 %4995
    %4997 = vrot.lane.b32.xlu0 %v1963, 30
    %v4998 = vpop.permute.xlu0 %4997
    %4999 = vrot.lane.b32.xlu0 %v1964, 30
    %v5000 = vpop.permute.xlu0 %4999
    %5001 = vrot.lane.b32.xlu0 %v1965, 30
    %v5002 = vpop.permute.xlu0 %5001
    %5003 = vrot.lane.b32.xlu0 %v1966, 30
    %v5004 = vpop.permute.xlu0 %5003
    %5005 = vrot.lane.b32.xlu0 %v1967, 30
    %v5006 = vpop.permute.xlu0 %5005
    %5007 = vrot.lane.b32.xlu0 %v1968, 30
    %v5008 = vpop.permute.xlu0 %5007
    %5009 = vrot.lane.b32.xlu0 %v1969, 30
    %v5010 = vpop.permute.xlu0 %5009
    %5011 = vrot.lane.b32.xlu0 %v1970, 30
    %v5012 = vpop.permute.xlu0 %5011
    %5013 = vrot.lane.b32.xlu0 %v1971, 30
    %v5014 = vpop.permute.xlu0 %5013
    %5015 = vrot.lane.b32.xlu0 %v1972, 30
    %v5016 = vpop.permute.xlu0 %5015
    %5017 = vrot.lane.b32.xlu0 %v1973, 30
    %v5018 = vpop.permute.xlu0 %5017
    %5019 = vrot.lane.b32.xlu0 %v1974, 30
    %v5020 = vpop.permute.xlu0 %5019
    %5021 = vrot.lane.b32.xlu0 %v1975, 30
    %v5022 = vpop.permute.xlu0 %5021
    %5023 = vrot.lane.b32.xlu0 %v1976, 30
    %v5024 = vpop.permute.xlu0 %5023
    %5025 = vrot.lane.b32.xlu0 %v1977, 30
    %v5026 = vpop.permute.xlu0 %5025
    %5027 = vrot.lane.b32.xlu0 %v1978, 30
    %v5028 = vpop.permute.xlu0 %5027
    %5029 = vrot.lane.b32.xlu0 %v1979, 30
    %v5030 = vpop.permute.xlu0 %5029
    %5031 = vrot.lane.b32.xlu0 %v1980, 30
    %v5032 = vpop.permute.xlu0 %5031
    %5033 = vrot.lane.b32.xlu0 %v1981, 30
    %v5034 = vpop.permute.xlu0 %5033
    %5035 = vrot.lane.b32.xlu0 %v2235, 30
    %v5036 = vpop.permute.xlu0 %5035
    %5037 = vrot.lane.b32.xlu0 %v2236, 30
    %v5038 = vpop.permute.xlu0 %5037
    %5039 = vrot.lane.b32.xlu0 %v2237, 30
    %v5040 = vpop.permute.xlu0 %5039
    %5041 = vrot.lane.b32.xlu0 %v2259, 30
    %v5042 = vpop.permute.xlu0 %5041
    %5043 = vrot.lane.b32.xlu0 %v2260, 30
    %v5044 = vpop.permute.xlu0 %5043
    %5082 = vrot.lane.b32.xlu0 %v1952, 40
    %v5083 = vpop.permute.xlu0 %5082
    %5084 = vrot.lane.b32.xlu0 %v1953, 40
    %v5085 = vpop.permute.xlu0 %5084
    %5086 = vrot.lane.b32.xlu0 %v1954, 40
    %v5087 = vpop.permute.xlu0 %5086
    %5088 = vrot.lane.b32.xlu0 %v1955, 40
    %v5089 = vpop.permute.xlu0 %5088
    %5090 = vrot.lane.b32.xlu0 %v1956, 40
    %v5091 = vpop.permute.xlu0 %5090
    %5092 = vrot.lane.b32.xlu0 %v1957, 40
    %v5093 = vpop.permute.xlu0 %5092
    %5094 = vrot.lane.b32.xlu0 %v1958, 40
    %v5095 = vpop.permute.xlu0 %5094
    %5096 = vrot.lane.b32.xlu0 %v1959, 40
    %v5097 = vpop.permute.xlu0 %5096
    %5098 = vrot.lane.b32.xlu0 %v1960, 40
    %v5099 = vpop.permute.xlu0 %5098
    %5100 = vrot.lane.b32.xlu0 %v1961, 40
    %v5101 = vpop.permute.xlu0 %5100
    %5102 = vrot.lane.b32.xlu0 %v1962, 40
    %v5103 = vpop.permute.xlu0 %5102
    %5104 = vrot.lane.b32.xlu0 %v1963, 40
    %v5105 = vpop.permute.xlu0 %5104
    %5106 = vrot.lane.b32.xlu0 %v1964, 40
    %v5107 = vpop.permute.xlu0 %5106
    %5108 = vrot.lane.b32.xlu0 %v1965, 40
    %v5109 = vpop.permute.xlu0 %5108
    %5110 = vrot.lane.b32.xlu0 %v1966, 40
    %v5111 = vpop.permute.xlu0 %5110
    %5112 = vrot.lane.b32.xlu0 %v1967, 40
    %v5113 = vpop.permute.xlu0 %5112
    %5114 = vrot.lane.b32.xlu0 %v1968, 40
    %v5115 = vpop.permute.xlu0 %5114
    %5116 = vrot.lane.b32.xlu0 %v1969, 40
    %v5117 = vpop.permute.xlu0 %5116
    %5118 = vrot.lane.b32.xlu0 %v1970, 40
    %v5119 = vpop.permute.xlu0 %5118
    %5120 = vrot.lane.b32.xlu0 %v1971, 40
    %v5121 = vpop.permute.xlu0 %5120
    %5122 = vrot.lane.b32.xlu0 %v1972, 40
    %v5123 = vpop.permute.xlu0 %5122
    %5124 = vrot.lane.b32.xlu0 %v1973, 40
    %v5125 = vpop.permute.xlu0 %5124
    %5126 = vrot.lane.b32.xlu0 %v1974, 40
    %v5127 = vpop.permute.xlu0 %5126
    %5128 = vrot.lane.b32.xlu0 %v1975, 40
    %v5129 = vpop.permute.xlu0 %5128
    %5130 = vrot.lane.b32.xlu0 %v1976, 40
    %v5131 = vpop.permute.xlu0 %5130
    %5132 = vrot.lane.b32.xlu0 %v1977, 40
    %v5133 = vpop.permute.xlu0 %5132
    %5134 = vrot.lane.b32.xlu0 %v1978, 40
    %v5135 = vpop.permute.xlu0 %5134
    %5136 = vrot.lane.b32.xlu0 %v1979, 40
    %v5137 = vpop.permute.xlu0 %5136
    %5138 = vrot.lane.b32.xlu0 %v1980, 40
    %v5139 = vpop.permute.xlu0 %5138
    %5140 = vrot.lane.b32.xlu0 %v1981, 40
    %v5141 = vpop.permute.xlu0 %5140
    %5142 = vrot.lane.b32.xlu0 %v2235, 40
    %v5143 = vpop.permute.xlu0 %5142
    %5144 = vrot.lane.b32.xlu0 %v2236, 40
    %v5145 = vpop.permute.xlu0 %5144
    %5146 = vrot.lane.b32.xlu0 %v2237, 40
    %v5147 = vpop.permute.xlu0 %5146
    %5148 = vrot.lane.b32.xlu0 %v2259, 40
    %v5149 = vpop.permute.xlu0 %5148
    %5150 = vrot.lane.b32.xlu0 %v2260, 40
    %v5151 = vpop.permute.xlu0 %5150
    %5152 = vrot.lane.b32.xlu0 %v2261, 40
    %v5153 = vpop.permute.xlu0 %5152
    %5193 = vrot.lane.b32.xlu0 %v1988, 50
    %v5194 = vpop.permute.xlu0 %5193
    %5195 = vrot.lane.b32.xlu0 %v1989, 50
    %v5196 = vpop.permute.xlu0 %5195
    %5197 = vrot.lane.b32.xlu0 %v1990, 50
    %v5198 = vpop.permute.xlu0 %5197
    %5199 = vrot.lane.b32.xlu0 %v1991, 50
    %v5200 = vpop.permute.xlu0 %5199
    %5201 = vrot.lane.b32.xlu0 %v1992, 50
    %v5202 = vpop.permute.xlu0 %5201
    %5203 = vrot.lane.b32.xlu0 %v1993, 50
    %v5204 = vpop.permute.xlu0 %5203
    %5205 = vrot.lane.b32.xlu0 %v1994, 50
    %v5206 = vpop.permute.xlu0 %5205
    %5207 = vrot.lane.b32.xlu0 %v1995, 50
    %v5208 = vpop.permute.xlu0 %5207
    %5209 = vrot.lane.b32.xlu0 %v1996, 50
    %v5210 = vpop.permute.xlu0 %5209
    %5211 = vrot.lane.b32.xlu0 %v1997, 50
    %v5212 = vpop.permute.xlu0 %5211
    %5213 = vrot.lane.b32.xlu0 %v1998, 50
    %v5214 = vpop.permute.xlu0 %5213
    %5215 = vrot.lane.b32.xlu0 %v1999, 50
    %v5216 = vpop.permute.xlu0 %5215
    %5217 = vrot.lane.b32.xlu0 %v2000, 50
    %v5218 = vpop.permute.xlu0 %5217
    %5219 = vrot.lane.b32.xlu0 %v2001, 50
    %v5220 = vpop.permute.xlu0 %5219
    %5221 = vrot.lane.b32.xlu0 %v2002, 50
    %v5222 = vpop.permute.xlu0 %5221
    %5223 = vrot.lane.b32.xlu0 %v2003, 50
    %v5224 = vpop.permute.xlu0 %5223
    %5225 = vrot.lane.b32.xlu0 %v2004, 50
    %v5226 = vpop.permute.xlu0 %5225
    %5227 = vrot.lane.b32.xlu0 %v2005, 50
    %v5228 = vpop.permute.xlu0 %5227
    %5229 = vrot.lane.b32.xlu0 %v2006, 50
    %v5230 = vpop.permute.xlu0 %5229
    %5231 = vrot.lane.b32.xlu0 %v2007, 50
    %v5232 = vpop.permute.xlu0 %5231
    %5233 = vrot.lane.b32.xlu0 %v2008, 50
    %v5234 = vpop.permute.xlu0 %5233
    %5235 = vrot.lane.b32.xlu0 %v2009, 50
    %v5236 = vpop.permute.xlu0 %5235
    %5237 = vrot.lane.b32.xlu0 %v2010, 50
    %v5238 = vpop.permute.xlu0 %5237
    %5239 = vrot.lane.b32.xlu0 %v2011, 50
    %v5240 = vpop.permute.xlu0 %5239
    %5241 = vrot.lane.b32.xlu0 %v2012, 50
    %v5242 = vpop.permute.xlu0 %5241
    %5243 = vrot.lane.b32.xlu0 %v2013, 50
    %v5244 = vpop.permute.xlu0 %5243
    %5245 = vrot.lane.b32.xlu0 %v2014, 50
    %v5246 = vpop.permute.xlu0 %5245
    %5247 = vrot.lane.b32.xlu0 %v2015, 50
    %v5248 = vpop.permute.xlu0 %5247
    %5249 = vrot.lane.b32.xlu0 %v2016, 50
    %v5250 = vpop.permute.xlu0 %5249
    %5251 = vrot.lane.b32.xlu0 %v2017, 50
    %v5252 = vpop.permute.xlu0 %5251
    %5253 = vrot.lane.b32.xlu0 %v2238, 50
    %v5254 = vpop.permute.xlu0 %5253
    %5255 = vrot.lane.b32.xlu0 %v2239, 50
    %v5256 = vpop.permute.xlu0 %5255
    %5257 = vrot.lane.b32.xlu0 %v2240, 50
    %v5258 = vpop.permute.xlu0 %5257
    %5259 = vrot.lane.b32.xlu0 %v2262, 50
    %v5260 = vpop.permute.xlu0 %5259
    %5261 = vrot.lane.b32.xlu0 %v2263, 50
    %v5262 = vpop.permute.xlu0 %5261
    %5263 = vrot.lane.b32.xlu0 %v2264, 50
    %v5264 = vpop.permute.xlu0 %5263
    %5304 = vrot.lane.b32.xlu0 %v2024, 60
    %v5305 = vpop.permute.xlu0 %5304
    %5306 = vrot.lane.b32.xlu0 %v2025, 60
    %v5307 = vpop.permute.xlu0 %5306
    %5308 = vrot.lane.b32.xlu0 %v2026, 60
    %v5309 = vpop.permute.xlu0 %5308
    %5310 = vrot.lane.b32.xlu0 %v2027, 60
    %v5311 = vpop.permute.xlu0 %5310
    %5312 = vrot.lane.b32.xlu0 %v2028, 60
    %v5313 = vpop.permute.xlu0 %5312
    %5314 = vrot.lane.b32.xlu0 %v2029, 60
    %v5315 = vpop.permute.xlu0 %5314
    %5316 = vrot.lane.b32.xlu0 %v2030, 60
    %v5317 = vpop.permute.xlu0 %5316
    %5318 = vrot.lane.b32.xlu0 %v2031, 60
    %v5319 = vpop.permute.xlu0 %5318
    %5320 = vrot.lane.b32.xlu0 %v2032, 60
    %v5321 = vpop.permute.xlu0 %5320
    %5322 = vrot.lane.b32.xlu0 %v2033, 60
    %v5323 = vpop.permute.xlu0 %5322
    %5324 = vrot.lane.b32.xlu0 %v2034, 60
    %v5325 = vpop.permute.xlu0 %5324
    %5326 = vrot.lane.b32.xlu0 %v2035, 60
    %v5327 = vpop.permute.xlu0 %5326
    %5328 = vrot.lane.b32.xlu0 %v2036, 60
    %v5329 = vpop.permute.xlu0 %5328
    %5330 = vrot.lane.b32.xlu0 %v2037, 60
    %v5331 = vpop.permute.xlu0 %5330
    %5332 = vrot.lane.b32.xlu0 %v2038, 60
    %v5333 = vpop.permute.xlu0 %5332
    %5334 = vrot.lane.b32.xlu0 %v2039, 60
    %v5335 = vpop.permute.xlu0 %5334
    %5336 = vrot.lane.b32.xlu0 %v2040, 60
    %v5337 = vpop.permute.xlu0 %5336
    %5338 = vrot.lane.b32.xlu0 %v2041, 60
    %v5339 = vpop.permute.xlu0 %5338
    %5340 = vrot.lane.b32.xlu0 %v2042, 60
    %v5341 = vpop.permute.xlu0 %5340
    %5342 = vrot.lane.b32.xlu0 %v2043, 60
    %v5343 = vpop.permute.xlu0 %5342
    %5344 = vrot.lane.b32.xlu0 %v2044, 60
    %v5345 = vpop.permute.xlu0 %5344
    %5346 = vrot.lane.b32.xlu0 %v2045, 60
    %v5347 = vpop.permute.xlu0 %5346
    %5348 = vrot.lane.b32.xlu0 %v2046, 60
    %v5349 = vpop.permute.xlu0 %5348
    %5350 = vrot.lane.b32.xlu0 %v2047, 60
    %v5351 = vpop.permute.xlu0 %5350
    %5352 = vrot.lane.b32.xlu0 %v2048, 60
    %v5353 = vpop.permute.xlu0 %5352
    %5354 = vrot.lane.b32.xlu0 %v2049, 60
    %v5355 = vpop.permute.xlu0 %5354
    %5356 = vrot.lane.b32.xlu0 %v2050, 60
    %v5357 = vpop.permute.xlu0 %5356
    %5358 = vrot.lane.b32.xlu0 %v2051, 60
    %v5359 = vpop.permute.xlu0 %5358
    %5360 = vrot.lane.b32.xlu0 %v2052, 60
    %v5361 = vpop.permute.xlu0 %5360
    %5362 = vrot.lane.b32.xlu0 %v2053, 60
    %v5363 = vpop.permute.xlu0 %5362
    %5364 = vrot.lane.b32.xlu0 %v2241, 60
    %v5365 = vpop.permute.xlu0 %5364
    %5366 = vrot.lane.b32.xlu0 %v2242, 60
    %v5367 = vpop.permute.xlu0 %5366
    %5368 = vrot.lane.b32.xlu0 %v2243, 60
    %v5369 = vpop.permute.xlu0 %5368
    %5370 = vrot.lane.b32.xlu0 %v2265, 60
    %v5371 = vpop.permute.xlu0 %5370
    %5372 = vrot.lane.b32.xlu0 %v2266, 60
    %v5373 = vpop.permute.xlu0 %5372
    %5374 = vrot.lane.b32.xlu0 %v2267, 60
    %v5375 = vpop.permute.xlu0 %5374
    %5415 = vrot.lane.b32.xlu0 %v2060, 70
    %v5416 = vpop.permute.xlu0 %5415
    %5417 = vrot.lane.b32.xlu0 %v2061, 70
    %v5418 = vpop.permute.xlu0 %5417
    %5419 = vrot.lane.b32.xlu0 %v2062, 70
    %v5420 = vpop.permute.xlu0 %5419
    %5421 = vrot.lane.b32.xlu0 %v2063, 70
    %v5422 = vpop.permute.xlu0 %5421
    %5423 = vrot.lane.b32.xlu0 %v2064, 70
    %v5424 = vpop.permute.xlu0 %5423
    %5425 = vrot.lane.b32.xlu0 %v2065, 70
    %v5426 = vpop.permute.xlu0 %5425
    %5427 = vrot.lane.b32.xlu0 %v2066, 70
    %v5428 = vpop.permute.xlu0 %5427
    %5429 = vrot.lane.b32.xlu0 %v2067, 70
    %v5430 = vpop.permute.xlu0 %5429
    %5431 = vrot.lane.b32.xlu0 %v2068, 70
    %v5432 = vpop.permute.xlu0 %5431
    %5433 = vrot.lane.b32.xlu0 %v2069, 70
    %v5434 = vpop.permute.xlu0 %5433
    %5435 = vrot.lane.b32.xlu0 %v2070, 70
    %v5436 = vpop.permute.xlu0 %5435
    %5437 = vrot.lane.b32.xlu0 %v2071, 70
    %v5438 = vpop.permute.xlu0 %5437
    %5439 = vrot.lane.b32.xlu0 %v2072, 70
    %v5440 = vpop.permute.xlu0 %5439
    %5441 = vrot.lane.b32.xlu0 %v2073, 70
    %v5442 = vpop.permute.xlu0 %5441
    %5443 = vrot.lane.b32.xlu0 %v2074, 70
    %v5444 = vpop.permute.xlu0 %5443
    %5445 = vrot.lane.b32.xlu0 %v2075, 70
    %v5446 = vpop.permute.xlu0 %5445
    %5447 = vrot.lane.b32.xlu0 %v2076, 70
    %v5448 = vpop.permute.xlu0 %5447
    %5449 = vrot.lane.b32.xlu0 %v2077, 70
    %v5450 = vpop.permute.xlu0 %5449
    %5451 = vrot.lane.b32.xlu0 %v2078, 70
    %v5452 = vpop.permute.xlu0 %5451
    %5453 = vrot.lane.b32.xlu0 %v2079, 70
    %v5454 = vpop.permute.xlu0 %5453
    %5455 = vrot.lane.b32.xlu0 %v2080, 70
    %v5456 = vpop.permute.xlu0 %5455
    %5457 = vrot.lane.b32.xlu0 %v2081, 70
    %v5458 = vpop.permute.xlu0 %5457
    %5459 = vrot.lane.b32.xlu0 %v2082, 70
    %v5460 = vpop.permute.xlu0 %5459
    %5461 = vrot.lane.b32.xlu0 %v2083, 70
    %v5462 = vpop.permute.xlu0 %5461
    %5463 = vrot.lane.b32.xlu0 %v2084, 70
    %v5464 = vpop.permute.xlu0 %5463
    %5465 = vrot.lane.b32.xlu0 %v2085, 70
    %v5466 = vpop.permute.xlu0 %5465
    %5467 = vrot.lane.b32.xlu0 %v2086, 70
    %v5468 = vpop.permute.xlu0 %5467
    %5469 = vrot.lane.b32.xlu0 %v2087, 70
    %v5470 = vpop.permute.xlu0 %5469
    %5471 = vrot.lane.b32.xlu0 %v2088, 70
    %v5472 = vpop.permute.xlu0 %5471
    %5473 = vrot.lane.b32.xlu0 %v2089, 70
    %v5474 = vpop.permute.xlu0 %5473
    %5475 = vrot.lane.b32.xlu0 %v2244, 70
    %v5476 = vpop.permute.xlu0 %5475
    %5477 = vrot.lane.b32.xlu0 %v2245, 70
    %v5478 = vpop.permute.xlu0 %5477
    %5479 = vrot.lane.b32.xlu0 %v2246, 70
    %v5480 = vpop.permute.xlu0 %5479
    %5481 = vrot.lane.b32.xlu0 %v2268, 70
    %v5482 = vpop.permute.xlu0 %5481
    %5483 = vrot.lane.b32.xlu0 %v2269, 70
    %v5484 = vpop.permute.xlu0 %5483
    %5485 = vrot.lane.b32.xlu0 %v2270, 70
    %v5486 = vpop.permute.xlu0 %5485
    %5525 = vrot.lane.b32.xlu0 %v2096, 80
    %v5526 = vpop.permute.xlu0 %5525
    %5527 = vrot.lane.b32.xlu0 %v2097, 80
    %v5528 = vpop.permute.xlu0 %5527
    %5529 = vrot.lane.b32.xlu0 %v2098, 80
    %v5530 = vpop.permute.xlu0 %5529
    %5531 = vrot.lane.b32.xlu0 %v2099, 80
    %v5532 = vpop.permute.xlu0 %5531
    %5533 = vrot.lane.b32.xlu0 %v2100, 80
    %v5534 = vpop.permute.xlu0 %5533
    %5535 = vrot.lane.b32.xlu0 %v2101, 80
    %v5536 = vpop.permute.xlu0 %5535
    %5537 = vrot.lane.b32.xlu0 %v2102, 80
    %v5538 = vpop.permute.xlu0 %5537
    %5539 = vrot.lane.b32.xlu0 %v2103, 80
    %v5540 = vpop.permute.xlu0 %5539
    %5541 = vrot.lane.b32.xlu0 %v2104, 80
    %v5542 = vpop.permute.xlu0 %5541
    %5543 = vrot.lane.b32.xlu0 %v2105, 80
    %v5544 = vpop.permute.xlu0 %5543
    %5545 = vrot.lane.b32.xlu0 %v2106, 80
    %v5546 = vpop.permute.xlu0 %5545
    %5547 = vrot.lane.b32.xlu0 %v2107, 80
    %v5548 = vpop.permute.xlu0 %5547
    %5549 = vrot.lane.b32.xlu0 %v2108, 80
    %v5550 = vpop.permute.xlu0 %5549
    %5551 = vrot.lane.b32.xlu0 %v2109, 80
    %v5552 = vpop.permute.xlu0 %5551
    %5553 = vrot.lane.b32.xlu0 %v2110, 80
    %v5554 = vpop.permute.xlu0 %5553
    %5555 = vrot.lane.b32.xlu0 %v2111, 80
    %v5556 = vpop.permute.xlu0 %5555
    %5557 = vrot.lane.b32.xlu0 %v2112, 80
    %v5558 = vpop.permute.xlu0 %5557
    %5559 = vrot.lane.b32.xlu0 %v2113, 80
    %v5560 = vpop.permute.xlu0 %5559
    %5561 = vrot.lane.b32.xlu0 %v2114, 80
    %v5562 = vpop.permute.xlu0 %5561
    %5563 = vrot.lane.b32.xlu0 %v2115, 80
    %v5564 = vpop.permute.xlu0 %5563
    %5565 = vrot.lane.b32.xlu0 %v2116, 80
    %v5566 = vpop.permute.xlu0 %5565
    %5567 = vrot.lane.b32.xlu0 %v2117, 80
    %v5568 = vpop.permute.xlu0 %5567
    %5569 = vrot.lane.b32.xlu0 %v2118, 80
    %v5570 = vpop.permute.xlu0 %5569
    %5571 = vrot.lane.b32.xlu0 %v2119, 80
    %v5572 = vpop.permute.xlu0 %5571
    %5573 = vrot.lane.b32.xlu0 %v2120, 80
    %v5574 = vpop.permute.xlu0 %5573
    %5575 = vrot.lane.b32.xlu0 %v2121, 80
    %v5576 = vpop.permute.xlu0 %5575
    %5577 = vrot.lane.b32.xlu0 %v2122, 80
    %v5578 = vpop.permute.xlu0 %5577
    %5579 = vrot.lane.b32.xlu0 %v2123, 80
    %v5580 = vpop.permute.xlu0 %5579
    %5581 = vrot.lane.b32.xlu0 %v2124, 80
    %v5582 = vpop.permute.xlu0 %5581
    %5583 = vrot.lane.b32.xlu0 %v2125, 80
    %v5584 = vpop.permute.xlu0 %5583
    %5585 = vrot.lane.b32.xlu0 %v2126, 80
    %v5586 = vpop.permute.xlu0 %5585
    %5587 = vrot.lane.b32.xlu0 %v2247, 80
    %v5588 = vpop.permute.xlu0 %5587
    %5589 = vrot.lane.b32.xlu0 %v2248, 80
    %v5590 = vpop.permute.xlu0 %5589
    %5591 = vrot.lane.b32.xlu0 %v2249, 80
    %v5592 = vpop.permute.xlu0 %5591
    %5593 = vrot.lane.b32.xlu0 %v2271, 80
    %v5594 = vpop.permute.xlu0 %5593
    %5595 = vrot.lane.b32.xlu0 %v2272, 80
    %v5596 = vpop.permute.xlu0 %5595
    %v5633 = vsel %vm1549, %v2130, %v4753
    %v5634 = vsel %vm1549, %v2131, %v4755
    %v5635 = vsel %vm1549, %v2132, %v4757
    %v5636 = vsel %vm1549, %v2133, %v4759
    %v5637 = vsel %vm1549, %v2134, %v4761
    %v5638 = vsel %vm1549, %v2135, %v4763
    %v5639 = vsel %vm1549, %v2136, %v4765
    %v5640 = vsel %vm1549, %v2137, %v4767
    %v5641 = vsel %vm1549, %v2138, %v4769
    %v5642 = vsel %vm1549, %v2139, %v4771
    %v5643 = vsel %vm1549, %v2140, %v4773
    %v5644 = vsel %vm1549, %v2141, %v4775
    %v5645 = vsel %vm1549, %v2142, %v4777
    %v5646 = vsel %vm1549, %v2143, %v4779
    %v5647 = vsel %vm1549, %v2144, %v4781
    %v5648 = vsel %vm1549, %v2145, %v4783
    %v5649 = vsel %vm1549, %v2146, %v4785
    %v5650 = vsel %vm1549, %v2147, %v4787
    %v5651 = vsel %vm1549, %v2148, %v4789
    %v5652 = vsel %vm1549, %v2149, %v4791
    %v5653 = vsel %vm1549, %v2150, %v4793
    %v5654 = vsel %vm1549, %v2151, %v4795
    %v5655 = vsel %vm1549, %v2152, %v4797
    %v5656 = vsel %vm1549, %v2153, %v4799
    %v5657 = vsel %vm1549, %v2154, %v4801
    %v5658 = vsel %vm1549, %v2155, %v4803
    %v5659 = vsel %vm1549, %v2156, %v4805
    %v5660 = vsel %vm1549, %v2157, %v4807
    %v5661 = vsel %vm1549, %v2158, %v4809
    %v5662 = vsel %vm1549, %v2159, %v4811
    %v5663 = vsel %vm1549, %v2160, %v4813
    %v5664 = vsel %vm1549, %v2161, %v4815
    %v5665 = vsel %vm1549, %v2162, %v4817
    %v5666 = vsel %vm1549, %v2250, %v4819
    %v5667 = vsel %vm1549, %v2251, %v4821
    %v5668 = vsel %vm1549, %v2252, %v4823
    %v5669 = vsel %vm4231, %v5633, %v4864
    %v5670 = vsel %vm4231, %v5634, %v4866
    %v5671 = vsel %vm4231, %v5635, %v4868
    %v5672 = vsel %vm4231, %v5636, %v4870
    %v5673 = vsel %vm4231, %v5637, %v4872
    %v5674 = vsel %vm4231, %v5638, %v4874
    %v5675 = vsel %vm4231, %v5639, %v4876
    %v5676 = vsel %vm4231, %v5640, %v4878
    %v5677 = vsel %vm4231, %v5641, %v4880
    %v5678 = vsel %vm4231, %v5642, %v4882
    %v5679 = vsel %vm4231, %v5643, %v4884
    %v5680 = vsel %vm4231, %v5644, %v4886
    %v5681 = vsel %vm4231, %v5645, %v4888
    %v5682 = vsel %vm4231, %v5646, %v4890
    %v5683 = vsel %vm4231, %v5647, %v4892
    %v5684 = vsel %vm4231, %v5648, %v4894
    %v5685 = vsel %vm4231, %v5649, %v4896
    %v5686 = vsel %vm4231, %v5650, %v4898
    %v5687 = vsel %vm4231, %v5651, %v4900
    %v5688 = vsel %vm4231, %v5652, %v4902
    %v5689 = vsel %vm4231, %v5653, %v4904
    %v5690 = vsel %vm4231, %v5654, %v4906
    %v5691 = vsel %vm4231, %v5655, %v4908
    %v5692 = vsel %vm4231, %v5656, %v4910
    %v5693 = vsel %vm4231, %v5657, %v4912
    %v5694 = vsel %vm4231, %v5658, %v4914
    %v5695 = vsel %vm4231, %v5659, %v4916
    %v5696 = vsel %vm4231, %v5660, %v4918
    %v5697 = vsel %vm4231, %v5661, %v4920
    %v5698 = vsel %vm4231, %v5662, %v4922
    %v5699 = vsel %vm4231, %v5663, %v4924
    %v5700 = vsel %vm4231, %v5664, %v4926
    %v5701 = vsel %vm4231, %v5665, %v4928
    %v5702 = vsel %vm4231, %v5666, %v4930
    %v5703 = vsel %vm4231, %v5667, %v4932
    %v5704 = vsel %vm4231, %v5668, %v4934
    %v5705 = vsel %vm4268, %v5669, %v4974
    %v5706 = vsel %vm4268, %v5670, %v4976
    %v5707 = vsel %vm4268, %v5671, %v4978
    %v5708 = vsel %vm4268, %v5672, %v4980
    %v5709 = vsel %vm4268, %v5673, %v4982
    %v5710 = vsel %vm4268, %v5674, %v4984
    %v5711 = vsel %vm4268, %v5675, %v4986
    %v5712 = vsel %vm4268, %v5676, %v4988
    %v5713 = vsel %vm4268, %v5677, %v4990
    %v5714 = vsel %vm4268, %v5678, %v4992
    %v5715 = vsel %vm4268, %v5679, %v4994
    %v5716 = vsel %vm4268, %v5680, %v4996
    %v5717 = vsel %vm4268, %v5681, %v4998
    %v5718 = vsel %vm4268, %v5682, %v5000
    %v5719 = vsel %vm4268, %v5683, %v5002
    %v5720 = vsel %vm4268, %v5684, %v5004
    %v5721 = vsel %vm4268, %v5685, %v5006
    %v5722 = vsel %vm4268, %v5686, %v5008
    %v5723 = vsel %vm4268, %v5687, %v5010
    %v5724 = vsel %vm4268, %v5688, %v5012
    %v5725 = vsel %vm4268, %v5689, %v5014
    %v5726 = vsel %vm4268, %v5690, %v5016
    %v5727 = vsel %vm4268, %v5691, %v5018
    %v5728 = vsel %vm4268, %v5692, %v5020
    %v5729 = vsel %vm4268, %v5693, %v5022
    %v5730 = vsel %vm4268, %v5694, %v5024
    %v5731 = vsel %vm4268, %v5695, %v5026
    %v5732 = vsel %vm4268, %v5696, %v5028
    %v5733 = vsel %vm4268, %v5697, %v5030
    %v5734 = vsel %vm4268, %v5698, %v5032
    %v5735 = vsel %vm4268, %v5699, %v5034
    %v5736 = vsel %vm4268, %v5700, %v5036
    %v5737 = vsel %vm4268, %v5701, %v5038
    %v5738 = vsel %vm4268, %v5702, %v5040
    %v5739 = vsel %vm4268, %v5703, %v5042
    %v5740 = vsel %vm4268, %v5704, %v5044
    %v5741 = vsel %vm4305, %v5705, %v5083
    %v5742 = vsel %vm4305, %v5706, %v5085
    %v5743 = vsel %vm4305, %v5707, %v5087
    %v5744 = vsel %vm4305, %v5708, %v5089
    %v5745 = vsel %vm4305, %v5709, %v5091
    %v5746 = vsel %vm4305, %v5710, %v5093
    %v5747 = vsel %vm4305, %v5711, %v5095
    %v5748 = vsel %vm4305, %v5712, %v5097
    %v5749 = vsel %vm4305, %v5713, %v5099
    %v5750 = vsel %vm4305, %v5714, %v5101
    %v5751 = vsel %vm4305, %v5715, %v5103
    %v5752 = vsel %vm4305, %v5716, %v5105
    %v5753 = vsel %vm4305, %v5717, %v5107
    %v5754 = vsel %vm4305, %v5718, %v5109
    %v5755 = vsel %vm4305, %v5719, %v5111
    %v5756 = vsel %vm4305, %v5720, %v5113
    %v5757 = vsel %vm4305, %v5721, %v5115
    %v5758 = vsel %vm4305, %v5722, %v5117
    %v5759 = vsel %vm4305, %v5723, %v5119
    %v5760 = vsel %vm4305, %v5724, %v5121
    %v5761 = vsel %vm4305, %v5725, %v5123
    %v5762 = vsel %vm4305, %v5726, %v5125
    %v5763 = vsel %vm4305, %v5727, %v5127
    %v5764 = vsel %vm4305, %v5728, %v5129
    %v5765 = vsel %vm4305, %v5729, %v5131
    %v5766 = vsel %vm4305, %v5730, %v5133
    %v5767 = vsel %vm4305, %v5731, %v5135
    %v5768 = vsel %vm4305, %v5732, %v5137
    %v5769 = vsel %vm4305, %v5733, %v5139
    %v5770 = vsel %vm4305, %v5734, %v5141
    %v5771 = vsel %vm4305, %v5735, %v5143
    %v5772 = vsel %vm4305, %v5736, %v5145
    %v5773 = vsel %vm4305, %v5737, %v5147
    %v5774 = vsel %vm4305, %v5738, %v5149
    %v5775 = vsel %vm4305, %v5739, %v5151
    %v5776 = vsel %vm4305, %v5740, %v5153
    %v5777 = vsel %vm4342, %v5741, %v5194
    %v5778 = vsel %vm4342, %v5742, %v5196
    %v5779 = vsel %vm4342, %v5743, %v5198
    %v5780 = vsel %vm4342, %v5744, %v5200
    %v5781 = vsel %vm4342, %v5745, %v5202
    %v5782 = vsel %vm4342, %v5746, %v5204
    %v5783 = vsel %vm4342, %v5747, %v5206
    %v5784 = vsel %vm4342, %v5748, %v5208
    %v5785 = vsel %vm4342, %v5749, %v5210
    %v5786 = vsel %vm4342, %v5750, %v5212
    %v5787 = vsel %vm4342, %v5751, %v5214
    %v5788 = vsel %vm4342, %v5752, %v5216
    %v5789 = vsel %vm4342, %v5753, %v5218
    %v5790 = vsel %vm4342, %v5754, %v5220
    %v5791 = vsel %vm4342, %v5755, %v5222
    %v5792 = vsel %vm4342, %v5756, %v5224
    %v5793 = vsel %vm4342, %v5757, %v5226
    %v5794 = vsel %vm4342, %v5758, %v5228
    %v5795 = vsel %vm4342, %v5759, %v5230
    %v5796 = vsel %vm4342, %v5760, %v5232
    %v5797 = vsel %vm4342, %v5761, %v5234
    %v5798 = vsel %vm4342, %v5762, %v5236
    %v5799 = vsel %vm4342, %v5763, %v5238
    %v5800 = vsel %vm4342, %v5764, %v5240
    %v5801 = vsel %vm4342, %v5765, %v5242
    %v5802 = vsel %vm4342, %v5766, %v5244
    %v5803 = vsel %vm4342, %v5767, %v5246
    %v5804 = vsel %vm4342, %v5768, %v5248
    %v5805 = vsel %vm4342, %v5769, %v5250
    %v5806 = vsel %vm4342, %v5770, %v5252
    %v5807 = vsel %vm4342, %v5771, %v5254
    %v5808 = vsel %vm4342, %v5772, %v5256
    %v5809 = vsel %vm4342, %v5773, %v5258
    %v5810 = vsel %vm4342, %v5774, %v5260
    %v5811 = vsel %vm4342, %v5775, %v5262
    %v5812 = vsel %vm4342, %v5776, %v5264
    %v5813 = vsel %vm4379, %v5777, %v5305
    %v5814 = vsel %vm4379, %v5778, %v5307
    %v5815 = vsel %vm4379, %v5779, %v5309
    %v5816 = vsel %vm4379, %v5780, %v5311
    %v5817 = vsel %vm4379, %v5781, %v5313
    %v5818 = vsel %vm4379, %v5782, %v5315
    %v5819 = vsel %vm4379, %v5783, %v5317
    %v5820 = vsel %vm4379, %v5784, %v5319
    %v5821 = vsel %vm4379, %v5785, %v5321
    %v5822 = vsel %vm4379, %v5786, %v5323
    %v5823 = vsel %vm4379, %v5787, %v5325
    %v5824 = vsel %vm4379, %v5788, %v5327
    %v5825 = vsel %vm4379, %v5789, %v5329
    %v5826 = vsel %vm4379, %v5790, %v5331
    %v5827 = vsel %vm4379, %v5791, %v5333
    %v5828 = vsel %vm4379, %v5792, %v5335
    %v5829 = vsel %vm4379, %v5793, %v5337
    %v5830 = vsel %vm4379, %v5794, %v5339
    %v5831 = vsel %vm4379, %v5795, %v5341
    %v5832 = vsel %vm4379, %v5796, %v5343
    %v5833 = vsel %vm4379, %v5797, %v5345
    %v5834 = vsel %vm4379, %v5798, %v5347
    %v5835 = vsel %vm4379, %v5799, %v5349
    %v5836 = vsel %vm4379, %v5800, %v5351
    %v5837 = vsel %vm4379, %v5801, %v5353
    %v5838 = vsel %vm4379, %v5802, %v5355
    %v5839 = vsel %vm4379, %v5803, %v5357
    %v5840 = vsel %vm4379, %v5804, %v5359
    %v5841 = vsel %vm4379, %v5805, %v5361
    %v5842 = vsel %vm4379, %v5806, %v5363
    %v5843 = vsel %vm4379, %v5807, %v5365
    %v5844 = vsel %vm4379, %v5808, %v5367
    %v5845 = vsel %vm4379, %v5809, %v5369
    %v5846 = vsel %vm4379, %v5810, %v5371
    %v5847 = vsel %vm4379, %v5811, %v5373
    %v5848 = vsel %vm4379, %v5812, %v5375
    %v5849 = vsel %vm4416, %v5813, %v5416
    %v5850 = vsel %vm4416, %v5814, %v5418
    %v5851 = vsel %vm4416, %v5815, %v5420
    %v5852 = vsel %vm4416, %v5816, %v5422
    %v5853 = vsel %vm4416, %v5817, %v5424
    %v5854 = vsel %vm4416, %v5818, %v5426
    %v5855 = vsel %vm4416, %v5819, %v5428
    %v5856 = vsel %vm4416, %v5820, %v5430
    %v5857 = vsel %vm4416, %v5821, %v5432
    %v5858 = vsel %vm4416, %v5822, %v5434
    %v5859 = vsel %vm4416, %v5823, %v5436
    %v5860 = vsel %vm4416, %v5824, %v5438
    %v5861 = vsel %vm4416, %v5825, %v5440
    %v5862 = vsel %vm4416, %v5826, %v5442
    %v5863 = vsel %vm4416, %v5827, %v5444
    %v5864 = vsel %vm4416, %v5828, %v5446
    %v5865 = vsel %vm4416, %v5829, %v5448
    %v5866 = vsel %vm4416, %v5830, %v5450
    %v5867 = vsel %vm4416, %v5831, %v5452
    %v5868 = vsel %vm4416, %v5832, %v5454
    %v5869 = vsel %vm4416, %v5833, %v5456
    %v5870 = vsel %vm4416, %v5834, %v5458
    %v5871 = vsel %vm4416, %v5835, %v5460
    %v5872 = vsel %vm4416, %v5836, %v5462
    %v5873 = vsel %vm4416, %v5837, %v5464
    %v5874 = vsel %vm4416, %v5838, %v5466
    %v5875 = vsel %vm4416, %v5839, %v5468
    %v5876 = vsel %vm4416, %v5840, %v5470
    %v5877 = vsel %vm4416, %v5841, %v5472
    %v5878 = vsel %vm4416, %v5842, %v5474
    %v5879 = vsel %vm4416, %v5843, %v5476
    %v5880 = vsel %vm4416, %v5844, %v5478
    %v5881 = vsel %vm4416, %v5845, %v5480
    %v5882 = vsel %vm4416, %v5846, %v5482
    %v5883 = vsel %vm4416, %v5847, %v5484
    %v5884 = vsel %vm4416, %v5848, %v5486
    %v5885 = vsel %vm4453, %v5849, %v5526
    %v5886 = vsel %vm4453, %v5850, %v5528
    %v5887 = vsel %vm4453, %v5851, %v5530
    %v5888 = vsel %vm4453, %v5852, %v5532
    %v5889 = vsel %vm4453, %v5853, %v5534
    %v5890 = vsel %vm4453, %v5854, %v5536
    %v5891 = vsel %vm4453, %v5855, %v5538
    %v5892 = vsel %vm4453, %v5856, %v5540
    %v5893 = vsel %vm4453, %v5857, %v5542
    %v5894 = vsel %vm4453, %v5858, %v5544
    %v5895 = vsel %vm4453, %v5859, %v5546
    %v5896 = vsel %vm4453, %v5860, %v5548
    %v5897 = vsel %vm4453, %v5861, %v5550
    %v5898 = vsel %vm4453, %v5862, %v5552
    %v5899 = vsel %vm4453, %v5863, %v5554
    %v5900 = vsel %vm4453, %v5864, %v5556
    %v5901 = vsel %vm4453, %v5865, %v5558
    %v5902 = vsel %vm4453, %v5866, %v5560
    %v5903 = vsel %vm4453, %v5867, %v5562
    %v5904 = vsel %vm4453, %v5868, %v5564
    %v5905 = vsel %vm4453, %v5869, %v5566
    %v5906 = vsel %vm4453, %v5870, %v5568
    %v5907 = vsel %vm4453, %v5871, %v5570
    %v5908 = vsel %vm4453, %v5872, %v5572
    %v5909 = vsel %vm4453, %v5873, %v5574
    %v5910 = vsel %vm4453, %v5874, %v5576
    %v5911 = vsel %vm4453, %v5875, %v5578
    %v5912 = vsel %vm4453, %v5876, %v5580
    %v5913 = vsel %vm4453, %v5877, %v5582
    %v5914 = vsel %vm4453, %v5878, %v5584
    %v5915 = vsel %vm4453, %v5879, %v5586
    %v5916 = vsel %vm4453, %v5880, %v5588
    %v5917 = vsel %vm4453, %v5881, %v5590
    %v5918 = vsel %vm4453, %v5882, %v5592
    %v5919 = vsel %vm4453, %v5883, %v5594
    %v5920 = vsel %vm4453, %v5884, %v5596
    %5957 = vrot.lane.b32.xlu0 %v5885, 32
    %v5958 = vpop.permute.xlu0 %5957
    %5959 = vrot.lane.b32.xlu0 %v5886, 32
    %v5960 = vpop.permute.xlu0 %5959
    %5961 = vrot.lane.b32.xlu0 %v5887, 32
    %v5962 = vpop.permute.xlu0 %5961
    %5963 = vrot.lane.b32.xlu0 %v5888, 32
    %v5964 = vpop.permute.xlu0 %5963
    %5965 = vrot.lane.b32.xlu0 %v5889, 32
    %v5966 = vpop.permute.xlu0 %5965
    %5967 = vrot.lane.b32.xlu0 %v5890, 32
    %v5968 = vpop.permute.xlu0 %5967
    %5969 = vrot.lane.b32.xlu0 %v5891, 32
    %v5970 = vpop.permute.xlu0 %5969
    %5971 = vrot.lane.b32.xlu0 %v5892, 32
    %v5972 = vpop.permute.xlu0 %5971
    %5973 = vrot.lane.b32.xlu0 %v5893, 32
    %v5974 = vpop.permute.xlu0 %5973
    %5975 = vrot.lane.b32.xlu0 %v5894, 32
    %v5976 = vpop.permute.xlu0 %5975
    %5977 = vrot.lane.b32.xlu0 %v5895, 32
    %v5978 = vpop.permute.xlu0 %5977
    %5979 = vrot.lane.b32.xlu0 %v5896, 32
    %v5980 = vpop.permute.xlu0 %5979
    %5981 = vrot.lane.b32.xlu0 %v5897, 32
    %v5982 = vpop.permute.xlu0 %5981
    %5983 = vrot.lane.b32.xlu0 %v5898, 32
    %v5984 = vpop.permute.xlu0 %5983
    %5985 = vrot.lane.b32.xlu0 %v5899, 32
    %v5986 = vpop.permute.xlu0 %5985
    %5987 = vrot.lane.b32.xlu0 %v5900, 32
    %v5988 = vpop.permute.xlu0 %5987
    %5989 = vrot.lane.b32.xlu0 %v5901, 32
    %v5990 = vpop.permute.xlu0 %5989
    %5991 = vrot.lane.b32.xlu0 %v5902, 32
    %v5992 = vpop.permute.xlu0 %5991
    %5993 = vrot.lane.b32.xlu0 %v5903, 32
    %v5994 = vpop.permute.xlu0 %5993
    %5995 = vrot.lane.b32.xlu0 %v5904, 32
    %v5996 = vpop.permute.xlu0 %5995
    %5997 = vrot.lane.b32.xlu0 %v5905, 32
    %v5998 = vpop.permute.xlu0 %5997
    %5999 = vrot.lane.b32.xlu0 %v5906, 32
    %v6000 = vpop.permute.xlu0 %5999
    %6001 = vrot.lane.b32.xlu0 %v5907, 32
    %v6002 = vpop.permute.xlu0 %6001
    %6003 = vrot.lane.b32.xlu0 %v5908, 32
    %v6004 = vpop.permute.xlu0 %6003
    %6005 = vrot.lane.b32.xlu0 %v5909, 32
    %v6006 = vpop.permute.xlu0 %6005
    %6007 = vrot.lane.b32.xlu0 %v5910, 32
    %v6008 = vpop.permute.xlu0 %6007
    %6009 = vrot.lane.b32.xlu0 %v5911, 32
    %v6010 = vpop.permute.xlu0 %6009
    %6011 = vrot.lane.b32.xlu0 %v5912, 32
    %v6012 = vpop.permute.xlu0 %6011
    %6013 = vrot.lane.b32.xlu0 %v5913, 32
    %v6014 = vpop.permute.xlu0 %6013
    %6015 = vrot.lane.b32.xlu0 %v5914, 32
    %v6016 = vpop.permute.xlu0 %6015
    %6017 = vrot.lane.b32.xlu0 %v5915, 32
    %v6018 = vpop.permute.xlu0 %6017
    %6019 = vrot.lane.b32.xlu0 %v5916, 32
    %v6020 = vpop.permute.xlu0 %6019
    %6021 = vrot.lane.b32.xlu0 %v5917, 32
    %v6022 = vpop.permute.xlu0 %6021
    %6023 = vrot.lane.b32.xlu0 %v5918, 32
    %v6024 = vpop.permute.xlu0 %6023
    %6025 = vrot.lane.b32.xlu0 %v5919, 32
    %v6026 = vpop.permute.xlu0 %6025
    %6027 = vrot.lane.b32.xlu0 %v5920, 32
    %v6028 = vpop.permute.xlu0 %6027
    %vm6065 = vcmask 261120
    %v6066 = vsel %vm6065, %v4713, %v5958
    %v6067 = vsel %vm6065, %v4714, %v5960
    %v6068 = vsel %vm6065, %v4715, %v5962
    %v6069 = vsel %vm6065, %v4716, %v5964
    %v6070 = vsel %vm6065, %v4717, %v5966
    %v6071 = vsel %vm6065, %v4718, %v5968
    %v6072 = vsel %vm6065, %v4719, %v5970
    %v6073 = vsel %vm6065, %v4720, %v5972
    %v6074 = vsel %vm6065, %v4721, %v5974
    %v6075 = vsel %vm6065, %v4722, %v5976
    %v6076 = vsel %vm6065, %v4723, %v5978
    %v6077 = vsel %vm6065, %v4724, %v5980
    %v6078 = vsel %vm6065, %v4725, %v5982
    %v6079 = vsel %vm6065, %v4726, %v5984
    %v6080 = vsel %vm6065, %v4727, %v5986
    %v6081 = vsel %vm6065, %v4728, %v5988
    %v6082 = vsel %vm6065, %v4729, %v5990
    %v6083 = vsel %vm6065, %v4730, %v5992
    %v6084 = vsel %vm6065, %v4731, %v5994
    %v6085 = vsel %vm6065, %v4732, %v5996
    %v6086 = vsel %vm6065, %v4733, %v5998
    %v6087 = vsel %vm6065, %v4734, %v6000
    %v6088 = vsel %vm6065, %v4735, %v6002
    %v6089 = vsel %vm6065, %v4736, %v6004
    %v6090 = vsel %vm6065, %v4737, %v6006
    %v6091 = vsel %vm6065, %v4738, %v6008
    %v6092 = vsel %vm6065, %v4739, %v6010
    %v6093 = vsel %vm6065, %v4740, %v6012
    %v6094 = vsel %vm6065, %v4741, %v6014
    %v6095 = vsel %vm6065, %v4742, %v6016
    %v6096 = vsel %vm6065, %v4743, %v6018
    %v6097 = vsel %vm6065, %v4744, %v6020
    %v6098 = vsel %vm6065, %v4745, %v6022
    %v6099 = vsel %vm6065, %v4746, %v6024
    %v6100 = vsel %vm6065, %v4747, %v6026
    %v6101 = vsel %vm6065, %v4748, %v6028
    %v6102 = vpack.c.bf16 %v4603, %v4602
    %v6103 = vpack.c.bf16 %v6067, %v6066
    %v6104 = vpack.c.bf16 %v4605, %v4604
    %v6105 = vpack.c.bf16 %v6069, %v6068
    %v6106 = vpack.c.bf16 %v4607, %v4606
    %v6107 = vpack.c.bf16 %v6071, %v6070
    %v6108 = vpack.c.bf16 %v4609, %v4608
    %v6109 = vpack.c.bf16 %v6073, %v6072
    %v6110 = vpack.c.bf16 %v4611, %v4610
    %v6111 = vpack.c.bf16 %v6075, %v6074
    %v6112 = vpack.c.bf16 %v4613, %v4612
    %v6113 = vpack.c.bf16 %v6077, %v6076
    %v6114 = vpack.c.bf16 %v4615, %v4614
    %v6115 = vpack.c.bf16 %v6079, %v6078
    %v6116 = vpack.c.bf16 %v4617, %v4616
    %v6117 = vpack.c.bf16 %v6081, %v6080
    %v6118 = vpack.c.bf16 %v4619, %v4618
    %v6119 = vpack.c.bf16 %v6083, %v6082
    %v6120 = vpack.c.bf16 %v4621, %v4620
    %v6121 = vpack.c.bf16 %v6085, %v6084
    %v6122 = vpack.c.bf16 %v4623, %v4622
    %v6123 = vpack.c.bf16 %v6087, %v6086
    %v6124 = vpack.c.bf16 %v4625, %v4624
    %v6125 = vpack.c.bf16 %v6089, %v6088
    %v6126 = vpack.c.bf16 %v4627, %v4626
    %v6127 = vpack.c.bf16 %v6091, %v6090
    %v6128 = vpack.c.bf16 %v4629, %v4628
    %v6129 = vpack.c.bf16 %v6093, %v6092
    %v6130 = vpack.c.bf16 %v4631, %v4630
    %v6131 = vpack.c.bf16 %v6095, %v6094
    %v6132 = vpack.c.bf16 %v4633, %v4632
    %v6133 = vpack.c.bf16 %v6097, %v6096
    %v6134 = vpack.c.bf16 %v4635, %v4634
    %v6135 = vpack.c.bf16 %v6099, %v6098
    %v6136 = vpack.c.bf16 %v4637, %v4636
    %v6137 = vpack.c.bf16 %v6101, %v6100
    %v6138 = vld [vmem:[%s5] sm:$0xf]
    %v6139 = vld [vmem:[%s5 + $0x4] sm:$0xf]
    %v6140 = vld [vmem:[%s5 + $0x8] sm:$0xf]
    %v6141 = vld [vmem:[%s5 + $0xc] sm:$0xf]
    %v6142 = vld [vmem:[%s5 + $0x10] sm:$0xf]
    %v6143 = vld [vmem:[%s5 + $0x14] sm:$0xf]
    %v6144 = vld [vmem:[%s5 + $0x18] sm:$0xf]
    %v6145 = vld [vmem:[%s5 + $0x1c] sm:$0xf]
    %v6146 = vld [vmem:[%s5 + $0x20] sm:$0xf]
    %v6147 = vld [vmem:[%s5 + $0x24] sm:$0xf]
    %v6148 = vld [vmem:[%s5 + $0x28] sm:$0xf]
    %v6149 = vld [vmem:[%s5 + $0x2c] sm:$0xf]
    %v6150 = vld [vmem:[%s5 + $0x30] sm:$0xf]
    %v6151 = vld [vmem:[%s5 + $0x34] sm:$0xf]
    %v6152 = vld [vmem:[%s5 + $0x38] sm:$0xf]
    %v6153 = vld [vmem:[%s5 + $0x3c] sm:$0xf]
    %v6154 = vld [vmem:[%s5 + $0x40] sm:$0xf]
    %v6155 = vld [vmem:[%s5 + $0x44] sm:$0xf]
    %v6156 = vld [vmem:[%s5 + $0x48] sm:$0xf]
    %v6157 = vld [vmem:[%s5 + $0x4c] sm:$0xf]
    %v6158 = vld [vmem:[%s5 + $0x50] sm:$0xf]
    %v6159 = vld [vmem:[%s5 + $0x54] sm:$0xf]
    %v6160 = vld [vmem:[%s5 + $0x58] sm:$0xf]
    %v6161 = vld [vmem:[%s5 + $0x5c] sm:$0xf]
    %v6162 = vld [vmem:[%s5 + $0x60] sm:$0xf]
    %v6163 = vld [vmem:[%s5 + $0x64] sm:$0xf]
    %v6164 = vld [vmem:[%s5 + $0x68] sm:$0xf]
    %v6165 = vld [vmem:[%s5 + $0x6c] sm:$0xf]
    %v6166 = vld [vmem:[%s5 + $0x70] sm:$0xf]
    %v6167 = vld [vmem:[%s5 + $0x74] sm:$0xf]
    %v6168 = vld [vmem:[%s5 + $0x78] sm:$0xf]
    %v6169 = vld [vmem:[%s5 + $0x7c] sm:$0x1]
    %v6170 = vld [vmem:[%s6] sm:$0x1]
    %v6172 = vlaneseq
    %v6173 = vshrl.u32 %v6172, 7
    %v6174 = vsub.s32 0, %v6173
    %v6175 = vrot.slane %v6170, %v6174
    %v6209 = vunpack.c.l.b16 %v6138
    %v6210 = vunpack.c.l.b16 %v6139
    %v6211 = vunpack.c.l.b16 %v6140
    %v6212 = vunpack.c.l.b16 %v6141
    %v6213 = vunpack.c.l.b16 %v6142
    %v6214 = vunpack.c.l.b16 %v6143
    %v6215 = vunpack.c.l.b16 %v6144
    %v6216 = vunpack.c.l.b16 %v6145
    %v6217 = vunpack.c.l.b16 %v6146
    %v6218 = vunpack.c.l.b16 %v6147
    %v6219 = vunpack.c.l.b16 %v6148
    %v6220 = vunpack.c.l.b16 %v6149
    %v6221 = vunpack.c.l.b16 %v6150
    %v6222 = vunpack.c.l.b16 %v6151
    %v6223 = vunpack.c.l.b16 %v6152
    %v6224 = vunpack.c.l.b16 %v6153
    %v6225 = vunpack.c.l.b16 %v6154
    %v6226 = vunpack.c.l.b16 %v6155
    %v6227 = vunpack.c.l.b16 %v6156
    %v6228 = vunpack.c.l.b16 %v6157
    %v6229 = vunpack.c.l.b16 %v6158
    %v6230 = vunpack.c.l.b16 %v6159
    %v6231 = vunpack.c.l.b16 %v6160
    %v6232 = vunpack.c.l.b16 %v6161
    %v6233 = vunpack.c.l.b16 %v6162
    %v6234 = vunpack.c.l.b16 %v6163
    %v6235 = vunpack.c.l.b16 %v6164
    %v6236 = vunpack.c.l.b16 %v6165
    %v6237 = vunpack.c.l.b16 %v6166
    %v6238 = vunpack.c.l.b16 %v6167
    %v6239 = vunpack.c.l.b16 %v6168
    %v6240 = vunpack.c.l.b16 %v6169
    %v6241 = vpack.c.b16 %v6210, %v6209
    %v6242 = vpack.c.b16 %v6212, %v6211
    %v6243 = vpack.c.b16 %v6214, %v6213
    %v6244 = vpack.c.b16 %v6216, %v6215
    %v6245 = vpack.c.b16 %v6218, %v6217
    %v6246 = vpack.c.b16 %v6220, %v6219
    %v6247 = vpack.c.b16 %v6222, %v6221
    %v6248 = vpack.c.b16 %v6224, %v6223
    %v6249 = vpack.c.b16 %v6226, %v6225
    %v6250 = vpack.c.b16 %v6228, %v6227
    %v6251 = vpack.c.b16 %v6230, %v6229
    %v6252 = vpack.c.b16 %v6232, %v6231
    %v6253 = vpack.c.b16 %v6234, %v6233
    %v6254 = vpack.c.b16 %v6236, %v6235
    %v6255 = vpack.c.b16 %v6238, %v6237
    %v6256 = vpack.c.b16 %v6240, %v6239
    %vm6272 = vcmask 998400
    %v6274 = vsel %vm6272, %v6103, 0
    %v6277 = vsel %vm6272, %v6105, 0
    %v6280 = vsel %vm6272, %v6107, 0
    %v6283 = vsel %vm6272, %v6109, 0
    %v6286 = vsel %vm6272, %v6111, 0
    %v6289 = vsel %vm6272, %v6113, 0
    %v6292 = vsel %vm6272, %v6115, 0
    %v6295 = vsel %vm6272, %v6117, 0
    %v6298 = vsel %vm6272, %v6119, 0
    %v6301 = vsel %vm6272, %v6121, 0
    %v6304 = vsel %vm6272, %v6123, 0
    %v6307 = vsel %vm6272, %v6125, 0
    %v6310 = vsel %vm6272, %v6127, 0
    %v6313 = vsel %vm6272, %v6129, 0
    %v6316 = vsel %vm6272, %v6131, 0
    %v6319 = vsel %vm6272, %v6133, 0
    %v6322 = vsel %vm6272, %v6135, 0
    %v6325 = vsel %vm6272, %v6137, 0
    %v6328 = vsel %vm790, %v6256, 0
    %6330 = vmatprep.subr.bf16.mxu0 0
    %6331 = vmatpush1.bf16.msra.mxu0 %v6241
    %6332 = vmatprep.subr.bf16.mxu0 0
    %6333 = vmatpush1.bf16.msra.mxu0 %v6242
    %6334 = vmatprep.subr.bf16.mxu0 0
    %6335 = vmatpush1.bf16.msra.mxu0 %v6243
    %6336 = vmatprep.subr.bf16.mxu0 0
    %6337 = vmatpush1.bf16.msra.mxu0 %v6244
    %6338 = vmatprep.subr.bf16.mxu0 0
    %6339 = vmatpush1.bf16.msra.mxu0 %v6245
    %6340 = vmatprep.subr.bf16.mxu0 0
    %6341 = vmatpush1.bf16.msra.mxu0 %v6246
    %6342 = vmatprep.subr.bf16.mxu0 0
    %6343 = vmatpush1.bf16.msra.mxu0 %v6247
    %6344 = vmatprep.subr.bf16.mxu0 0
    %6345 = vmatpush1.bf16.msra.mxu0 %v6248
    %6346 = vmatprep.subr.bf16.mxu0 0
    %6347 = vmatpush1.bf16.msra.mxu0 %v6249
    %6348 = vmatprep.subr.bf16.mxu0 0
    %6349 = vmatpush1.bf16.msra.mxu0 %v6250
    %6350 = vmatprep.subr.bf16.mxu0 0
    %6351 = vmatpush1.bf16.msra.mxu0 %v6251
    %6352 = vmatprep.subr.bf16.mxu0 0
    %6353 = vmatpush1.bf16.msra.mxu0 %v6252
    %6354 = vmatprep.subr.bf16.mxu0 0
    %6355 = vmatpush1.bf16.msra.mxu0 %v6253
    %6356 = vmatprep.subr.bf16.mxu0 0
    %6357 = vmatpush1.bf16.msra.mxu0 %v6254
    %6358 = vmatprep.subr.bf16.mxu0 0
    %6359 = vmatpush1.bf16.msra.mxu0 %v6255
    %6360 = vmatprep.subr.bf16.mxu0 0
    %6361 = vmatpush1.bf16.msra.mxu0 %v6328
    %6362 = vmatprep.mubr.bf16.mxu0 %v6274
    %6363 = vmatmul.mubr.bf16.gmra.mrb[0].mxu0 %v6102
    %v6364 = vpop.f32.mrb[0].mxu0
    %v6365 = vadd.f32 %v6175, %v6364
    %v6366 = vpop.f32.mrb[0].mxu0
    %v6367 = vpop.f32.mrb[0].mxu0
    %v6368 = vadd.f32 %v6175, %v6367
    %v6369 = vpop.f32.mrb[0].mxu0
    %6370 = vmatprep.mubr.bf16.mxu0 %v6277
    %6371 = vmatmul.mubr.bf16.gmra.mrb[0].mxu0 %v6104
    %v6372 = vpop.f32.mrb[0].mxu0
    %v6373 = vadd.f32 %v6175, %v6372
    %v6374 = vpop.f32.mrb[0].mxu0
    %v6375 = vpop.f32.mrb[0].mxu0
    %v6376 = vadd.f32 %v6175, %v6375
    %v6377 = vpop.f32.mrb[0].mxu0
    %6378 = vmatprep.mubr.bf16.mxu0 %v6280
    %6379 = vmatmul.mubr.bf16.gmra.mrb[0].mxu0 %v6106
    %v6380 = vpop.f32.mrb[0].mxu0
    %v6381 = vadd.f32 %v6175, %v6380
    %v6382 = vpop.f32.mrb[0].mxu0
    %v6383 = vpop.f32.mrb[0].mxu0
    %v6384 = vadd.f32 %v6175, %v6383
    %v6385 = vpop.f32.mrb[0].mxu0
    %6386 = vmatprep.mubr.bf16.mxu0 %v6283
    %6387 = vmatmul.mubr.bf16.gmra.mrb[0].mxu0 %v6108
    %v6388 = vpop.f32.mrb[0].mxu0
    %v6389 = vadd.f32 %v6175, %v6388
    %v6390 = vpop.f32.mrb[0].mxu0
    %v6391 = vpop.f32.mrb[0].mxu0
    %v6392 = vadd.f32 %v6175, %v6391
    %v6393 = vpop.f32.mrb[0].mxu0
    %6394 = vmatprep.mubr.bf16.mxu0 %v6286
    %6395 = vmatmul.mubr.bf16.gmra.mrb[0].mxu0 %v6110
    %v6396 = vpop.f32.mrb[0].mxu0
    %v6397 = vadd.f32 %v6175, %v6396
    %v6398 = vpop.f32.mrb[0].mxu0
    %v6399 = vpop.f32.mrb[0].mxu0
    %v6400 = vadd.f32 %v6175, %v6399
    %v6401 = vpop.f32.mrb[0].mxu0
    %6402 = vmatprep.mubr.bf16.mxu0 %v6289
    %6403 = vmatmul.mubr.bf16.gmra.mrb[0].mxu0 %v6112
    %v6404 = vpop.f32.mrb[0].mxu0
    %v6405 = vadd.f32 %v6175, %v6404
    %v6406 = vpop.f32.mrb[0].mxu0
    %v6407 = vpop.f32.mrb[0].mxu0
    %v6408 = vadd.f32 %v6175, %v6407
    %v6409 = vpop.f32.mrb[0].mxu0
    %6410 = vmatprep.mubr.bf16.mxu0 %v6292
    %6411 = vmatmul.mubr.bf16.gmra.mrb[0].mxu0 %v6114
    %v6412 = vpop.f32.mrb[0].mxu0
    %v6413 = vadd.f32 %v6175, %v6412
    %v6414 = vpop.f32.mrb[0].mxu0
    %v6415 = vpop.f32.mrb[0].mxu0
    %v6416 = vadd.f32 %v6175, %v6415
    %v6417 = vpop.f32.mrb[0].mxu0
    %6418 = vmatprep.mubr.bf16.mxu0 %v6295
    %6419 = vmatmul.mubr.bf16.gmra.mrb[0].mxu0 %v6116
    %v6420 = vpop.f32.mrb[0].mxu0
    %v6421 = vadd.f32 %v6175, %v6420
    %v6422 = vpop.f32.mrb[0].mxu0
    %v6423 = vpop.f32.mrb[0].mxu0
    %v6424 = vadd.f32 %v6175, %v6423
    %v6425 = vpop.f32.mrb[0].mxu0
    %6426 = vmatprep.mubr.bf16.mxu0 %v6298
    %6427 = vmatmul.mubr.bf16.gmra.mrb[0].mxu0 %v6118
    %v6428 = vpop.f32.mrb[0].mxu0
    %v6429 = vadd.f32 %v6175, %v6428
    %v6430 = vpop.f32.mrb[0].mxu0
    %v6431 = vpop.f32.mrb[0].mxu0
    %v6432 = vadd.f32 %v6175, %v6431
    %v6433 = vpop.f32.mrb[0].mxu0
    %6434 = vmatprep.mubr.bf16.mxu0 %v6301
    %6435 = vmatmul.mubr.bf16.gmra.mrb[0].mxu0 %v6120
    %v6436 = vpop.f32.mrb[0].mxu0
    %v6437 = vadd.f32 %v6175, %v6436
    %v6438 = vpop.f32.mrb[0].mxu0
    %v6439 = vpop.f32.mrb[0].mxu0
    %v6440 = vadd.f32 %v6175, %v6439
    %v6441 = vpop.f32.mrb[0].mxu0
    %6442 = vmatprep.mubr.bf16.mxu0 %v6304
    %6443 = vmatmul.mubr.bf16.gmra.mrb[0].mxu0 %v6122
    %v6444 = vpop.f32.mrb[0].mxu0
    %v6445 = vadd.f32 %v6175, %v6444
    %v6446 = vpop.f32.mrb[0].mxu0
    %v6447 = vpop.f32.mrb[0].mxu0
    %v6448 = vadd.f32 %v6175, %v6447
    %v6449 = vpop.f32.mrb[0].mxu0
    %6450 = vmatprep.mubr.bf16.mxu0 %v6307
    %6451 = vmatmul.mubr.bf16.gmra.mrb[0].mxu0 %v6124
    %v6452 = vpop.f32.mrb[0].mxu0
    %v6453 = vadd.f32 %v6175, %v6452
    %v6454 = vpop.f32.mrb[0].mxu0
    %v6455 = vpop.f32.mrb[0].mxu0
    %v6456 = vadd.f32 %v6175, %v6455
    %v6457 = vpop.f32.mrb[0].mxu0
    %6458 = vmatprep.mubr.bf16.mxu0 %v6310
    %6459 = vmatmul.mubr.bf16.gmra.mrb[0].mxu0 %v6126
    %v6460 = vpop.f32.mrb[0].mxu0
    %v6461 = vadd.f32 %v6175, %v6460
    %v6462 = vpop.f32.mrb[0].mxu0
    %v6463 = vpop.f32.mrb[0].mxu0
    %v6464 = vadd.f32 %v6175, %v6463
    %v6465 = vpop.f32.mrb[0].mxu0
    %6466 = vmatprep.mubr.bf16.mxu0 %v6313
    %6467 = vmatmul.mubr.bf16.gmra.mrb[0].mxu0 %v6128
    %v6468 = vpop.f32.mrb[0].mxu0
    %v6469 = vadd.f32 %v6175, %v6468
    %v6470 = vpop.f32.mrb[0].mxu0
    %v6471 = vpop.f32.mrb[0].mxu0
    %v6472 = vadd.f32 %v6175, %v6471
    %v6473 = vpop.f32.mrb[0].mxu0
    %6474 = vmatprep.mubr.bf16.mxu0 %v6316
    %6475 = vmatmul.mubr.bf16.gmra.mrb[0].mxu0 %v6130
    %v6476 = vpop.f32.mrb[0].mxu0
    %v6477 = vadd.f32 %v6175, %v6476
    %v6478 = vpop.f32.mrb[0].mxu0
    %v6479 = vpop.f32.mrb[0].mxu0
    %v6480 = vadd.f32 %v6175, %v6479
    %v6481 = vpop.f32.mrb[0].mxu0
    %6482 = vmatprep.mubr.bf16.mxu0 %v6319
    %6483 = vmatmul.mubr.bf16.gmra.mrb[0].mxu0 %v6132
    %v6484 = vpop.f32.mrb[0].mxu0
    %v6485 = vadd.f32 %v6175, %v6484
    %v6486 = vpop.f32.mrb[0].mxu0
    %v6487 = vpop.f32.mrb[0].mxu0
    %v6488 = vadd.f32 %v6175, %v6487
    %v6489 = vpop.f32.mrb[0].mxu0
    %6490 = vmatprep.mubr.bf16.mxu0 %v6322
    %6491 = vmatmul.mubr.bf16.gmra.mrb[0].mxu0 %v6134
    %v6492 = vpop.f32.mrb[0].mxu0
    %v6493 = vadd.f32 %v6175, %v6492
    %v6494 = vpop.f32.mrb[0].mxu0
    %v6495 = vpop.f32.mrb[0].mxu0
    %v6496 = vadd.f32 %v6175, %v6495
    %v6497 = vpop.f32.mrb[0].mxu0
    %6498 = vmatprep.mubr.bf16.mxu0 %v6325
    %6499 = vmatmul.mubr.bf16.gmra.mrb[0].mxu0 %v6136
    %v6500 = vpop.f32.mrb[0].mxu0
    %v6501 = vadd.f32 %v6175, %v6500
    %v6502 = vpop.f32.mrb[0].mxu0
    %v6503 = vpop.f32.mrb[0].mxu0
    %v6504 = vadd.f32 %v6175, %v6503
    %v6505 = vpop.f32.mrb[0].mxu0
    %6506 = vdwg.mxu0
    %6507 = vst.msk [vmem:[#allocation3] sm:$0xff] %vm4231, %v6365
    %6508 = vst.msk [vmem:[#allocation3 + $0x8] sm:$0xff] %vm4231, %v6368
    %6509 = vst.msk [vmem:[#allocation3 + $0x10] sm:$0xff] %vm4231, %v6373
    %6510 = vst.msk [vmem:[#allocation3 + $0x18] sm:$0xff] %vm4231, %v6376
    %6511 = vst.msk [vmem:[#allocation3 + $0x20] sm:$0xff] %vm4231, %v6381
    %6512 = vst.msk [vmem:[#allocation3 + $0x28] sm:$0xff] %vm4231, %v6384
    %6513 = vst.msk [vmem:[#allocation3 + $0x30] sm:$0xff] %vm4231, %v6389
    %6514 = vst.msk [vmem:[#allocation3 + $0x38] sm:$0xff] %vm4231, %v6392
    %6515 = vst.msk [vmem:[#allocation3 + $0x40] sm:$0xff] %vm4231, %v6397
    %6516 = vst.msk [vmem:[#allocation3 + $0x48] sm:$0xff] %vm4231, %v6400
    %6517 = vst.msk [vmem:[#allocation3 + $0x50] sm:$0xff] %vm4231, %v6405
    %6518 = vst.msk [vmem:[#allocation3 + $0x58] sm:$0xff] %vm4231, %v6408
    %6519 = vst.msk [vmem:[#allocation3 + $0x60] sm:$0xff] %vm4231, %v6413
    %6520 = vst.msk [vmem:[#allocation3 + $0x68] sm:$0xff] %vm4231, %v6416
    %6521 = vst.msk [vmem:[#allocation3 + $0x70] sm:$0xff] %vm4231, %v6421
    %6522 = vst.msk [vmem:[#allocation3 + $0x78] sm:$0xff] %vm4231, %v6424
    %6523 = vst.msk [vmem:[#allocation3 + $0x80] sm:$0xff] %vm4231, %v6429
    %6524 = vst.msk [vmem:[#allocation3 + $0x88] sm:$0xff] %vm4231, %v6432
    %6525 = vst.msk [vmem:[#allocation3 + $0x90] sm:$0xff] %vm4231, %v6437
    %6526 = vst.msk [vmem:[#allocation3 + $0x98] sm:$0xff] %vm4231, %v6440
    %6527 = vst.msk [vmem:[#allocation3 + $0xa0] sm:$0xff] %vm4231, %v6445
    %6528 = vst.msk [vmem:[#allocation3 + $0xa8] sm:$0xff] %vm4231, %v6448
    %6529 = vst.msk [vmem:[#allocation3 + $0xb0] sm:$0xff] %vm4231, %v6453
    %6530 = vst.msk [vmem:[#allocation3 + $0xb8] sm:$0xff] %vm4231, %v6456
    %6531 = vst.msk [vmem:[#allocation3 + $0xc0] sm:$0xff] %vm4231, %v6461
    %6532 = vst.msk [vmem:[#allocation3 + $0xc8] sm:$0xff] %vm4231, %v6464
    %6533 = vst.msk [vmem:[#allocation3 + $0xd0] sm:$0xff] %vm4231, %v6469
    %6534 = vst.msk [vmem:[#allocation3 + $0xd8] sm:$0xff] %vm4231, %v6472
    %6535 = vst.msk [vmem:[#allocation3 + $0xe0] sm:$0xff] %vm4231, %v6477
    %6536 = vst.msk [vmem:[#allocation3 + $0xe8] sm:$0xff] %vm4231, %v6480
    %6537 = vst.msk [vmem:[#allocation3 + $0xf0] sm:$0xff] %vm4231, %v6485
    %6538 = vst.msk [vmem:[#allocation3 + $0xf8] sm:$0xff] %vm4231, %v6488
    %6539 = vst.msk [vmem:[#allocation3 + $0x100] sm:$0xff] %vm4231, %v6493
    %6540 = vst.msk [vmem:[#allocation3 + $0x108] sm:$0xff] %vm4231, %v6496
    %6541 = vst.msk [vmem:[#allocation3 + $0x110] sm:$0xff] %vm4231, %v6501
    %6542 = vst.msk [vmem:[#allocation3 + $0x118] sm:$0xff] %vm4231, %v6504
    %v6543 = vld [vmem:[#allocation3] ss:$144 sm:$0x3]
    %s6544 = scalar_lea.vmem [#allocation3], 1
    %v6545 = vld [vmem:[%s6544] ss:$144 sm:$0x3]
    %v6546 = vmax.f32 %v6543, %v6545
    %s6547 = scalar_lea.vmem [#allocation3], 12
    %v6548 = vld [vmem:[%s6547] ss:$144 sm:$0x3]
    %s6549 = scalar_lea.vmem [#allocation3], 13
    %v6550 = vld [vmem:[%s6549] ss:$144 sm:$0x3]
    %v6551 = vmax.f32 %v6548, %v6550
    %v6552 = vmax.f32 %v6546, %v6551
    %v6553 = vmax.f32 %v6552, 0.0
    %vm6554 = vcmask 156672
    %v6555 = vsel %vm6554, %v6553, 0.0
    %v6556 = vrot.slane %v6555, 4
    %v6557 = vadd.f32 %v6555, %v6556
    %v6558 = vrot.slane %v6557, 2
    %v6559 = vadd.f32 %v6557, %v6558
    %v6560 = vrot.slane %v6559, 1
    %v6561 = vadd.f32 %v6559, %v6560
    %v6562 = vadd.f32 %v6561, 0.0
    %v6563 = vmul.f32 %v6553, %v6553
    %v6564 = vsel %vm6554, %v6563, 0.0
    %v6565 = vrot.slane %v6564, 4
    %v6566 = vadd.f32 %v6564, %v6565
    %v6567 = vrot.slane %v6566, 2
    %v6568 = vadd.f32 %v6566, %v6567
    %v6569 = vrot.slane %v6568, 1
    %v6570 = vadd.f32 %v6568, %v6569
    %v6571 = vadd.f32 %v6570, 0.0
    %s6572 = scalar_lea.vmem [#allocation3], 2
    %v6573 = vld [vmem:[%s6572] ss:$144 sm:$0x3]
    %s6574 = scalar_lea.vmem [#allocation3], 3
    %v6575 = vld [vmem:[%s6574] ss:$144 sm:$0x3]
    %v6576 = vmax.f32 %v6573, %v6575
    %s6577 = scalar_lea.vmem [#allocation3], 14
    %v6578 = vld [vmem:[%s6577] ss:$144 sm:$0x3]
    %s6579 = scalar_lea.vmem [#allocation3], 15
    %v6580 = vld [vmem:[%s6579] ss:$144 sm:$0x3]
    %v6581 = vmax.f32 %v6578, %v6580
    %v6582 = vmax.f32 %v6576, %v6581
    %v6583 = vmax.f32 %v6582, 0.0
    %v6584 = vsel %vm6554, %v6583, 0.0
    %v6585 = vrot.slane %v6584, 4
    %v6586 = vadd.f32 %v6584, %v6585
    %v6587 = vrot.slane %v6586, 2
    %v6588 = vadd.f32 %v6586, %v6587
    %v6589 = vrot.slane %v6588, 1
    %v6590 = vadd.f32 %v6588, %v6589
    %v6591 = vadd.f32 %v6562, %v6590
    %v6592 = vmul.f32 %v6583, %v6583
    %v6593 = vsel %vm6554, %v6592, 0.0
    %v6594 = vrot.slane %v6593, 4
    %v6595 = vadd.f32 %v6593, %v6594
    %v6596 = vrot.slane %v6595, 2
    %v6597 = vadd.f32 %v6595, %v6596
    %v6598 = vrot.slane %v6597, 1
    %v6599 = vadd.f32 %v6597, %v6598
    %v6600 = vadd.f32 %v6571, %v6599
    %s6601 = scalar_lea.vmem [#allocation3], 4
    %v6602 = vld [vmem:[%s6601] ss:$144 sm:$0x3]
    %s6603 = scalar_lea.vmem [#allocation3], 5
    %v6604 = vld [vmem:[%s6603] ss:$144 sm:$0x3]
    %v6605 = vmax.f32 %v6602, %v6604
    %s6606 = scalar_lea.vmem [#allocation3], 16
    %v6607 = vld [vmem:[%s6606] ss:$144 sm:$0x3]
    %s6608 = scalar_lea.vmem [#allocation3], 17
    %v6609 = vld [vmem:[%s6608] ss:$144 sm:$0x3]
    %v6610 = vmax.f32 %v6607, %v6609
    %v6611 = vmax.f32 %v6605, %v6610
    %v6612 = vmax.f32 %v6611, 0.0
    %v6613 = vsel %vm6554, %v6612, 0.0
    %v6614 = vrot.slane %v6613, 4
    %v6615 = vadd.f32 %v6613, %v6614
    %v6616 = vrot.slane %v6615, 2
    %v6617 = vadd.f32 %v6615, %v6616
    %v6618 = vrot.slane %v6617, 1
    %v6619 = vadd.f32 %v6617, %v6618
    %v6620 = vadd.f32 %v6591, %v6619
    %v6621 = vmul.f32 %v6612, %v6612
    %v6622 = vsel %vm6554, %v6621, 0.0
    %v6623 = vrot.slane %v6622, 4
    %v6624 = vadd.f32 %v6622, %v6623
    %v6625 = vrot.slane %v6624, 2
    %v6626 = vadd.f32 %v6624, %v6625
    %v6627 = vrot.slane %v6626, 1
    %v6628 = vadd.f32 %v6626, %v6627
    %v6629 = vadd.f32 %v6600, %v6628
    %s6630 = scalar_lea.vmem [#allocation3], 6
    %v6631 = vld [vmem:[%s6630] ss:$144 sm:$0x3]
    %s6632 = scalar_lea.vmem [#allocation3], 7
    %v6633 = vld [vmem:[%s6632] ss:$144 sm:$0x3]
    %v6634 = vmax.f32 %v6631, %v6633
    %s6635 = scalar_lea.vmem [#allocation3], 18
    %v6636 = vld [vmem:[%s6635] ss:$144 sm:$0x3]
    %s6637 = scalar_lea.vmem [#allocation3], 19
    %v6638 = vld [vmem:[%s6637] ss:$144 sm:$0x3]
    %v6639 = vmax.f32 %v6636, %v6638
    %v6640 = vmax.f32 %v6634, %v6639
    %v6641 = vmax.f32 %v6640, 0.0
    %v6642 = vsel %vm6554, %v6641, 0.0
    %v6643 = vrot.slane %v6642, 4
    %v6644 = vadd.f32 %v6642, %v6643
    %v6645 = vrot.slane %v6644, 2
    %v6646 = vadd.f32 %v6644, %v6645
    %v6647 = vrot.slane %v6646, 1
    %v6648 = vadd.f32 %v6646, %v6647
    %v6649 = vadd.f32 %v6620, %v6648
    %v6650 = vmul.f32 %v6641, %v6641
    %v6651 = vsel %vm6554, %v6650, 0.0
    %v6652 = vrot.slane %v6651, 4
    %v6653 = vadd.f32 %v6651, %v6652
    %v6654 = vrot.slane %v6653, 2
    %v6655 = vadd.f32 %v6653, %v6654
    %v6656 = vrot.slane %v6655, 1
    %v6657 = vadd.f32 %v6655, %v6656
    %v6658 = vadd.f32 %v6629, %v6657
    %s6659 = scalar_lea.vmem [#allocation3], 24
    %v6660 = vld [vmem:[%s6659] ss:$144 sm:$0x3]
    %s6661 = scalar_lea.vmem [#allocation3], 25
    %v6662 = vld [vmem:[%s6661] ss:$144 sm:$0x3]
    %v6663 = vmax.f32 %v6660, %v6662
    %s6664 = scalar_lea.vmem [#allocation3], 36
    %v6665 = vld [vmem:[%s6664] ss:$144 sm:$0x3]
    %s6666 = scalar_lea.vmem [#allocation3], 37
    %v6667 = vld [vmem:[%s6666] ss:$144 sm:$0x3]
    %v6668 = vmax.f32 %v6665, %v6667
    %v6669 = vmax.f32 %v6663, %v6668
    %v6670 = vmax.f32 %v6669, 0.0
    %v6671 = vsel %vm6554, %v6670, 0.0
    %v6672 = vrot.slane %v6671, 4
    %v6673 = vadd.f32 %v6671, %v6672
    %v6674 = vrot.slane %v6673, 2
    %v6675 = vadd.f32 %v6673, %v6674
    %v6676 = vrot.slane %v6675, 1
    %v6677 = vadd.f32 %v6675, %v6676
    %v6678 = vadd.f32 %v6649, %v6677
    %v6679 = vmul.f32 %v6670, %v6670
    %v6680 = vsel %vm6554, %v6679, 0.0
    %v6681 = vrot.slane %v6680, 4
    %v6682 = vadd.f32 %v6680, %v6681
    %v6683 = vrot.slane %v6682, 2
    %v6684 = vadd.f32 %v6682, %v6683
    %v6685 = vrot.slane %v6684, 1
    %v6686 = vadd.f32 %v6684, %v6685
    %v6687 = vadd.f32 %v6658, %v6686
    %s6688 = scalar_lea.vmem [#allocation3], 26
    %v6689 = vld [vmem:[%s6688] ss:$144 sm:$0x3]
    %s6690 = scalar_lea.vmem [#allocation3], 27
    %v6691 = vld [vmem:[%s6690] ss:$144 sm:$0x3]
    %v6692 = vmax.f32 %v6689, %v6691
    %s6693 = scalar_lea.vmem [#allocation3], 38
    %v6694 = vld [vmem:[%s6693] ss:$144 sm:$0x3]
    %s6695 = scalar_lea.vmem [#allocation3], 39
    %v6696 = vld [vmem:[%s6695] ss:$144 sm:$0x3]
    %v6697 = vmax.f32 %v6694, %v6696
    %v6698 = vmax.f32 %v6692, %v6697
    %v6699 = vmax.f32 %v6698, 0.0
    %v6700 = vsel %vm6554, %v6699, 0.0
    %v6701 = vrot.slane %v6700, 4
    %v6702 = vadd.f32 %v6700, %v6701
    %v6703 = vrot.slane %v6702, 2
    %v6704 = vadd.f32 %v6702, %v6703
    %v6705 = vrot.slane %v6704, 1
    %v6706 = vadd.f32 %v6704, %v6705
    %v6707 = vadd.f32 %v6678, %v6706
    %v6708 = vmul.f32 %v6699, %v6699
    %v6709 = vsel %vm6554, %v6708, 0.0
    %v6710 = vrot.slane %v6709, 4
    %v6711 = vadd.f32 %v6709, %v6710
    %v6712 = vrot.slane %v6711, 2
    %v6713 = vadd.f32 %v6711, %v6712
    %v6714 = vrot.slane %v6713, 1
    %v6715 = vadd.f32 %v6713, %v6714
    %v6716 = vadd.f32 %v6687, %v6715
    %s6717 = scalar_lea.vmem [#allocation3], 28
    %v6718 = vld [vmem:[%s6717] ss:$144 sm:$0x3]
    %s6719 = scalar_lea.vmem [#allocation3], 29
    %v6720 = vld [vmem:[%s6719] ss:$144 sm:$0x3]
    %v6721 = vmax.f32 %v6718, %v6720
    %s6722 = scalar_lea.vmem [#allocation3], 40
    %v6723 = vld [vmem:[%s6722] ss:$144 sm:$0x3]
    %s6724 = scalar_lea.vmem [#allocation3], 41
    %v6725 = vld [vmem:[%s6724] ss:$144 sm:$0x3]
    %v6726 = vmax.f32 %v6723, %v6725
    %v6727 = vmax.f32 %v6721, %v6726
    %v6728 = vmax.f32 %v6727, 0.0
    %v6729 = vsel %vm6554, %v6728, 0.0
    %v6730 = vrot.slane %v6729, 4
    %v6731 = vadd.f32 %v6729, %v6730
    %v6732 = vrot.slane %v6731, 2
    %v6733 = vadd.f32 %v6731, %v6732
    %v6734 = vrot.slane %v6733, 1
    %v6735 = vadd.f32 %v6733, %v6734
    %v6736 = vadd.f32 %v6707, %v6735
    %v6737 = vmul.f32 %v6728, %v6728
    %v6738 = vsel %vm6554, %v6737, 0.0
    %v6739 = vrot.slane %v6738, 4
    %v6740 = vadd.f32 %v6738, %v6739
    %v6741 = vrot.slane %v6740, 2
    %v6742 = vadd.f32 %v6740, %v6741
    %v6743 = vrot.slane %v6742, 1
    %v6744 = vadd.f32 %v6742, %v6743
    %v6745 = vadd.f32 %v6716, %v6744
    %s6746 = scalar_lea.vmem [#allocation3], 30
    %v6747 = vld [vmem:[%s6746] ss:$144 sm:$0x3]
    %s6748 = scalar_lea.vmem [#allocation3], 31
    %v6749 = vld [vmem:[%s6748] ss:$144 sm:$0x3]
    %v6750 = vmax.f32 %v6747, %v6749
    %s6751 = scalar_lea.vmem [#allocation3], 42
    %v6752 = vld [vmem:[%s6751] ss:$144 sm:$0x3]
    %s6753 = scalar_lea.vmem [#allocation3], 43
    %v6754 = vld [vmem:[%s6753] ss:$144 sm:$0x3]
    %v6755 = vmax.f32 %v6752, %v6754
    %v6756 = vmax.f32 %v6750, %v6755
    %v6757 = vmax.f32 %v6756, 0.0
    %v6758 = vsel %vm6554, %v6757, 0.0
    %v6759 = vrot.slane %v6758, 4
    %v6760 = vadd.f32 %v6758, %v6759
    %v6761 = vrot.slane %v6760, 2
    %v6762 = vadd.f32 %v6760, %v6761
    %v6763 = vrot.slane %v6762, 1
    %v6764 = vadd.f32 %v6762, %v6763
    %v6765 = vadd.f32 %v6736, %v6764
    %v6766 = vmul.f32 %v6757, %v6757
    %v6767 = vsel %vm6554, %v6766, 0.0
    %v6768 = vrot.slane %v6767, 4
    %v6769 = vadd.f32 %v6767, %v6768
    %v6770 = vrot.slane %v6769, 2
    %v6771 = vadd.f32 %v6769, %v6770
    %v6772 = vrot.slane %v6771, 1
    %v6773 = vadd.f32 %v6771, %v6772
    %v6774 = vadd.f32 %v6745, %v6773
    %s6775 = scalar_lea.vmem [#allocation3], 48
    %v6776 = vld [vmem:[%s6775] ss:$144 sm:$0x3]
    %s6777 = scalar_lea.vmem [#allocation3], 49
    %v6778 = vld [vmem:[%s6777] ss:$144 sm:$0x3]
    %v6779 = vmax.f32 %v6776, %v6778
    %s6780 = scalar_lea.vmem [#allocation3], 60
    %v6781 = vld [vmem:[%s6780] ss:$144 sm:$0x3]
    %s6782 = scalar_lea.vmem [#allocation3], 61
    %v6783 = vld [vmem:[%s6782] ss:$144 sm:$0x3]
    %v6784 = vmax.f32 %v6781, %v6783
    %v6785 = vmax.f32 %v6779, %v6784
    %v6786 = vmax.f32 %v6785, 0.0
    %v6787 = vsel %vm6554, %v6786, 0.0
    %v6788 = vrot.slane %v6787, 4
    %v6789 = vadd.f32 %v6787, %v6788
    %v6790 = vrot.slane %v6789, 2
    %v6791 = vadd.f32 %v6789, %v6790
    %v6792 = vrot.slane %v6791, 1
    %v6793 = vadd.f32 %v6791, %v6792
    %v6794 = vadd.f32 %v6765, %v6793
    %v6795 = vmul.f32 %v6786, %v6786
    %v6796 = vsel %vm6554, %v6795, 0.0
    %v6797 = vrot.slane %v6796, 4
    %v6798 = vadd.f32 %v6796, %v6797
    %v6799 = vrot.slane %v6798, 2
    %v6800 = vadd.f32 %v6798, %v6799
    %v6801 = vrot.slane %v6800, 1
    %v6802 = vadd.f32 %v6800, %v6801
    %v6803 = vadd.f32 %v6774, %v6802
    %s6804 = scalar_lea.vmem [#allocation3], 50
    %v6805 = vld [vmem:[%s6804] ss:$144 sm:$0x3]
    %s6806 = scalar_lea.vmem [#allocation3], 51
    %v6807 = vld [vmem:[%s6806] ss:$144 sm:$0x3]
    %v6808 = vmax.f32 %v6805, %v6807
    %s6809 = scalar_lea.vmem [#allocation3], 62
    %v6810 = vld [vmem:[%s6809] ss:$144 sm:$0x3]
    %s6811 = scalar_lea.vmem [#allocation3], 63
    %v6812 = vld [vmem:[%s6811] ss:$144 sm:$0x3]
    %v6813 = vmax.f32 %v6810, %v6812
    %v6814 = vmax.f32 %v6808, %v6813
    %v6815 = vmax.f32 %v6814, 0.0
    %v6816 = vsel %vm6554, %v6815, 0.0
    %v6817 = vrot.slane %v6816, 4
    %v6818 = vadd.f32 %v6816, %v6817
    %v6819 = vrot.slane %v6818, 2
    %v6820 = vadd.f32 %v6818, %v6819
    %v6821 = vrot.slane %v6820, 1
    %v6822 = vadd.f32 %v6820, %v6821
    %v6823 = vadd.f32 %v6794, %v6822
    %v6824 = vmul.f32 %v6815, %v6815
    %v6825 = vsel %vm6554, %v6824, 0.0
    %v6826 = vrot.slane %v6825, 4
    %v6827 = vadd.f32 %v6825, %v6826
    %v6828 = vrot.slane %v6827, 2
    %v6829 = vadd.f32 %v6827, %v6828
    %v6830 = vrot.slane %v6829, 1
    %v6831 = vadd.f32 %v6829, %v6830
    %v6832 = vadd.f32 %v6803, %v6831
    %s6833 = scalar_lea.vmem [#allocation3], 52
    %v6834 = vld [vmem:[%s6833] ss:$144 sm:$0x3]
    %s6835 = scalar_lea.vmem [#allocation3], 53
    %v6836 = vld [vmem:[%s6835] ss:$144 sm:$0x3]
    %v6837 = vmax.f32 %v6834, %v6836
    %s6838 = scalar_lea.vmem [#allocation3], 64
    %v6839 = vld [vmem:[%s6838] ss:$144 sm:$0x3]
    %s6840 = scalar_lea.vmem [#allocation3], 65
    %v6841 = vld [vmem:[%s6840] ss:$144 sm:$0x3]
    %v6842 = vmax.f32 %v6839, %v6841
    %v6843 = vmax.f32 %v6837, %v6842
    %v6844 = vmax.f32 %v6843, 0.0
    %v6845 = vsel %vm6554, %v6844, 0.0
    %v6846 = vrot.slane %v6845, 4
    %v6847 = vadd.f32 %v6845, %v6846
    %v6848 = vrot.slane %v6847, 2
    %v6849 = vadd.f32 %v6847, %v6848
    %v6850 = vrot.slane %v6849, 1
    %v6851 = vadd.f32 %v6849, %v6850
    %v6852 = vadd.f32 %v6823, %v6851
    %v6853 = vmul.f32 %v6844, %v6844
    %v6854 = vsel %vm6554, %v6853, 0.0
    %v6855 = vrot.slane %v6854, 4
    %v6856 = vadd.f32 %v6854, %v6855
    %v6857 = vrot.slane %v6856, 2
    %v6858 = vadd.f32 %v6856, %v6857
    %v6859 = vrot.slane %v6858, 1
    %v6860 = vadd.f32 %v6858, %v6859
    %v6861 = vadd.f32 %v6832, %v6860
    %s6862 = scalar_lea.vmem [#allocation3], 54
    %v6863 = vld [vmem:[%s6862] ss:$144 sm:$0x3]
    %s6864 = scalar_lea.vmem [#allocation3], 55
    %v6865 = vld [vmem:[%s6864] ss:$144 sm:$0x3]
    %v6866 = vmax.f32 %v6863, %v6865
    %s6867 = scalar_lea.vmem [#allocation3], 66
    %v6868 = vld [vmem:[%s6867] ss:$144 sm:$0x3]
    %s6869 = scalar_lea.vmem [#allocation3], 67
    %v6870 = vld [vmem:[%s6869] ss:$144 sm:$0x3]
    %v6871 = vmax.f32 %v6868, %v6870
    %v6872 = vmax.f32 %v6866, %v6871
    %v6873 = vmax.f32 %v6872, 0.0
    %v6874 = vsel %vm6554, %v6873, 0.0
    %v6875 = vrot.slane %v6874, 4
    %v6876 = vadd.f32 %v6874, %v6875
    %v6877 = vrot.slane %v6876, 2
    %v6878 = vadd.f32 %v6876, %v6877
    %v6879 = vrot.slane %v6878, 1
    %v6880 = vadd.f32 %v6878, %v6879
    %v6881 = vadd.f32 %v6852, %v6880
    %v6882 = vmul.f32 %v6873, %v6873
    %v6883 = vsel %vm6554, %v6882, 0.0
    %v6884 = vrot.slane %v6883, 4
    %v6885 = vadd.f32 %v6883, %v6884
    %v6886 = vrot.slane %v6885, 2
    %v6887 = vadd.f32 %v6885, %v6886
    %v6888 = vrot.slane %v6887, 1
    %v6889 = vadd.f32 %v6887, %v6888
    %v6890 = vadd.f32 %v6861, %v6889
    %s6891 = scalar_lea.vmem [#allocation3], 72
    %v6892 = vld [vmem:[%s6891] ss:$144 sm:$0x3]
    %s6893 = scalar_lea.vmem [#allocation3], 73
    %v6894 = vld [vmem:[%s6893] ss:$144 sm:$0x3]
    %v6895 = vmax.f32 %v6892, %v6894
    %s6896 = scalar_lea.vmem [#allocation3], 84
    %v6897 = vld [vmem:[%s6896] ss:$144 sm:$0x3]
    %s6898 = scalar_lea.vmem [#allocation3], 85
    %v6899 = vld [vmem:[%s6898] ss:$144 sm:$0x3]
    %v6900 = vmax.f32 %v6897, %v6899
    %v6901 = vmax.f32 %v6895, %v6900
    %v6902 = vmax.f32 %v6901, 0.0
    %v6903 = vsel %vm6554, %v6902, 0.0
    %v6904 = vrot.slane %v6903, 4
    %v6905 = vadd.f32 %v6903, %v6904
    %v6906 = vrot.slane %v6905, 2
    %v6907 = vadd.f32 %v6905, %v6906
    %v6908 = vrot.slane %v6907, 1
    %v6909 = vadd.f32 %v6907, %v6908
    %v6910 = vadd.f32 %v6881, %v6909
    %v6911 = vmul.f32 %v6902, %v6902
    %v6912 = vsel %vm6554, %v6911, 0.0
    %v6913 = vrot.slane %v6912, 4
    %v6914 = vadd.f32 %v6912, %v6913
    %v6915 = vrot.slane %v6914, 2
    %v6916 = vadd.f32 %v6914, %v6915
    %v6917 = vrot.slane %v6916, 1
    %v6918 = vadd.f32 %v6916, %v6917
    %v6919 = vadd.f32 %v6890, %v6918
    %s6920 = scalar_lea.vmem [#allocation3], 74
    %v6921 = vld [vmem:[%s6920] ss:$144 sm:$0x3]
    %s6922 = scalar_lea.vmem [#allocation3], 75
    %v6923 = vld [vmem:[%s6922] ss:$144 sm:$0x3]
    %v6924 = vmax.f32 %v6921, %v6923
    %s6925 = scalar_lea.vmem [#allocation3], 86
    %v6926 = vld [vmem:[%s6925] ss:$144 sm:$0x3]
    %s6927 = scalar_lea.vmem [#allocation3], 87
    %v6928 = vld [vmem:[%s6927] ss:$144 sm:$0x3]
    %v6929 = vmax.f32 %v6926, %v6928
    %v6930 = vmax.f32 %v6924, %v6929
    %v6931 = vmax.f32 %v6930, 0.0
    %v6932 = vsel %vm6554, %v6931, 0.0
    %v6933 = vrot.slane %v6932, 4
    %v6934 = vadd.f32 %v6932, %v6933
    %v6935 = vrot.slane %v6934, 2
    %v6936 = vadd.f32 %v6934, %v6935
    %v6937 = vrot.slane %v6936, 1
    %v6938 = vadd.f32 %v6936, %v6937
    %v6939 = vadd.f32 %v6910, %v6938
    %v6940 = vmul.f32 %v6931, %v6931
    %v6941 = vsel %vm6554, %v6940, 0.0
    %v6942 = vrot.slane %v6941, 4
    %v6943 = vadd.f32 %v6941, %v6942
    %v6944 = vrot.slane %v6943, 2
    %v6945 = vadd.f32 %v6943, %v6944
    %v6946 = vrot.slane %v6945, 1
    %v6947 = vadd.f32 %v6945, %v6946
    %v6948 = vadd.f32 %v6919, %v6947
    %s6949 = scalar_lea.vmem [#allocation3], 76
    %v6950 = vld [vmem:[%s6949] ss:$144 sm:$0x3]
    %s6951 = scalar_lea.vmem [#allocation3], 77
    %v6952 = vld [vmem:[%s6951] ss:$144 sm:$0x3]
    %v6953 = vmax.f32 %v6950, %v6952
    %s6954 = scalar_lea.vmem [#allocation3], 88
    %v6955 = vld [vmem:[%s6954] ss:$144 sm:$0x3]
    %s6956 = scalar_lea.vmem [#allocation3], 89
    %v6957 = vld [vmem:[%s6956] ss:$144 sm:$0x3]
    %v6958 = vmax.f32 %v6955, %v6957
    %v6959 = vmax.f32 %v6953, %v6958
    %v6960 = vmax.f32 %v6959, 0.0
    %v6961 = vsel %vm6554, %v6960, 0.0
    %v6962 = vrot.slane %v6961, 4
    %v6963 = vadd.f32 %v6961, %v6962
    %v6964 = vrot.slane %v6963, 2
    %v6965 = vadd.f32 %v6963, %v6964
    %v6966 = vrot.slane %v6965, 1
    %v6967 = vadd.f32 %v6965, %v6966
    %v6968 = vadd.f32 %v6939, %v6967
    %v6969 = vmul.f32 %v6960, %v6960
    %v6970 = vsel %vm6554, %v6969, 0.0
    %v6971 = vrot.slane %v6970, 4
    %v6972 = vadd.f32 %v6970, %v6971
    %v6973 = vrot.slane %v6972, 2
    %v6974 = vadd.f32 %v6972, %v6973
    %v6975 = vrot.slane %v6974, 1
    %v6976 = vadd.f32 %v6974, %v6975
    %v6977 = vadd.f32 %v6948, %v6976
    %s6978 = scalar_lea.vmem [#allocation3], 78
    %v6979 = vld [vmem:[%s6978] ss:$144 sm:$0x3]
    %s6980 = scalar_lea.vmem [#allocation3], 79
    %v6981 = vld [vmem:[%s6980] ss:$144 sm:$0x3]
    %v6982 = vmax.f32 %v6979, %v6981
    %s6983 = scalar_lea.vmem [#allocation3], 90
    %v6984 = vld [vmem:[%s6983] ss:$144 sm:$0x3]
    %s6985 = scalar_lea.vmem [#allocation3], 91
    %v6986 = vld [vmem:[%s6985] ss:$144 sm:$0x3]
    %v6987 = vmax.f32 %v6984, %v6986
    %v6988 = vmax.f32 %v6982, %v6987
    %v6989 = vmax.f32 %v6988, 0.0
    %v6990 = vsel %vm6554, %v6989, 0.0
    %v6991 = vrot.slane %v6990, 4
    %v6992 = vadd.f32 %v6990, %v6991
    %v6993 = vrot.slane %v6992, 2
    %v6994 = vadd.f32 %v6992, %v6993
    %v6995 = vrot.slane %v6994, 1
    %v6996 = vadd.f32 %v6994, %v6995
    %v6997 = vadd.f32 %v6968, %v6996
    %v6998 = vmul.f32 %v6989, %v6989
    %v6999 = vsel %vm6554, %v6998, 0.0
    %v7000 = vrot.slane %v6999, 4
    %v7001 = vadd.f32 %v6999, %v7000
    %v7002 = vrot.slane %v7001, 2
    %v7003 = vadd.f32 %v7001, %v7002
    %v7004 = vrot.slane %v7003, 1
    %v7005 = vadd.f32 %v7003, %v7004
    %v7006 = vadd.f32 %v6977, %v7005
    %7008 = vrot.lane.b32.xlu0 %v6583, 20
    %v7009 = vpop.permute.xlu0 %7008
    %7012 = vrot.lane.b32.xlu0 %v6612, 40
    %v7013 = vpop.permute.xlu0 %7012
    %7016 = vrot.lane.b32.xlu0 %v6641, 60
    %v7017 = vpop.permute.xlu0 %7016
    %7020 = vrot.lane.b32.xlu0 %v6670, 80
    %v7021 = vpop.permute.xlu0 %7020
    %7024 = vrot.lane.b32.xlu0 %v6699, 100
    %v7025 = vpop.permute.xlu0 %7024
    %7028 = vrot.lane.b32.xlu0 %v6728, 120
    %v7029 = vpop.permute.xlu0 %7028
    %7032 = vrot.lane.b32.xlu0 %v6757, 12
    %v7033 = vpop.permute.xlu0 %7032
    %7036 = vrot.lane.b32.xlu0 %v6786, 32
    %v7037 = vpop.permute.xlu0 %7036
    %7040 = vrot.lane.b32.xlu0 %v6815, 52
    %v7041 = vpop.permute.xlu0 %7040
    %7044 = vrot.lane.b32.xlu0 %v6844, 72
    %v7045 = vpop.permute.xlu0 %7044
    %7048 = vrot.lane.b32.xlu0 %v6873, 92
    %v7049 = vpop.permute.xlu0 %7048
    %7052 = vrot.lane.b32.xlu0 %v6902, 112
    %v7053 = vpop.permute.xlu0 %7052
    %7056 = vrot.lane.b32.xlu0 %v6931, 4
    %v7057 = vpop.permute.xlu0 %7056
    %7060 = vrot.lane.b32.xlu0 %v6960, 24
    %v7061 = vpop.permute.xlu0 %7060
    %7064 = vrot.lane.b32.xlu0 %v6989, 44
    %v7065 = vpop.permute.xlu0 %7064
    %v7067 = vsel %vm4231, %v6553, %v7009
    %v7068 = vsel %vm4305, %v7067, %v7013
    %v7069 = vsel %vm4379, %v7068, %v7017
    %v7070 = vsel %vm4453, %v7069, %v7021
    %v7071 = vsel %vm4527, %v7070, %v7025
    %v7072 = vsel %vm4601, %v7071, %v7029
    %v7073 = vsel %vm4675, %v7029, %v7033
    %v7074 = vsel %vm6065, %v7073, %v7037
    %vm7075 = vcmask 424960
    %v7076 = vsel %vm7075, %v7074, %v7041
    %vm7077 = vcmask 588800
    %v7078 = vsel %vm7077, %v7076, %v7045
    %vm7079 = vcmask 752640
    %v7080 = vsel %vm7079, %v7078, %v7049
    %vm7081 = vcmask 916480
    %v7082 = vsel %vm7081, %v7080, %v7053
    %vm7083 = vcmask 31744
    %v7084 = vsel %vm7083, %v7053, %v7057
    %vm7085 = vcmask 195584
    %v7086 = vsel %vm7085, %v7084, %v7061
    %vm7087 = vcmask 359424
    %v7088 = vsel %vm7087, %v7086, %v7065
    %v7089 = vrcp.pop 32.0
    %v7090 = vmul.f32 %v6997, %v7089
    %v7091 = vmul.f32 %v7006, %v7089
    %v7092 = vmul.f32 %v7090, %v7090
    %v7093 = vsub.f32 %v7091, %v7092
    %v7094 = vmax.f32 %v7093, 0.0
    %v7095 = vadd.f32 %v7094, 1e-05
    %v7096 = vrsqrt.pop %v7095
    %7098 = vrot.lane.b32.xlu0 %v7090, 20
    %v7099 = vpop.permute.xlu0 %7098
    %7101 = vrot.lane.b32.xlu0 %v7090, 40
    %v7102 = vpop.permute.xlu0 %7101
    %7104 = vrot.lane.b32.xlu0 %v7090, 60
    %v7105 = vpop.permute.xlu0 %7104
    %7107 = vrot.lane.b32.xlu0 %v7090, 80
    %v7108 = vpop.permute.xlu0 %7107
    %7110 = vrot.lane.b32.xlu0 %v7090, 100
    %v7111 = vpop.permute.xlu0 %7110
    %7113 = vrot.lane.b32.xlu0 %v7090, 120
    %v7114 = vpop.permute.xlu0 %7113
    %7116 = vrot.lane.b32.xlu0 %v7090, 12
    %v7117 = vpop.permute.xlu0 %7116
    %7119 = vrot.lane.b32.xlu0 %v7090, 32
    %v7120 = vpop.permute.xlu0 %7119
    %7122 = vrot.lane.b32.xlu0 %v7090, 52
    %v7123 = vpop.permute.xlu0 %7122
    %7125 = vrot.lane.b32.xlu0 %v7090, 72
    %v7126 = vpop.permute.xlu0 %7125
    %7128 = vrot.lane.b32.xlu0 %v7090, 92
    %v7129 = vpop.permute.xlu0 %7128
    %7131 = vrot.lane.b32.xlu0 %v7090, 112
    %v7132 = vpop.permute.xlu0 %7131
    %7134 = vrot.lane.b32.xlu0 %v7090, 4
    %v7135 = vpop.permute.xlu0 %7134
    %7137 = vrot.lane.b32.xlu0 %v7090, 24
    %v7138 = vpop.permute.xlu0 %7137
    %7140 = vrot.lane.b32.xlu0 %v7090, 44
    %v7141 = vpop.permute.xlu0 %7140
    %v7143 = vsel %vm4231, %v7090, %v7099
    %v7144 = vsel %vm4305, %v7143, %v7102
    %v7145 = vsel %vm4379, %v7144, %v7105
    %v7146 = vsel %vm4453, %v7145, %v7108
    %v7147 = vsel %vm4527, %v7146, %v7111
    %v7148 = vsel %vm4601, %v7147, %v7114
    %v7149 = vsel %vm4675, %v7114, %v7117
    %v7150 = vsel %vm6065, %v7149, %v7120
    %v7151 = vsel %vm7075, %v7150, %v7123
    %v7152 = vsel %vm7077, %v7151, %v7126
    %v7153 = vsel %vm7079, %v7152, %v7129
    %v7154 = vsel %vm7081, %v7153, %v7132
    %v7155 = vsel %vm7083, %v7132, %v7135
    %v7156 = vsel %vm7085, %v7155, %v7138
    %v7157 = vsel %vm7087, %v7156, %v7141
    %v7158 = vlaneseq
    %v7159 = vshrl.u32 %v7158, 7
    %v7160 = vsub.s32 0, %v7159
    %v7161 = vrot.slane %v7148, %v7160
    %v7162 = vlaneseq
    %v7163 = vshrl.u32 %v7162, 7
    %v7164 = vsub.s32 0, %v7163
    %v7165 = vrot.slane %v7154, %v7164
    %v7166 = vlaneseq
    %v7167 = vshrl.u32 %v7166, 7
    %v7168 = vsub.s32 0, %v7167
    %v7169 = vrot.slane %v7157, %v7168
    %v7170 = vsub.f32 %v7072, %v7161
    %v7171 = vsub.f32 %v7082, %v7165
    %v7172 = vsub.f32 %v7088, %v7169
    %7174 = vrot.lane.b32.xlu0 %v7096, 20
    %v7175 = vpop.permute.xlu0 %7174
    %7177 = vrot.lane.b32.xlu0 %v7096, 40
    %v7178 = vpop.permute.xlu0 %7177
    %7180 = vrot.lane.b32.xlu0 %v7096, 60
    %v7181 = vpop.permute.xlu0 %7180
    %7183 = vrot.lane.b32.xlu0 %v7096, 80
    %v7184 = vpop.permute.xlu0 %7183
    %7186 = vrot.lane.b32.xlu0 %v7096, 100
    %v7187 = vpop.permute.xlu0 %7186
    %7189 = vrot.lane.b32.xlu0 %v7096, 120
    %v7190 = vpop.permute.xlu0 %7189
    %7192 = vrot.lane.b32.xlu0 %v7096, 12
    %v7193 = vpop.permute.xlu0 %7192
    %7195 = vrot.lane.b32.xlu0 %v7096, 32
    %v7196 = vpop.permute.xlu0 %7195
    %7198 = vrot.lane.b32.xlu0 %v7096, 52
    %v7199 = vpop.permute.xlu0 %7198
    %7201 = vrot.lane.b32.xlu0 %v7096, 72
    %v7202 = vpop.permute.xlu0 %7201
    %7204 = vrot.lane.b32.xlu0 %v7096, 92
    %v7205 = vpop.permute.xlu0 %7204
    %7207 = vrot.lane.b32.xlu0 %v7096, 112
    %v7208 = vpop.permute.xlu0 %7207
    %7210 = vrot.lane.b32.xlu0 %v7096, 4
    %v7211 = vpop.permute.xlu0 %7210
    %7213 = vrot.lane.b32.xlu0 %v7096, 24
    %v7214 = vpop.permute.xlu0 %7213
    %7216 = vrot.lane.b32.xlu0 %v7096, 44
    %v7217 = vpop.permute.xlu0 %7216
    %v7219 = vsel %vm4231, %v7096, %v7175
    %v7220 = vsel %vm4305, %v7219, %v7178
    %v7221 = vsel %vm4379, %v7220, %v7181
    %v7222 = vsel %vm4453, %v7221, %v7184
    %v7223 = vsel %vm4527, %v7222, %v7187
    %v7224 = vsel %vm4601, %v7223, %v7190
    %v7225 = vsel %vm4675, %v7190, %v7193
    %v7226 = vsel %vm6065, %v7225, %v7196
    %v7227 = vsel %vm7075, %v7226, %v7199
    %v7228 = vsel %vm7077, %v7227, %v7202
    %v7229 = vsel %vm7079, %v7228, %v7205
    %v7230 = vsel %vm7081, %v7229, %v7208
    %v7231 = vsel %vm7083, %v7208, %v7211
    %v7232 = vsel %vm7085, %v7231, %v7214
    %v7233 = vsel %vm7087, %v7232, %v7217
    %v7234 = vlaneseq
    %v7235 = vshrl.u32 %v7234, 7
    %v7236 = vsub.s32 0, %v7235
    %v7237 = vrot.slane %v7224, %v7236
    %v7238 = vlaneseq
    %v7239 = vshrl.u32 %v7238, 7
    %v7240 = vsub.s32 0, %v7239
    %v7241 = vrot.slane %v7230, %v7240
    %v7242 = vlaneseq
    %v7243 = vshrl.u32 %v7242, 7
    %v7244 = vsub.s32 0, %v7243
    %v7245 = vrot.slane %v7233, %v7244
    %v7246 = vmul.f32 %v7170, %v7237
    %v7247 = vmul.f32 %v7171, %v7241
    %v7248 = vmul.f32 %v7172, %v7245
    %v7249 = vld [vmem:[%s7] sm:$0x7]
    %v7251 = vlaneseq
    %v7252 = vshrl.u32 %v7251, 7
    %v7253 = vsub.s32 0, %v7252
    %v7254 = vrot.slane %v7249, %v7253
    %v7255 = vlaneseq
    %v7256 = vshrl.u32 %v7255, 7
    %v7257 = vsub.s32 1, %v7256
    %v7258 = vrot.slane %v7249, %v7257
    %v7259 = vlaneseq
    %v7260 = vshrl.u32 %v7259, 7
    %v7261 = vsub.s32 2, %v7260
    %v7262 = vrot.slane %v7249, %v7261
    %v7266 = vmul.f32 %v7246, %v7254
    %v7267 = vmul.f32 %v7247, %v7258
    %v7268 = vmul.f32 %v7248, %v7262
    %v7269 = vld [vmem:[%s8] sm:$0x7]
    %v7271 = vlaneseq
    %v7272 = vshrl.u32 %v7271, 7
    %v7273 = vsub.s32 0, %v7272
    %v7274 = vrot.slane %v7269, %v7273
    %v7275 = vlaneseq
    %v7276 = vshrl.u32 %v7275, 7
    %v7277 = vsub.s32 1, %v7276
    %v7278 = vrot.slane %v7269, %v7277
    %v7279 = vlaneseq
    %v7280 = vshrl.u32 %v7279, 7
    %v7281 = vsub.s32 2, %v7280
    %v7282 = vrot.slane %v7269, %v7281
    %v7286 = vadd.f32 %v7266, %v7274
    %v7287 = vadd.f32 %v7267, %v7278
    %v7288 = vadd.f32 %v7268, %v7282
    %v7289 = vpack.c.bf16 %v7286, %v7286
    %v7290 = vpack.c.bf16 %v7287, %v7287
    %v7291 = vpack.c.bf16 %v7288, %v7288
    %v7292 = vld [vmem:[%s9] sm:$0xf]
    %v7293 = vld [vmem:[%s9 + $0x4] sm:$0xf]
    %v7294 = vld [vmem:[%s9 + $0x8] sm:$0xf]
    %v7295 = vld [vmem:[%s9 + $0xc] sm:$0xf]
    %v7296 = vld [vmem:[%s9 + $0x10] sm:$0xf]
    %v7297 = vld [vmem:[%s9 + $0x14] sm:$0xf]
    %v7298 = vld [vmem:[%s9 + $0x18] sm:$0xf]
    %v7299 = vld [vmem:[%s9 + $0x1c] sm:$0xf]
    %v7300 = vld [vmem:[%s9 + $0x20] sm:$0xf]
    %v7301 = vld [vmem:[%s9 + $0x24] sm:$0xf]
    %v7302 = vld [vmem:[%s9 + $0x28] sm:$0xf]
    %v7303 = vld [vmem:[%s9 + $0x2c] sm:$0xf]
    %v7304 = vld [vmem:[%s9 + $0x30] sm:$0xf]
    %v7305 = vld [vmem:[%s9 + $0x34] sm:$0xf]
    %v7306 = vld [vmem:[%s9 + $0x38] sm:$0xf]
    %v7307 = vld [vmem:[%s9 + $0x3c] sm:$0xf]
    %v7308 = vld [vmem:[%s9 + $0x40] sm:$0xf]
    %v7309 = vld [vmem:[%s9 + $0x44] sm:$0xf]
    %v7310 = vld [vmem:[%s9 + $0x48] sm:$0xf]
    %v7311 = vld [vmem:[%s9 + $0x4c] sm:$0xf]
    %v7312 = vld [vmem:[%s9 + $0x50] sm:$0xf]
    %v7313 = vld [vmem:[%s9 + $0x54] sm:$0xf]
    %v7314 = vld [vmem:[%s9 + $0x58] sm:$0xf]
    %v7315 = vld [vmem:[%s9 + $0x5c] sm:$0xf]
    %v7316 = vld [vmem:[%s9 + $0x60] sm:$0xf]
    %v7317 = vld [vmem:[%s9 + $0x64] sm:$0xf]
    %v7318 = vld [vmem:[%s9 + $0x68] sm:$0xf]
    %v7319 = vld [vmem:[%s9 + $0x6c] sm:$0xf]
    %v7320 = vld [vmem:[%s9 + $0x70] sm:$0xf]
    %v7321 = vld [vmem:[%s9 + $0x74] sm:$0xf]
    %v7322 = vld [vmem:[%s9 + $0x78] sm:$0xf]
    %v7323 = vld [vmem:[%s9 + $0x7c] sm:$0xf]
    %v7324 = vld [vmem:[%s9 + $0x80] sm:$0xf]
    %v7325 = vld [vmem:[%s9 + $0x84] sm:$0xf]
    %v7326 = vld [vmem:[%s9 + $0x88] sm:$0xf]
    %v7327 = vld [vmem:[%s9 + $0x8c] sm:$0xf]
    %v7328 = vld [vmem:[%s9 + $0x90] sm:$0xf]
    %v7329 = vld [vmem:[%s9 + $0x94] sm:$0xf]
    %v7330 = vld [vmem:[%s9 + $0x98] sm:$0xf]
    %v7331 = vld [vmem:[%s9 + $0x9c] sm:$0xf]
    %v7332 = vld [vmem:[%s10] sm:$0x1]
    %v7334 = vlaneseq
    %v7335 = vshrl.u32 %v7334, 7
    %v7336 = vsub.s32 0, %v7335
    %v7337 = vrot.slane %v7332, %v7336
    %v7379 = vunpack.c.l.b16 %v7292
    %v7380 = vunpack.c.l.b16 %v7293
    %v7381 = vunpack.c.l.b16 %v7294
    %v7382 = vunpack.c.l.b16 %v7295
    %v7383 = vunpack.c.l.b16 %v7296
    %v7384 = vunpack.c.l.b16 %v7297
    %v7385 = vunpack.c.l.b16 %v7298
    %v7386 = vunpack.c.l.b16 %v7299
    %v7387 = vunpack.c.l.b16 %v7300
    %v7388 = vunpack.c.l.b16 %v7301
    %v7389 = vunpack.c.l.b16 %v7302
    %v7390 = vunpack.c.l.b16 %v7303
    %v7391 = vunpack.c.l.b16 %v7304
    %v7392 = vunpack.c.l.b16 %v7305
    %v7393 = vunpack.c.l.b16 %v7306
    %v7394 = vunpack.c.l.b16 %v7307
    %v7395 = vunpack.c.l.b16 %v7308
    %v7396 = vunpack.c.l.b16 %v7309
    %v7397 = vunpack.c.l.b16 %v7310
    %v7398 = vunpack.c.l.b16 %v7311
    %v7399 = vunpack.c.l.b16 %v7312
    %v7400 = vunpack.c.l.b16 %v7313
    %v7401 = vunpack.c.l.b16 %v7314
    %v7402 = vunpack.c.l.b16 %v7315
    %v7403 = vunpack.c.l.b16 %v7316
    %v7404 = vunpack.c.l.b16 %v7317
    %v7405 = vunpack.c.l.b16 %v7318
    %v7406 = vunpack.c.l.b16 %v7319
    %v7407 = vunpack.c.l.b16 %v7320
    %v7408 = vunpack.c.l.b16 %v7321
    %v7409 = vunpack.c.l.b16 %v7322
    %v7410 = vunpack.c.l.b16 %v7323
    %v7411 = vunpack.c.l.b16 %v7324
    %v7412 = vunpack.c.l.b16 %v7325
    %v7413 = vunpack.c.l.b16 %v7326
    %v7414 = vunpack.c.l.b16 %v7327
    %v7415 = vunpack.c.l.b16 %v7328
    %v7416 = vunpack.c.l.b16 %v7329
    %v7417 = vunpack.c.l.b16 %v7330
    %v7418 = vunpack.c.l.b16 %v7331
    %v7419 = vpack.c.b16 %v7380, %v7379
    %v7420 = vpack.c.b16 %v7382, %v7381
    %v7421 = vpack.c.b16 %v7384, %v7383
    %v7422 = vpack.c.b16 %v7386, %v7385
    %v7423 = vpack.c.b16 %v7388, %v7387
    %v7424 = vpack.c.b16 %v7390, %v7389
    %v7425 = vpack.c.b16 %v7392, %v7391
    %v7426 = vpack.c.b16 %v7394, %v7393
    %v7427 = vpack.c.b16 %v7396, %v7395
    %v7428 = vpack.c.b16 %v7398, %v7397
    %v7429 = vpack.c.b16 %v7400, %v7399
    %v7430 = vpack.c.b16 %v7402, %v7401
    %v7431 = vpack.c.b16 %v7404, %v7403
    %v7432 = vpack.c.b16 %v7406, %v7405
    %v7433 = vpack.c.b16 %v7408, %v7407
    %v7434 = vpack.c.b16 %v7410, %v7409
    %v7435 = vpack.c.b16 %v7412, %v7411
    %v7436 = vpack.c.b16 %v7414, %v7413
    %v7437 = vpack.c.b16 %v7416, %v7415
    %v7438 = vpack.c.b16 %v7418, %v7417
    %vm7459 = vcmask 523264
    %v7461 = vsel %vm7459, %v7291, 0
    %7463 = vmatprep.subr.bf16.mxu0 0
    %7464 = vmatpush1.bf16.msra.mxu0 %v7419
    %7465 = vmatprep.subr.bf16.mxu0 0
    %7466 = vmatpush1.bf16.msra.mxu0 %v7420
    %7467 = vmatprep.subr.bf16.mxu0 0
    %7468 = vmatpush1.bf16.msra.mxu0 %v7421
    %7469 = vmatprep.subr.bf16.mxu0 0
    %7470 = vmatpush1.bf16.msra.mxu0 %v7422
    %7471 = vmatprep.subr.bf16.mxu0 0
    %7472 = vmatpush1.bf16.msra.mxu0 %v7423
    %7473 = vmatprep.subr.bf16.mxu0 0
    %7474 = vmatpush1.bf16.msra.mxu0 %v7424
    %7475 = vmatprep.subr.bf16.mxu0 0
    %7476 = vmatpush1.bf16.msra.mxu0 %v7425
    %7477 = vmatprep.subr.bf16.mxu0 0
    %7478 = vmatpush1.bf16.msra.mxu0 %v7426
    %7479 = vmatprep.subr.bf16.mxu0 0
    %7480 = vmatpush1.bf16.msra.mxu0 %v7427
    %7481 = vmatprep.subr.bf16.mxu0 0
    %7482 = vmatpush1.bf16.msra.mxu0 %v7428
    %7483 = vmatprep.subr.bf16.mxu0 0
    %7484 = vmatpush1.bf16.msra.mxu0 %v7429
    %7485 = vmatprep.subr.bf16.mxu0 0
    %7486 = vmatpush1.bf16.msra.mxu0 %v7430
    %7487 = vmatprep.subr.bf16.mxu0 0
    %7488 = vmatpush1.bf16.msra.mxu0 %v7431
    %7489 = vmatprep.subr.bf16.mxu0 0
    %7490 = vmatpush1.bf16.msra.mxu0 %v7432
    %7491 = vmatprep.subr.bf16.mxu0 0
    %7492 = vmatpush1.bf16.msra.mxu0 %v7433
    %7493 = vmatprep.subr.bf16.mxu0 0
    %7494 = vmatpush1.bf16.msra.mxu0 %v7434
    %7495 = vmatprep.mubr.bf16.mxu0 %v7290
    %7496 = vmatmul.mubr.bf16.gmra.mrb[0].mxu0 %v7289
    %v7497 = vpop.f32.mrb[0].mxu0
    %v7498 = vadd.f32 %v7337, %v7497
    %v7499 = vpop.f32.mrb[0].mxu0
    %v7500 = vpop.f32.mrb[0].mxu0
    %v7501 = vpop.f32.mrb[0].mxu0
    %7502 = vdwg.mxu0
    %7503 = vmatprep.subr.bf16.mxu0 0
    %7504 = vmatpush1.bf16.msra.mxu0 %v7435
    %7505 = vmatprep.subr.bf16.mxu0 0
    %7506 = vmatpush1.bf16.msra.mxu0 %v7436
    %7507 = vmatprep.subr.bf16.mxu0 0
    %7508 = vmatpush1.bf16.msra.mxu0 %v7437
    %7509 = vmatprep.subr.bf16.mxu0 0
    %7510 = vmatpush1.bf16.msra.mxu0 %v7438
    %7511 = vmatprep.subr.bf16.mxu0 0
    %7512 = vmatpush1.bf16.msra.mxu0 0
    %7513 = vmatprep.subr.bf16.mxu0 0
    %7514 = vmatpush1.bf16.msra.mxu0 0
    %7515 = vmatprep.subr.bf16.mxu0 0
    %7516 = vmatpush1.bf16.msra.mxu0 0
    %7517 = vmatprep.subr.bf16.mxu0 0
    %7518 = vmatpush1.bf16.msra.mxu0 0
    %7519 = vmatprep.subr.bf16.mxu0 0
    %7520 = vmatpush1.bf16.msra.mxu0 0
    %7521 = vmatprep.subr.bf16.mxu0 0
    %7522 = vmatpush1.bf16.msra.mxu0 0
    %7523 = vmatprep.subr.bf16.mxu0 0
    %7524 = vmatpush1.bf16.msra.mxu0 0
    %7525 = vmatprep.subr.bf16.mxu0 0
    %7526 = vmatpush1.bf16.msra.mxu0 0
    %7527 = vmatprep.subr.bf16.mxu0 0
    %7528 = vmatpush1.bf16.msra.mxu0 0
    %7529 = vmatprep.subr.bf16.mxu0 0
    %7530 = vmatpush1.bf16.msra.mxu0 0
    %7531 = vmatprep.subr.bf16.mxu0 0
    %7532 = vmatpush1.bf16.msra.mxu0 0
    %7533 = vmatprep.subr.bf16.mxu0 0
    %7534 = vmatpush1.bf16.msra.mxu0 0
    %7535 = vmatprep.mubr.bf16.mxu0 0
    %7536 = vmatmul.mubr.bf16.gmra.mrb[0].mxu0 %v7461
    %v7537 = vpop.f32.mrb[0].mxu0
    %v7538 = vadd.f32 %v7498, %v7537
    %v7539 = vpop.f32.mrb[0].mxu0
    %v7540 = vpop.f32.mrb[0].mxu0
    %v7541 = vpop.f32.mrb[0].mxu0
    %7542 = vdwg.mxu0
    %v7543 = vmax.f32 %v7538, 0.0
    %v7544 = vpack.c.bf16 %v7543, %v7543
    %v7545 = vld [vmem:[%s11] sm:$0xf]
    %v7546 = vld [vmem:[%s11 + $0x4] sm:$0xf]
    %v7547 = vld [vmem:[%s11 + $0x8] sm:$0xf]
    %v7548 = vld [vmem:[%s11 + $0xc] sm:$0xf]
    %v7549 = vld [vmem:[%s11 + $0x10] sm:$0xf]
    %v7550 = vld [vmem:[%s11 + $0x14] sm:$0xf]
    %v7551 = vld [vmem:[%s11 + $0x18] sm:$0x1]
    %v7552 = vld [vmem:[%s12] sm:$0x1]
    %v7554 = vlaneseq
    %v7555 = vshrl.u32 %v7554, 7
    %v7556 = vsub.s32 0, %v7555
    %v7557 = vrot.slane %v7552, %v7556
    %v7566 = vunpack.c.l.b16 %v7545
    %v7567 = vunpack.c.l.b16 %v7546
    %v7568 = vunpack.c.l.b16 %v7547
    %v7569 = vunpack.c.l.b16 %v7548
    %v7570 = vunpack.c.l.b16 %v7549
    %v7571 = vunpack.c.l.b16 %v7550
    %v7572 = vunpack.c.l.b16 %v7551
    %v7573 = vpack.c.b16 %v7567, %v7566
    %v7574 = vpack.c.b16 %v7569, %v7568
    %v7575 = vpack.c.b16 %v7571, %v7570
    %v7576 = vpack.c.b16 %v7572, %v7572
    %v7581 = vsel %vm4342, %v7544, 0
    %vm7583 = vcmask 1040384
    %v7585 = vsel %vm7583, %v7576, 0
    %7587 = vmatprep.subr.bf16.mxu0 0
    %7588 = vmatpush1.bf16.msra.mxu0 %v7573
    %7589 = vmatprep.subr.bf16.mxu0 0
    %7590 = vmatpush1.bf16.msra.mxu0 %v7574
    %7591 = vmatprep.subr.bf16.mxu0 0
    %7592 = vmatpush1.bf16.msra.mxu0 %v7575
    %7593 = vmatprep.subr.bf16.mxu0 0
    %7594 = vmatpush1.bf16.msra.mxu0 %v7585
    %7595 = vmatprep.subr.bf16.mxu0 0
    %7596 = vmatpush1.bf16.msra.mxu0 0
    %7597 = vmatprep.subr.bf16.mxu0 0
    %7598 = vmatpush1.bf16.msra.mxu0 0
    %7599 = vmatprep.subr.bf16.mxu0 0
    %7600 = vmatpush1.bf16.msra.mxu0 0
    %7601 = vmatprep.subr.bf16.mxu0 0
    %7602 = vmatpush1.bf16.msra.mxu0 0
    %7603 = vmatprep.subr.bf16.mxu0 0
    %7604 = vmatpush1.bf16.msra.mxu0 0
    %7605 = vmatprep.subr.bf16.mxu0 0
    %7606 = vmatpush1.bf16.msra.mxu0 0
    %7607 = vmatprep.subr.bf16.mxu0 0
    %7608 = vmatpush1.bf16.msra.mxu0 0
    %7609 = vmatprep.subr.bf16.mxu0 0
    %7610 = vmatpush1.bf16.msra.mxu0 0
    %7611 = vmatprep.subr.bf16.mxu0 0
    %7612 = vmatpush1.bf16.msra.mxu0 0
    %7613 = vmatprep.subr.bf16.mxu0 0
    %7614 = vmatpush1.bf16.msra.mxu0 0
    %7615 = vmatprep.subr.bf16.mxu0 0
    %7616 = vmatpush1.bf16.msra.mxu0 0
    %7617 = vmatprep.subr.bf16.mxu0 0
    %7618 = vmatpush1.bf16.msra.mxu0 0
    %7619 = vmatprep.mubr.bf16.mxu0 0
    %7620 = vmatmul.mubr.bf16.gmra.mrb[0].mxu0 %v7581
    %v7621 = vpop.f32.mrb[0].mxu0
    %v7622 = vadd.f32 %v7557, %v7621
    %v7623 = vpop.f32.mrb[0].mxu0
    %v7624 = vpop.f32.mrb[0].mxu0
    %v7625 = vpop.f32.mrb[0].mxu0
    %7626 = vdwg.mxu0
    %vm7627 = vcmask 74752
    %v7628 = vsel %vm7627, %v7622, -inf
    %7629 = vmax.xlane.f32.xlu0 %v7628
    %v7630 = vpop.xlane.xlu0 %7629
    %v7631 = vsub.f32 %v7622, %v7630
    %v7632 = vmul.f32 %v7631, 1.442695
    %v7633 = vpow.pop %v7632
    %v7634 = vsel %vm7627, %v7633, 0.0
    %7635 = vadd.xlane.f32.xlu0 %v7634
    %v7636 = vpop.xlane.xlu0 %7635
    %v7637 = vlog2.pop %v7636
    %v7638 = vmul.f32 %v7637, 0.6931472
    %v7639 = vsub.f32 %v7631, %v7638
    %7640 = vst.msk [vmem:[#allocation4] sm:$0x3] %vm7627, %v7639
    // Predicated region
    $region54: #{mnist_forward.1} parent=1 // pred_check
      _
    $region55: #{mnist_forward.1} parent=1 // pred_check_branch
      %7642 = sbr.rel (0) target = $region57
    $region56: #{mnist_forward.1} parent=1 // pred_region
      %s7644 = ssub.s32 32, 32
      %7645 = vsyncadd [#allocation5], %s7644
      %s7647 = sshll.u32 [#allocation4], 4
      %s7648 = int_to_ptr.vmem [resolvable:$true] %s7647
      %7650 = dma.vmem_to_hbm [thread:$0]  %s7648, 32, %s13, [#allocation5]
    $region57: #{mnist_forward.1} parent=1 // pred_fallthru
      _
    // Predicated region
    $region58: #{mnist_forward.1} parent=1 // pred_check
      _
    $region59: #{mnist_forward.1} parent=1 // pred_check_branch
      %7652 = sbr.rel (0) target = $region61
    $region60: #{mnist_forward.1} parent=1 // pred_region
      %7653 = dma.done [#allocation5], 32
    $region61: #{mnist_forward.1} parent=1 // pred_fallthru
      _
    %7654 = vsyncpa [#allocation5], 1

</llo_original>
